<compile_context>
chip_gen: v7x
topology: tpu7x:2x2x1
jax: 0.10.0
libtpu: 0.0.40
codegen_flags: <defaults>
</compile_context>

<pallas_src>
import functools
from types import SimpleNamespace

import jax
import jax.numpy as jnp
import numpy as np
from jax import lax
from jax.experimental import pallas as pl
from jax.experimental.pallas import tpu as pltpu


_SMEM = pl.BlockSpec(memory_space=pltpu.MemorySpace.SMEM)
_LO_BINS = 16          # low-nibble width of the two-stage LUT gather


def _round_up(x, m):
    return ((x + m - 1) // m) * m


# ------------------------------ fused kernel --------------------------------

def _fused_loss_kernel(scal_ref, lut_ref, logits_ref, targets_ref,
                       ft_ref, c1_ref, fc_ref, fo_ref, xs_ref,
                       closs_ref, sloss_ref, bs_ref, acc_ref,
                       *, l1, res, valid_last, inv_m):
    """Fused loss kernel.

    Grid: 1-D over column tiles of the (pre-sorted, column-padded) gate matrix.
    Tiny CE / sparsity inputs have constant block indices (VMEM resident) and
    are evaluated once on grid step 0 under pl.when; batch-shaping partial
    sums accumulate in a lane-vector VMEM scratch and are reduced once on the
    last step.
      scal = [den_target, lbda_eff, gamma_eff]      (SMEM, f32)
      lut  = beta CDF LUT reshaped to (H, 16); entries past res-2 are padding
             that is never selected (idx <= res-2 after the clip).
    """
    j = pl.program_id(0)
    last = pl.num_programs(0) - 1

    # ---------- step 0: init accumulator, cross entropy, sparsity loss ------
    @pl.when(j == 0)
    def _():
        acc_ref[...] = jnp.zeros_like(acc_ref)

        # cross entropy (mean NLL)
        logits = logits_ref[...]                      # (N, C) f32
        tgt = targets_ref[...]                        # (N, 1) i32
        n, c = logits.shape
        row_max = jnp.max(logits, axis=1, keepdims=True)
        lse = jnp.log(jnp.sum(jnp.exp(logits - row_max), axis=1,
                              keepdims=True)) + row_max
        col = lax.broadcasted_iota(jnp.int32, (n, c), 1)
        onehot = (col == tgt).astype(jnp.float32)
        picked = jnp.sum(onehot * logits, axis=1, keepdims=True)
        closs_ref[0, 0] = jnp.sum(lse - picked) / n

        # sparsity (FLOPs) loss
        den_target = scal_ref[0]
        lbda = scal_ref[1]
        ft = ft_ref[...]                              # (B, F)
        b, f = ft.shape
        c1 = c1_ref[...]                              # (1, B)
        fc = fc_ref[...]                              # (1, B)
        flops_conv = jnp.sum(ft) / b                  # mean over clips, sum frames
        c1_mean = jnp.sum(c1) / c1.shape[1]
        fc_mean = jnp.sum(fc) / fc.shape[1]
        ori = jnp.sum(fo_ref[...]) + c1_mean * f + fc_mean
        real = flops_conv + c1_mean * f + fc_mean
        d = real / ori - den_target
        if l1:
            sloss_ref[0, 0] = lbda * jnp.maximum(jnp.float32(0.0), d)
        else:
            sloss_ref[0, 0] = lbda * d * d

    # ---------- every step (only while gamma > 0): batch-shaping tile -------
    @pl.when(scal_ref[2] > 0.0)
    def _():
        x = xs_ref[...]                               # (n_rows, TM), col-sorted
        n_rows, tm = x.shape

        inv_res = 1.0 / res
        xc = jnp.clip(x, inv_res, 1.0 - inv_res)
        idx = (jnp.round(xc * res) - 1.0).astype(jnp.int32)   # in [0, res-2]
        lo = jnp.bitwise_and(idx, _LO_BINS - 1)
        hi = jnp.right_shift(idx, 4)                  # idx // 16

        # LUT split into bf16 hi/lo halves: one-hot values are exactly
        # representable in bf16 and the two MXU passes reconstruct the f32
        # LUT value to ~2^-17 relative error (review: never quantize the LUT).
        lut = lut_ref[...]                            # (H, 16) f32
        hh = lut.shape[0]
        lut_hi_b = lut.astype(jnp.bfloat16)
        lut_lo_b = (lut - lut_hi_b.astype(jnp.float32)).astype(jnp.bfloat16)

        iota_lo = lax.broadcasted_iota(jnp.int32, (_LO_BINS, tm), 0)
        iota_hi = lax.broadcasted_iota(jnp.int32, (hh, tm), 0)

        acc_lane = jnp.zeros((1, tm), jnp.float32)
        for i in range(n_rows):                       # statically unrolled
            # 16-wide one-hot over the low nibble -> MXU contraction with LUT.
            eq = (iota_lo == lo[i:i + 1, :])
            oh = jnp.where(eq, jnp.float32(1.0),
                           jnp.float32(0.0)).astype(jnp.bfloat16)   # (16, TM)
            t = (jnp.dot(lut_hi_b, oh, preferred_element_type=jnp.float32)
                 + jnp.dot(lut_lo_b, oh, preferred_element_type=jnp.float32))
            # select the high-nibble row: p[j'] = LUT[hi, lo] = LUT_flat[idx]
            p = jnp.sum(jnp.where(iota_hi == hi[i:i + 1, :], t, 0.0),
                        axis=0, keepdims=True)        # (1, TM)
            e_i = jnp.float32((i + 1.0) / (n_rows + 1.0))   # compile-time const
            d = e_i - p
            acc_lane = acc_lane + d * d

        # mask out host-side padded columns; only the last tile has any.
        lane = lax.broadcasted_iota(jnp.int32, (1, tm), 1)
        keep = jnp.logical_or(j != last, lane < valid_last)
        acc_ref[...] = acc_ref[...] + jnp.where(keep, acc_lane, 0.0)

    # ---------- last step: finalize batch-shaping loss ----------------------
    @pl.when(j == last)
    def _():
        gamma = scal_ref[2]
        total = jnp.sum(acc_ref[...])                 # single cross-lane reduce
        bs_ref[0, 0] = jnp.where(gamma > 0.0,
                                 gamma * total * jnp.float32(inv_m),
                                 jnp.float32(0.0))


# ------------------------------- wrapper -------------------------------------

def _fused_loss(output, targets, flops_tensor, flops_conv1, flops_fc, flops_ori,
                scal, lut2d, x_sorted_padded, tile_m, m_real, l1, res):
    n_cls, c_cls = output.shape
    b, f = flops_tensor.shape
    k = flops_ori.shape[0]
    n_rows, m_pad = x_sorted_padded.shape
    num_tiles = m_pad // tile_m
    valid_last = int(m_real - (num_tiles - 1) * tile_m)
    hh = lut2d.shape[0]

    kernel = functools.partial(_fused_loss_kernel, l1=bool(l1), res=int(res),
                               valid_last=valid_last,
                               inv_m=1.0 / float(m_real))
    out = pl.pallas_call(
        kernel,
        out_shape=(jax.ShapeDtypeStruct((1, 1), jnp.float32),
                   jax.ShapeDtypeStruct((1, 1), jnp.float32),
                   jax.ShapeDtypeStruct((1, 1), jnp.float32)),
        grid_spec=pltpu.PrefetchScalarGridSpec(
            num_scalar_prefetch=0,
            grid=(num_tiles,),
            in_specs=[
                _SMEM,                                             # scal (3,)
                pl.BlockSpec((hh, _LO_BINS), lambda j: (0, 0)),    # LUT (H,16)
                pl.BlockSpec((n_cls, c_cls), lambda j: (0, 0)),    # logits
                pl.BlockSpec((n_cls, 1), lambda j: (0, 0)),        # targets
                pl.BlockSpec((b, f), lambda j: (0, 0)),            # flops_tensor
                pl.BlockSpec((1, b), lambda j: (0, 0)),            # flops_conv1
                pl.BlockSpec((1, b), lambda j: (0, 0)),            # flops_fc
                pl.BlockSpec((1, k), lambda j: (0, 0)),            # flops_ori
                pl.BlockSpec((n_rows, tile_m), lambda j: (0, j)),  # sorted gates
            ],
            out_specs=(_SMEM, _SMEM, _SMEM),
            scratch_shapes=[pltpu.VMEM((1, tile_m), jnp.float32)]),
        compiler_params=pltpu.CompilerParams(
            dimension_semantics=("arbitrary",)),
    )(scal, lut2d,
      output.astype(jnp.float32),
      targets.astype(jnp.int32).reshape(n_cls, 1),
      flops_tensor.astype(jnp.float32),
      flops_conv1.astype(jnp.float32).reshape(1, -1),
      flops_fc.astype(jnp.float32).reshape(1, -1),
      flops_ori.astype(jnp.float32).reshape(1, -1),
      x_sorted_padded.astype(jnp.float32))
    return out[0][0, 0], out[1][0, 0], out[2][0, 0]


class Loss:
    """Forward-equivalent of the PyTorch Loss module (CE + sparsity + batch shaping)."""

    def __init__(self, bs_pdf_alpha, bs_pdf_beta, bs_beta_cdf_res):
        res = int(bs_beta_cdf_res)
        xs = jnp.linspace(1.0 / res, 1.0 - 1.0 / res, res - 1).astype(jnp.float32)
        a = jnp.float32(bs_pdf_alpha)
        b = jnp.float32(bs_pdf_beta)
        cdf = jax.scipy.special.betainc(a, b, xs).astype(jnp.float32)     # (res-1,)
        # two-level (hi, lo) LUT layout: pad to a multiple of 16 entries; the
        # padded tail is never selected because idx <= res-2 after the clip.
        n_hi = (res - 2) // _LO_BINS + 1
        n_pad = n_hi * _LO_BINS
        flat = jnp.concatenate(
            [cdf, jnp.full((n_pad - (res - 1),), cdf[-1], jnp.float32)])
        self.beta_cdf_lut = flat                                          # (n_pad,)
        self.beta_cdf_lut2d = flat.reshape(n_hi, _LO_BINS)                # (H, 16)
        # pdf LUT is only needed by the custom backward; kept for completeness.
        log_pdf = ((a - 1.0) * jnp.log(xs) + (b - 1.0) * jnp.log1p(-xs)
                   - jax.scipy.special.betaln(a, b))
        self.beta_pdf_lut = jnp.exp(log_pdf).astype(jnp.float32)
        self.beta_cdf_res = res

    def __call__(self, output, targets, flops_real, flops_ori, batch_size,
                 den_target, lbda, channel_gates_outputs, epoch=None, args=None):
        flops_tensor, flops_conv1, flops_fc = flops_real
        res = self.beta_cdf_res
        den_t = jnp.asarray(den_target, jnp.float32)
        lbda = jnp.asarray(lbda, jnp.float32)

        bs_enabled = (args is not None) and (args.bs_gamma > 0)
        l1 = bool(args.spars_loss_L1) if args is not None else False

        if args is None:
            lbda_eff = lbda
            gamma_eff = jnp.float32(0.0)
        else:
            # epoch schedule via jnp ops on a device scalar -> graph is
            # epoch-invariant (no per-epoch retrace/recompile of the kernel).
            e = jnp.asarray(epoch, jnp.float32)
            if 0 <= args.sparsity_warmup_start < args.sparsity_warmup_end:
                factor = jnp.clip(
                    (e - args.sparsity_warmup_start)
                    / (args.sparsity_warmup_end - args.sparsity_warmup_start),
                    0.0, 1.0)
            else:
                factor = jnp.float32(1.0)
            lbda_eff = jnp.where(e < args.eff_loss_after, 0.0, lbda * factor)

            if bs_enabled:
                g = jnp.float32(args.bs_gamma)
                if args.bs_loss_stop_epoch > 0:
                    g = (args.bs_loss_stop_epoch - e) / (
                        args.bs_loss_stop_epoch - args.bs_loss_start_epoch) * g
                gamma_eff = jnp.where(e < args.bs_loss_start_epoch, 0.0, g)
            else:
                gamma_eff = jnp.float32(0.0)

        if bs_enabled:
            gates = channel_gates_outputs
            if args.bs_from_block > 0:
                gates = gates[args.bs_from_block:]
            blocks = [jnp.squeeze(g.reshape((-1,) + g.shape[2:])) for g in gates]
            x_m = jnp.hstack(blocks).astype(jnp.float32)
            # TODO(synk): torch.sort along dim 0 has no clean Pallas TPU
            # equivalent; the sort stays in plain JAX glue.
            x_sorted = jnp.sort(x_m, axis=0)
            n_rows, m_real = x_sorted.shape
            tile_m = min(2048, _round_up(max(m_real, 1), 128))
            m_pad = _round_up(m_real, tile_m)
            if m_pad > m_real:
                x_sorted = jnp.pad(x_sorted, ((0, 0), (0, m_pad - m_real)),
                                   constant_values=0.5)
        else:
            # batch shaping disabled: dummy tile, gamma_eff == 0 skips the work.
            n_rows, m_real, tile_m = 8, 128, 128
            x_sorted = jnp.full((8, 128), 0.5, jnp.float32)

        scal = jnp.stack([den_t,
                          jnp.asarray(lbda_eff, jnp.float32),
                          jnp.asarray(gamma_eff, jnp.float32)])

        closs, sloss, bs = _fused_loss(
            output, targets, flops_tensor, flops_conv1, flops_fc, flops_ori,
            scal, self.beta_cdf_lut2d, x_sorted, tile_m, m_real, l1, res)
        return closs, sloss, bs


# --------------------------------- demo ---------------------------------------

if __name__ == "__main__":
    key = jax.random.PRNGKey(0)
    k1, k2, k3, k4, k5, k6, k7, k8 = jax.random.split(key, 8)

    N, C = 8, 32                                   # samples / classes
    output = jax.random.normal(k1, (N, C), jnp.float32)
    targets = jax.random.randint(k2, (N,), 0, C, jnp.int32)

    B, F = 4, 16                                   # clips / frames per clip
    flops_tensor = jax.random.uniform(k3, (B, F), jnp.float32, 1e6, 5e6)
    flops_conv1 = jax.random.uniform(k4, (B,), jnp.float32, 1e5, 2e5)
    flops_fc = jax.random.uniform(k5, (B,), jnp.float32, 1e4, 5e4)
    flops_ori = jax.random.uniform(k6, (16,), jnp.float32, 1e6, 8e6)

    # two gate blocks (clips=2, frames=4); total channels 2124 -> exercises the
    # multi-tile path (tile_m = 2048) and the padded-column mask on the last tile.
    g1 = jax.nn.sigmoid(jax.random.normal(k7, (2, 4, 1024), jnp.float32))
    g2 = jax.nn.sigmoid(jax.random.normal(k8, (2, 4, 1100), jnp.float32))
    channel_gates_outputs = [g1, g2]

    args = SimpleNamespace(
        eff_loss_after=0,
        sparsity_warmup_start=-1,
        sparsity_warmup_end=-1,
        spars_loss_L1=False,
        bs_gamma=0.2,
        bs_loss_start_epoch=0,
        bs_loss_stop_epoch=0,
        bs_from_block=0,
    )

    loss_mod = Loss(bs_pdf_alpha=0.6, bs_pdf_beta=0.4, bs_beta_cdf_res=256)
    closs, sloss, bs_loss = loss_mod(
        output, targets,
        (flops_tensor, flops_conv1, flops_fc), flops_ori,
        batch_size=N, den_target=0.5, lbda=5.0,
        channel_gates_outputs=channel_gates_outputs,
        epoch=5, args=args)
    jax.block_until_ready((closs, sloss, bs_loss))

    # ---- pure-JAX reference (forward semantics of the PyTorch module) ------
    row_max = jnp.max(output, axis=1, keepdims=True)
    lse = jnp.log(jnp.sum(jnp.exp(output - row_max), axis=1, keepdims=True)) + row_max
    picked = jnp.take_along_axis(output, targets[:, None], axis=1)
    closs_ref = jnp.mean(lse - picked)

    f = flops_tensor.shape[1]
    flops_conv = flops_tensor.mean(axis=0).sum()
    ori = flops_ori.sum() + flops_conv1.mean() * f + flops_fc.mean()
    real = flops_conv + flops_conv1.mean() * f + flops_fc.mean()
    lbda_eff, gamma_eff = 5.0, args.bs_gamma       # schedule at epoch=5
    sloss_ref = lbda_eff * (real / ori - 0.5) ** 2

    x_m = jnp.hstack([jnp.squeeze(g.reshape((-1,) + g.shape[2:]))
                      for g in channel_gates_outputs])
    xs = jnp.sort(x_m, axis=0)
    res = loss_mod.beta_cdf_res
    xc = jnp.clip(xs, 1.0 / res, 1.0 - 1.0 / res)
    idx = (jnp.round(xc * res) - 1).astype(jnp.int32)
    p_cdf = loss_mod.beta_cdf_lut[idx]
    n = xs.shape[0]
    e_cdf = (jnp.arange(1, n + 1, dtype=jnp.float32) / (n + 1))[:, None]
    bs_ref = gamma_eff * jnp.mean(jnp.sum((e_cdf - p_cdf) ** 2, axis=0))

    np.testing.assert_allclose(np.asarray(closs), np.asarray(closs_ref),
                               rtol=1e-4, atol=1e-5)
    np.testing.assert_allclose(np.asarray(sloss), np.asarray(sloss_ref),
                               rtol=1e-4, atol=1e-5)
    np.testing.assert_allclose(np.asarray(bs_loss), np.asarray(bs_ref),
                               rtol=1e-4, atol=1e-5)
    print("KERNEL_OK")
</pallas_src>

<mosaic_0001>
module attributes {stable_mosaic.version = 11 : i64} {
  func.func @_fused_loss_kernel(%arg0: i32, %arg1: memref<3xf32, #tpu.memory_space<smem>>, %arg2: memref<16x16xf32, #tpu.memory_space<vmem>>, %arg3: memref<8x32xf32, #tpu.memory_space<vmem>>, %arg4: memref<8x1xi32, #tpu.memory_space<vmem>>, %arg5: memref<4x16xf32, #tpu.memory_space<vmem>>, %arg6: memref<1x4xf32, #tpu.memory_space<vmem>>, %arg7: memref<1x4xf32, #tpu.memory_space<vmem>>, %arg8: memref<1x16xf32, #tpu.memory_space<vmem>>, %arg9: memref<8x2048xf32, #tpu.memory_space<vmem>>, %arg10: memref<1x1xf32, #tpu.memory_space<smem>>, %arg11: memref<1x1xf32, #tpu.memory_space<smem>>, %arg12: memref<1x1xf32, #tpu.memory_space<smem>>, %arg13: memref<1x2048xf32, #tpu.memory_space<vmem>>) attributes {dimension_semantics = [#tpu.dimension_semantics<arbitrary>], iteration_bounds = array<i64: 2>, scalar_prefetch = 0 : i64, scratch_operands = 1 : i64, tpu.core_type = #tpu.core_type<tc>, window_params = [{transform_indices = @transform_0, window_bounds = array<i64: 3>}, {pipeline_mode = #tpu.pipeline_mode<synchronous>, transform_indices = @transform_1, window_bounds = array<i64: 16, 16>}, {pipeline_mode = #tpu.pipeline_mode<synchronous>, transform_indices = @transform_2, window_bounds = array<i64: 8, 32>}, {pipeline_mode = #tpu.pipeline_mode<synchronous>, transform_indices = @transform_3, window_bounds = array<i64: 8, 1>}, {pipeline_mode = #tpu.pipeline_mode<synchronous>, transform_indices = @transform_4, window_bounds = array<i64: 4, 16>}, {pipeline_mode = #tpu.pipeline_mode<synchronous>, transform_indices = @transform_5, window_bounds = array<i64: 1, 4>}, {pipeline_mode = #tpu.pipeline_mode<synchronous>, transform_indices = @transform_6, window_bounds = array<i64: 1, 4>}, {pipeline_mode = #tpu.pipeline_mode<synchronous>, transform_indices = @transform_7, window_bounds = array<i64: 1, 16>}, {transform_indices = @transform_8, window_bounds = array<i64: 8, 2048>}, {transform_indices = @transform_9, window_bounds = array<i64: 1, 1>}, {transform_indices = @transform_10, window_bounds = array<i64: 1, 1>}, {transform_indices = @transform_11, window_bounds = array<i64: 1, 1>}]} {
    %c0_i32 = arith.constant 0 : i32
    %0 = arith.cmpi eq, %arg0, %c0_i32 : i32
    %1 = arith.extui %0 : i1 to i32
    %c0_i32_0 = arith.constant 0 : i32
    %2 = arith.cmpi ne, %1, %c0_i32_0 : i32
    scf.if %2 {
      %cst_3 = arith.constant 0.000000e+00 : f32
      %10 = vector.broadcast %cst_3 : f32 to vector<1x2048xf32>
      %c0 = arith.constant 0 : index
      %c0_4 = arith.constant 0 : index
      %11 = vector.load %arg13[%c0, %c0_4] : memref<1x2048xf32, #tpu.memory_space<vmem>>, vector<1x2048xf32>
      tpu.vector_store %arg13[%c0, %c0_4], %10 {strides = array<i32>} : memref<1x2048xf32, #tpu.memory_space<vmem>>, vector<1x2048xf32>,
      %c0_5 = arith.constant 0 : index
      %c0_6 = arith.constant 0 : index
      %12 = vector.load %arg3[%c0_5, %c0_6] : memref<8x32xf32, #tpu.memory_space<vmem>>, vector<8x32xf32>
      %c0_7 = arith.constant 0 : index
      %c0_8 = arith.constant 0 : index
      %13 = vector.load %arg4[%c0_7, %c0_8] : memref<8x1xi32, #tpu.memory_space<vmem>>, vector<8x1xi32>
      %cst_9 = arith.constant dense<0xFF800000> : vector<8xf32>
      %14 = vector.multi_reduction <maximumf>, %12, %cst_9 [1] : vector<8x32xf32> to vector<8xf32>
      %15 = vector.shape_cast %14 : vector<8xf32> to vector<8x1xf32>
      %16 = vector.broadcast %15 : vector<8x1xf32> to vector<8x32xf32>
      %17 = arith.subf %12, %16 : vector<8x32xf32>
      %18 = math.exp %17 : vector<8x32xf32>
      %cst_10 = arith.constant dense<0.000000e+00> : vector<8xf32>
      %19 = vector.multi_reduction <add>, %18, %cst_10 [1] : vector<8x32xf32> to vector<8xf32>
      %20 = vector.shape_cast %19 : vector<8xf32> to vector<8x1xf32>
      %21 = math.log %20 : vector<8x1xf32>
      %22 = arith.addf %21, %15 : vector<8x1xf32>
      %23 = tpu.iota {dimensions = array<i32: 1>} : vector<8x32xi32>
      %24 = vector.broadcast %13 : vector<8x1xi32> to vector<8x32xi32>
      %25 = arith.cmpi eq, %23, %24 : vector<8x32xi32>
      %26 = arith.extui %25 : vector<8x32xi1> to vector<8x32xi32>
      %27 = arith.sitofp %26 : vector<8x32xi32> to vector<8x32xf32>
      %28 = arith.mulf %27, %12 : vector<8x32xf32>
      %cst_11 = arith.constant dense<0.000000e+00> : vector<8xf32>
      %29 = vector.multi_reduction <add>, %28, %cst_11 [1] : vector<8x32xf32> to vector<8xf32>
      %30 = vector.shape_cast %29 : vector<8xf32> to vector<8x1xf32>
      %31 = arith.subf %22, %30 : vector<8x1xf32>
      %32 = vector.shape_cast %31 : vector<8x1xf32> to vector<1x8x1xf32>
      %cst_12 = arith.constant dense<0.000000e+00> : vector<1xf32>
      %33 = vector.multi_reduction <add>, %32, %cst_12 [1, 2] : vector<1x8x1xf32> to vector<1xf32>
      %34 = vector.shape_cast %33 : vector<1xf32> to vector<1x1x1xf32>
      %35 = vector.extract %34[0, 0, 0] : f32 from vector<1x1x1xf32>
      %cst_13 = arith.constant 8.000000e+00 : f32
      %36 = arith.divf %35, %cst_13 : f32
      %c0_14 = arith.constant 0 : index
      %c0_15 = arith.constant 0 : index
      %37 = memref.load %arg10[%c0_14, %c0_15] : memref<1x1xf32, #tpu.memory_space<smem>>
      memref.store %36, %arg10[%c0_14, %c0_15] : memref<1x1xf32, #tpu.memory_space<smem>>
      %c0_16 = arith.constant 0 : index
      %38 = memref.load %arg1[%c0_16] : memref<3xf32, #tpu.memory_space<smem>>
      %c1 = arith.constant 1 : index
      %39 = memref.load %arg1[%c1] : memref<3xf32, #tpu.memory_space<smem>>
      %c0_17 = arith.constant 0 : index
      %c0_18 = arith.constant 0 : index
      %40 = vector.load %arg5[%c0_17, %c0_18] : memref<4x16xf32, #tpu.memory_space<vmem>>, vector<4x16xf32>
      %c0_19 = arith.constant 0 : index
      %c0_20 = arith.constant 0 : index
      %41 = vector.load %arg6[%c0_19, %c0_20] : memref<1x4xf32, #tpu.memory_space<vmem>>, vector<1x4xf32>
      %c0_21 = arith.constant 0 : index
      %c0_22 = arith.constant 0 : index
      %42 = vector.load %arg7[%c0_21, %c0_22] : memref<1x4xf32, #tpu.memory_space<vmem>>, vector<1x4xf32>
      %43 = vector.shape_cast %40 : vector<4x16xf32> to vector<1x4x16xf32>
      %cst_23 = arith.constant dense<0.000000e+00> : vector<1xf32>
      %44 = vector.multi_reduction <add>, %43, %cst_23 [1, 2] : vector<1x4x16xf32> to vector<1xf32>
      %45 = vector.shape_cast %44 : vector<1xf32> to vector<1x1x1xf32>
      %46 = vector.extract %45[0, 0, 0] : f32 from vector<1x1x1xf32>
      %cst_24 = arith.constant 4.000000e+00 : f32
      %47 = arith.divf %46, %cst_24 : f32
      %48 = vector.shape_cast %41 : vector<1x4xf32> to vector<1x1x4xf32>
      %cst_25 = arith.constant dense<0.000000e+00> : vector<1xf32>
      %49 = vector.multi_reduction <add>, %48, %cst_25 [1, 2] : vector<1x1x4xf32> to vector<1xf32>
      %50 = vector.shape_cast %49 : vector<1xf32> to vector<1x1x1xf32>
      %51 = vector.extract %50[0, 0, 0] : f32 from vector<1x1x1xf32>
      %cst_26 = arith.constant 4.000000e+00 : f32
      %52 = arith.divf %51, %cst_26 : f32
      %53 = vector.shape_cast %42 : vector<1x4xf32> to vector<1x1x4xf32>
      %cst_27 = arith.constant dense<0.000000e+00> : vector<1xf32>
      %54 = vector.multi_reduction <add>, %53, %cst_27 [1, 2] : vector<1x1x4xf32> to vector<1xf32>
      %55 = vector.shape_cast %54 : vector<1xf32> to vector<1x1x1xf32>
      %56 = vector.extract %55[0, 0, 0] : f32 from vector<1x1x1xf32>
      %cst_28 = arith.constant 4.000000e+00 : f32
      %57 = arith.divf %56, %cst_28 : f32
      %c0_29 = arith.constant 0 : index
      %c0_30 = arith.constant 0 : index
      %58 = vector.load %arg8[%c0_29, %c0_30] : memref<1x16xf32, #tpu.memory_space<vmem>>, vector<1x16xf32>
      %59 = vector.shape_cast %58 : vector<1x16xf32> to vector<1x1x16xf32>
      %cst_31 = arith.constant dense<0.000000e+00> : vector<1xf32>
      %60 = vector.multi_reduction <add>, %59, %cst_31 [1, 2] : vector<1x1x16xf32> to vector<1xf32>
      %61 = vector.shape_cast %60 : vector<1xf32> to vector<1x1x1xf32>
      %62 = vector.extract %61[0, 0, 0] : f32 from vector<1x1x1xf32>
      %cst_32 = arith.constant 1.600000e+01 : f32
      %63 = arith.mulf %52, %cst_32 : f32
      %64 = arith.addf %62, %63 : f32
      %65 = arith.addf %64, %57 : f32
      %cst_33 = arith.constant 1.600000e+01 : f32
      %66 = arith.mulf %52, %cst_33 : f32
      %67 = arith.addf %47, %66 : f32
      %68 = arith.addf %67, %57 : f32
      %69 = arith.divf %68, %65 : f32
      %70 = arith.subf %69, %38 : f32
      %71 = arith.mulf %39, %70 : f32
      %72 = arith.mulf %71, %70 : f32
      %c0_34 = arith.constant 0 : index
      %c0_35 = arith.constant 0 : index
      %73 = memref.load %arg11[%c0_34, %c0_35] : memref<1x1xf32, #tpu.memory_space<smem>>
      memref.store %72, %arg11[%c0_34, %c0_35] : memref<1x1xf32, #tpu.memory_space<smem>>
    } else {
    }
    %c2 = arith.constant 2 : index
    %3 = memref.load %arg1[%c2] : memref<3xf32, #tpu.memory_space<smem>>
    %cst = arith.constant 0.000000e+00 : f32
    %4 = arith.cmpf ogt, %3, %cst : f32
    %5 = arith.extui %4 : i1 to i32
    %c0_i32_1 = arith.constant 0 : i32
    %6 = arith.cmpi ne, %5, %c0_i32_1 : i32
    scf.if %6 {
      %c0 = arith.constant 0 : index
      %c0_3 = arith.constant 0 : index
      %10 = vector.load %arg9[%c0, %c0_3] : memref<8x2048xf32, #tpu.memory_space<vmem>>, vector<8x2048xf32>
      %cst_4 = arith.constant 3.906250e-03 : f32
      %cst_5 = arith.constant 0.99609375 : f32
      %11 = vector.broadcast %cst_4 : f32 to vector<8x2048xf32>
      %12 = arith.maximumf %11, %10 : vector<8x2048xf32>
      %13 = vector.broadcast %cst_5 : f32 to vector<8x2048xf32>
      %14 = arith.minimumf %13, %12 : vector<8x2048xf32>
      %cst_6 = arith.constant 2.560000e+02 : f32
      %15 = vector.broadcast %cst_6 : f32 to vector<8x2048xf32>
      %16 = arith.mulf %14, %15 : vector<8x2048xf32>
      %17 = math.roundeven %16 : vector<8x2048xf32>
      %cst_7 = arith.constant 1.000000e+00 : f32
      %18 = vector.broadcast %cst_7 : f32 to vector<8x2048xf32>
      %19 = arith.subf %17, %18 : vector<8x2048xf32>
      %20 = arith.fptosi %19 : vector<8x2048xf32> to vector<8x2048xi32>
      %c15_i32 = arith.constant 15 : i32
      %21 = vector.broadcast %c15_i32 : i32 to vector<8x2048xi32>
      %22 = arith.andi %20, %21 : vector<8x2048xi32>
      %c4_i32 = arith.constant 4 : i32
      %23 = vector.broadcast %c4_i32 : i32 to vector<8x2048xi32>
      %24 = arith.shrsi %20, %23 : vector<8x2048xi32>
      %c0_8 = arith.constant 0 : index
      %c0_9 = arith.constant 0 : index
      %25 = vector.load %arg2[%c0_8, %c0_9] : memref<16x16xf32, #tpu.memory_space<vmem>>, vector<16x16xf32>
      %26 = arith.truncf %25 : vector<16x16xf32> to vector<16x16xbf16>
      %27 = arith.extf %26 : vector<16x16xbf16> to vector<16x16xf32>
      %28 = arith.subf %25, %27 : vector<16x16xf32>
      %29 = arith.truncf %28 : vector<16x16xf32> to vector<16x16xbf16>
      %30 = tpu.iota {dimensions = array<i32: 0>} : vector<16x2048xi32>
      %31 = tpu.iota {dimensions = array<i32: 0>} : vector<16x2048xi32>
      %cst_10 = arith.constant 0.000000e+00 : f32
      %32 = vector.broadcast %cst_10 : f32 to vector<1x2048xf32>
      %33 = vector.extract_strided_slice %22 {offsets = [0, 0], sizes = [1, 2048], strides = [1, 1]} : vector<8x2048xi32> to vector<1x2048xi32>
      %34 = vector.broadcast %33 : vector<1x2048xi32> to vector<16x2048xi32>
      %35 = arith.cmpi eq, %30, %34 : vector<16x2048xi32>
      %cst_11 = arith.constant 1.000000e+00 : f32
      %cst_12 = arith.constant 0.000000e+00 : f32
      %36 = vector.broadcast %cst_11 : f32 to vector<16x2048xf32>
      %37 = vector.broadcast %cst_12 : f32 to vector<16x2048xf32>
      %38 = arith.select %35, %36, %37 : vector<16x2048xi1>, vector<16x2048xf32>
      %39 = arith.truncf %38 : vector<16x2048xf32> to vector<16x2048xbf16>
      %cst_13 = arith.constant dense<0.000000e+00> : vector<16x2048xf32>
      %40 = tpu.matmul %26, %39, %cst_13 {dimension_numbers = #tpu.dot_dimension_numbers<[1], [0], [0], [1], [0, 0, 1, 1], [], []>} : vector<16x16xbf16>, vector<16x2048xbf16>, vector<16x2048xf32> -> vector<16x2048xf32>
      %cst_14 = arith.constant dense<0.000000e+00> : vector<16x2048xf32>
      %41 = tpu.matmul %29, %39, %cst_14 {dimension_numbers = #tpu.dot_dimension_numbers<[1], [0], [0], [1], [0, 0, 1, 1], [], []>} : vector<16x16xbf16>, vector<16x2048xbf16>, vector<16x2048xf32> -> vector<16x2048xf32>
      %42 = arith.addf %40, %41 : vector<16x2048xf32>
      %43 = vector.extract_strided_slice %24 {offsets = [0, 0], sizes = [1, 2048], strides = [1, 1]} : vector<8x2048xi32> to vector<1x2048xi32>
      %44 = vector.broadcast %43 : vector<1x2048xi32> to vector<16x2048xi32>
      %45 = arith.cmpi eq, %31, %44 : vector<16x2048xi32>
      %cst_15 = arith.constant 0.000000e+00 : f32
      %46 = vector.broadcast %cst_15 : f32 to vector<16x2048xf32>
      %47 = arith.select %45, %42, %46 : vector<16x2048xi1>, vector<16x2048xf32>
      %cst_16 = arith.constant dense<0.000000e+00> : vector<2048xf32>
      %48 = vector.multi_reduction <add>, %47, %cst_16 [0] : vector<16x2048xf32> to vector<2048xf32>
      %49 = vector.shape_cast %48 : vector<2048xf32> to vector<1x2048xf32>
      %cst_17 = arith.constant 0.111111112 : f32
      %50 = vector.broadcast %cst_17 : f32 to vector<1x2048xf32>
      %51 = arith.subf %50, %49 : vector<1x2048xf32>
      %52 = arith.mulf %51, %51 : vector<1x2048xf32>
      %53 = arith.addf %32, %52 : vector<1x2048xf32>
      %54 = vector.extract_strided_slice %22 {offsets = [1, 0], sizes = [1, 2048], strides = [1, 1]} : vector<8x2048xi32> to vector<1x2048xi32>
      %55 = vector.broadcast %54 : vector<1x2048xi32> to vector<16x2048xi32>
      %56 = arith.cmpi eq, %30, %55 : vector<16x2048xi32>
      %cst_18 = arith.constant 1.000000e+00 : f32
      %cst_19 = arith.constant 0.000000e+00 : f32
      %57 = vector.broadcast %cst_18 : f32 to vector<16x2048xf32>
      %58 = vector.broadcast %cst_19 : f32 to vector<16x2048xf32>
      %59 = arith.select %56, %57, %58 : vector<16x2048xi1>, vector<16x2048xf32>
      %60 = arith.truncf %59 : vector<16x2048xf32> to vector<16x2048xbf16>
      %cst_20 = arith.constant dense<0.000000e+00> : vector<16x2048xf32>
      %61 = tpu.matmul %26, %60, %cst_20 {dimension_numbers = #tpu.dot_dimension_numbers<[1], [0], [0], [1], [0, 0, 1, 1], [], []>} : vector<16x16xbf16>, vector<16x2048xbf16>, vector<16x2048xf32> -> vector<16x2048xf32>
      %cst_21 = arith.constant dense<0.000000e+00> : vector<16x2048xf32>
      %62 = tpu.matmul %29, %60, %cst_21 {dimension_numbers = #tpu.dot_dimension_numbers<[1], [0], [0], [1], [0, 0, 1, 1], [], []>} : vector<16x16xbf16>, vector<16x2048xbf16>, vector<16x2048xf32> -> vector<16x2048xf32>
      %63 = arith.addf %61, %62 : vector<16x2048xf32>
      %64 = vector.extract_strided_slice %24 {offsets = [1, 0], sizes = [1, 2048], strides = [1, 1]} : vector<8x2048xi32> to vector<1x2048xi32>
      %65 = vector.broadcast %64 : vector<1x2048xi32> to vector<16x2048xi32>
      %66 = arith.cmpi eq, %31, %65 : vector<16x2048xi32>
      %cst_22 = arith.constant 0.000000e+00 : f32
      %67 = vector.broadcast %cst_22 : f32 to vector<16x2048xf32>
      %68 = arith.select %66, %63, %67 : vector<16x2048xi1>, vector<16x2048xf32>
      %cst_23 = arith.constant dense<0.000000e+00> : vector<2048xf32>
      %69 = vector.multi_reduction <add>, %68, %cst_23 [0] : vector<16x2048xf32> to vector<2048xf32>
      %70 = vector.shape_cast %69 : vector<2048xf32> to vector<1x2048xf32>
      %cst_24 = arith.constant 0.222222224 : f32
      %71 = vector.broadcast %cst_24 : f32 to vector<1x2048xf32>
      %72 = arith.subf %71, %70 : vector<1x2048xf32>
      %73 = arith.mulf %72, %72 : vector<1x2048xf32>
      %74 = arith.addf %53, %73 : vector<1x2048xf32>
      %75 = vector.extract_strided_slice %22 {offsets = [2, 0], sizes = [1, 2048], strides = [1, 1]} : vector<8x2048xi32> to vector<1x2048xi32>
      %76 = vector.broadcast %75 : vector<1x2048xi32> to vector<16x2048xi32>
      %77 = arith.cmpi eq, %30, %76 : vector<16x2048xi32>
      %cst_25 = arith.constant 1.000000e+00 : f32
      %cst_26 = arith.constant 0.000000e+00 : f32
      %78 = vector.broadcast %cst_25 : f32 to vector<16x2048xf32>
      %79 = vector.broadcast %cst_26 : f32 to vector<16x2048xf32>
      %80 = arith.select %77, %78, %79 : vector<16x2048xi1>, vector<16x2048xf32>
      %81 = arith.truncf %80 : vector<16x2048xf32> to vector<16x2048xbf16>
      %cst_27 = arith.constant dense<0.000000e+00> : vector<16x2048xf32>
      %82 = tpu.matmul %26, %81, %cst_27 {dimension_numbers = #tpu.dot_dimension_numbers<[1], [0], [0], [1], [0, 0, 1, 1], [], []>} : vector<16x16xbf16>, vector<16x2048xbf16>, vector<16x2048xf32> -> vector<16x2048xf32>
      %cst_28 = arith.constant dense<0.000000e+00> : vector<16x2048xf32>
      %83 = tpu.matmul %29, %81, %cst_28 {dimension_numbers = #tpu.dot_dimension_numbers<[1], [0], [0], [1], [0, 0, 1, 1], [], []>} : vector<16x16xbf16>, vector<16x2048xbf16>, vector<16x2048xf32> -> vector<16x2048xf32>
      %84 = arith.addf %82, %83 : vector<16x2048xf32>
      %85 = vector.extract_strided_slice %24 {offsets = [2, 0], sizes = [1, 2048], strides = [1, 1]} : vector<8x2048xi32> to vector<1x2048xi32>
      %86 = vector.broadcast %85 : vector<1x2048xi32> to vector<16x2048xi32>
      %87 = arith.cmpi eq, %31, %86 : vector<16x2048xi32>
      %cst_29 = arith.constant 0.000000e+00 : f32
      %88 = vector.broadcast %cst_29 : f32 to vector<16x2048xf32>
      %89 = arith.select %87, %84, %88 : vector<16x2048xi1>, vector<16x2048xf32>
      %cst_30 = arith.constant dense<0.000000e+00> : vector<2048xf32>
      %90 = vector.multi_reduction <add>, %89, %cst_30 [0] : vector<16x2048xf32> to vector<2048xf32>
      %91 = vector.shape_cast %90 : vector<2048xf32> to vector<1x2048xf32>
      %cst_31 = arith.constant 0.333333343 : f32
      %92 = vector.broadcast %cst_31 : f32 to vector<1x2048xf32>
      %93 = arith.subf %92, %91 : vector<1x2048xf32>
      %94 = arith.mulf %93, %93 : vector<1x2048xf32>
      %95 = arith.addf %74, %94 : vector<1x2048xf32>
      %96 = vector.extract_strided_slice %22 {offsets = [3, 0], sizes = [1, 2048], strides = [1, 1]} : vector<8x2048xi32> to vector<1x2048xi32>
      %97 = vector.broadcast %96 : vector<1x2048xi32> to vector<16x2048xi32>
      %98 = arith.cmpi eq, %30, %97 : vector<16x2048xi32>
      %cst_32 = arith.constant 1.000000e+00 : f32
      %cst_33 = arith.constant 0.000000e+00 : f32
      %99 = vector.broadcast %cst_32 : f32 to vector<16x2048xf32>
      %100 = vector.broadcast %cst_33 : f32 to vector<16x2048xf32>
      %101 = arith.select %98, %99, %100 : vector<16x2048xi1>, vector<16x2048xf32>
      %102 = arith.truncf %101 : vector<16x2048xf32> to vector<16x2048xbf16>
      %cst_34 = arith.constant dense<0.000000e+00> : vector<16x2048xf32>
      %103 = tpu.matmul %26, %102, %cst_34 {dimension_numbers = #tpu.dot_dimension_numbers<[1], [0], [0], [1], [0, 0, 1, 1], [], []>} : vector<16x16xbf16>, vector<16x2048xbf16>, vector<16x2048xf32> -> vector<16x2048xf32>
      %cst_35 = arith.constant dense<0.000000e+00> : vector<16x2048xf32>
      %104 = tpu.matmul %29, %102, %cst_35 {dimension_numbers = #tpu.dot_dimension_numbers<[1], [0], [0], [1], [0, 0, 1, 1], [], []>} : vector<16x16xbf16>, vector<16x2048xbf16>, vector<16x2048xf32> -> vector<16x2048xf32>
      %105 = arith.addf %103, %104 : vector<16x2048xf32>
      %106 = vector.extract_strided_slice %24 {offsets = [3, 0], sizes = [1, 2048], strides = [1, 1]} : vector<8x2048xi32> to vector<1x2048xi32>
      %107 = vector.broadcast %106 : vector<1x2048xi32> to vector<16x2048xi32>
      %108 = arith.cmpi eq, %31, %107 : vector<16x2048xi32>
      %cst_36 = arith.constant 0.000000e+00 : f32
      %109 = vector.broadcast %cst_36 : f32 to vector<16x2048xf32>
      %110 = arith.select %108, %105, %109 : vector<16x2048xi1>, vector<16x2048xf32>
      %cst_37 = arith.constant dense<0.000000e+00> : vector<2048xf32>
      %111 = vector.multi_reduction <add>, %110, %cst_37 [0] : vector<16x2048xf32> to vector<2048xf32>
      %112 = vector.shape_cast %111 : vector<2048xf32> to vector<1x2048xf32>
      %cst_38 = arith.constant 0.444444448 : f32
      %113 = vector.broadcast %cst_38 : f32 to vector<1x2048xf32>
      %114 = arith.subf %113, %112 : vector<1x2048xf32>
      %115 = arith.mulf %114, %114 : vector<1x2048xf32>
      %116 = arith.addf %95, %115 : vector<1x2048xf32>
      %117 = vector.extract_strided_slice %22 {offsets = [4, 0], sizes = [1, 2048], strides = [1, 1]} : vector<8x2048xi32> to vector<1x2048xi32>
      %118 = vector.broadcast %117 : vector<1x2048xi32> to vector<16x2048xi32>
      %119 = arith.cmpi eq, %30, %118 : vector<16x2048xi32>
      %cst_39 = arith.constant 1.000000e+00 : f32
      %cst_40 = arith.constant 0.000000e+00 : f32
      %120 = vector.broadcast %cst_39 : f32 to vector<16x2048xf32>
      %121 = vector.broadcast %cst_40 : f32 to vector<16x2048xf32>
      %122 = arith.select %119, %120, %121 : vector<16x2048xi1>, vector<16x2048xf32>
      %123 = arith.truncf %122 : vector<16x2048xf32> to vector<16x2048xbf16>
      %cst_41 = arith.constant dense<0.000000e+00> : vector<16x2048xf32>
      %124 = tpu.matmul %26, %123, %cst_41 {dimension_numbers = #tpu.dot_dimension_numbers<[1], [0], [0], [1], [0, 0, 1, 1], [], []>} : vector<16x16xbf16>, vector<16x2048xbf16>, vector<16x2048xf32> -> vector<16x2048xf32>
      %cst_42 = arith.constant dense<0.000000e+00> : vector<16x2048xf32>
      %125 = tpu.matmul %29, %123, %cst_42 {dimension_numbers = #tpu.dot_dimension_numbers<[1], [0], [0], [1], [0, 0, 1, 1], [], []>} : vector<16x16xbf16>, vector<16x2048xbf16>, vector<16x2048xf32> -> vector<16x2048xf32>
      %126 = arith.addf %124, %125 : vector<16x2048xf32>
      %127 = vector.extract_strided_slice %24 {offsets = [4, 0], sizes = [1, 2048], strides = [1, 1]} : vector<8x2048xi32> to vector<1x2048xi32>
      %128 = vector.broadcast %127 : vector<1x2048xi32> to vector<16x2048xi32>
      %129 = arith.cmpi eq, %31, %128 : vector<16x2048xi32>
      %cst_43 = arith.constant 0.000000e+00 : f32
      %130 = vector.broadcast %cst_43 : f32 to vector<16x2048xf32>
      %131 = arith.select %129, %126, %130 : vector<16x2048xi1>, vector<16x2048xf32>
      %cst_44 = arith.constant dense<0.000000e+00> : vector<2048xf32>
      %132 = vector.multi_reduction <add>, %131, %cst_44 [0] : vector<16x2048xf32> to vector<2048xf32>
      %133 = vector.shape_cast %132 : vector<2048xf32> to vector<1x2048xf32>
      %cst_45 = arith.constant 0.555555582 : f32
      %134 = vector.broadcast %cst_45 : f32 to vector<1x2048xf32>
      %135 = arith.subf %134, %133 : vector<1x2048xf32>
      %136 = arith.mulf %135, %135 : vector<1x2048xf32>
      %137 = arith.addf %116, %136 : vector<1x2048xf32>
      %138 = vector.extract_strided_slice %22 {offsets = [5, 0], sizes = [1, 2048], strides = [1, 1]} : vector<8x2048xi32> to vector<1x2048xi32>
      %139 = vector.broadcast %138 : vector<1x2048xi32> to vector<16x2048xi32>
      %140 = arith.cmpi eq, %30, %139 : vector<16x2048xi32>
      %cst_46 = arith.constant 1.000000e+00 : f32
      %cst_47 = arith.constant 0.000000e+00 : f32
      %141 = vector.broadcast %cst_46 : f32 to vector<16x2048xf32>
      %142 = vector.broadcast %cst_47 : f32 to vector<16x2048xf32>
      %143 = arith.select %140, %141, %142 : vector<16x2048xi1>, vector<16x2048xf32>
      %144 = arith.truncf %143 : vector<16x2048xf32> to vector<16x2048xbf16>
      %cst_48 = arith.constant dense<0.000000e+00> : vector<16x2048xf32>
      %145 = tpu.matmul %26, %144, %cst_48 {dimension_numbers = #tpu.dot_dimension_numbers<[1], [0], [0], [1], [0, 0, 1, 1], [], []>} : vector<16x16xbf16>, vector<16x2048xbf16>, vector<16x2048xf32> -> vector<16x2048xf32>
      %cst_49 = arith.constant dense<0.000000e+00> : vector<16x2048xf32>
      %146 = tpu.matmul %29, %144, %cst_49 {dimension_numbers = #tpu.dot_dimension_numbers<[1], [0], [0], [1], [0, 0, 1, 1], [], []>} : vector<16x16xbf16>, vector<16x2048xbf16>, vector<16x2048xf32> -> vector<16x2048xf32>
      %147 = arith.addf %145, %146 : vector<16x2048xf32>
      %148 = vector.extract_strided_slice %24 {offsets = [5, 0], sizes = [1, 2048], strides = [1, 1]} : vector<8x2048xi32> to vector<1x2048xi32>
      %149 = vector.broadcast %148 : vector<1x2048xi32> to vector<16x2048xi32>
      %150 = arith.cmpi eq, %31, %149 : vector<16x2048xi32>
      %cst_50 = arith.constant 0.000000e+00 : f32
      %151 = vector.broadcast %cst_50 : f32 to vector<16x2048xf32>
      %152 = arith.select %150, %147, %151 : vector<16x2048xi1>, vector<16x2048xf32>
      %cst_51 = arith.constant dense<0.000000e+00> : vector<2048xf32>
      %153 = vector.multi_reduction <add>, %152, %cst_51 [0] : vector<16x2048xf32> to vector<2048xf32>
      %154 = vector.shape_cast %153 : vector<2048xf32> to vector<1x2048xf32>
      %cst_52 = arith.constant 0.666666686 : f32
      %155 = vector.broadcast %cst_52 : f32 to vector<1x2048xf32>
      %156 = arith.subf %155, %154 : vector<1x2048xf32>
      %157 = arith.mulf %156, %156 : vector<1x2048xf32>
      %158 = arith.addf %137, %157 : vector<1x2048xf32>
      %159 = vector.extract_strided_slice %22 {offsets = [6, 0], sizes = [1, 2048], strides = [1, 1]} : vector<8x2048xi32> to vector<1x2048xi32>
      %160 = vector.broadcast %159 : vector<1x2048xi32> to vector<16x2048xi32>
      %161 = arith.cmpi eq, %30, %160 : vector<16x2048xi32>
      %cst_53 = arith.constant 1.000000e+00 : f32
      %cst_54 = arith.constant 0.000000e+00 : f32
      %162 = vector.broadcast %cst_53 : f32 to vector<16x2048xf32>
      %163 = vector.broadcast %cst_54 : f32 to vector<16x2048xf32>
      %164 = arith.select %161, %162, %163 : vector<16x2048xi1>, vector<16x2048xf32>
      %165 = arith.truncf %164 : vector<16x2048xf32> to vector<16x2048xbf16>
      %cst_55 = arith.constant dense<0.000000e+00> : vector<16x2048xf32>
      %166 = tpu.matmul %26, %165, %cst_55 {dimension_numbers = #tpu.dot_dimension_numbers<[1], [0], [0], [1], [0, 0, 1, 1], [], []>} : vector<16x16xbf16>, vector<16x2048xbf16>, vector<16x2048xf32> -> vector<16x2048xf32>
      %cst_56 = arith.constant dense<0.000000e+00> : vector<16x2048xf32>
      %167 = tpu.matmul %29, %165, %cst_56 {dimension_numbers = #tpu.dot_dimension_numbers<[1], [0], [0], [1], [0, 0, 1, 1], [], []>} : vector<16x16xbf16>, vector<16x2048xbf16>, vector<16x2048xf32> -> vector<16x2048xf32>
      %168 = arith.addf %166, %167 : vector<16x2048xf32>
      %169 = vector.extract_strided_slice %24 {offsets = [6, 0], sizes = [1, 2048], strides = [1, 1]} : vector<8x2048xi32> to vector<1x2048xi32>
      %170 = vector.broadcast %169 : vector<1x2048xi32> to vector<16x2048xi32>
      %171 = arith.cmpi eq, %31, %170 : vector<16x2048xi32>
      %cst_57 = arith.constant 0.000000e+00 : f32
      %172 = vector.broadcast %cst_57 : f32 to vector<16x2048xf32>
      %173 = arith.select %171, %168, %172 : vector<16x2048xi1>, vector<16x2048xf32>
      %cst_58 = arith.constant dense<0.000000e+00> : vector<2048xf32>
      %174 = vector.multi_reduction <add>, %173, %cst_58 [0] : vector<16x2048xf32> to vector<2048xf32>
      %175 = vector.shape_cast %174 : vector<2048xf32> to vector<1x2048xf32>
      %cst_59 = arith.constant 0.777777791 : f32
      %176 = vector.broadcast %cst_59 : f32 to vector<1x2048xf32>
      %177 = arith.subf %176, %175 : vector<1x2048xf32>
      %178 = arith.mulf %177, %177 : vector<1x2048xf32>
      %179 = arith.addf %158, %178 : vector<1x2048xf32>
      %180 = vector.extract_strided_slice %22 {offsets = [7, 0], sizes = [1, 2048], strides = [1, 1]} : vector<8x2048xi32> to vector<1x2048xi32>
      %181 = vector.broadcast %180 : vector<1x2048xi32> to vector<16x2048xi32>
      %182 = arith.cmpi eq, %30, %181 : vector<16x2048xi32>
      %cst_60 = arith.constant 1.000000e+00 : f32
      %cst_61 = arith.constant 0.000000e+00 : f32
      %183 = vector.broadcast %cst_60 : f32 to vector<16x2048xf32>
      %184 = vector.broadcast %cst_61 : f32 to vector<16x2048xf32>
      %185 = arith.select %182, %183, %184 : vector<16x2048xi1>, vector<16x2048xf32>
      %186 = arith.truncf %185 : vector<16x2048xf32> to vector<16x2048xbf16>
      %cst_62 = arith.constant dense<0.000000e+00> : vector<16x2048xf32>
      %187 = tpu.matmul %26, %186, %cst_62 {dimension_numbers = #tpu.dot_dimension_numbers<[1], [0], [0], [1], [0, 0, 1, 1], [], []>} : vector<16x16xbf16>, vector<16x2048xbf16>, vector<16x2048xf32> -> vector<16x2048xf32>
      %cst_63 = arith.constant dense<0.000000e+00> : vector<16x2048xf32>
      %188 = tpu.matmul %29, %186, %cst_63 {dimension_numbers = #tpu.dot_dimension_numbers<[1], [0], [0], [1], [0, 0, 1, 1], [], []>} : vector<16x16xbf16>, vector<16x2048xbf16>, vector<16x2048xf32> -> vector<16x2048xf32>
      %189 = arith.addf %187, %188 : vector<16x2048xf32>
      %190 = vector.extract_strided_slice %24 {offsets = [7, 0], sizes = [1, 2048], strides = [1, 1]} : vector<8x2048xi32> to vector<1x2048xi32>
      %191 = vector.broadcast %190 : vector<1x2048xi32> to vector<16x2048xi32>
      %192 = arith.cmpi eq, %31, %191 : vector<16x2048xi32>
      %cst_64 = arith.constant 0.000000e+00 : f32
      %193 = vector.broadcast %cst_64 : f32 to vector<16x2048xf32>
      %194 = arith.select %192, %189, %193 : vector<16x2048xi1>, vector<16x2048xf32>
      %cst_65 = arith.constant dense<0.000000e+00> : vector<2048xf32>
      %195 = vector.multi_reduction <add>, %194, %cst_65 [0] : vector<16x2048xf32> to vector<2048xf32>
      %196 = vector.shape_cast %195 : vector<2048xf32> to vector<1x2048xf32>
      %cst_66 = arith.constant 0.888888895 : f32
      %197 = vector.broadcast %cst_66 : f32 to vector<1x2048xf32>
      %198 = arith.subf %197, %196 : vector<1x2048xf32>
      %199 = arith.mulf %198, %198 : vector<1x2048xf32>
      %200 = arith.addf %179, %199 : vector<1x2048xf32>
      %201 = tpu.iota {dimensions = array<i32: 1>} : vector<1x2048xi32>
      %c1_i32_67 = arith.constant 1 : i32
      %202 = arith.cmpi ne, %arg0, %c1_i32_67 : i32
      %c76_i32 = arith.constant 76 : i32
      %203 = vector.broadcast %c76_i32 : i32 to vector<1x2048xi32>
      %204 = arith.cmpi slt, %201, %203 : vector<1x2048xi32>
      %205 = vector.broadcast %202 : i1 to vector<1x2048xi1>
      %206 = arith.ori %205, %204 : vector<1x2048xi1>
      %c0_68 = arith.constant 0 : index
      %c0_69 = arith.constant 0 : index
      %207 = vector.load %arg13[%c0_68, %c0_69] : memref<1x2048xf32, #tpu.memory_space<vmem>>, vector<1x2048xf32>
      %cst_70 = arith.constant 0.000000e+00 : f32
      %208 = vector.broadcast %cst_70 : f32 to vector<1x2048xf32>
      %209 = arith.select %206, %200, %208 : vector<1x2048xi1>, vector<1x2048xf32>
      %210 = arith.addf %207, %209 : vector<1x2048xf32>
      %c0_71 = arith.constant 0 : index
      %c0_72 = arith.constant 0 : index
      %211 = vector.load %arg13[%c0_71, %c0_72] : memref<1x2048xf32, #tpu.memory_space<vmem>>, vector<1x2048xf32>
      tpu.vector_store %arg13[%c0_71, %c0_72], %210 {strides = array<i32>} : memref<1x2048xf32, #tpu.memory_space<vmem>>, vector<1x2048xf32>,
    } else {
    }
    %c1_i32 = arith.constant 1 : i32
    %7 = arith.cmpi eq, %arg0, %c1_i32 : i32
    %8 = arith.extui %7 : i1 to i32
    %c0_i32_2 = arith.constant 0 : i32
    %9 = arith.cmpi ne, %8, %c0_i32_2 : i32
    scf.if %9 {
      %c2_3 = arith.constant 2 : index
      %10 = memref.load %arg1[%c2_3] : memref<3xf32, #tpu.memory_space<smem>>
      %c0 = arith.constant 0 : index
      %c0_4 = arith.constant 0 : index
      %11 = vector.load %arg13[%c0, %c0_4] : memref<1x2048xf32, #tpu.memory_space<vmem>>, vector<1x2048xf32>
      %12 = vector.shape_cast %11 : vector<1x2048xf32> to vector<1x1x2048xf32>
      %cst_5 = arith.constant dense<0.000000e+00> : vector<1xf32>
      %13 = vector.multi_reduction <add>, %12, %cst_5 [1, 2] : vector<1x1x2048xf32> to vector<1xf32>
      %14 = vector.shape_cast %13 : vector<1xf32> to vector<1x1x1xf32>
      %15 = vector.extract %14[0, 0, 0] : f32 from vector<1x1x1xf32>
      %cst_6 = arith.constant 0.000000e+00 : f32
      %16 = arith.cmpf ogt, %10, %cst_6 : f32
      %17 = arith.mulf %10, %15 : f32
      %cst_7 = arith.constant 4.70809784E-4 : f32
      %18 = arith.mulf %17, %cst_7 : f32
      %cst_8 = arith.constant 0.000000e+00 : f32
      %19 = arith.select %16, %18, %cst_8 : f32
      %c0_9 = arith.constant 0 : index
      %c0_10 = arith.constant 0 : index
      %20 = memref.load %arg12[%c0_9, %c0_10] : memref<1x1xf32, #tpu.memory_space<smem>>
      memref.store %19, %arg12[%c0_9, %c0_10] : memref<1x1xf32, #tpu.memory_space<smem>>
    } else {
    }
    return
  }
  func.func @transform_0(%arg0: i32) -> i32 {
    %c0_i32 = arith.constant 0 : i32
    %c0_i32_0 = arith.constant 0 : i32
    return %c0_i32 : i32
  }
  func.func @transform_1(%arg0: i32) -> (i32, i32) {
    %c0_i32 = arith.constant 0 : i32
    %c0_i32_0 = arith.constant 0 : i32
    %c0_i32_1 = arith.constant 0 : i32
    return %c0_i32, %c0_i32_0 : i32, i32
  }
  func.func @transform_2(%arg0: i32) -> (i32, i32) {
    %c0_i32 = arith.constant 0 : i32
    %c0_i32_0 = arith.constant 0 : i32
    %c0_i32_1 = arith.constant 0 : i32
    return %c0_i32, %c0_i32_0 : i32, i32
  }
  func.func @transform_3(%arg0: i32) -> (i32, i32) {
    %c0_i32 = arith.constant 0 : i32
    %c0_i32_0 = arith.constant 0 : i32
    %c0_i32_1 = arith.constant 0 : i32
    return %c0_i32, %c0_i32_0 : i32, i32
  }
  func.func @transform_4(%arg0: i32) -> (i32, i32) {
    %c0_i32 = arith.constant 0 : i32
    %c0_i32_0 = arith.constant 0 : i32
    %c0_i32_1 = arith.constant 0 : i32
    return %c0_i32, %c0_i32_0 : i32, i32
  }
  func.func @transform_5(%arg0: i32) -> (i32, i32) {
    %c0_i32 = arith.constant 0 : i32
    %c0_i32_0 = arith.constant 0 : i32
    %c0_i32_1 = arith.constant 0 : i32
    return %c0_i32, %c0_i32_0 : i32, i32
  }
  func.func @transform_6(%arg0: i32) -> (i32, i32) {
    %c0_i32 = arith.constant 0 : i32
    %c0_i32_0 = arith.constant 0 : i32
    %c0_i32_1 = arith.constant 0 : i32
    return %c0_i32, %c0_i32_0 : i32, i32
  }
  func.func @transform_7(%arg0: i32) -> (i32, i32) {
    %c0_i32 = arith.constant 0 : i32
    %c0_i32_0 = arith.constant 0 : i32
    %c0_i32_1 = arith.constant 0 : i32
    return %c0_i32, %c0_i32_0 : i32, i32
  }
  func.func @transform_8(%arg0: i32) -> (i32, i32) {
    %c0_i32 = arith.constant 0 : i32
    %c0_i32_0 = arith.constant 0 : i32
    return %c0_i32, %arg0 : i32, i32
  }
  func.func @transform_9(%arg0: i32) -> (i32, i32) {
    %c0_i32 = arith.constant 0 : i32
    %c0_i32_0 = arith.constant 0 : i32
    %c0_i32_1 = arith.constant 0 : i32
    return %c0_i32, %c0_i32_0 : i32, i32
  }
  func.func @transform_10(%arg0: i32) -> (i32, i32) {
    %c0_i32 = arith.constant 0 : i32
    %c0_i32_0 = arith.constant 0 : i32
    %c0_i32_1 = arith.constant 0 : i32
    return %c0_i32, %c0_i32_0 : i32, i32
  }
  func.func @transform_11(%arg0: i32) -> (i32, i32) {
    %c0_i32 = arith.constant 0 : i32
    %c0_i32_0 = arith.constant 0 : i32
    %c0_i32_1 = arith.constant 0 : i32
    return %c0_i32, %c0_i32_0 : i32, i32
  }
}

</mosaic_0001>

<llo_original>
// kernel: tpu_custom_call.1
$region0: #{tpu_custom_call.1}
  #allocation0 [shape = 'u32[]', space=smem, size = 0x4, offset = 0x4, fixed_abs, tag = 'smem constant byte address 0x4 - core index']
  #allocation1 [shape = 'u32[144,128]{1,0:T(1,128)}', space=vmem, size = 0x12000, scoped, tag = 'internal scratch']
  #allocation2 [shape = 'f32[1,2048]{1,0:T(1,128)}', space=vmem, size = 0x2000, scoped, tag = 'scratch operand']
  %s0 = inlined_call_operand.vmem [shape: f32[3], index: 0, kind: input, shape index: {}]
  %s1 = inlined_call_operand.hbm [shape: f32[16,16], index: 1, kind: input, shape index: {}]
  %s2 = inlined_call_operand.vmem [shape: f32[8,32], index: 2, kind: input, shape index: {}]
  %s3 = inlined_call_operand.vmem [shape: s32[8,1], index: 3, kind: input, shape index: {}]
  %s4 = inlined_call_operand.vmem [shape: f32[4,16], index: 4, kind: input, shape index: {}]
  %s5 = inlined_call_operand.vmem [shape: f32[1,4], index: 5, kind: input, shape index: {}]
  %s6 = inlined_call_operand.vmem [shape: f32[1,4], index: 6, kind: input, shape index: {}]
  %s7 = inlined_call_operand.vmem [shape: f32[1,16], index: 7, kind: input, shape index: {}]
  %s8 = inlined_call_operand.hbm [shape: f32[8,4096], index: 8, kind: input, shape index: {}]
  %s9 = inlined_call_operand.hbm [shape: f32[1,1], index: 9, kind: output, shape index: {0}]
  %s10 = inlined_call_operand.hbm [shape: f32[1,1], index: 10, kind: output, shape index: {1}]
  %s11 = inlined_call_operand.hbm [shape: f32[1,1], index: 11, kind: output, shape index: {2}]
  %12 = xla_tuple %s9, %s10, %s11
  %s13 = sld [smem:[#allocation0]]
  $region109: #{tpu_custom_call.1} parent=0
    _
  %s15 = ssub.s32 1, %s13
  %s16 = scalar_select 0, %s15, %s13
  $region1: #{tpu_custom_call.1} parent=0
    #allocation3 [shape = 'u8[512]{0}', space=smem, size = 0x200, scoped, tag = 'input window, operand 0, single buffered']
    #allocation4 [shape = 's32[2]{0}', space=sflag, size = 0x8, scoped, tag = 'scoped memory for tpu_custom_call.1']
    #allocation5 [shape = 's32[2]{0}', space=sflag, size = 0x8, scoped, tag = 'scoped memory for tpu_custom_call.1']
    #allocation6 [shape = 's32[2]{0}', space=sflag, size = 0x8, scoped, tag = 'scoped memory for tpu_custom_call.1']
    #allocation7 [shape = 'u8[8192]{0}', space=vmem, size = 0x2000, scoped, tag = 'input window, operand 1, single buffered']
    #allocation8 [shape = 'u8[131072]{0}', space=vmem, size = 0x20000, scoped, tag = 'input window, operand 8']
    #allocation9 [shape = 's32[2]{0}', space=sflag, size = 0x8, scoped, tag = 'scoped memory for tpu_custom_call.1']
    #allocation10 [shape = 'u8[512]{0}', space=smem, size = 0x200, scoped, tag = 'output window, operand 0, single buffered']
    #allocation11 [shape = 'u8[512]{0}', space=smem, size = 0x200, scoped, tag = 'output window, operand 1, single buffered']
    #allocation12 [shape = 's32[1]{0}', space=sflag, size = 0x4, scoped, tag = 'scoped memory for tpu_custom_call.1']
    #allocation13 [shape = 'u8[512]{0}', space=smem, size = 0x200, scoped, tag = 'output window, operand 2, single buffered']
    %17 = vsyncpa [#allocation6], 0
    %18 = vsyncpa [#allocation4], 0
    %19 = vsyncpa [#allocation9], 0
    %s20 = scalar_lea.sflag [#allocation9], 1
    %21 = vsyncpa %s20, 0
    %22 = vsyncpa [#allocation5], 0
    %23 = vsyncpa [#allocation12], 0
    loop: start=0, step=1, limit=4
    $region2: #{tpu_custom_call.1} parent=1 // loop_pre_header
      _
    $region3: #{tpu_custom_call.1} parent=1 // loop_header
      %s25 = sphi 0, %s29
      %p26 = scmp.ge.s32.totalorder %s25, 4
      %s33 = sphi 0, %s33
      %s35 = sphi 0, %s33
      %s36 = sphi 0, %s35
      %s50 = sphi 0, %s36
      %s54 = sphi 0, %s54
      %s56 = sphi 0, %s54
      %s57 = sphi 0, %s56
      %s71 = sphi 0, %s57
      %s75 = sphi 0, %s75
      %s77 = sphi 0, %s75
      %s78 = sphi 0, %s77
      %s92 = sphi 0, %s78
      %s96 = sphi 0, %s96
      %s98 = sphi 0, %s96
      %s99 = sphi 0, %s98
      %s113 = sphi 0, %s99
      %s117 = sphi 0, %s117
      %s119 = sphi 0, %s117
      %s120 = sphi 0, %s119
      %s134 = sphi 0, %s120
      %s138 = sphi 0, %s138
      %s140 = sphi 0, %s138
      %s141 = sphi 0, %s140
      %s155 = sphi 0, %s141
      %s159 = sphi 0, %s159
      %s161 = sphi 0, %s159
      %s162 = sphi 0, %s161
      %s176 = sphi 0, %s162
      %s180 = sphi 0, %s180
      %s182 = sphi 0, %s180
      %s183 = sphi 0, %s182
      %s197 = sphi 0, %s183
      %s203 = sphi 0, %s205
      %s206 = sphi 0, %s203
      %s207 = sphi 0, %s206
      %s223 = sphi 0, %s207
      %s227 = sphi 0, %s227
      %s229 = sphi 0, %s227
      %s230 = sphi 0, %s229
      %s244 = sphi 0, %s230
      %s248 = sphi 0, %s248
      %s250 = sphi 0, %s248
      %s251 = sphi 0, %s250
      %s265 = sphi 0, %s251
      %s269 = sphi 0, %s269
      %s271 = sphi 0, %s269
      %s272 = sphi 0, %s271
      %s286 = sphi 0, %s272
    $region4: #{tpu_custom_call.1} parent=1 // loop_header_branch
      %28 = sbr.rel (%p26) target = $region8
    $region5: #{tpu_custom_call.1} parent=1 // loop_body
      %s30 = ssub.s32 %s25, 1
      %s31 = ssub.s32 %s25, 2
      %s32 = sadd.s32 %s25, 1
      %s34 = sadd.s32 %s33, 1
      %p37 = scmp.eq.s32.totalorder %s25, 1
      %p38 = scmp.ne.s32.totalorder %s33, %s35
      %p39 = scmp.eq.s32.totalorder %s25, 0
      %p40 = por %p38, %p39
      %p41 = scmp.ne.s32.totalorder %s33, %s35
      %p42 = scmp.eq.s32.totalorder %s30, 1
      %p43 = por %p41, %p42
      %p44 = scmp.ne.s32.totalorder %s35, %s36
      %p45 = scmp.eq.s32.totalorder %s30, 0
      %p46 = por %p44, %p45
      %p47 = scmp.ne.s32.totalorder %s35, %s36
      %p48 = scmp.eq.s32.totalorder %s31, 1
      %p49 = por %p47, %p48
      %p51 = scmp.ne.s32.totalorder %s36, %s50
      %p52 = scmp.eq.s32.totalorder %s31, 0
      %p53 = por %p51, %p52
      %s55 = sadd.s32 %s54, 1
      %p58 = scmp.eq.s32.totalorder %s25, 1
      %p59 = scmp.ne.s32.totalorder %s54, %s56
      %p60 = scmp.eq.s32.totalorder %s25, 0
      %p61 = por %p59, %p60
      %p62 = scmp.ne.s32.totalorder %s54, %s56
      %p63 = scmp.eq.s32.totalorder %s30, 1
      %p64 = por %p62, %p63
      %p65 = scmp.ne.s32.totalorder %s56, %s57
      %p66 = scmp.eq.s32.totalorder %s30, 0
      %p67 = por %p65, %p66
      %p68 = scmp.ne.s32.totalorder %s56, %s57
      %p69 = scmp.eq.s32.totalorder %s31, 1
      %p70 = por %p68, %p69
      %p72 = scmp.ne.s32.totalorder %s57, %s71
      %p73 = scmp.eq.s32.totalorder %s31, 0
      %p74 = por %p72, %p73
      %s76 = sadd.s32 %s75, 1
      %p79 = scmp.eq.s32.totalorder %s25, 1
      %p80 = scmp.ne.s32.totalorder %s75, %s77
      %p81 = scmp.eq.s32.totalorder %s25, 0
      %p82 = por %p80, %p81
      %p83 = scmp.ne.s32.totalorder %s75, %s77
      %p84 = scmp.eq.s32.totalorder %s30, 1
      %p85 = por %p83, %p84
      %p86 = scmp.ne.s32.totalorder %s77, %s78
      %p87 = scmp.eq.s32.totalorder %s30, 0
      %p88 = por %p86, %p87
      %p89 = scmp.ne.s32.totalorder %s77, %s78
      %p90 = scmp.eq.s32.totalorder %s31, 1
      %p91 = por %p89, %p90
      %p93 = scmp.ne.s32.totalorder %s78, %s92
      %p94 = scmp.eq.s32.totalorder %s31, 0
      %p95 = por %p93, %p94
      %s97 = sadd.s32 %s96, 1
      %p100 = scmp.eq.s32.totalorder %s25, 1
      %p101 = scmp.ne.s32.totalorder %s96, %s98
      %p102 = scmp.eq.s32.totalorder %s25, 0
      %p103 = por %p101, %p102
      %p104 = scmp.ne.s32.totalorder %s96, %s98
      %p105 = scmp.eq.s32.totalorder %s30, 1
      %p106 = por %p104, %p105
      %p107 = scmp.ne.s32.totalorder %s98, %s99
      %p108 = scmp.eq.s32.totalorder %s30, 0
      %p109 = por %p107, %p108
      %p110 = scmp.ne.s32.totalorder %s98, %s99
      %p111 = scmp.eq.s32.totalorder %s31, 1
      %p112 = por %p110, %p111
      %p114 = scmp.ne.s32.totalorder %s99, %s113
      %p115 = scmp.eq.s32.totalorder %s31, 0
      %p116 = por %p114, %p115
      %s118 = sadd.s32 %s117, 1
      %p121 = scmp.eq.s32.totalorder %s25, 1
      %p122 = scmp.ne.s32.totalorder %s117, %s119
      %p123 = scmp.eq.s32.totalorder %s25, 0
      %p124 = por %p122, %p123
      %p125 = scmp.ne.s32.totalorder %s117, %s119
      %p126 = scmp.eq.s32.totalorder %s30, 1
      %p127 = por %p125, %p126
      %p128 = scmp.ne.s32.totalorder %s119, %s120
      %p129 = scmp.eq.s32.totalorder %s30, 0
      %p130 = por %p128, %p129
      %p131 = scmp.ne.s32.totalorder %s119, %s120
      %p132 = scmp.eq.s32.totalorder %s31, 1
      %p133 = por %p131, %p132
      %p135 = scmp.ne.s32.totalorder %s120, %s134
      %p136 = scmp.eq.s32.totalorder %s31, 0
      %p137 = por %p135, %p136
      %s139 = sadd.s32 %s138, 1
      %p142 = scmp.eq.s32.totalorder %s25, 1
      %p143 = scmp.ne.s32.totalorder %s138, %s140
      %p144 = scmp.eq.s32.totalorder %s25, 0
      %p145 = por %p143, %p144
      %p146 = scmp.ne.s32.totalorder %s138, %s140
      %p147 = scmp.eq.s32.totalorder %s30, 1
      %p148 = por %p146, %p147
      %p149 = scmp.ne.s32.totalorder %s140, %s141
      %p150 = scmp.eq.s32.totalorder %s30, 0
      %p151 = por %p149, %p150
      %p152 = scmp.ne.s32.totalorder %s140, %s141
      %p153 = scmp.eq.s32.totalorder %s31, 1
      %p154 = por %p152, %p153
      %p156 = scmp.ne.s32.totalorder %s141, %s155
      %p157 = scmp.eq.s32.totalorder %s31, 0
      %p158 = por %p156, %p157
      %s160 = sadd.s32 %s159, 1
      %p163 = scmp.eq.s32.totalorder %s25, 1
      %p164 = scmp.ne.s32.totalorder %s159, %s161
      %p165 = scmp.eq.s32.totalorder %s25, 0
      %p166 = por %p164, %p165
      %p167 = scmp.ne.s32.totalorder %s159, %s161
      %p168 = scmp.eq.s32.totalorder %s30, 1
      %p169 = por %p167, %p168
      %p170 = scmp.ne.s32.totalorder %s161, %s162
      %p171 = scmp.eq.s32.totalorder %s30, 0
      %p172 = por %p170, %p171
      %p173 = scmp.ne.s32.totalorder %s161, %s162
      %p174 = scmp.eq.s32.totalorder %s31, 1
      %p175 = por %p173, %p174
      %p177 = scmp.ne.s32.totalorder %s162, %s176
      %p178 = scmp.eq.s32.totalorder %s31, 0
      %p179 = por %p177, %p178
      %s181 = sadd.s32 %s180, 1
      %p184 = scmp.eq.s32.totalorder %s25, 1
      %p185 = scmp.ne.s32.totalorder %s180, %s182
      %p186 = scmp.eq.s32.totalorder %s25, 0
      %p187 = por %p185, %p186
      %p188 = scmp.ne.s32.totalorder %s180, %s182
      %p189 = scmp.eq.s32.totalorder %s30, 1
      %p190 = por %p188, %p189
      %p191 = scmp.ne.s32.totalorder %s182, %s183
      %p192 = scmp.eq.s32.totalorder %s30, 0
      %p193 = por %p191, %p192
      %p194 = scmp.ne.s32.totalorder %s182, %s183
      %p195 = scmp.eq.s32.totalorder %s31, 1
      %p196 = por %p194, %p195
      %p198 = scmp.ne.s32.totalorder %s183, %s197
      %p199 = scmp.eq.s32.totalorder %s31, 0
      %p200 = por %p198, %p199
      %s201 = ssub.s32 %s25, %s32
      %p202 = scmp.eq.s32.totalorder %s201, 0
      %s204 = sadd.s32 %s203, 1
      %s205 = scalar_select %p202, %s203, %s204
      %p208 = pneg %p202
      %p209 = scmp.eq.s32.totalorder %s25, 1
      %p210 = por %p208, %p209
      %p211 = scmp.ne.s32.totalorder %s203, %s206
      %p212 = scmp.eq.s32.totalorder %s25, 0
      %p213 = por %p211, %p212
      %p214 = scmp.ne.s32.totalorder %s203, %s206
      %p215 = scmp.eq.s32.totalorder %s30, 1
      %p216 = por %p214, %p215
      %p217 = scmp.ne.s32.totalorder %s206, %s207
      %p218 = scmp.eq.s32.totalorder %s30, 0
      %p219 = por %p217, %p218
      %p220 = scmp.ne.s32.totalorder %s206, %s207
      %p221 = scmp.eq.s32.totalorder %s31, 1
      %p222 = por %p220, %p221
      %p224 = scmp.ne.s32.totalorder %s207, %s223
      %p225 = scmp.eq.s32.totalorder %s31, 0
      %p226 = por %p224, %p225
      %s228 = sadd.s32 %s227, 1
      %p231 = scmp.eq.s32.totalorder %s25, 1
      %p232 = scmp.ne.s32.totalorder %s227, %s229
      %p233 = scmp.eq.s32.totalorder %s25, 0
      %p234 = por %p232, %p233
      %p235 = scmp.ne.s32.totalorder %s227, %s229
      %p236 = scmp.eq.s32.totalorder %s30, 1
      %p237 = por %p235, %p236
      %p238 = scmp.ne.s32.totalorder %s229, %s230
      %p239 = scmp.eq.s32.totalorder %s30, 0
      %p240 = por %p238, %p239
      %p241 = scmp.ne.s32.totalorder %s229, %s230
      %p242 = scmp.eq.s32.totalorder %s31, 1
      %p243 = por %p241, %p242
      %p245 = scmp.ne.s32.totalorder %s230, %s244
      %p246 = scmp.eq.s32.totalorder %s31, 0
      %p247 = por %p245, %p246
      %s249 = sadd.s32 %s248, 1
      %p252 = scmp.eq.s32.totalorder %s25, 1
      %p253 = scmp.ne.s32.totalorder %s248, %s250
      %p254 = scmp.eq.s32.totalorder %s25, 0
      %p255 = por %p253, %p254
      %p256 = scmp.ne.s32.totalorder %s248, %s250
      %p257 = scmp.eq.s32.totalorder %s30, 1
      %p258 = por %p256, %p257
      %p259 = scmp.ne.s32.totalorder %s250, %s251
      %p260 = scmp.eq.s32.totalorder %s30, 0
      %p261 = por %p259, %p260
      %p262 = scmp.ne.s32.totalorder %s250, %s251
      %p263 = scmp.eq.s32.totalorder %s31, 1
      %p264 = por %p262, %p263
      %p266 = scmp.ne.s32.totalorder %s251, %s265
      %p267 = scmp.eq.s32.totalorder %s31, 0
      %p268 = por %p266, %p267
      %s270 = sadd.s32 %s269, 1
      %p273 = scmp.eq.s32.totalorder %s25, 1
      %p274 = scmp.ne.s32.totalorder %s269, %s271
      %p275 = scmp.eq.s32.totalorder %s25, 0
      %p276 = por %p274, %p275
      %p277 = scmp.ne.s32.totalorder %s269, %s271
      %p278 = scmp.eq.s32.totalorder %s30, 1
      %p279 = por %p277, %p278
      %p280 = scmp.ne.s32.totalorder %s271, %s272
      %p281 = scmp.eq.s32.totalorder %s30, 0
      %p282 = por %p280, %p281
      %p283 = scmp.ne.s32.totalorder %s271, %s272
      %p284 = scmp.eq.s32.totalorder %s31, 1
      %p285 = por %p283, %p284
      %p287 = scmp.ne.s32.totalorder %s272, %s286
      %p288 = scmp.eq.s32.totalorder %s31, 0
      %p289 = por %p287, %p288
      %p290 = scmp.le.s32.totalorder 1, %s25
      %p291 = scmp.lt.s32.totalorder %s25, 3
      %p292 = pnand %p290, %p291
      %p293 = pneg %p292
      // Predicated region
      $region9: #{tpu_custom_call.1} parent=5 // pred_check
        _
      $region10: #{tpu_custom_call.1} parent=5 // pred_check_branch
        %295 = sbr.rel (%p292) target = $region12
      $region11: #{tpu_custom_call.1} parent=5 // pred_region
        %s296 = ssub.s32 %s25, 1
        // Predicated region
        $region13: #{tpu_custom_call.1} parent=11 // pred_check
          %p297 = pneg %p46
        $region14: #{tpu_custom_call.1} parent=11 // pred_check_branch
          %299 = sbr.rel (%p297) target = $region16
        $region15: #{tpu_custom_call.1} parent=11 // pred_region
          %s301 = ssub.s32 16, 16
          %302 = vsyncadd [#allocation6], %s301
          %s304 = sshll.u32 %s0, 4
          %s305 = int_to_ptr.vmem [resolvable:$true] %s304
          %307 = dma.vmem_to_smem %s305, 16, [#allocation3], [#allocation6]
        $region16: #{tpu_custom_call.1} parent=11 // pred_fallthru
          _
        // Predicated region
        $region17: #{tpu_custom_call.1} parent=11 // pred_check
          %p308 = pneg %p67
        $region18: #{tpu_custom_call.1} parent=11 // pred_check_branch
          %310 = sbr.rel (%p308) target = $region20
        $region19: #{tpu_custom_call.1} parent=11 // pred_region
          %s312 = ssub.s32 256, 256
          %313 = vsyncadd [#allocation4], %s312
          %s314 = sshll.u32 [#allocation7], 4
          %s315 = int_to_ptr.vmem [resolvable:$true] %s314
          %320 = dma.hbm_to_vmem [thread:$0]  %s1, 256, %s315, [#allocation4], 128, 128, 8
        $region20: #{tpu_custom_call.1} parent=11 // pred_fallthru
          _
        // Predicated region
        $region21: #{tpu_custom_call.1} parent=11 // pred_check
          %p321 = pneg %p88
        $region22: #{tpu_custom_call.1} parent=11 // pred_check_branch
          %323 = sbr.rel (%p321) target = $region24
        $region23: #{tpu_custom_call.1} parent=11 // pred_region
          _
        $region24: #{tpu_custom_call.1} parent=11 // pred_fallthru
          _
        // Predicated region
        $region25: #{tpu_custom_call.1} parent=11 // pred_check
          %p324 = pneg %p109
        $region26: #{tpu_custom_call.1} parent=11 // pred_check_branch
          %326 = sbr.rel (%p324) target = $region28
        $region27: #{tpu_custom_call.1} parent=11 // pred_region
          _
        $region28: #{tpu_custom_call.1} parent=11 // pred_fallthru
          _
        // Predicated region
        $region29: #{tpu_custom_call.1} parent=11 // pred_check
          %p327 = pneg %p130
        $region30: #{tpu_custom_call.1} parent=11 // pred_check_branch
          %329 = sbr.rel (%p327) target = $region32
        $region31: #{tpu_custom_call.1} parent=11 // pred_region
          _
        $region32: #{tpu_custom_call.1} parent=11 // pred_fallthru
          _
        // Predicated region
        $region33: #{tpu_custom_call.1} parent=11 // pred_check
          %p330 = pneg %p151
        $region34: #{tpu_custom_call.1} parent=11 // pred_check_branch
          %332 = sbr.rel (%p330) target = $region36
        $region35: #{tpu_custom_call.1} parent=11 // pred_region
          _
        $region36: #{tpu_custom_call.1} parent=11 // pred_fallthru
          _
        // Predicated region
        $region37: #{tpu_custom_call.1} parent=11 // pred_check
          %p333 = pneg %p172
        $region38: #{tpu_custom_call.1} parent=11 // pred_check_branch
          %335 = sbr.rel (%p333) target = $region40
        $region39: #{tpu_custom_call.1} parent=11 // pred_region
          _
        $region40: #{tpu_custom_call.1} parent=11 // pred_fallthru
          _
        // Predicated region
        $region41: #{tpu_custom_call.1} parent=11 // pred_check
          %p336 = pneg %p193
        $region42: #{tpu_custom_call.1} parent=11 // pred_check_branch
          %338 = sbr.rel (%p336) target = $region44
        $region43: #{tpu_custom_call.1} parent=11 // pred_region
          _
        $region44: #{tpu_custom_call.1} parent=11 // pred_fallthru
          _
      $region12: #{tpu_custom_call.1} parent=5 // pred_fallthru
        _
      %p339 = scmp.lt.s32.totalorder %s25, 2
      // Predicated region
      $region45: #{tpu_custom_call.1} parent=5 // pred_check
        %p340 = pneg %p339
      $region46: #{tpu_custom_call.1} parent=5 // pred_check_branch
        %342 = sbr.rel (%p340) target = $region48
      $region47: #{tpu_custom_call.1} parent=5 // pred_region
        // Predicated region
        $region49: #{tpu_custom_call.1} parent=47 // pred_check
          %p343 = pneg %p213
        $region50: #{tpu_custom_call.1} parent=47 // pred_check_branch
          %345 = sbr.rel (%p343) target = $region52
        $region51: #{tpu_custom_call.1} parent=47 // pred_region
          %s346 = sand.u32 %s203, 1
          %s347 = scalar_lea.sflag [#allocation9], %s346
          %s348 = sand.u32 %s203, 1
          %s349 = smul.addr %s348, 128
          %s350 = scalar_lea.vmem [#allocation8], %s349
          %s351 = smul.u32 16, %s25
          %s353 = ssub.s32 2048, 2048
          %354 = vsyncadd %s347, %s353
          %s355 = smul.addr %s351, 128
          %s356 = scalar_lea.hbm %s8, %s355
          %s358 = sshll.u32 %s350, 4
          %s359 = int_to_ptr.vmem [resolvable:$true] %s358
          %361 = dma.hbm_to_vmem [thread:$0]  %s356, 2048, %s359, %s347
        $region52: #{tpu_custom_call.1} parent=47 // pred_fallthru
          _
      $region48: #{tpu_custom_call.1} parent=5 // pred_fallthru
        _
      %p362 = scmp.le.s32.totalorder 1, %s25
      %p363 = scmp.lt.s32.totalorder %s25, 3
      %p364 = pnand %p362, %p363
      %p365 = pneg %p364
      // Predicated region
      $region53: #{tpu_custom_call.1} parent=5 // pred_check
        _
      $region54: #{tpu_custom_call.1} parent=5 // pred_check_branch
        %367 = sbr.rel (%p364) target = $region56
      $region55: #{tpu_custom_call.1} parent=5 // pred_region
        %s368 = ssub.s32 %s25, 1
        // Predicated region
        $region57: #{tpu_custom_call.1} parent=55 // pred_check
          %p369 = pneg %p46
        $region58: #{tpu_custom_call.1} parent=55 // pred_check_branch
          %371 = sbr.rel (%p369) target = $region60
        $region59: #{tpu_custom_call.1} parent=55 // pred_region
          %372 = dma.done [#allocation6], 16
        $region60: #{tpu_custom_call.1} parent=55 // pred_fallthru
          _
        // Predicated region
        $region61: #{tpu_custom_call.1} parent=55 // pred_check
          %p373 = pneg %p67
        $region62: #{tpu_custom_call.1} parent=55 // pred_check_branch
          %375 = sbr.rel (%p373) target = $region64
        $region63: #{tpu_custom_call.1} parent=55 // pred_region
          %376 = dma.done [#allocation4], 256
        $region64: #{tpu_custom_call.1} parent=55 // pred_fallthru
          _
        %s377 = sand.u32 %s206, 1
        %s378 = scalar_lea.sflag [#allocation9], %s377
        %s379 = sand.u32 %s206, 1
        %s380 = smul.addr %s379, 128
        %s381 = scalar_lea.vmem [#allocation8], %s380
        // Predicated region
        $region65: #{tpu_custom_call.1} parent=55 // pred_check
          %p382 = pneg %p219
        $region66: #{tpu_custom_call.1} parent=55 // pred_check_branch
          %384 = sbr.rel (%p382) target = $region68
        $region67: #{tpu_custom_call.1} parent=55 // pred_region
          %385 = dma.done %s378, 2048
        $region68: #{tpu_custom_call.1} parent=55 // pred_fallthru
          _
        %386 = sfence
        %p387 = pneg %p46
        %p388 = pneg %p43
        %p389 = pneg %p67
        %p390 = pneg %p64
        %p391 = pneg %p88
        %p392 = pneg %p85
        %p393 = pneg %p109
        %p394 = pneg %p106
        %p395 = pneg %p130
        %p396 = pneg %p127
        %p397 = pneg %p151
        %p398 = pneg %p148
        %p399 = pneg %p172
        %p400 = pneg %p169
        %p401 = pneg %p193
        %p402 = pneg %p190
        %s403 = sand.u32 %s206, 1
        %s404 = scalar_lea.sflag [#allocation9], %s403
        %s405 = sand.u32 %s206, 1
        %s406 = smul.addr %s405, 128
        %s407 = scalar_lea.vmem [#allocation8], %s406
        %p408 = pneg %p219
        %p409 = pneg %p216
        %p410 = pneg %p240
        %p411 = pneg %p237
        %p412 = pneg %p261
        %p413 = pneg %p258
        %p414 = pneg %p282
        %p415 = pneg %p279
        %s416 = smul.u32 16, %s30
        %p418 = scmp.eq.s32.totalorder %s30, 0
        // Predicated region
        $region69: #{tpu_custom_call.1} parent=55 // pred_check
          %p419 = pneg %p418
        $region70: #{tpu_custom_call.1} parent=55 // pred_check_branch
          %421 = sbr.rel (%p419) target = $region72
        $region71: #{tpu_custom_call.1} parent=55 // pred_region
          %422 = vst [vmem:[#allocation2] sm:$0xff] 0.0
          %423 = vst [vmem:[#allocation2 + $0x8] sm:$0xff] 0.0
          %v424 = vld [vmem:[%s2] sm:$0xff]
          %v425 = vld [vmem:[%s3] sm:$0xff]
          %vm426 = vcmask 261120
          %v427 = vsel %vm426, %v424, -inf
          %428 = vmax.xlane.f32.xlu0 %v427
          %v429 = vpop.xlane.xlu0 %428
          %v430 = vsub.f32 %v424, %v429
          %v431 = vmul.f32 %v430, 1.442695
          %v432 = vpow.pop %v431
          %v433 = vsel %vm426, %v432, 0.0
          %434 = vadd.xlane.f32.xlu0 %v433
          %v435 = vpop.xlane.xlu0 %434
          %v436 = vlog2.pop %v435
          %v437 = vmul.f32 %v436, 0.6931472
          %v438 = vadd.f32 %v437, %v429
          %v439 = vlaneseq
          %v440 = vand.u32 %v439, 127
          %441 = vset.pattern.permute.xlu0 0
          %442 = vperm.xlu0 %441, %v425
          %v443 = vpop.permute.xlu0 %442
          %vm444 = vcmp.eq.s32.totalorder %v440, %v443
          %v445 = vsel %vm444, 1, 0
          %v446 = vcvt.s32.f32 %v445
          %v447 = vmul.f32 %v446, %v424
          %v448 = vsel %vm426, %v447, 0.0
          %449 = vadd.xlane.f32.xlu0 %v448
          %v450 = vpop.xlane.xlu0 %449
          %v451 = vsub.f32 %v438, %v450
          %vm452 = vcmask 7168
          %v453 = vsel %vm452, %v451, 0.0
          %454 = vadd.xlane.f32.xlu0 %v453
          %v455 = vpop.xlane.xlu0 %454
          %v456 = vrot.slane %v455, 4
          %v457 = vadd.f32 %v455, %v456
          %v458 = vrot.slane %v457, 2
          %v459 = vadd.f32 %v457, %v458
          %v460 = vrot.slane %v459, 1
          %v461 = vadd.f32 %v459, %v460
          %s462 = vtos %v461
          %v463 = vrcp.pop 8.0
          %s464 = vtos %v463
          %s465 = smul.f32 %s462, %s464
          %s466 = scalar_lea.smem [#allocation10], 0
          %467 = sst [smem:[%s466]] %s465
          %s468 = sld [smem:[#allocation3]]
          %s469 = sld [smem:[#allocation3 + $0x1]]
          %v470 = vld [vmem:[%s4] sm:$0xf]
          %v471 = vld [vmem:[%s5] sm:$0x1]
          %v472 = vld [vmem:[%s6] sm:$0x1]
          %vm473 = vcmask 125952
          %v474 = vsel %vm473, %v470, 0.0
          %475 = vadd.xlane.f32.xlu0 %v474
          %v476 = vpop.xlane.xlu0 %475
          %v477 = vrot.slane %v476, 4
          %v478 = vadd.f32 %v476, %v477
          %v479 = vrot.slane %v478, 2
          %v480 = vadd.f32 %v478, %v479
          %v481 = vrot.slane %v480, 1
          %v482 = vadd.f32 %v480, %v481
          %s483 = vtos %v482
          %v484 = vrcp.pop 4.0
          %s485 = vtos %v484
          %s486 = smul.f32 %s483, %s485
          %vm487 = vcmask 24576
          %v488 = vsel %vm487, %v471, 0.0
          %489 = vadd.xlane.f32.xlu0 %v488
          %v490 = vpop.xlane.xlu0 %489
          %v491 = vrot.slane %v490, 4
          %v492 = vadd.f32 %v490, %v491
          %v493 = vrot.slane %v492, 2
          %v494 = vadd.f32 %v492, %v493
          %v495 = vrot.slane %v494, 1
          %v496 = vadd.f32 %v494, %v495
          %s497 = vtos %v496
          %v498 = vrcp.pop 4.0
          %s499 = vtos %v498
          %s500 = smul.f32 %s497, %s499
          %v501 = vsel %vm487, %v472, 0.0
          %502 = vadd.xlane.f32.xlu0 %v501
          %v503 = vpop.xlane.xlu0 %502
          %v504 = vrot.slane %v503, 4
          %v505 = vadd.f32 %v503, %v504
          %v506 = vrot.slane %v505, 2
          %v507 = vadd.f32 %v505, %v506
          %v508 = vrot.slane %v507, 1
          %v509 = vadd.f32 %v507, %v508
          %s510 = vtos %v509
          %v511 = vrcp.pop 4.0
          %s512 = vtos %v511
          %s513 = smul.f32 %s510, %s512
          %v514 = vld [vmem:[%s7] sm:$0x1]
          %vm515 = vcmask 122880
          %v516 = vsel %vm515, %v514, 0.0
          %517 = vadd.xlane.f32.xlu0 %v516
          %v518 = vpop.xlane.xlu0 %517
          %v519 = vrot.slane %v518, 4
          %v520 = vadd.f32 %v518, %v519
          %v521 = vrot.slane %v520, 2
          %v522 = vadd.f32 %v520, %v521
          %v523 = vrot.slane %v522, 1
          %v524 = vadd.f32 %v522, %v523
          %s525 = vtos %v524
          %s526 = smul.f32 %s500, 16.0
          %s527 = sadd.f32 %s525, %s526
          %s528 = sadd.f32 %s527, %s513
          %s529 = sadd.f32 %s486, %s526
          %s530 = sadd.f32 %s529, %s513
          %v531 = vstv %s528
          %v532 = vrcp.pop %v531
          %s533 = vtos %v532
          %s534 = smul.f32 %s530, %s533
          %s535 = ssub.f32 %s534, %s468
          %s536 = smul.f32 %s469, %s535
          %s537 = smul.f32 %s536, %s535
          %s538 = scalar_lea.smem [#allocation11], 0
          %539 = sst [smem:[%s538]] %s537
        $region72: #{tpu_custom_call.1} parent=55 // pred_fallthru
          _
        %s540 = sld [smem:[#allocation3 + $0x2]]
        %p541 = scmp.gt.f32.partialorder %s540, 0.0
        // Predicated region
        $region73: #{tpu_custom_call.1} parent=55 // pred_check
          %p542 = pneg %p541
        $region74: #{tpu_custom_call.1} parent=55 // pred_check_branch
          %544 = sbr.rel (%p542) target = $region76
        $region75: #{tpu_custom_call.1} parent=55 // pred_region
          %v545 = vld [vmem:[%s381] sm:$0xff]
          %v546 = vld [vmem:[%s381 + $0x8] sm:$0xff]
          %v547 = vld [vmem:[%s381 + $0x10] sm:$0xff]
          %v548 = vld [vmem:[%s381 + $0x18] sm:$0xff]
          %v549 = vld [vmem:[%s381 + $0x20] sm:$0xff]
          %v550 = vld [vmem:[%s381 + $0x28] sm:$0xff]
          %v551 = vld [vmem:[%s381 + $0x30] sm:$0xff]
          %v552 = vld [vmem:[%s381 + $0x38] sm:$0xff]
          %v553 = vld [vmem:[%s381 + $0x40] sm:$0xff]
          %v554 = vld [vmem:[%s381 + $0x48] sm:$0xff]
          %v555 = vld [vmem:[%s381 + $0x50] sm:$0xff]
          %v556 = vld [vmem:[%s381 + $0x58] sm:$0xff]
          %v557 = vld [vmem:[%s381 + $0x60] sm:$0xff]
          %v558 = vld [vmem:[%s381 + $0x68] sm:$0xff]
          %v559 = vld [vmem:[%s381 + $0x70] sm:$0xff]
          %v560 = vld [vmem:[%s381 + $0x78] sm:$0xff]
          %v561 = vmax.f32 %v545, 0.00390625
          %v562 = vmax.f32 %v546, 0.00390625
          %v563 = vmax.f32 %v547, 0.00390625
          %v564 = vmax.f32 %v548, 0.00390625
          %v565 = vmax.f32 %v549, 0.00390625
          %v566 = vmax.f32 %v550, 0.00390625
          %v567 = vmax.f32 %v551, 0.00390625
          %v568 = vmax.f32 %v552, 0.00390625
          %v569 = vmax.f32 %v553, 0.00390625
          %v570 = vmax.f32 %v554, 0.00390625
          %v571 = vmax.f32 %v555, 0.00390625
          %v572 = vmax.f32 %v556, 0.00390625
          %v573 = vmax.f32 %v557, 0.00390625
          %v574 = vmax.f32 %v558, 0.00390625
          %v575 = vmax.f32 %v559, 0.00390625
          %v576 = vmax.f32 %v560, 0.00390625
          %v577 = vmin.f32 %v561, 0.99609375
          %v578 = vmin.f32 %v562, 0.99609375
          %v579 = vmin.f32 %v563, 0.99609375
          %v580 = vmin.f32 %v564, 0.99609375
          %v581 = vmin.f32 %v565, 0.99609375
          %v582 = vmin.f32 %v566, 0.99609375
          %v583 = vmin.f32 %v567, 0.99609375
          %v584 = vmin.f32 %v568, 0.99609375
          %v585 = vmin.f32 %v569, 0.99609375
          %v586 = vmin.f32 %v570, 0.99609375
          %v587 = vmin.f32 %v571, 0.99609375
          %v588 = vmin.f32 %v572, 0.99609375
          %v589 = vmin.f32 %v573, 0.99609375
          %v590 = vmin.f32 %v574, 0.99609375
          %v591 = vmin.f32 %v575, 0.99609375
          %v592 = vmin.f32 %v576, 0.99609375
          %v593 = vmul.f32 %v577, 256.0
          %v594 = vmul.f32 %v578, 256.0
          %v595 = vmul.f32 %v579, 256.0
          %v596 = vmul.f32 %v580, 256.0
          %v597 = vmul.f32 %v581, 256.0
          %v598 = vmul.f32 %v582, 256.0
          %v599 = vmul.f32 %v583, 256.0
          %v600 = vmul.f32 %v584, 256.0
          %v601 = vmul.f32 %v585, 256.0
          %v602 = vmul.f32 %v586, 256.0
          %v603 = vmul.f32 %v587, 256.0
          %v604 = vmul.f32 %v588, 256.0
          %v605 = vmul.f32 %v589, 256.0
          %v606 = vmul.f32 %v590, 256.0
          %v607 = vmul.f32 %v591, 256.0
          %v608 = vmul.f32 %v592, 256.0
          %v609 = vround.ne.pseudo %v593
          %v610 = vround.ne.pseudo %v594
          %v611 = vround.ne.pseudo %v595
          %v612 = vround.ne.pseudo %v596
          %v613 = vround.ne.pseudo %v597
          %v614 = vround.ne.pseudo %v598
          %v615 = vround.ne.pseudo %v599
          %v616 = vround.ne.pseudo %v600
          %v617 = vround.ne.pseudo %v601
          %v618 = vround.ne.pseudo %v602
          %v619 = vround.ne.pseudo %v603
          %v620 = vround.ne.pseudo %v604
          %v621 = vround.ne.pseudo %v605
          %v622 = vround.ne.pseudo %v606
          %v623 = vround.ne.pseudo %v607
          %v624 = vround.ne.pseudo %v608
          %v625 = vsub.f32 %v609, 1.0
          %v626 = vsub.f32 %v610, 1.0
          %v627 = vsub.f32 %v611, 1.0
          %v628 = vsub.f32 %v612, 1.0
          %v629 = vsub.f32 %v613, 1.0
          %v630 = vsub.f32 %v614, 1.0
          %v631 = vsub.f32 %v615, 1.0
          %v632 = vsub.f32 %v616, 1.0
          %v633 = vsub.f32 %v617, 1.0
          %v634 = vsub.f32 %v618, 1.0
          %v635 = vsub.f32 %v619, 1.0
          %v636 = vsub.f32 %v620, 1.0
          %v637 = vsub.f32 %v621, 1.0
          %v638 = vsub.f32 %v622, 1.0
          %v639 = vsub.f32 %v623, 1.0
          %v640 = vsub.f32 %v624, 1.0
          %v641 = vcvt.f32.s32.to.zero.pseudo %v625
          %v642 = vcvt.f32.s32.to.zero.pseudo %v626
          %v643 = vcvt.f32.s32.to.zero.pseudo %v627
          %v644 = vcvt.f32.s32.to.zero.pseudo %v628
          %v645 = vcvt.f32.s32.to.zero.pseudo %v629
          %v646 = vcvt.f32.s32.to.zero.pseudo %v630
          %v647 = vcvt.f32.s32.to.zero.pseudo %v631
          %v648 = vcvt.f32.s32.to.zero.pseudo %v632
          %v649 = vcvt.f32.s32.to.zero.pseudo %v633
          %v650 = vcvt.f32.s32.to.zero.pseudo %v634
          %v651 = vcvt.f32.s32.to.zero.pseudo %v635
          %v652 = vcvt.f32.s32.to.zero.pseudo %v636
          %v653 = vcvt.f32.s32.to.zero.pseudo %v637
          %v654 = vcvt.f32.s32.to.zero.pseudo %v638
          %v655 = vcvt.f32.s32.to.zero.pseudo %v639
          %v656 = vcvt.f32.s32.to.zero.pseudo %v640
          %v657 = vand.u32 %v641, 15
          %v658 = vand.u32 %v642, 15
          %v659 = vand.u32 %v643, 15
          %v660 = vand.u32 %v644, 15
          %v661 = vand.u32 %v645, 15
          %v662 = vand.u32 %v646, 15
          %v663 = vand.u32 %v647, 15
          %v664 = vand.u32 %v648, 15
          %v665 = vand.u32 %v649, 15
          %v666 = vand.u32 %v650, 15
          %v667 = vand.u32 %v651, 15
          %v668 = vand.u32 %v652, 15
          %v669 = vand.u32 %v653, 15
          %v670 = vand.u32 %v654, 15
          %v671 = vand.u32 %v655, 15
          %v672 = vand.u32 %v656, 15
          %v673 = vshra.s32 %v641, 4
          %v674 = vshra.s32 %v642, 4
          %v675 = vshra.s32 %v643, 4
          %v676 = vshra.s32 %v644, 4
          %v677 = vshra.s32 %v645, 4
          %v678 = vshra.s32 %v646, 4
          %v679 = vshra.s32 %v647, 4
          %v680 = vshra.s32 %v648, 4
          %v681 = vshra.s32 %v649, 4
          %v682 = vshra.s32 %v650, 4
          %v683 = vshra.s32 %v651, 4
          %v684 = vshra.s32 %v652, 4
          %v685 = vshra.s32 %v653, 4
          %v686 = vshra.s32 %v654, 4
          %v687 = vshra.s32 %v655, 4
          %v688 = vshra.s32 %v656, 4
          %v689 = vld [vmem:[#allocation7] sm:$0xff]
          %v690 = vld [vmem:[#allocation7 + $0x8] sm:$0xff]
          %v691 = vpack.c.bf16 %v690, %v689
          %v692 = vunpack.c.l.bf16 %v691
          %v693 = vunpack.c.h.bf16 %v691
          %v694 = vsub.f32 %v689, %v692
          %v695 = vsub.f32 %v690, %v693
          %v696 = vpack.c.bf16 %v695, %v694
          %v697 = vlaneseq
          %v698 = vshrl.u32 %v697, 7
          %v699 = vadd.s32 %v698, 8
          %v700 = vlaneseq
          %v701 = vshrl.u32 %v700, 7
          %v702 = vsub.s32 0, %v701
          %v703 = vrot.slane %v657, %v702
          %v704 = vlaneseq
          %v705 = vshrl.u32 %v704, 7
          %v706 = vsub.s32 0, %v705
          %v707 = vrot.slane %v658, %v706
          %v708 = vlaneseq
          %v709 = vshrl.u32 %v708, 7
          %v710 = vsub.s32 0, %v709
          %v711 = vrot.slane %v659, %v710
          %v712 = vlaneseq
          %v713 = vshrl.u32 %v712, 7
          %v714 = vsub.s32 0, %v713
          %v715 = vrot.slane %v660, %v714
          %v716 = vlaneseq
          %v717 = vshrl.u32 %v716, 7
          %v718 = vsub.s32 0, %v717
          %v719 = vrot.slane %v661, %v718
          %v720 = vlaneseq
          %v721 = vshrl.u32 %v720, 7
          %v722 = vsub.s32 0, %v721
          %v723 = vrot.slane %v662, %v722
          %v724 = vlaneseq
          %v725 = vshrl.u32 %v724, 7
          %v726 = vsub.s32 0, %v725
          %v727 = vrot.slane %v663, %v726
          %v728 = vlaneseq
          %v729 = vshrl.u32 %v728, 7
          %v730 = vsub.s32 0, %v729
          %v731 = vrot.slane %v664, %v730
          %v732 = vlaneseq
          %v733 = vshrl.u32 %v732, 7
          %v734 = vsub.s32 0, %v733
          %v735 = vrot.slane %v665, %v734
          %v736 = vlaneseq
          %v737 = vshrl.u32 %v736, 7
          %v738 = vsub.s32 0, %v737
          %v739 = vrot.slane %v666, %v738
          %v740 = vlaneseq
          %v741 = vshrl.u32 %v740, 7
          %v742 = vsub.s32 0, %v741
          %v743 = vrot.slane %v667, %v742
          %v744 = vlaneseq
          %v745 = vshrl.u32 %v744, 7
          %v746 = vsub.s32 0, %v745
          %v747 = vrot.slane %v668, %v746
          %v748 = vlaneseq
          %v749 = vshrl.u32 %v748, 7
          %v750 = vsub.s32 0, %v749
          %v751 = vrot.slane %v669, %v750
          %v752 = vlaneseq
          %v753 = vshrl.u32 %v752, 7
          %v754 = vsub.s32 0, %v753
          %v755 = vrot.slane %v670, %v754
          %v756 = vlaneseq
          %v757 = vshrl.u32 %v756, 7
          %v758 = vsub.s32 0, %v757
          %v759 = vrot.slane %v671, %v758
          %v760 = vlaneseq
          %v761 = vshrl.u32 %v760, 7
          %v762 = vsub.s32 0, %v761
          %v763 = vrot.slane %v672, %v762
          %vm764 = vcmp.eq.s32.totalorder %v698, %v703
          %vm765 = vcmp.eq.s32.totalorder %v698, %v707
          %vm766 = vcmp.eq.s32.totalorder %v698, %v711
          %vm767 = vcmp.eq.s32.totalorder %v698, %v715
          %vm768 = vcmp.eq.s32.totalorder %v698, %v719
          %vm769 = vcmp.eq.s32.totalorder %v698, %v723
          %vm770 = vcmp.eq.s32.totalorder %v698, %v727
          %vm771 = vcmp.eq.s32.totalorder %v698, %v731
          %vm772 = vcmp.eq.s32.totalorder %v698, %v735
          %vm773 = vcmp.eq.s32.totalorder %v698, %v739
          %vm774 = vcmp.eq.s32.totalorder %v698, %v743
          %vm775 = vcmp.eq.s32.totalorder %v698, %v747
          %vm776 = vcmp.eq.s32.totalorder %v698, %v751
          %vm777 = vcmp.eq.s32.totalorder %v698, %v755
          %vm778 = vcmp.eq.s32.totalorder %v698, %v759
          %vm779 = vcmp.eq.s32.totalorder %v698, %v763
          %vm780 = vcmp.eq.s32.totalorder %v699, %v703
          %vm781 = vcmp.eq.s32.totalorder %v699, %v707
          %vm782 = vcmp.eq.s32.totalorder %v699, %v711
          %vm783 = vcmp.eq.s32.totalorder %v699, %v715
          %vm784 = vcmp.eq.s32.totalorder %v699, %v719
          %vm785 = vcmp.eq.s32.totalorder %v699, %v723
          %vm786 = vcmp.eq.s32.totalorder %v699, %v727
          %vm787 = vcmp.eq.s32.totalorder %v699, %v731
          %vm788 = vcmp.eq.s32.totalorder %v699, %v735
          %vm789 = vcmp.eq.s32.totalorder %v699, %v739
          %vm790 = vcmp.eq.s32.totalorder %v699, %v743
          %vm791 = vcmp.eq.s32.totalorder %v699, %v747
          %vm792 = vcmp.eq.s32.totalorder %v699, %v751
          %vm793 = vcmp.eq.s32.totalorder %v699, %v755
          %vm794 = vcmp.eq.s32.totalorder %v699, %v759
          %vm795 = vcmp.eq.s32.totalorder %v699, %v763
          %v796 = vsel %vm764, 1.0, 0.0
          %v797 = vsel %vm765, 1.0, 0.0
          %v798 = vsel %vm766, 1.0, 0.0
          %v799 = vsel %vm767, 1.0, 0.0
          %v800 = vsel %vm768, 1.0, 0.0
          %v801 = vsel %vm769, 1.0, 0.0
          %v802 = vsel %vm770, 1.0, 0.0
          %v803 = vsel %vm771, 1.0, 0.0
          %v804 = vsel %vm772, 1.0, 0.0
          %v805 = vsel %vm773, 1.0, 0.0
          %v806 = vsel %vm774, 1.0, 0.0
          %v807 = vsel %vm775, 1.0, 0.0
          %v808 = vsel %vm776, 1.0, 0.0
          %v809 = vsel %vm777, 1.0, 0.0
          %v810 = vsel %vm778, 1.0, 0.0
          %v811 = vsel %vm779, 1.0, 0.0
          %v812 = vsel %vm780, 1.0, 0.0
          %v813 = vsel %vm781, 1.0, 0.0
          %v814 = vsel %vm782, 1.0, 0.0
          %v815 = vsel %vm783, 1.0, 0.0
          %v816 = vsel %vm784, 1.0, 0.0
          %v817 = vsel %vm785, 1.0, 0.0
          %v818 = vsel %vm786, 1.0, 0.0
          %v819 = vsel %vm787, 1.0, 0.0
          %v820 = vsel %vm788, 1.0, 0.0
          %v821 = vsel %vm789, 1.0, 0.0
          %v822 = vsel %vm790, 1.0, 0.0
          %v823 = vsel %vm791, 1.0, 0.0
          %v824 = vsel %vm792, 1.0, 0.0
          %v825 = vsel %vm793, 1.0, 0.0
          %v826 = vsel %vm794, 1.0, 0.0
          %v827 = vsel %vm795, 1.0, 0.0
          %v828 = vpack.c.bf16 %v812, %v796
          %v829 = vpack.c.bf16 %v813, %v797
          %v830 = vpack.c.bf16 %v814, %v798
          %v831 = vpack.c.bf16 %v815, %v799
          %v832 = vpack.c.bf16 %v816, %v800
          %v833 = vpack.c.bf16 %v817, %v801
          %v834 = vpack.c.bf16 %v818, %v802
          %v835 = vpack.c.bf16 %v819, %v803
          %v836 = vpack.c.bf16 %v820, %v804
          %v837 = vpack.c.bf16 %v821, %v805
          %v838 = vpack.c.bf16 %v822, %v806
          %v839 = vpack.c.bf16 %v823, %v807
          %v840 = vpack.c.bf16 %v824, %v808
          %v841 = vpack.c.bf16 %v825, %v809
          %v842 = vpack.c.bf16 %v826, %v810
          %v843 = vpack.c.bf16 %v827, %v811
          %vm844 = vcmask 130048
          %v846 = vsel %vm844, %v696, 0
          %848 = vmatprep.subr.bf16.mxu0 %v829
          %849 = vmatpush1.bf16.msra.mxu0 %v828
          %850 = vmatprep.subr.bf16.mxu0 0
          %851 = vmatpush1.bf16.msra.mxu0 0
          %852 = vmatprep.subr.bf16.mxu0 0
          %853 = vmatpush1.bf16.msra.mxu0 0
          %854 = vmatprep.subr.bf16.mxu0 0
          %855 = vmatpush1.bf16.msra.mxu0 0
          %856 = vmatprep.subr.bf16.mxu0 0
          %857 = vmatpush1.bf16.msra.mxu0 0
          %858 = vmatprep.subr.bf16.mxu0 0
          %859 = vmatpush1.bf16.msra.mxu0 0
          %860 = vmatprep.subr.bf16.mxu0 0
          %861 = vmatpush1.bf16.msra.mxu0 0
          %862 = vmatprep.subr.bf16.mxu0 0
          %863 = vmatpush1.bf16.msra.mxu0 0
          %864 = vmatprep.subr.bf16.mxu0 0
          %865 = vmatpush1.bf16.msra.mxu0 0
          %866 = vmatprep.subr.bf16.mxu0 0
          %867 = vmatpush1.bf16.msra.mxu0 0
          %868 = vmatprep.subr.bf16.mxu0 0
          %869 = vmatpush1.bf16.msra.mxu0 0
          %870 = vmatprep.subr.bf16.mxu0 0
          %871 = vmatpush1.bf16.msra.mxu0 0
          %872 = vmatprep.subr.bf16.mxu0 0
          %873 = vmatpush1.bf16.msra.mxu0 0
          %874 = vmatprep.subr.bf16.mxu0 0
          %875 = vmatpush1.bf16.msra.mxu0 0
          %876 = vmatprep.subr.bf16.mxu0 0
          %877 = vmatpush1.bf16.msra.mxu0 0
          %878 = vmatprep.subr.bf16.mxu0 0
          %879 = vmatpush1.bf16.msra.mxu0 0
          %880 = vmatprep.mubr.bf16.mxu0 0
          %881 = vmatmul.mubr.bf16.gmra.mrb[0].mxu0 %v846
          %v882 = vpop.f32.mrb[0].mxu0
          %v883 = vadd.f32 0.0, %v882
          %v884 = vpop.f32.mrb[0].mxu0
          %v885 = vadd.f32 0.0, %v884
          %v886 = vpop.f32.mrb[0].mxu0
          %v887 = vadd.f32 0.0, %v886
          %v888 = vpop.f32.mrb[0].mxu0
          %v889 = vadd.f32 0.0, %v888
          %890 = vdwg.mxu0
          %891 = vmatprep.subr.bf16.mxu0 %v831
          %892 = vmatpush1.bf16.msra.mxu0 %v830
          %893 = vmatprep.subr.bf16.mxu0 0
          %894 = vmatpush1.bf16.msra.mxu0 0
          %895 = vmatprep.subr.bf16.mxu0 0
          %896 = vmatpush1.bf16.msra.mxu0 0
          %897 = vmatprep.subr.bf16.mxu0 0
          %898 = vmatpush1.bf16.msra.mxu0 0
          %899 = vmatprep.subr.bf16.mxu0 0
          %900 = vmatpush1.bf16.msra.mxu0 0
          %901 = vmatprep.subr.bf16.mxu0 0
          %902 = vmatpush1.bf16.msra.mxu0 0
          %903 = vmatprep.subr.bf16.mxu0 0
          %904 = vmatpush1.bf16.msra.mxu0 0
          %905 = vmatprep.subr.bf16.mxu0 0
          %906 = vmatpush1.bf16.msra.mxu0 0
          %907 = vmatprep.subr.bf16.mxu0 0
          %908 = vmatpush1.bf16.msra.mxu0 0
          %909 = vmatprep.subr.bf16.mxu0 0
          %910 = vmatpush1.bf16.msra.mxu0 0
          %911 = vmatprep.subr.bf16.mxu0 0
          %912 = vmatpush1.bf16.msra.mxu0 0
          %913 = vmatprep.subr.bf16.mxu0 0
          %914 = vmatpush1.bf16.msra.mxu0 0
          %915 = vmatprep.subr.bf16.mxu0 0
          %916 = vmatpush1.bf16.msra.mxu0 0
          %917 = vmatprep.subr.bf16.mxu0 0
          %918 = vmatpush1.bf16.msra.mxu0 0
          %919 = vmatprep.subr.bf16.mxu0 0
          %920 = vmatpush1.bf16.msra.mxu0 0
          %921 = vmatprep.subr.bf16.mxu0 0
          %922 = vmatpush1.bf16.msra.mxu0 0
          %923 = vmatprep.mubr.bf16.mxu0 0
          %924 = vmatmul.mubr.bf16.gmra.mrb[0].mxu0 %v846
          %v925 = vpop.f32.mrb[0].mxu0
          %v926 = vadd.f32 0.0, %v925
          %v927 = vpop.f32.mrb[0].mxu0
          %v928 = vadd.f32 0.0, %v927
          %v929 = vpop.f32.mrb[0].mxu0
          %v930 = vadd.f32 0.0, %v929
          %v931 = vpop.f32.mrb[0].mxu0
          %v932 = vadd.f32 0.0, %v931
          %933 = vdwg.mxu0
          %934 = vmatprep.subr.bf16.mxu0 %v833
          %935 = vmatpush1.bf16.msra.mxu0 %v832
          %936 = vmatprep.subr.bf16.mxu0 0
          %937 = vmatpush1.bf16.msra.mxu0 0
          %938 = vmatprep.subr.bf16.mxu0 0
          %939 = vmatpush1.bf16.msra.mxu0 0
          %940 = vmatprep.subr.bf16.mxu0 0
          %941 = vmatpush1.bf16.msra.mxu0 0
          %942 = vmatprep.subr.bf16.mxu0 0
          %943 = vmatpush1.bf16.msra.mxu0 0
          %944 = vmatprep.subr.bf16.mxu0 0
          %945 = vmatpush1.bf16.msra.mxu0 0
          %946 = vmatprep.subr.bf16.mxu0 0
          %947 = vmatpush1.bf16.msra.mxu0 0
          %948 = vmatprep.subr.bf16.mxu0 0
          %949 = vmatpush1.bf16.msra.mxu0 0
          %950 = vmatprep.subr.bf16.mxu0 0
          %951 = vmatpush1.bf16.msra.mxu0 0
          %952 = vmatprep.subr.bf16.mxu0 0
          %953 = vmatpush1.bf16.msra.mxu0 0
          %954 = vmatprep.subr.bf16.mxu0 0
          %955 = vmatpush1.bf16.msra.mxu0 0
          %956 = vmatprep.subr.bf16.mxu0 0
          %957 = vmatpush1.bf16.msra.mxu0 0
          %958 = vmatprep.subr.bf16.mxu0 0
          %959 = vmatpush1.bf16.msra.mxu0 0
          %960 = vmatprep.subr.bf16.mxu0 0
          %961 = vmatpush1.bf16.msra.mxu0 0
          %962 = vmatprep.subr.bf16.mxu0 0
          %963 = vmatpush1.bf16.msra.mxu0 0
          %964 = vmatprep.subr.bf16.mxu0 0
          %965 = vmatpush1.bf16.msra.mxu0 0
          %966 = vmatprep.mubr.bf16.mxu0 0
          %967 = vmatmul.mubr.bf16.gmra.mrb[0].mxu0 %v846
          %v968 = vpop.f32.mrb[0].mxu0
          %v969 = vadd.f32 0.0, %v968
          %v970 = vpop.f32.mrb[0].mxu0
          %v971 = vadd.f32 0.0, %v970
          %v972 = vpop.f32.mrb[0].mxu0
          %v973 = vadd.f32 0.0, %v972
          %v974 = vpop.f32.mrb[0].mxu0
          %v975 = vadd.f32 0.0, %v974
          %976 = vdwg.mxu0
          %977 = vmatprep.subr.bf16.mxu0 %v835
          %978 = vmatpush1.bf16.msra.mxu0 %v834
          %979 = vmatprep.subr.bf16.mxu0 0
          %980 = vmatpush1.bf16.msra.mxu0 0
          %981 = vmatprep.subr.bf16.mxu0 0
          %982 = vmatpush1.bf16.msra.mxu0 0
          %983 = vmatprep.subr.bf16.mxu0 0
          %984 = vmatpush1.bf16.msra.mxu0 0
          %985 = vmatprep.subr.bf16.mxu0 0
          %986 = vmatpush1.bf16.msra.mxu0 0
          %987 = vmatprep.subr.bf16.mxu0 0
          %988 = vmatpush1.bf16.msra.mxu0 0
          %989 = vmatprep.subr.bf16.mxu0 0
          %990 = vmatpush1.bf16.msra.mxu0 0
          %991 = vmatprep.subr.bf16.mxu0 0
          %992 = vmatpush1.bf16.msra.mxu0 0
          %993 = vmatprep.subr.bf16.mxu0 0
          %994 = vmatpush1.bf16.msra.mxu0 0
          %995 = vmatprep.subr.bf16.mxu0 0
          %996 = vmatpush1.bf16.msra.mxu0 0
          %997 = vmatprep.subr.bf16.mxu0 0
          %998 = vmatpush1.bf16.msra.mxu0 0
          %999 = vmatprep.subr.bf16.mxu0 0
          %1000 = vmatpush1.bf16.msra.mxu0 0
          %1001 = vmatprep.subr.bf16.mxu0 0
          %1002 = vmatpush1.bf16.msra.mxu0 0
          %1003 = vmatprep.subr.bf16.mxu0 0
          %1004 = vmatpush1.bf16.msra.mxu0 0
          %1005 = vmatprep.subr.bf16.mxu0 0
          %1006 = vmatpush1.bf16.msra.mxu0 0
          %1007 = vmatprep.subr.bf16.mxu0 0
          %1008 = vmatpush1.bf16.msra.mxu0 0
          %1009 = vmatprep.mubr.bf16.mxu0 0
          %1010 = vmatmul.mubr.bf16.gmra.mrb[0].mxu0 %v846
          %v1011 = vpop.f32.mrb[0].mxu0
          %v1012 = vadd.f32 0.0, %v1011
          %v1013 = vpop.f32.mrb[0].mxu0
          %v1014 = vadd.f32 0.0, %v1013
          %v1015 = vpop.f32.mrb[0].mxu0
          %v1016 = vadd.f32 0.0, %v1015
          %v1017 = vpop.f32.mrb[0].mxu0
          %v1018 = vadd.f32 0.0, %v1017
          %1019 = vdwg.mxu0
          %1020 = vmatprep.subr.bf16.mxu0 %v837
          %1021 = vmatpush1.bf16.msra.mxu0 %v836
          %1022 = vmatprep.subr.bf16.mxu0 0
          %1023 = vmatpush1.bf16.msra.mxu0 0
          %1024 = vmatprep.subr.bf16.mxu0 0
          %1025 = vmatpush1.bf16.msra.mxu0 0
          %1026 = vmatprep.subr.bf16.mxu0 0
          %1027 = vmatpush1.bf16.msra.mxu0 0
          %1028 = vmatprep.subr.bf16.mxu0 0
          %1029 = vmatpush1.bf16.msra.mxu0 0
          %1030 = vmatprep.subr.bf16.mxu0 0
          %1031 = vmatpush1.bf16.msra.mxu0 0
          %1032 = vmatprep.subr.bf16.mxu0 0
          %1033 = vmatpush1.bf16.msra.mxu0 0
          %1034 = vmatprep.subr.bf16.mxu0 0
          %1035 = vmatpush1.bf16.msra.mxu0 0
          %1036 = vmatprep.subr.bf16.mxu0 0
          %1037 = vmatpush1.bf16.msra.mxu0 0
          %1038 = vmatprep.subr.bf16.mxu0 0
          %1039 = vmatpush1.bf16.msra.mxu0 0
          %1040 = vmatprep.subr.bf16.mxu0 0
          %1041 = vmatpush1.bf16.msra.mxu0 0
          %1042 = vmatprep.subr.bf16.mxu0 0
          %1043 = vmatpush1.bf16.msra.mxu0 0
          %1044 = vmatprep.subr.bf16.mxu0 0
          %1045 = vmatpush1.bf16.msra.mxu0 0
          %1046 = vmatprep.subr.bf16.mxu0 0
          %1047 = vmatpush1.bf16.msra.mxu0 0
          %1048 = vmatprep.subr.bf16.mxu0 0
          %1049 = vmatpush1.bf16.msra.mxu0 0
          %1050 = vmatprep.subr.bf16.mxu0 0
          %1051 = vmatpush1.bf16.msra.mxu0 0
          %1052 = vmatprep.mubr.bf16.mxu0 0
          %1053 = vmatmul.mubr.bf16.gmra.mrb[0].mxu0 %v846
          %v1054 = vpop.f32.mrb[0].mxu0
          %v1055 = vadd.f32 0.0, %v1054
          %v1056 = vpop.f32.mrb[0].mxu0
          %v1057 = vadd.f32 0.0, %v1056
          %v1058 = vpop.f32.mrb[0].mxu0
          %v1059 = vadd.f32 0.0, %v1058
          %v1060 = vpop.f32.mrb[0].mxu0
          %v1061 = vadd.f32 0.0, %v1060
          %1062 = vdwg.mxu0
          %1063 = vmatprep.subr.bf16.mxu0 %v839
          %1064 = vmatpush1.bf16.msra.mxu0 %v838
          %1065 = vmatprep.subr.bf16.mxu0 0
          %1066 = vmatpush1.bf16.msra.mxu0 0
          %1067 = vmatprep.subr.bf16.mxu0 0
          %1068 = vmatpush1.bf16.msra.mxu0 0
          %1069 = vmatprep.subr.bf16.mxu0 0
          %1070 = vmatpush1.bf16.msra.mxu0 0
          %1071 = vmatprep.subr.bf16.mxu0 0
          %1072 = vmatpush1.bf16.msra.mxu0 0
          %1073 = vmatprep.subr.bf16.mxu0 0
          %1074 = vmatpush1.bf16.msra.mxu0 0
          %1075 = vmatprep.subr.bf16.mxu0 0
          %1076 = vmatpush1.bf16.msra.mxu0 0
          %1077 = vmatprep.subr.bf16.mxu0 0
          %1078 = vmatpush1.bf16.msra.mxu0 0
          %1079 = vmatprep.subr.bf16.mxu0 0
          %1080 = vmatpush1.bf16.msra.mxu0 0
          %1081 = vmatprep.subr.bf16.mxu0 0
          %1082 = vmatpush1.bf16.msra.mxu0 0
          %1083 = vmatprep.subr.bf16.mxu0 0
          %1084 = vmatpush1.bf16.msra.mxu0 0
          %1085 = vmatprep.subr.bf16.mxu0 0
          %1086 = vmatpush1.bf16.msra.mxu0 0
          %1087 = vmatprep.subr.bf16.mxu0 0
          %1088 = vmatpush1.bf16.msra.mxu0 0
          %1089 = vmatprep.subr.bf16.mxu0 0
          %1090 = vmatpush1.bf16.msra.mxu0 0
          %1091 = vmatprep.subr.bf16.mxu0 0
          %1092 = vmatpush1.bf16.msra.mxu0 0
          %1093 = vmatprep.subr.bf16.mxu0 0
          %1094 = vmatpush1.bf16.msra.mxu0 0
          %1095 = vmatprep.mubr.bf16.mxu0 0
          %1096 = vmatmul.mubr.bf16.gmra.mrb[0].mxu0 %v846
          %v1097 = vpop.f32.mrb[0].mxu0
          %v1098 = vadd.f32 0.0, %v1097
          %v1099 = vpop.f32.mrb[0].mxu0
          %v1100 = vadd.f32 0.0, %v1099
          %v1101 = vpop.f32.mrb[0].mxu0
          %v1102 = vadd.f32 0.0, %v1101
          %v1103 = vpop.f32.mrb[0].mxu0
          %v1104 = vadd.f32 0.0, %v1103
          %1105 = vdwg.mxu0
          %1106 = vmatprep.subr.bf16.mxu0 %v841
          %1107 = vmatpush1.bf16.msra.mxu0 %v840
          %1108 = vmatprep.subr.bf16.mxu0 0
          %1109 = vmatpush1.bf16.msra.mxu0 0
          %1110 = vmatprep.subr.bf16.mxu0 0
          %1111 = vmatpush1.bf16.msra.mxu0 0
          %1112 = vmatprep.subr.bf16.mxu0 0
          %1113 = vmatpush1.bf16.msra.mxu0 0
          %1114 = vmatprep.subr.bf16.mxu0 0
          %1115 = vmatpush1.bf16.msra.mxu0 0
          %1116 = vmatprep.subr.bf16.mxu0 0
          %1117 = vmatpush1.bf16.msra.mxu0 0
          %1118 = vmatprep.subr.bf16.mxu0 0
          %1119 = vmatpush1.bf16.msra.mxu0 0
          %1120 = vmatprep.subr.bf16.mxu0 0
          %1121 = vmatpush1.bf16.msra.mxu0 0
          %1122 = vmatprep.subr.bf16.mxu0 0
          %1123 = vmatpush1.bf16.msra.mxu0 0
          %1124 = vmatprep.subr.bf16.mxu0 0
          %1125 = vmatpush1.bf16.msra.mxu0 0
          %1126 = vmatprep.subr.bf16.mxu0 0
          %1127 = vmatpush1.bf16.msra.mxu0 0
          %1128 = vmatprep.subr.bf16.mxu0 0
          %1129 = vmatpush1.bf16.msra.mxu0 0
          %1130 = vmatprep.subr.bf16.mxu0 0
          %1131 = vmatpush1.bf16.msra.mxu0 0
          %1132 = vmatprep.subr.bf16.mxu0 0
          %1133 = vmatpush1.bf16.msra.mxu0 0
          %1134 = vmatprep.subr.bf16.mxu0 0
          %1135 = vmatpush1.bf16.msra.mxu0 0
          %1136 = vmatprep.subr.bf16.mxu0 0
          %1137 = vmatpush1.bf16.msra.mxu0 0
          %1138 = vmatprep.mubr.bf16.mxu0 0
          %1139 = vmatmul.mubr.bf16.gmra.mrb[0].mxu0 %v846
          %v1140 = vpop.f32.mrb[0].mxu0
          %v1141 = vadd.f32 0.0, %v1140
          %v1142 = vpop.f32.mrb[0].mxu0
          %v1143 = vadd.f32 0.0, %v1142
          %v1144 = vpop.f32.mrb[0].mxu0
          %v1145 = vadd.f32 0.0, %v1144
          %v1146 = vpop.f32.mrb[0].mxu0
          %v1147 = vadd.f32 0.0, %v1146
          %1148 = vdwg.mxu0
          %1149 = vmatprep.subr.bf16.mxu0 %v843
          %1150 = vmatpush1.bf16.msra.mxu0 %v842
          %1151 = vmatprep.subr.bf16.mxu0 0
          %1152 = vmatpush1.bf16.msra.mxu0 0
          %1153 = vmatprep.subr.bf16.mxu0 0
          %1154 = vmatpush1.bf16.msra.mxu0 0
          %1155 = vmatprep.subr.bf16.mxu0 0
          %1156 = vmatpush1.bf16.msra.mxu0 0
          %1157 = vmatprep.subr.bf16.mxu0 0
          %1158 = vmatpush1.bf16.msra.mxu0 0
          %1159 = vmatprep.subr.bf16.mxu0 0
          %1160 = vmatpush1.bf16.msra.mxu0 0
          %1161 = vmatprep.subr.bf16.mxu0 0
          %1162 = vmatpush1.bf16.msra.mxu0 0
          %1163 = vmatprep.subr.bf16.mxu0 0
          %1164 = vmatpush1.bf16.msra.mxu0 0
          %1165 = vmatprep.subr.bf16.mxu0 0
          %1166 = vmatpush1.bf16.msra.mxu0 0
          %1167 = vmatprep.subr.bf16.mxu0 0
          %1168 = vmatpush1.bf16.msra.mxu0 0
          %1169 = vmatprep.subr.bf16.mxu0 0
          %1170 = vmatpush1.bf16.msra.mxu0 0
          %1171 = vmatprep.subr.bf16.mxu0 0
          %1172 = vmatpush1.bf16.msra.mxu0 0
          %1173 = vmatprep.subr.bf16.mxu0 0
          %1174 = vmatpush1.bf16.msra.mxu0 0
          %1175 = vmatprep.subr.bf16.mxu0 0
          %1176 = vmatpush1.bf16.msra.mxu0 0
          %1177 = vmatprep.subr.bf16.mxu0 0
          %1178 = vmatpush1.bf16.msra.mxu0 0
          %1179 = vmatprep.subr.bf16.mxu0 0
          %1180 = vmatpush1.bf16.msra.mxu0 0
          %1181 = vmatprep.mubr.bf16.mxu0 0
          %1182 = vmatmul.mubr.bf16.gmra.mrb[0].mxu0 %v846
          %v1183 = vpop.f32.mrb[0].mxu0
          %v1184 = vadd.f32 0.0, %v1183
          %v1185 = vpop.f32.mrb[0].mxu0
          %v1186 = vadd.f32 0.0, %v1185
          %v1187 = vpop.f32.mrb[0].mxu0
          %v1188 = vadd.f32 0.0, %v1187
          %v1189 = vpop.f32.mrb[0].mxu0
          %v1190 = vadd.f32 0.0, %v1189
          %1191 = vdwg.mxu0
          %v1193 = vsel %vm844, %v691, 0
          %1195 = vmatprep.subr.bf16.mxu0 %v829
          %1196 = vmatpush1.bf16.msra.mxu0 %v828
          %1197 = vmatprep.subr.bf16.mxu0 0
          %1198 = vmatpush1.bf16.msra.mxu0 0
          %1199 = vmatprep.subr.bf16.mxu0 0
          %1200 = vmatpush1.bf16.msra.mxu0 0
          %1201 = vmatprep.subr.bf16.mxu0 0
          %1202 = vmatpush1.bf16.msra.mxu0 0
          %1203 = vmatprep.subr.bf16.mxu0 0
          %1204 = vmatpush1.bf16.msra.mxu0 0
          %1205 = vmatprep.subr.bf16.mxu0 0
          %1206 = vmatpush1.bf16.msra.mxu0 0
          %1207 = vmatprep.subr.bf16.mxu0 0
          %1208 = vmatpush1.bf16.msra.mxu0 0
          %1209 = vmatprep.subr.bf16.mxu0 0
          %1210 = vmatpush1.bf16.msra.mxu0 0
          %1211 = vmatprep.subr.bf16.mxu0 0
          %1212 = vmatpush1.bf16.msra.mxu0 0
          %1213 = vmatprep.subr.bf16.mxu0 0
          %1214 = vmatpush1.bf16.msra.mxu0 0
          %1215 = vmatprep.subr.bf16.mxu0 0
          %1216 = vmatpush1.bf16.msra.mxu0 0
          %1217 = vmatprep.subr.bf16.mxu0 0
          %1218 = vmatpush1.bf16.msra.mxu0 0
          %1219 = vmatprep.subr.bf16.mxu0 0
          %1220 = vmatpush1.bf16.msra.mxu0 0
          %1221 = vmatprep.subr.bf16.mxu0 0
          %1222 = vmatpush1.bf16.msra.mxu0 0
          %1223 = vmatprep.subr.bf16.mxu0 0
          %1224 = vmatpush1.bf16.msra.mxu0 0
          %1225 = vmatprep.subr.bf16.mxu0 0
          %1226 = vmatpush1.bf16.msra.mxu0 0
          %1227 = vmatprep.mubr.bf16.mxu0 0
          %1228 = vmatmul.mubr.bf16.gmra.mrb[0].mxu0 %v1193
          %v1229 = vpop.f32.mrb[0].mxu0
          %v1230 = vadd.f32 %v883, %v1229
          %v1231 = vpop.f32.mrb[0].mxu0
          %v1232 = vadd.f32 %v885, %v1231
          %v1233 = vpop.f32.mrb[0].mxu0
          %v1234 = vadd.f32 %v887, %v1233
          %v1235 = vpop.f32.mrb[0].mxu0
          %v1236 = vadd.f32 %v889, %v1235
          %1237 = vdwg.mxu0
          %1238 = vmatprep.subr.bf16.mxu0 %v831
          %1239 = vmatpush1.bf16.msra.mxu0 %v830
          %1240 = vmatprep.subr.bf16.mxu0 0
          %1241 = vmatpush1.bf16.msra.mxu0 0
          %1242 = vmatprep.subr.bf16.mxu0 0
          %1243 = vmatpush1.bf16.msra.mxu0 0
          %1244 = vmatprep.subr.bf16.mxu0 0
          %1245 = vmatpush1.bf16.msra.mxu0 0
          %1246 = vmatprep.subr.bf16.mxu0 0
          %1247 = vmatpush1.bf16.msra.mxu0 0
          %1248 = vmatprep.subr.bf16.mxu0 0
          %1249 = vmatpush1.bf16.msra.mxu0 0
          %1250 = vmatprep.subr.bf16.mxu0 0
          %1251 = vmatpush1.bf16.msra.mxu0 0
          %1252 = vmatprep.subr.bf16.mxu0 0
          %1253 = vmatpush1.bf16.msra.mxu0 0
          %1254 = vmatprep.subr.bf16.mxu0 0
          %1255 = vmatpush1.bf16.msra.mxu0 0
          %1256 = vmatprep.subr.bf16.mxu0 0
          %1257 = vmatpush1.bf16.msra.mxu0 0
          %1258 = vmatprep.subr.bf16.mxu0 0
          %1259 = vmatpush1.bf16.msra.mxu0 0
          %1260 = vmatprep.subr.bf16.mxu0 0
          %1261 = vmatpush1.bf16.msra.mxu0 0
          %1262 = vmatprep.subr.bf16.mxu0 0
          %1263 = vmatpush1.bf16.msra.mxu0 0
          %1264 = vmatprep.subr.bf16.mxu0 0
          %1265 = vmatpush1.bf16.msra.mxu0 0
          %1266 = vmatprep.subr.bf16.mxu0 0
          %1267 = vmatpush1.bf16.msra.mxu0 0
          %1268 = vmatprep.subr.bf16.mxu0 0
          %1269 = vmatpush1.bf16.msra.mxu0 0
          %1270 = vmatprep.mubr.bf16.mxu0 0
          %1271 = vmatmul.mubr.bf16.gmra.mrb[0].mxu0 %v1193
          %v1272 = vpop.f32.mrb[0].mxu0
          %v1273 = vadd.f32 %v926, %v1272
          %v1274 = vpop.f32.mrb[0].mxu0
          %v1275 = vadd.f32 %v928, %v1274
          %v1276 = vpop.f32.mrb[0].mxu0
          %v1277 = vadd.f32 %v930, %v1276
          %v1278 = vpop.f32.mrb[0].mxu0
          %v1279 = vadd.f32 %v932, %v1278
          %1280 = vdwg.mxu0
          %1281 = vmatprep.subr.bf16.mxu0 %v833
          %1282 = vmatpush1.bf16.msra.mxu0 %v832
          %1283 = vmatprep.subr.bf16.mxu0 0
          %1284 = vmatpush1.bf16.msra.mxu0 0
          %1285 = vmatprep.subr.bf16.mxu0 0
          %1286 = vmatpush1.bf16.msra.mxu0 0
          %1287 = vmatprep.subr.bf16.mxu0 0
          %1288 = vmatpush1.bf16.msra.mxu0 0
          %1289 = vmatprep.subr.bf16.mxu0 0
          %1290 = vmatpush1.bf16.msra.mxu0 0
          %1291 = vmatprep.subr.bf16.mxu0 0
          %1292 = vmatpush1.bf16.msra.mxu0 0
          %1293 = vmatprep.subr.bf16.mxu0 0
          %1294 = vmatpush1.bf16.msra.mxu0 0
          %1295 = vmatprep.subr.bf16.mxu0 0
          %1296 = vmatpush1.bf16.msra.mxu0 0
          %1297 = vmatprep.subr.bf16.mxu0 0
          %1298 = vmatpush1.bf16.msra.mxu0 0
          %1299 = vmatprep.subr.bf16.mxu0 0
          %1300 = vmatpush1.bf16.msra.mxu0 0
          %1301 = vmatprep.subr.bf16.mxu0 0
          %1302 = vmatpush1.bf16.msra.mxu0 0
          %1303 = vmatprep.subr.bf16.mxu0 0
          %1304 = vmatpush1.bf16.msra.mxu0 0
          %1305 = vmatprep.subr.bf16.mxu0 0
          %1306 = vmatpush1.bf16.msra.mxu0 0
          %1307 = vmatprep.subr.bf16.mxu0 0
          %1308 = vmatpush1.bf16.msra.mxu0 0
          %1309 = vmatprep.subr.bf16.mxu0 0
          %1310 = vmatpush1.bf16.msra.mxu0 0
          %1311 = vmatprep.subr.bf16.mxu0 0
          %1312 = vmatpush1.bf16.msra.mxu0 0
          %1313 = vmatprep.mubr.bf16.mxu0 0
          %1314 = vmatmul.mubr.bf16.gmra.mrb[0].mxu0 %v1193
          %v1315 = vpop.f32.mrb[0].mxu0
          %v1316 = vadd.f32 %v969, %v1315
          %v1317 = vpop.f32.mrb[0].mxu0
          %v1318 = vadd.f32 %v971, %v1317
          %v1319 = vpop.f32.mrb[0].mxu0
          %v1320 = vadd.f32 %v973, %v1319
          %v1321 = vpop.f32.mrb[0].mxu0
          %v1322 = vadd.f32 %v975, %v1321
          %1323 = vdwg.mxu0
          %1324 = vmatprep.subr.bf16.mxu0 %v835
          %1325 = vmatpush1.bf16.msra.mxu0 %v834
          %1326 = vmatprep.subr.bf16.mxu0 0
          %1327 = vmatpush1.bf16.msra.mxu0 0
          %1328 = vmatprep.subr.bf16.mxu0 0
          %1329 = vmatpush1.bf16.msra.mxu0 0
          %1330 = vmatprep.subr.bf16.mxu0 0
          %1331 = vmatpush1.bf16.msra.mxu0 0
          %1332 = vmatprep.subr.bf16.mxu0 0
          %1333 = vmatpush1.bf16.msra.mxu0 0
          %1334 = vmatprep.subr.bf16.mxu0 0
          %1335 = vmatpush1.bf16.msra.mxu0 0
          %1336 = vmatprep.subr.bf16.mxu0 0
          %1337 = vmatpush1.bf16.msra.mxu0 0
          %1338 = vmatprep.subr.bf16.mxu0 0
          %1339 = vmatpush1.bf16.msra.mxu0 0
          %1340 = vmatprep.subr.bf16.mxu0 0
          %1341 = vmatpush1.bf16.msra.mxu0 0
          %1342 = vmatprep.subr.bf16.mxu0 0
          %1343 = vmatpush1.bf16.msra.mxu0 0
          %1344 = vmatprep.subr.bf16.mxu0 0
          %1345 = vmatpush1.bf16.msra.mxu0 0
          %1346 = vmatprep.subr.bf16.mxu0 0
          %1347 = vmatpush1.bf16.msra.mxu0 0
          %1348 = vmatprep.subr.bf16.mxu0 0
          %1349 = vmatpush1.bf16.msra.mxu0 0
          %1350 = vmatprep.subr.bf16.mxu0 0
          %1351 = vmatpush1.bf16.msra.mxu0 0
          %1352 = vmatprep.subr.bf16.mxu0 0
          %1353 = vmatpush1.bf16.msra.mxu0 0
          %1354 = vmatprep.subr.bf16.mxu0 0
          %1355 = vmatpush1.bf16.msra.mxu0 0
          %1356 = vmatprep.mubr.bf16.mxu0 0
          %1357 = vmatmul.mubr.bf16.gmra.mrb[0].mxu0 %v1193
          %v1358 = vpop.f32.mrb[0].mxu0
          %v1359 = vadd.f32 %v1012, %v1358
          %v1360 = vpop.f32.mrb[0].mxu0
          %v1361 = vadd.f32 %v1014, %v1360
          %v1362 = vpop.f32.mrb[0].mxu0
          %v1363 = vadd.f32 %v1016, %v1362
          %v1364 = vpop.f32.mrb[0].mxu0
          %v1365 = vadd.f32 %v1018, %v1364
          %1366 = vdwg.mxu0
          %1367 = vmatprep.subr.bf16.mxu0 %v837
          %1368 = vmatpush1.bf16.msra.mxu0 %v836
          %1369 = vmatprep.subr.bf16.mxu0 0
          %1370 = vmatpush1.bf16.msra.mxu0 0
          %1371 = vmatprep.subr.bf16.mxu0 0
          %1372 = vmatpush1.bf16.msra.mxu0 0
          %1373 = vmatprep.subr.bf16.mxu0 0
          %1374 = vmatpush1.bf16.msra.mxu0 0
          %1375 = vmatprep.subr.bf16.mxu0 0
          %1376 = vmatpush1.bf16.msra.mxu0 0
          %1377 = vmatprep.subr.bf16.mxu0 0
          %1378 = vmatpush1.bf16.msra.mxu0 0
          %1379 = vmatprep.subr.bf16.mxu0 0
          %1380 = vmatpush1.bf16.msra.mxu0 0
          %1381 = vmatprep.subr.bf16.mxu0 0
          %1382 = vmatpush1.bf16.msra.mxu0 0
          %1383 = vmatprep.subr.bf16.mxu0 0
          %1384 = vmatpush1.bf16.msra.mxu0 0
          %1385 = vmatprep.subr.bf16.mxu0 0
          %1386 = vmatpush1.bf16.msra.mxu0 0
          %1387 = vmatprep.subr.bf16.mxu0 0
          %1388 = vmatpush1.bf16.msra.mxu0 0
          %1389 = vmatprep.subr.bf16.mxu0 0
          %1390 = vmatpush1.bf16.msra.mxu0 0
          %1391 = vmatprep.subr.bf16.mxu0 0
          %1392 = vmatpush1.bf16.msra.mxu0 0
          %1393 = vmatprep.subr.bf16.mxu0 0
          %1394 = vmatpush1.bf16.msra.mxu0 0
          %1395 = vmatprep.subr.bf16.mxu0 0
          %1396 = vmatpush1.bf16.msra.mxu0 0
          %1397 = vmatprep.subr.bf16.mxu0 0
          %1398 = vmatpush1.bf16.msra.mxu0 0
          %1399 = vmatprep.mubr.bf16.mxu0 0
          %1400 = vmatmul.mubr.bf16.gmra.mrb[0].mxu0 %v1193
          %v1401 = vpop.f32.mrb[0].mxu0
          %v1402 = vadd.f32 %v1055, %v1401
          %v1403 = vpop.f32.mrb[0].mxu0
          %v1404 = vadd.f32 %v1057, %v1403
          %v1405 = vpop.f32.mrb[0].mxu0
          %v1406 = vadd.f32 %v1059, %v1405
          %v1407 = vpop.f32.mrb[0].mxu0
          %v1408 = vadd.f32 %v1061, %v1407
          %1409 = vdwg.mxu0
          %1410 = vmatprep.subr.bf16.mxu0 %v839
          %1411 = vmatpush1.bf16.msra.mxu0 %v838
          %1412 = vmatprep.subr.bf16.mxu0 0
          %1413 = vmatpush1.bf16.msra.mxu0 0
          %1414 = vmatprep.subr.bf16.mxu0 0
          %1415 = vmatpush1.bf16.msra.mxu0 0
          %1416 = vmatprep.subr.bf16.mxu0 0
          %1417 = vmatpush1.bf16.msra.mxu0 0
          %1418 = vmatprep.subr.bf16.mxu0 0
          %1419 = vmatpush1.bf16.msra.mxu0 0
          %1420 = vmatprep.subr.bf16.mxu0 0
          %1421 = vmatpush1.bf16.msra.mxu0 0
          %1422 = vmatprep.subr.bf16.mxu0 0
          %1423 = vmatpush1.bf16.msra.mxu0 0
          %1424 = vmatprep.subr.bf16.mxu0 0
          %1425 = vmatpush1.bf16.msra.mxu0 0
          %1426 = vmatprep.subr.bf16.mxu0 0
          %1427 = vmatpush1.bf16.msra.mxu0 0
          %1428 = vmatprep.subr.bf16.mxu0 0
          %1429 = vmatpush1.bf16.msra.mxu0 0
          %1430 = vmatprep.subr.bf16.mxu0 0
          %1431 = vmatpush1.bf16.msra.mxu0 0
          %1432 = vmatprep.subr.bf16.mxu0 0
          %1433 = vmatpush1.bf16.msra.mxu0 0
          %1434 = vmatprep.subr.bf16.mxu0 0
          %1435 = vmatpush1.bf16.msra.mxu0 0
          %1436 = vmatprep.subr.bf16.mxu0 0
          %1437 = vmatpush1.bf16.msra.mxu0 0
          %1438 = vmatprep.subr.bf16.mxu0 0
          %1439 = vmatpush1.bf16.msra.mxu0 0
          %1440 = vmatprep.subr.bf16.mxu0 0
          %1441 = vmatpush1.bf16.msra.mxu0 0
          %1442 = vmatprep.mubr.bf16.mxu0 0
          %1443 = vmatmul.mubr.bf16.gmra.mrb[0].mxu0 %v1193
          %v1444 = vpop.f32.mrb[0].mxu0
          %v1445 = vadd.f32 %v1098, %v1444
          %v1446 = vpop.f32.mrb[0].mxu0
          %v1447 = vadd.f32 %v1100, %v1446
          %v1448 = vpop.f32.mrb[0].mxu0
          %v1449 = vadd.f32 %v1102, %v1448
          %v1450 = vpop.f32.mrb[0].mxu0
          %v1451 = vadd.f32 %v1104, %v1450
          %1452 = vdwg.mxu0
          %1453 = vmatprep.subr.bf16.mxu0 %v841
          %1454 = vmatpush1.bf16.msra.mxu0 %v840
          %1455 = vmatprep.subr.bf16.mxu0 0
          %1456 = vmatpush1.bf16.msra.mxu0 0
          %1457 = vmatprep.subr.bf16.mxu0 0
          %1458 = vmatpush1.bf16.msra.mxu0 0
          %1459 = vmatprep.subr.bf16.mxu0 0
          %1460 = vmatpush1.bf16.msra.mxu0 0
          %1461 = vmatprep.subr.bf16.mxu0 0
          %1462 = vmatpush1.bf16.msra.mxu0 0
          %1463 = vmatprep.subr.bf16.mxu0 0
          %1464 = vmatpush1.bf16.msra.mxu0 0
          %1465 = vmatprep.subr.bf16.mxu0 0
          %1466 = vmatpush1.bf16.msra.mxu0 0
          %1467 = vmatprep.subr.bf16.mxu0 0
          %1468 = vmatpush1.bf16.msra.mxu0 0
          %1469 = vmatprep.subr.bf16.mxu0 0
          %1470 = vmatpush1.bf16.msra.mxu0 0
          %1471 = vmatprep.subr.bf16.mxu0 0
          %1472 = vmatpush1.bf16.msra.mxu0 0
          %1473 = vmatprep.subr.bf16.mxu0 0
          %1474 = vmatpush1.bf16.msra.mxu0 0
          %1475 = vmatprep.subr.bf16.mxu0 0
          %1476 = vmatpush1.bf16.msra.mxu0 0
          %1477 = vmatprep.subr.bf16.mxu0 0
          %1478 = vmatpush1.bf16.msra.mxu0 0
          %1479 = vmatprep.subr.bf16.mxu0 0
          %1480 = vmatpush1.bf16.msra.mxu0 0
          %1481 = vmatprep.subr.bf16.mxu0 0
          %1482 = vmatpush1.bf16.msra.mxu0 0
          %1483 = vmatprep.subr.bf16.mxu0 0
          %1484 = vmatpush1.bf16.msra.mxu0 0
          %1485 = vmatprep.mubr.bf16.mxu0 0
          %1486 = vmatmul.mubr.bf16.gmra.mrb[0].mxu0 %v1193
          %v1487 = vpop.f32.mrb[0].mxu0
          %v1488 = vadd.f32 %v1141, %v1487
          %v1489 = vpop.f32.mrb[0].mxu0
          %v1490 = vadd.f32 %v1143, %v1489
          %v1491 = vpop.f32.mrb[0].mxu0
          %v1492 = vadd.f32 %v1145, %v1491
          %v1493 = vpop.f32.mrb[0].mxu0
          %v1494 = vadd.f32 %v1147, %v1493
          %1495 = vdwg.mxu0
          %1496 = vmatprep.subr.bf16.mxu0 %v843
          %1497 = vmatpush1.bf16.msra.mxu0 %v842
          %1498 = vmatprep.subr.bf16.mxu0 0
          %1499 = vmatpush1.bf16.msra.mxu0 0
          %1500 = vmatprep.subr.bf16.mxu0 0
          %1501 = vmatpush1.bf16.msra.mxu0 0
          %1502 = vmatprep.subr.bf16.mxu0 0
          %1503 = vmatpush1.bf16.msra.mxu0 0
          %1504 = vmatprep.subr.bf16.mxu0 0
          %1505 = vmatpush1.bf16.msra.mxu0 0
          %1506 = vmatprep.subr.bf16.mxu0 0
          %1507 = vmatpush1.bf16.msra.mxu0 0
          %1508 = vmatprep.subr.bf16.mxu0 0
          %1509 = vmatpush1.bf16.msra.mxu0 0
          %1510 = vmatprep.subr.bf16.mxu0 0
          %1511 = vmatpush1.bf16.msra.mxu0 0
          %1512 = vmatprep.subr.bf16.mxu0 0
          %1513 = vmatpush1.bf16.msra.mxu0 0
          %1514 = vmatprep.subr.bf16.mxu0 0
          %1515 = vmatpush1.bf16.msra.mxu0 0
          %1516 = vmatprep.subr.bf16.mxu0 0
          %1517 = vmatpush1.bf16.msra.mxu0 0
          %1518 = vmatprep.subr.bf16.mxu0 0
          %1519 = vmatpush1.bf16.msra.mxu0 0
          %1520 = vmatprep.subr.bf16.mxu0 0
          %1521 = vmatpush1.bf16.msra.mxu0 0
          %1522 = vmatprep.subr.bf16.mxu0 0
          %1523 = vmatpush1.bf16.msra.mxu0 0
          %1524 = vmatprep.subr.bf16.mxu0 0
          %1525 = vmatpush1.bf16.msra.mxu0 0
          %1526 = vmatprep.subr.bf16.mxu0 0
          %1527 = vmatpush1.bf16.msra.mxu0 0
          %1528 = vmatprep.mubr.bf16.mxu0 0
          %1529 = vmatmul.mubr.bf16.gmra.mrb[0].mxu0 %v1193
          %v1530 = vpop.f32.mrb[0].mxu0
          %v1531 = vadd.f32 %v1184, %v1530
          %v1532 = vpop.f32.mrb[0].mxu0
          %v1533 = vadd.f32 %v1186, %v1532
          %v1534 = vpop.f32.mrb[0].mxu0
          %v1535 = vadd.f32 %v1188, %v1534
          %v1536 = vpop.f32.mrb[0].mxu0
          %v1537 = vadd.f32 %v1190, %v1536
          %1538 = vdwg.mxu0
          %v1539 = vlaneseq
          %v1540 = vshrl.u32 %v1539, 7
          %v1541 = vsub.s32 0, %v1540
          %v1542 = vrot.slane %v673, %v1541
          %v1543 = vlaneseq
          %v1544 = vshrl.u32 %v1543, 7
          %v1545 = vsub.s32 0, %v1544
          %v1546 = vrot.slane %v674, %v1545
          %v1547 = vlaneseq
          %v1548 = vshrl.u32 %v1547, 7
          %v1549 = vsub.s32 0, %v1548
          %v1550 = vrot.slane %v675, %v1549
          %v1551 = vlaneseq
          %v1552 = vshrl.u32 %v1551, 7
          %v1553 = vsub.s32 0, %v1552
          %v1554 = vrot.slane %v676, %v1553
          %v1555 = vlaneseq
          %v1556 = vshrl.u32 %v1555, 7
          %v1557 = vsub.s32 0, %v1556
          %v1558 = vrot.slane %v677, %v1557
          %v1559 = vlaneseq
          %v1560 = vshrl.u32 %v1559, 7
          %v1561 = vsub.s32 0, %v1560
          %v1562 = vrot.slane %v678, %v1561
          %v1563 = vlaneseq
          %v1564 = vshrl.u32 %v1563, 7
          %v1565 = vsub.s32 0, %v1564
          %v1566 = vrot.slane %v679, %v1565
          %v1567 = vlaneseq
          %v1568 = vshrl.u32 %v1567, 7
          %v1569 = vsub.s32 0, %v1568
          %v1570 = vrot.slane %v680, %v1569
          %v1571 = vlaneseq
          %v1572 = vshrl.u32 %v1571, 7
          %v1573 = vsub.s32 0, %v1572
          %v1574 = vrot.slane %v681, %v1573
          %v1575 = vlaneseq
          %v1576 = vshrl.u32 %v1575, 7
          %v1577 = vsub.s32 0, %v1576
          %v1578 = vrot.slane %v682, %v1577
          %v1579 = vlaneseq
          %v1580 = vshrl.u32 %v1579, 7
          %v1581 = vsub.s32 0, %v1580
          %v1582 = vrot.slane %v683, %v1581
          %v1583 = vlaneseq
          %v1584 = vshrl.u32 %v1583, 7
          %v1585 = vsub.s32 0, %v1584
          %v1586 = vrot.slane %v684, %v1585
          %v1587 = vlaneseq
          %v1588 = vshrl.u32 %v1587, 7
          %v1589 = vsub.s32 0, %v1588
          %v1590 = vrot.slane %v685, %v1589
          %v1591 = vlaneseq
          %v1592 = vshrl.u32 %v1591, 7
          %v1593 = vsub.s32 0, %v1592
          %v1594 = vrot.slane %v686, %v1593
          %v1595 = vlaneseq
          %v1596 = vshrl.u32 %v1595, 7
          %v1597 = vsub.s32 0, %v1596
          %v1598 = vrot.slane %v687, %v1597
          %v1599 = vlaneseq
          %v1600 = vshrl.u32 %v1599, 7
          %v1601 = vsub.s32 0, %v1600
          %v1602 = vrot.slane %v688, %v1601
          %vm1603 = vcmp.eq.s32.totalorder %v698, %v1542
          %vm1604 = vcmp.eq.s32.totalorder %v698, %v1546
          %vm1605 = vcmp.eq.s32.totalorder %v698, %v1550
          %vm1606 = vcmp.eq.s32.totalorder %v698, %v1554
          %vm1607 = vcmp.eq.s32.totalorder %v698, %v1558
          %vm1608 = vcmp.eq.s32.totalorder %v698, %v1562
          %vm1609 = vcmp.eq.s32.totalorder %v698, %v1566
          %vm1610 = vcmp.eq.s32.totalorder %v698, %v1570
          %vm1611 = vcmp.eq.s32.totalorder %v698, %v1574
          %vm1612 = vcmp.eq.s32.totalorder %v698, %v1578
          %vm1613 = vcmp.eq.s32.totalorder %v698, %v1582
          %vm1614 = vcmp.eq.s32.totalorder %v698, %v1586
          %vm1615 = vcmp.eq.s32.totalorder %v698, %v1590
          %vm1616 = vcmp.eq.s32.totalorder %v698, %v1594
          %vm1617 = vcmp.eq.s32.totalorder %v698, %v1598
          %vm1618 = vcmp.eq.s32.totalorder %v698, %v1602
          %vm1619 = vcmp.eq.s32.totalorder %v699, %v1542
          %vm1620 = vcmp.eq.s32.totalorder %v699, %v1546
          %vm1621 = vcmp.eq.s32.totalorder %v699, %v1550
          %vm1622 = vcmp.eq.s32.totalorder %v699, %v1554
          %vm1623 = vcmp.eq.s32.totalorder %v699, %v1558
          %vm1624 = vcmp.eq.s32.totalorder %v699, %v1562
          %vm1625 = vcmp.eq.s32.totalorder %v699, %v1566
          %vm1626 = vcmp.eq.s32.totalorder %v699, %v1570
          %vm1627 = vcmp.eq.s32.totalorder %v699, %v1574
          %vm1628 = vcmp.eq.s32.totalorder %v699, %v1578
          %vm1629 = vcmp.eq.s32.totalorder %v699, %v1582
          %vm1630 = vcmp.eq.s32.totalorder %v699, %v1586
          %vm1631 = vcmp.eq.s32.totalorder %v699, %v1590
          %vm1632 = vcmp.eq.s32.totalorder %v699, %v1594
          %vm1633 = vcmp.eq.s32.totalorder %v699, %v1598
          %vm1634 = vcmp.eq.s32.totalorder %v699, %v1602
          %v1635 = vsel %vm1603, %v1230, 0.0
          %v1636 = vsel %vm1604, %v1232, 0.0
          %v1637 = vsel %vm1605, %v1273, 0.0
          %v1638 = vsel %vm1606, %v1275, 0.0
          %v1639 = vsel %vm1607, %v1316, 0.0
          %v1640 = vsel %vm1608, %v1318, 0.0
          %v1641 = vsel %vm1609, %v1359, 0.0
          %v1642 = vsel %vm1610, %v1361, 0.0
          %v1643 = vsel %vm1611, %v1402, 0.0
          %v1644 = vsel %vm1612, %v1404, 0.0
          %v1645 = vsel %vm1613, %v1445, 0.0
          %v1646 = vsel %vm1614, %v1447, 0.0
          %v1647 = vsel %vm1615, %v1488, 0.0
          %v1648 = vsel %vm1616, %v1490, 0.0
          %v1649 = vsel %vm1617, %v1531, 0.0
          %v1650 = vsel %vm1618, %v1533, 0.0
          %v1651 = vsel %vm1619, %v1234, 0.0
          %v1652 = vsel %vm1620, %v1236, 0.0
          %v1653 = vsel %vm1621, %v1277, 0.0
          %v1654 = vsel %vm1622, %v1279, 0.0
          %v1655 = vsel %vm1623, %v1320, 0.0
          %v1656 = vsel %vm1624, %v1322, 0.0
          %v1657 = vsel %vm1625, %v1363, 0.0
          %v1658 = vsel %vm1626, %v1365, 0.0
          %v1659 = vsel %vm1627, %v1406, 0.0
          %v1660 = vsel %vm1628, %v1408, 0.0
          %v1661 = vsel %vm1629, %v1449, 0.0
          %v1662 = vsel %vm1630, %v1451, 0.0
          %v1663 = vsel %vm1631, %v1492, 0.0
          %v1664 = vsel %vm1632, %v1494, 0.0
          %v1665 = vsel %vm1633, %v1535, 0.0
          %v1666 = vsel %vm1634, %v1537, 0.0
          %v1667 = vadd.f32 %v1635, %v1651
          %v1668 = vrot.slane %v1667, 4
          %v1669 = vadd.f32 %v1667, %v1668
          %v1670 = vrot.slane %v1669, 2
          %v1671 = vadd.f32 %v1669, %v1670
          %v1672 = vrot.slane %v1671, 1
          %v1673 = vadd.f32 %v1671, %v1672
          %v1674 = vadd.f32 %v1636, %v1652
          %v1675 = vrot.slane %v1674, 4
          %v1676 = vadd.f32 %v1674, %v1675
          %v1677 = vrot.slane %v1676, 2
          %v1678 = vadd.f32 %v1676, %v1677
          %v1679 = vrot.slane %v1678, 1
          %v1680 = vadd.f32 %v1678, %v1679
          %v1681 = vadd.f32 %v1637, %v1653
          %v1682 = vrot.slane %v1681, 4
          %v1683 = vadd.f32 %v1681, %v1682
          %v1684 = vrot.slane %v1683, 2
          %v1685 = vadd.f32 %v1683, %v1684
          %v1686 = vrot.slane %v1685, 1
          %v1687 = vadd.f32 %v1685, %v1686
          %v1688 = vadd.f32 %v1638, %v1654
          %v1689 = vrot.slane %v1688, 4
          %v1690 = vadd.f32 %v1688, %v1689
          %v1691 = vrot.slane %v1690, 2
          %v1692 = vadd.f32 %v1690, %v1691
          %v1693 = vrot.slane %v1692, 1
          %v1694 = vadd.f32 %v1692, %v1693
          %v1695 = vadd.f32 %v1639, %v1655
          %v1696 = vrot.slane %v1695, 4
          %v1697 = vadd.f32 %v1695, %v1696
          %v1698 = vrot.slane %v1697, 2
          %v1699 = vadd.f32 %v1697, %v1698
          %v1700 = vrot.slane %v1699, 1
          %v1701 = vadd.f32 %v1699, %v1700
          %v1702 = vadd.f32 %v1640, %v1656
          %v1703 = vrot.slane %v1702, 4
          %v1704 = vadd.f32 %v1702, %v1703
          %v1705 = vrot.slane %v1704, 2
          %v1706 = vadd.f32 %v1704, %v1705
          %v1707 = vrot.slane %v1706, 1
          %v1708 = vadd.f32 %v1706, %v1707
          %v1709 = vadd.f32 %v1641, %v1657
          %v1710 = vrot.slane %v1709, 4
          %v1711 = vadd.f32 %v1709, %v1710
          %v1712 = vrot.slane %v1711, 2
          %v1713 = vadd.f32 %v1711, %v1712
          %v1714 = vrot.slane %v1713, 1
          %v1715 = vadd.f32 %v1713, %v1714
          %v1716 = vadd.f32 %v1642, %v1658
          %v1717 = vrot.slane %v1716, 4
          %v1718 = vadd.f32 %v1716, %v1717
          %v1719 = vrot.slane %v1718, 2
          %v1720 = vadd.f32 %v1718, %v1719
          %v1721 = vrot.slane %v1720, 1
          %v1722 = vadd.f32 %v1720, %v1721
          %v1723 = vadd.f32 %v1643, %v1659
          %v1724 = vrot.slane %v1723, 4
          %v1725 = vadd.f32 %v1723, %v1724
          %v1726 = vrot.slane %v1725, 2
          %v1727 = vadd.f32 %v1725, %v1726
          %v1728 = vrot.slane %v1727, 1
          %v1729 = vadd.f32 %v1727, %v1728
          %v1730 = vadd.f32 %v1644, %v1660
          %v1731 = vrot.slane %v1730, 4
          %v1732 = vadd.f32 %v1730, %v1731
          %v1733 = vrot.slane %v1732, 2
          %v1734 = vadd.f32 %v1732, %v1733
          %v1735 = vrot.slane %v1734, 1
          %v1736 = vadd.f32 %v1734, %v1735
          %v1737 = vadd.f32 %v1645, %v1661
          %v1738 = vrot.slane %v1737, 4
          %v1739 = vadd.f32 %v1737, %v1738
          %v1740 = vrot.slane %v1739, 2
          %v1741 = vadd.f32 %v1739, %v1740
          %v1742 = vrot.slane %v1741, 1
          %v1743 = vadd.f32 %v1741, %v1742
          %v1744 = vadd.f32 %v1646, %v1662
          %v1745 = vrot.slane %v1744, 4
          %v1746 = vadd.f32 %v1744, %v1745
          %v1747 = vrot.slane %v1746, 2
          %v1748 = vadd.f32 %v1746, %v1747
          %v1749 = vrot.slane %v1748, 1
          %v1750 = vadd.f32 %v1748, %v1749
          %v1751 = vadd.f32 %v1647, %v1663
          %v1752 = vrot.slane %v1751, 4
          %v1753 = vadd.f32 %v1751, %v1752
          %v1754 = vrot.slane %v1753, 2
          %v1755 = vadd.f32 %v1753, %v1754
          %v1756 = vrot.slane %v1755, 1
          %v1757 = vadd.f32 %v1755, %v1756
          %v1758 = vadd.f32 %v1648, %v1664
          %v1759 = vrot.slane %v1758, 4
          %v1760 = vadd.f32 %v1758, %v1759
          %v1761 = vrot.slane %v1760, 2
          %v1762 = vadd.f32 %v1760, %v1761
          %v1763 = vrot.slane %v1762, 1
          %v1764 = vadd.f32 %v1762, %v1763
          %v1765 = vadd.f32 %v1649, %v1665
          %v1766 = vrot.slane %v1765, 4
          %v1767 = vadd.f32 %v1765, %v1766
          %v1768 = vrot.slane %v1767, 2
          %v1769 = vadd.f32 %v1767, %v1768
          %v1770 = vrot.slane %v1769, 1
          %v1771 = vadd.f32 %v1769, %v1770
          %v1772 = vadd.f32 %v1650, %v1666
          %v1773 = vrot.slane %v1772, 4
          %v1774 = vadd.f32 %v1772, %v1773
          %v1775 = vrot.slane %v1774, 2
          %v1776 = vadd.f32 %v1774, %v1775
          %v1777 = vrot.slane %v1776, 1
          %v1778 = vadd.f32 %v1776, %v1777
          %v1779 = vsub.f32 0.11111111, %v1673
          %v1780 = vsub.f32 0.11111111, %v1680
          %v1781 = vsub.f32 0.11111111, %v1687
          %v1782 = vsub.f32 0.11111111, %v1694
          %v1783 = vsub.f32 0.11111111, %v1701
          %v1784 = vsub.f32 0.11111111, %v1708
          %v1785 = vsub.f32 0.11111111, %v1715
          %v1786 = vsub.f32 0.11111111, %v1722
          %v1787 = vsub.f32 0.11111111, %v1729
          %v1788 = vsub.f32 0.11111111, %v1736
          %v1789 = vsub.f32 0.11111111, %v1743
          %v1790 = vsub.f32 0.11111111, %v1750
          %v1791 = vsub.f32 0.11111111, %v1757
          %v1792 = vsub.f32 0.11111111, %v1764
          %v1793 = vsub.f32 0.11111111, %v1771
          %v1794 = vsub.f32 0.11111111, %v1778
          %v1795 = vmul.f32 %v1779, %v1779
          %v1796 = vmul.f32 %v1780, %v1780
          %v1797 = vmul.f32 %v1781, %v1781
          %v1798 = vmul.f32 %v1782, %v1782
          %v1799 = vmul.f32 %v1783, %v1783
          %v1800 = vmul.f32 %v1784, %v1784
          %v1801 = vmul.f32 %v1785, %v1785
          %v1802 = vmul.f32 %v1786, %v1786
          %v1803 = vmul.f32 %v1787, %v1787
          %v1804 = vmul.f32 %v1788, %v1788
          %v1805 = vmul.f32 %v1789, %v1789
          %v1806 = vmul.f32 %v1790, %v1790
          %v1807 = vmul.f32 %v1791, %v1791
          %v1808 = vmul.f32 %v1792, %v1792
          %v1809 = vmul.f32 %v1793, %v1793
          %v1810 = vmul.f32 %v1794, %v1794
          %v1811 = vadd.f32 %v1795, 0.0
          %v1812 = vadd.f32 %v1796, 0.0
          %v1813 = vadd.f32 %v1797, 0.0
          %v1814 = vadd.f32 %v1798, 0.0
          %v1815 = vadd.f32 %v1799, 0.0
          %v1816 = vadd.f32 %v1800, 0.0
          %v1817 = vadd.f32 %v1801, 0.0
          %v1818 = vadd.f32 %v1802, 0.0
          %v1819 = vadd.f32 %v1803, 0.0
          %v1820 = vadd.f32 %v1804, 0.0
          %v1821 = vadd.f32 %v1805, 0.0
          %v1822 = vadd.f32 %v1806, 0.0
          %v1823 = vadd.f32 %v1807, 0.0
          %v1824 = vadd.f32 %v1808, 0.0
          %v1825 = vadd.f32 %v1809, 0.0
          %v1826 = vadd.f32 %v1810, 0.0
          %v1827 = vlaneseq
          %v1828 = vshrl.u32 %v1827, 7
          %v1829 = vsub.s32 1, %v1828
          %v1830 = vrot.slane %v657, %v1829
          %v1831 = vlaneseq
          %v1832 = vshrl.u32 %v1831, 7
          %v1833 = vsub.s32 1, %v1832
          %v1834 = vrot.slane %v658, %v1833
          %v1835 = vlaneseq
          %v1836 = vshrl.u32 %v1835, 7
          %v1837 = vsub.s32 1, %v1836
          %v1838 = vrot.slane %v659, %v1837
          %v1839 = vlaneseq
          %v1840 = vshrl.u32 %v1839, 7
          %v1841 = vsub.s32 1, %v1840
          %v1842 = vrot.slane %v660, %v1841
          %v1843 = vlaneseq
          %v1844 = vshrl.u32 %v1843, 7
          %v1845 = vsub.s32 1, %v1844
          %v1846 = vrot.slane %v661, %v1845
          %v1847 = vlaneseq
          %v1848 = vshrl.u32 %v1847, 7
          %v1849 = vsub.s32 1, %v1848
          %v1850 = vrot.slane %v662, %v1849
          %v1851 = vlaneseq
          %v1852 = vshrl.u32 %v1851, 7
          %v1853 = vsub.s32 1, %v1852
          %v1854 = vrot.slane %v663, %v1853
          %v1855 = vlaneseq
          %v1856 = vshrl.u32 %v1855, 7
          %v1857 = vsub.s32 1, %v1856
          %v1858 = vrot.slane %v664, %v1857
          %v1859 = vlaneseq
          %v1860 = vshrl.u32 %v1859, 7
          %v1861 = vsub.s32 1, %v1860
          %v1862 = vrot.slane %v665, %v1861
          %v1863 = vlaneseq
          %v1864 = vshrl.u32 %v1863, 7
          %v1865 = vsub.s32 1, %v1864
          %v1866 = vrot.slane %v666, %v1865
          %v1867 = vlaneseq
          %v1868 = vshrl.u32 %v1867, 7
          %v1869 = vsub.s32 1, %v1868
          %v1870 = vrot.slane %v667, %v1869
          %v1871 = vlaneseq
          %v1872 = vshrl.u32 %v1871, 7
          %v1873 = vsub.s32 1, %v1872
          %v1874 = vrot.slane %v668, %v1873
          %v1875 = vlaneseq
          %v1876 = vshrl.u32 %v1875, 7
          %v1877 = vsub.s32 1, %v1876
          %v1878 = vrot.slane %v669, %v1877
          %v1879 = vlaneseq
          %v1880 = vshrl.u32 %v1879, 7
          %v1881 = vsub.s32 1, %v1880
          %v1882 = vrot.slane %v670, %v1881
          %v1883 = vlaneseq
          %v1884 = vshrl.u32 %v1883, 7
          %v1885 = vsub.s32 1, %v1884
          %v1886 = vrot.slane %v671, %v1885
          %v1887 = vlaneseq
          %v1888 = vshrl.u32 %v1887, 7
          %v1889 = vsub.s32 1, %v1888
          %v1890 = vrot.slane %v672, %v1889
          %vm1891 = vcmp.eq.s32.totalorder %v698, %v1830
          %vm1892 = vcmp.eq.s32.totalorder %v698, %v1834
          %vm1893 = vcmp.eq.s32.totalorder %v698, %v1838
          %vm1894 = vcmp.eq.s32.totalorder %v698, %v1842
          %vm1895 = vcmp.eq.s32.totalorder %v698, %v1846
          %vm1896 = vcmp.eq.s32.totalorder %v698, %v1850
          %vm1897 = vcmp.eq.s32.totalorder %v698, %v1854
          %vm1898 = vcmp.eq.s32.totalorder %v698, %v1858
          %vm1899 = vcmp.eq.s32.totalorder %v698, %v1862
          %vm1900 = vcmp.eq.s32.totalorder %v698, %v1866
          %vm1901 = vcmp.eq.s32.totalorder %v698, %v1870
          %vm1902 = vcmp.eq.s32.totalorder %v698, %v1874
          %vm1903 = vcmp.eq.s32.totalorder %v698, %v1878
          %vm1904 = vcmp.eq.s32.totalorder %v698, %v1882
          %vm1905 = vcmp.eq.s32.totalorder %v698, %v1886
          %vm1906 = vcmp.eq.s32.totalorder %v698, %v1890
          %vm1907 = vcmp.eq.s32.totalorder %v699, %v1830
          %vm1908 = vcmp.eq.s32.totalorder %v699, %v1834
          %vm1909 = vcmp.eq.s32.totalorder %v699, %v1838
          %vm1910 = vcmp.eq.s32.totalorder %v699, %v1842
          %vm1911 = vcmp.eq.s32.totalorder %v699, %v1846
          %vm1912 = vcmp.eq.s32.totalorder %v699, %v1850
          %vm1913 = vcmp.eq.s32.totalorder %v699, %v1854
          %vm1914 = vcmp.eq.s32.totalorder %v699, %v1858
          %vm1915 = vcmp.eq.s32.totalorder %v699, %v1862
          %vm1916 = vcmp.eq.s32.totalorder %v699, %v1866
          %vm1917 = vcmp.eq.s32.totalorder %v699, %v1870
          %vm1918 = vcmp.eq.s32.totalorder %v699, %v1874
          %vm1919 = vcmp.eq.s32.totalorder %v699, %v1878
          %vm1920 = vcmp.eq.s32.totalorder %v699, %v1882
          %vm1921 = vcmp.eq.s32.totalorder %v699, %v1886
          %vm1922 = vcmp.eq.s32.totalorder %v699, %v1890
          %v1923 = vsel %vm1891, 1.0, 0.0
          %v1924 = vsel %vm1892, 1.0, 0.0
          %v1925 = vsel %vm1893, 1.0, 0.0
          %v1926 = vsel %vm1894, 1.0, 0.0
          %v1927 = vsel %vm1895, 1.0, 0.0
          %v1928 = vsel %vm1896, 1.0, 0.0
          %v1929 = vsel %vm1897, 1.0, 0.0
          %v1930 = vsel %vm1898, 1.0, 0.0
          %v1931 = vsel %vm1899, 1.0, 0.0
          %v1932 = vsel %vm1900, 1.0, 0.0
          %v1933 = vsel %vm1901, 1.0, 0.0
          %v1934 = vsel %vm1902, 1.0, 0.0
          %v1935 = vsel %vm1903, 1.0, 0.0
          %v1936 = vsel %vm1904, 1.0, 0.0
          %v1937 = vsel %vm1905, 1.0, 0.0
          %v1938 = vsel %vm1906, 1.0, 0.0
          %v1939 = vsel %vm1907, 1.0, 0.0
          %v1940 = vsel %vm1908, 1.0, 0.0
          %v1941 = vsel %vm1909, 1.0, 0.0
          %v1942 = vsel %vm1910, 1.0, 0.0
          %v1943 = vsel %vm1911, 1.0, 0.0
          %v1944 = vsel %vm1912, 1.0, 0.0
          %v1945 = vsel %vm1913, 1.0, 0.0
          %v1946 = vsel %vm1914, 1.0, 0.0
          %v1947 = vsel %vm1915, 1.0, 0.0
          %v1948 = vsel %vm1916, 1.0, 0.0
          %v1949 = vsel %vm1917, 1.0, 0.0
          %v1950 = vsel %vm1918, 1.0, 0.0
          %v1951 = vsel %vm1919, 1.0, 0.0
          %v1952 = vsel %vm1920, 1.0, 0.0
          %v1953 = vsel %vm1921, 1.0, 0.0
          %v1954 = vsel %vm1922, 1.0, 0.0
          %v1955 = vpack.c.bf16 %v1939, %v1923
          %v1956 = vpack.c.bf16 %v1940, %v1924
          %v1957 = vpack.c.bf16 %v1941, %v1925
          %v1958 = vpack.c.bf16 %v1942, %v1926
          %v1959 = vpack.c.bf16 %v1943, %v1927
          %v1960 = vpack.c.bf16 %v1944, %v1928
          %v1961 = vpack.c.bf16 %v1945, %v1929
          %v1962 = vpack.c.bf16 %v1946, %v1930
          %v1963 = vpack.c.bf16 %v1947, %v1931
          %v1964 = vpack.c.bf16 %v1948, %v1932
          %v1965 = vpack.c.bf16 %v1949, %v1933
          %v1966 = vpack.c.bf16 %v1950, %v1934
          %v1967 = vpack.c.bf16 %v1951, %v1935
          %v1968 = vpack.c.bf16 %v1952, %v1936
          %v1969 = vpack.c.bf16 %v1953, %v1937
          %v1970 = vpack.c.bf16 %v1954, %v1938
          %1971 = vmatprep.subr.bf16.mxu0 %v1956
          %1972 = vmatpush1.bf16.msra.mxu0 %v1955
          %1973 = vmatprep.subr.bf16.mxu0 0
          %1974 = vmatpush1.bf16.msra.mxu0 0
          %1975 = vmatprep.subr.bf16.mxu0 0
          %1976 = vmatpush1.bf16.msra.mxu0 0
          %1977 = vmatprep.subr.bf16.mxu0 0
          %1978 = vmatpush1.bf16.msra.mxu0 0
          %1979 = vmatprep.subr.bf16.mxu0 0
          %1980 = vmatpush1.bf16.msra.mxu0 0
          %1981 = vmatprep.subr.bf16.mxu0 0
          %1982 = vmatpush1.bf16.msra.mxu0 0
          %1983 = vmatprep.subr.bf16.mxu0 0
          %1984 = vmatpush1.bf16.msra.mxu0 0
          %1985 = vmatprep.subr.bf16.mxu0 0
          %1986 = vmatpush1.bf16.msra.mxu0 0
          %1987 = vmatprep.subr.bf16.mxu0 0
          %1988 = vmatpush1.bf16.msra.mxu0 0
          %1989 = vmatprep.subr.bf16.mxu0 0
          %1990 = vmatpush1.bf16.msra.mxu0 0
          %1991 = vmatprep.subr.bf16.mxu0 0
          %1992 = vmatpush1.bf16.msra.mxu0 0
          %1993 = vmatprep.subr.bf16.mxu0 0
          %1994 = vmatpush1.bf16.msra.mxu0 0
          %1995 = vmatprep.subr.bf16.mxu0 0
          %1996 = vmatpush1.bf16.msra.mxu0 0
          %1997 = vmatprep.subr.bf16.mxu0 0
          %1998 = vmatpush1.bf16.msra.mxu0 0
          %1999 = vmatprep.subr.bf16.mxu0 0
          %2000 = vmatpush1.bf16.msra.mxu0 0
          %2001 = vmatprep.subr.bf16.mxu0 0
          %2002 = vmatpush1.bf16.msra.mxu0 0
          %2003 = vmatprep.mubr.bf16.mxu0 0
          %2004 = vmatmul.mubr.bf16.gmra.mrb[0].mxu0 %v846
          %v2005 = vpop.f32.mrb[0].mxu0
          %v2006 = vadd.f32 0.0, %v2005
          %v2007 = vpop.f32.mrb[0].mxu0
          %v2008 = vadd.f32 0.0, %v2007
          %v2009 = vpop.f32.mrb[0].mxu0
          %v2010 = vadd.f32 0.0, %v2009
          %v2011 = vpop.f32.mrb[0].mxu0
          %v2012 = vadd.f32 0.0, %v2011
          %2013 = vdwg.mxu0
          %2014 = vmatprep.subr.bf16.mxu0 %v1958
          %2015 = vmatpush1.bf16.msra.mxu0 %v1957
          %2016 = vmatprep.subr.bf16.mxu0 0
          %2017 = vmatpush1.bf16.msra.mxu0 0
          %2018 = vmatprep.subr.bf16.mxu0 0
          %2019 = vmatpush1.bf16.msra.mxu0 0
          %2020 = vmatprep.subr.bf16.mxu0 0
          %2021 = vmatpush1.bf16.msra.mxu0 0
          %2022 = vmatprep.subr.bf16.mxu0 0
          %2023 = vmatpush1.bf16.msra.mxu0 0
          %2024 = vmatprep.subr.bf16.mxu0 0
          %2025 = vmatpush1.bf16.msra.mxu0 0
          %2026 = vmatprep.subr.bf16.mxu0 0
          %2027 = vmatpush1.bf16.msra.mxu0 0
          %2028 = vmatprep.subr.bf16.mxu0 0
          %2029 = vmatpush1.bf16.msra.mxu0 0
          %2030 = vmatprep.subr.bf16.mxu0 0
          %2031 = vmatpush1.bf16.msra.mxu0 0
          %2032 = vmatprep.subr.bf16.mxu0 0
          %2033 = vmatpush1.bf16.msra.mxu0 0
          %2034 = vmatprep.subr.bf16.mxu0 0
          %2035 = vmatpush1.bf16.msra.mxu0 0
          %2036 = vmatprep.subr.bf16.mxu0 0
          %2037 = vmatpush1.bf16.msra.mxu0 0
          %2038 = vmatprep.subr.bf16.mxu0 0
          %2039 = vmatpush1.bf16.msra.mxu0 0
          %2040 = vmatprep.subr.bf16.mxu0 0
          %2041 = vmatpush1.bf16.msra.mxu0 0
          %2042 = vmatprep.subr.bf16.mxu0 0
          %2043 = vmatpush1.bf16.msra.mxu0 0
          %2044 = vmatprep.subr.bf16.mxu0 0
          %2045 = vmatpush1.bf16.msra.mxu0 0
          %2046 = vmatprep.mubr.bf16.mxu0 0
          %2047 = vmatmul.mubr.bf16.gmra.mrb[0].mxu0 %v846
          %v2048 = vpop.f32.mrb[0].mxu0
          %v2049 = vadd.f32 0.0, %v2048
          %v2050 = vpop.f32.mrb[0].mxu0
          %v2051 = vadd.f32 0.0, %v2050
          %v2052 = vpop.f32.mrb[0].mxu0
          %v2053 = vadd.f32 0.0, %v2052
          %v2054 = vpop.f32.mrb[0].mxu0
          %v2055 = vadd.f32 0.0, %v2054
          %2056 = vdwg.mxu0
          %2057 = vmatprep.subr.bf16.mxu0 %v1960
          %2058 = vmatpush1.bf16.msra.mxu0 %v1959
          %2059 = vmatprep.subr.bf16.mxu0 0
          %2060 = vmatpush1.bf16.msra.mxu0 0
          %2061 = vmatprep.subr.bf16.mxu0 0
          %2062 = vmatpush1.bf16.msra.mxu0 0
          %2063 = vmatprep.subr.bf16.mxu0 0
          %2064 = vmatpush1.bf16.msra.mxu0 0
          %2065 = vmatprep.subr.bf16.mxu0 0
          %2066 = vmatpush1.bf16.msra.mxu0 0
          %2067 = vmatprep.subr.bf16.mxu0 0
          %2068 = vmatpush1.bf16.msra.mxu0 0
          %2069 = vmatprep.subr.bf16.mxu0 0
          %2070 = vmatpush1.bf16.msra.mxu0 0
          %2071 = vmatprep.subr.bf16.mxu0 0
          %2072 = vmatpush1.bf16.msra.mxu0 0
          %2073 = vmatprep.subr.bf16.mxu0 0
          %2074 = vmatpush1.bf16.msra.mxu0 0
          %2075 = vmatprep.subr.bf16.mxu0 0
          %2076 = vmatpush1.bf16.msra.mxu0 0
          %2077 = vmatprep.subr.bf16.mxu0 0
          %2078 = vmatpush1.bf16.msra.mxu0 0
          %2079 = vmatprep.subr.bf16.mxu0 0
          %2080 = vmatpush1.bf16.msra.mxu0 0
          %2081 = vmatprep.subr.bf16.mxu0 0
          %2082 = vmatpush1.bf16.msra.mxu0 0
          %2083 = vmatprep.subr.bf16.mxu0 0
          %2084 = vmatpush1.bf16.msra.mxu0 0
          %2085 = vmatprep.subr.bf16.mxu0 0
          %2086 = vmatpush1.bf16.msra.mxu0 0
          %2087 = vmatprep.subr.bf16.mxu0 0
          %2088 = vmatpush1.bf16.msra.mxu0 0
          %2089 = vmatprep.mubr.bf16.mxu0 0
          %2090 = vmatmul.mubr.bf16.gmra.mrb[0].mxu0 %v846
          %v2091 = vpop.f32.mrb[0].mxu0
          %v2092 = vadd.f32 0.0, %v2091
          %v2093 = vpop.f32.mrb[0].mxu0
          %v2094 = vadd.f32 0.0, %v2093
          %v2095 = vpop.f32.mrb[0].mxu0
          %v2096 = vadd.f32 0.0, %v2095
          %v2097 = vpop.f32.mrb[0].mxu0
          %v2098 = vadd.f32 0.0, %v2097
          %2099 = vdwg.mxu0
          %2100 = vmatprep.subr.bf16.mxu0 %v1962
          %2101 = vmatpush1.bf16.msra.mxu0 %v1961
          %2102 = vmatprep.subr.bf16.mxu0 0
          %2103 = vmatpush1.bf16.msra.mxu0 0
          %2104 = vmatprep.subr.bf16.mxu0 0
          %2105 = vmatpush1.bf16.msra.mxu0 0
          %2106 = vmatprep.subr.bf16.mxu0 0
          %2107 = vmatpush1.bf16.msra.mxu0 0
          %2108 = vmatprep.subr.bf16.mxu0 0
          %2109 = vmatpush1.bf16.msra.mxu0 0
          %2110 = vmatprep.subr.bf16.mxu0 0
          %2111 = vmatpush1.bf16.msra.mxu0 0
          %2112 = vmatprep.subr.bf16.mxu0 0
          %2113 = vmatpush1.bf16.msra.mxu0 0
          %2114 = vmatprep.subr.bf16.mxu0 0
          %2115 = vmatpush1.bf16.msra.mxu0 0
          %2116 = vmatprep.subr.bf16.mxu0 0
          %2117 = vmatpush1.bf16.msra.mxu0 0
          %2118 = vmatprep.subr.bf16.mxu0 0
          %2119 = vmatpush1.bf16.msra.mxu0 0
          %2120 = vmatprep.subr.bf16.mxu0 0
          %2121 = vmatpush1.bf16.msra.mxu0 0
          %2122 = vmatprep.subr.bf16.mxu0 0
          %2123 = vmatpush1.bf16.msra.mxu0 0
          %2124 = vmatprep.subr.bf16.mxu0 0
          %2125 = vmatpush1.bf16.msra.mxu0 0
          %2126 = vmatprep.subr.bf16.mxu0 0
          %2127 = vmatpush1.bf16.msra.mxu0 0
          %2128 = vmatprep.subr.bf16.mxu0 0
          %2129 = vmatpush1.bf16.msra.mxu0 0
          %2130 = vmatprep.subr.bf16.mxu0 0
          %2131 = vmatpush1.bf16.msra.mxu0 0
          %2132 = vmatprep.mubr.bf16.mxu0 0
          %2133 = vmatmul.mubr.bf16.gmra.mrb[0].mxu0 %v846
          %v2134 = vpop.f32.mrb[0].mxu0
          %v2135 = vadd.f32 0.0, %v2134
          %v2136 = vpop.f32.mrb[0].mxu0
          %v2137 = vadd.f32 0.0, %v2136
          %v2138 = vpop.f32.mrb[0].mxu0
          %v2139 = vadd.f32 0.0, %v2138
          %v2140 = vpop.f32.mrb[0].mxu0
          %v2141 = vadd.f32 0.0, %v2140
          %2142 = vdwg.mxu0
          %2143 = vmatprep.subr.bf16.mxu0 %v1964
          %2144 = vmatpush1.bf16.msra.mxu0 %v1963
          %2145 = vmatprep.subr.bf16.mxu0 0
          %2146 = vmatpush1.bf16.msra.mxu0 0
          %2147 = vmatprep.subr.bf16.mxu0 0
          %2148 = vmatpush1.bf16.msra.mxu0 0
          %2149 = vmatprep.subr.bf16.mxu0 0
          %2150 = vmatpush1.bf16.msra.mxu0 0
          %2151 = vmatprep.subr.bf16.mxu0 0
          %2152 = vmatpush1.bf16.msra.mxu0 0
          %2153 = vmatprep.subr.bf16.mxu0 0
          %2154 = vmatpush1.bf16.msra.mxu0 0
          %2155 = vmatprep.subr.bf16.mxu0 0
          %2156 = vmatpush1.bf16.msra.mxu0 0
          %2157 = vmatprep.subr.bf16.mxu0 0
          %2158 = vmatpush1.bf16.msra.mxu0 0
          %2159 = vmatprep.subr.bf16.mxu0 0
          %2160 = vmatpush1.bf16.msra.mxu0 0
          %2161 = vmatprep.subr.bf16.mxu0 0
          %2162 = vmatpush1.bf16.msra.mxu0 0
          %2163 = vmatprep.subr.bf16.mxu0 0
          %2164 = vmatpush1.bf16.msra.mxu0 0
          %2165 = vmatprep.subr.bf16.mxu0 0
          %2166 = vmatpush1.bf16.msra.mxu0 0
          %2167 = vmatprep.subr.bf16.mxu0 0
          %2168 = vmatpush1.bf16.msra.mxu0 0
          %2169 = vmatprep.subr.bf16.mxu0 0
          %2170 = vmatpush1.bf16.msra.mxu0 0
          %2171 = vmatprep.subr.bf16.mxu0 0
          %2172 = vmatpush1.bf16.msra.mxu0 0
          %2173 = vmatprep.subr.bf16.mxu0 0
          %2174 = vmatpush1.bf16.msra.mxu0 0
          %2175 = vmatprep.mubr.bf16.mxu0 0
          %2176 = vmatmul.mubr.bf16.gmra.mrb[0].mxu0 %v846
          %v2177 = vpop.f32.mrb[0].mxu0
          %v2178 = vadd.f32 0.0, %v2177
          %v2179 = vpop.f32.mrb[0].mxu0
          %v2180 = vadd.f32 0.0, %v2179
          %v2181 = vpop.f32.mrb[0].mxu0
          %v2182 = vadd.f32 0.0, %v2181
          %v2183 = vpop.f32.mrb[0].mxu0
          %v2184 = vadd.f32 0.0, %v2183
          %2185 = vdwg.mxu0
          %2186 = vmatprep.subr.bf16.mxu0 %v1966
          %2187 = vmatpush1.bf16.msra.mxu0 %v1965
          %2188 = vmatprep.subr.bf16.mxu0 0
          %2189 = vmatpush1.bf16.msra.mxu0 0
          %2190 = vmatprep.subr.bf16.mxu0 0
          %2191 = vmatpush1.bf16.msra.mxu0 0
          %2192 = vmatprep.subr.bf16.mxu0 0
          %2193 = vmatpush1.bf16.msra.mxu0 0
          %2194 = vmatprep.subr.bf16.mxu0 0
          %2195 = vmatpush1.bf16.msra.mxu0 0
          %2196 = vmatprep.subr.bf16.mxu0 0
          %2197 = vmatpush1.bf16.msra.mxu0 0
          %2198 = vmatprep.subr.bf16.mxu0 0
          %2199 = vmatpush1.bf16.msra.mxu0 0
          %2200 = vmatprep.subr.bf16.mxu0 0
          %2201 = vmatpush1.bf16.msra.mxu0 0
          %2202 = vmatprep.subr.bf16.mxu0 0
          %2203 = vmatpush1.bf16.msra.mxu0 0
          %2204 = vmatprep.subr.bf16.mxu0 0
          %2205 = vmatpush1.bf16.msra.mxu0 0
          %2206 = vmatprep.subr.bf16.mxu0 0
          %2207 = vmatpush1.bf16.msra.mxu0 0
          %2208 = vmatprep.subr.bf16.mxu0 0
          %2209 = vmatpush1.bf16.msra.mxu0 0
          %2210 = vmatprep.subr.bf16.mxu0 0
          %2211 = vmatpush1.bf16.msra.mxu0 0
          %2212 = vmatprep.subr.bf16.mxu0 0
          %2213 = vmatpush1.bf16.msra.mxu0 0
          %2214 = vmatprep.subr.bf16.mxu0 0
          %2215 = vmatpush1.bf16.msra.mxu0 0
          %2216 = vmatprep.subr.bf16.mxu0 0
          %2217 = vmatpush1.bf16.msra.mxu0 0
          %2218 = vmatprep.mubr.bf16.mxu0 0
          %2219 = vmatmul.mubr.bf16.gmra.mrb[0].mxu0 %v846
          %v2220 = vpop.f32.mrb[0].mxu0
          %v2221 = vadd.f32 0.0, %v2220
          %v2222 = vpop.f32.mrb[0].mxu0
          %v2223 = vadd.f32 0.0, %v2222
          %v2224 = vpop.f32.mrb[0].mxu0
          %v2225 = vadd.f32 0.0, %v2224
          %v2226 = vpop.f32.mrb[0].mxu0
          %v2227 = vadd.f32 0.0, %v2226
          %2228 = vdwg.mxu0
          %2229 = vmatprep.subr.bf16.mxu0 %v1968
          %2230 = vmatpush1.bf16.msra.mxu0 %v1967
          %2231 = vmatprep.subr.bf16.mxu0 0
          %2232 = vmatpush1.bf16.msra.mxu0 0
          %2233 = vmatprep.subr.bf16.mxu0 0
          %2234 = vmatpush1.bf16.msra.mxu0 0
          %2235 = vmatprep.subr.bf16.mxu0 0
          %2236 = vmatpush1.bf16.msra.mxu0 0
          %2237 = vmatprep.subr.bf16.mxu0 0
          %2238 = vmatpush1.bf16.msra.mxu0 0
          %2239 = vmatprep.subr.bf16.mxu0 0
          %2240 = vmatpush1.bf16.msra.mxu0 0
          %2241 = vmatprep.subr.bf16.mxu0 0
          %2242 = vmatpush1.bf16.msra.mxu0 0
          %2243 = vmatprep.subr.bf16.mxu0 0
          %2244 = vmatpush1.bf16.msra.mxu0 0
          %2245 = vmatprep.subr.bf16.mxu0 0
          %2246 = vmatpush1.bf16.msra.mxu0 0
          %2247 = vmatprep.subr.bf16.mxu0 0
          %2248 = vmatpush1.bf16.msra.mxu0 0
          %2249 = vmatprep.subr.bf16.mxu0 0
          %2250 = vmatpush1.bf16.msra.mxu0 0
          %2251 = vmatprep.subr.bf16.mxu0 0
          %2252 = vmatpush1.bf16.msra.mxu0 0
          %2253 = vmatprep.subr.bf16.mxu0 0
          %2254 = vmatpush1.bf16.msra.mxu0 0
          %2255 = vmatprep.subr.bf16.mxu0 0
          %2256 = vmatpush1.bf16.msra.mxu0 0
          %2257 = vmatprep.subr.bf16.mxu0 0
          %2258 = vmatpush1.bf16.msra.mxu0 0
          %2259 = vmatprep.subr.bf16.mxu0 0
          %2260 = vmatpush1.bf16.msra.mxu0 0
          %2261 = vmatprep.mubr.bf16.mxu0 0
          %2262 = vmatmul.mubr.bf16.gmra.mrb[0].mxu0 %v846
          %v2263 = vpop.f32.mrb[0].mxu0
          %v2264 = vadd.f32 0.0, %v2263
          %v2265 = vpop.f32.mrb[0].mxu0
          %v2266 = vadd.f32 0.0, %v2265
          %v2267 = vpop.f32.mrb[0].mxu0
          %v2268 = vadd.f32 0.0, %v2267
          %v2269 = vpop.f32.mrb[0].mxu0
          %v2270 = vadd.f32 0.0, %v2269
          %2271 = vdwg.mxu0
          %2272 = vmatprep.subr.bf16.mxu0 %v1970
          %2273 = vmatpush1.bf16.msra.mxu0 %v1969
          %2274 = vmatprep.subr.bf16.mxu0 0
          %2275 = vmatpush1.bf16.msra.mxu0 0
          %2276 = vmatprep.subr.bf16.mxu0 0
          %2277 = vmatpush1.bf16.msra.mxu0 0
          %2278 = vmatprep.subr.bf16.mxu0 0
          %2279 = vmatpush1.bf16.msra.mxu0 0
          %2280 = vmatprep.subr.bf16.mxu0 0
          %2281 = vmatpush1.bf16.msra.mxu0 0
          %2282 = vmatprep.subr.bf16.mxu0 0
          %2283 = vmatpush1.bf16.msra.mxu0 0
          %2284 = vmatprep.subr.bf16.mxu0 0
          %2285 = vmatpush1.bf16.msra.mxu0 0
          %2286 = vmatprep.subr.bf16.mxu0 0
          %2287 = vmatpush1.bf16.msra.mxu0 0
          %2288 = vmatprep.subr.bf16.mxu0 0
          %2289 = vmatpush1.bf16.msra.mxu0 0
          %2290 = vmatprep.subr.bf16.mxu0 0
          %2291 = vmatpush1.bf16.msra.mxu0 0
          %2292 = vmatprep.subr.bf16.mxu0 0
          %2293 = vmatpush1.bf16.msra.mxu0 0
          %2294 = vmatprep.subr.bf16.mxu0 0
          %2295 = vmatpush1.bf16.msra.mxu0 0
          %2296 = vmatprep.subr.bf16.mxu0 0
          %2297 = vmatpush1.bf16.msra.mxu0 0
          %2298 = vmatprep.subr.bf16.mxu0 0
          %2299 = vmatpush1.bf16.msra.mxu0 0
          %2300 = vmatprep.subr.bf16.mxu0 0
          %2301 = vmatpush1.bf16.msra.mxu0 0
          %2302 = vmatprep.subr.bf16.mxu0 0
          %2303 = vmatpush1.bf16.msra.mxu0 0
          %2304 = vmatprep.mubr.bf16.mxu0 0
          %2305 = vmatmul.mubr.bf16.gmra.mrb[0].mxu0 %v846
          %v2306 = vpop.f32.mrb[0].mxu0
          %v2307 = vadd.f32 0.0, %v2306
          %v2308 = vpop.f32.mrb[0].mxu0
          %v2309 = vadd.f32 0.0, %v2308
          %v2310 = vpop.f32.mrb[0].mxu0
          %v2311 = vadd.f32 0.0, %v2310
          %v2312 = vpop.f32.mrb[0].mxu0
          %v2313 = vadd.f32 0.0, %v2312
          %2314 = vdwg.mxu0
          %2315 = vmatprep.subr.bf16.mxu0 %v1956
          %2316 = vmatpush1.bf16.msra.mxu0 %v1955
          %2317 = vmatprep.subr.bf16.mxu0 0
          %2318 = vmatpush1.bf16.msra.mxu0 0
          %2319 = vmatprep.subr.bf16.mxu0 0
          %2320 = vmatpush1.bf16.msra.mxu0 0
          %2321 = vmatprep.subr.bf16.mxu0 0
          %2322 = vmatpush1.bf16.msra.mxu0 0
          %2323 = vmatprep.subr.bf16.mxu0 0
          %2324 = vmatpush1.bf16.msra.mxu0 0
          %2325 = vmatprep.subr.bf16.mxu0 0
          %2326 = vmatpush1.bf16.msra.mxu0 0
          %2327 = vmatprep.subr.bf16.mxu0 0
          %2328 = vmatpush1.bf16.msra.mxu0 0
          %2329 = vmatprep.subr.bf16.mxu0 0
          %2330 = vmatpush1.bf16.msra.mxu0 0
          %2331 = vmatprep.subr.bf16.mxu0 0
          %2332 = vmatpush1.bf16.msra.mxu0 0
          %2333 = vmatprep.subr.bf16.mxu0 0
          %2334 = vmatpush1.bf16.msra.mxu0 0
          %2335 = vmatprep.subr.bf16.mxu0 0
          %2336 = vmatpush1.bf16.msra.mxu0 0
          %2337 = vmatprep.subr.bf16.mxu0 0
          %2338 = vmatpush1.bf16.msra.mxu0 0
          %2339 = vmatprep.subr.bf16.mxu0 0
          %2340 = vmatpush1.bf16.msra.mxu0 0
          %2341 = vmatprep.subr.bf16.mxu0 0
          %2342 = vmatpush1.bf16.msra.mxu0 0
          %2343 = vmatprep.subr.bf16.mxu0 0
          %2344 = vmatpush1.bf16.msra.mxu0 0
          %2345 = vmatprep.subr.bf16.mxu0 0
          %2346 = vmatpush1.bf16.msra.mxu0 0
          %2347 = vmatprep.mubr.bf16.mxu0 0
          %2348 = vmatmul.mubr.bf16.gmra.mrb[0].mxu0 %v1193
          %v2349 = vpop.f32.mrb[0].mxu0
          %v2350 = vadd.f32 %v2006, %v2349
          %v2351 = vpop.f32.mrb[0].mxu0
          %v2352 = vadd.f32 %v2008, %v2351
          %v2353 = vpop.f32.mrb[0].mxu0
          %v2354 = vadd.f32 %v2010, %v2353
          %v2355 = vpop.f32.mrb[0].mxu0
          %v2356 = vadd.f32 %v2012, %v2355
          %2357 = vdwg.mxu0
          %2358 = vmatprep.subr.bf16.mxu0 %v1958
          %2359 = vmatpush1.bf16.msra.mxu0 %v1957
          %2360 = vmatprep.subr.bf16.mxu0 0
          %2361 = vmatpush1.bf16.msra.mxu0 0
          %2362 = vmatprep.subr.bf16.mxu0 0
          %2363 = vmatpush1.bf16.msra.mxu0 0
          %2364 = vmatprep.subr.bf16.mxu0 0
          %2365 = vmatpush1.bf16.msra.mxu0 0
          %2366 = vmatprep.subr.bf16.mxu0 0
          %2367 = vmatpush1.bf16.msra.mxu0 0
          %2368 = vmatprep.subr.bf16.mxu0 0
          %2369 = vmatpush1.bf16.msra.mxu0 0
          %2370 = vmatprep.subr.bf16.mxu0 0
          %2371 = vmatpush1.bf16.msra.mxu0 0
          %2372 = vmatprep.subr.bf16.mxu0 0
          %2373 = vmatpush1.bf16.msra.mxu0 0
          %2374 = vmatprep.subr.bf16.mxu0 0
          %2375 = vmatpush1.bf16.msra.mxu0 0
          %2376 = vmatprep.subr.bf16.mxu0 0
          %2377 = vmatpush1.bf16.msra.mxu0 0
          %2378 = vmatprep.subr.bf16.mxu0 0
          %2379 = vmatpush1.bf16.msra.mxu0 0
          %2380 = vmatprep.subr.bf16.mxu0 0
          %2381 = vmatpush1.bf16.msra.mxu0 0
          %2382 = vmatprep.subr.bf16.mxu0 0
          %2383 = vmatpush1.bf16.msra.mxu0 0
          %2384 = vmatprep.subr.bf16.mxu0 0
          %2385 = vmatpush1.bf16.msra.mxu0 0
          %2386 = vmatprep.subr.bf16.mxu0 0
          %2387 = vmatpush1.bf16.msra.mxu0 0
          %2388 = vmatprep.subr.bf16.mxu0 0
          %2389 = vmatpush1.bf16.msra.mxu0 0
          %2390 = vmatprep.mubr.bf16.mxu0 0
          %2391 = vmatmul.mubr.bf16.gmra.mrb[0].mxu0 %v1193
          %v2392 = vpop.f32.mrb[0].mxu0
          %v2393 = vadd.f32 %v2049, %v2392
          %v2394 = vpop.f32.mrb[0].mxu0
          %v2395 = vadd.f32 %v2051, %v2394
          %v2396 = vpop.f32.mrb[0].mxu0
          %v2397 = vadd.f32 %v2053, %v2396
          %v2398 = vpop.f32.mrb[0].mxu0
          %v2399 = vadd.f32 %v2055, %v2398
          %2400 = vdwg.mxu0
          %2401 = vmatprep.subr.bf16.mxu0 %v1960
          %2402 = vmatpush1.bf16.msra.mxu0 %v1959
          %2403 = vmatprep.subr.bf16.mxu0 0
          %2404 = vmatpush1.bf16.msra.mxu0 0
          %2405 = vmatprep.subr.bf16.mxu0 0
          %2406 = vmatpush1.bf16.msra.mxu0 0
          %2407 = vmatprep.subr.bf16.mxu0 0
          %2408 = vmatpush1.bf16.msra.mxu0 0
          %2409 = vmatprep.subr.bf16.mxu0 0
          %2410 = vmatpush1.bf16.msra.mxu0 0
          %2411 = vmatprep.subr.bf16.mxu0 0
          %2412 = vmatpush1.bf16.msra.mxu0 0
          %2413 = vmatprep.subr.bf16.mxu0 0
          %2414 = vmatpush1.bf16.msra.mxu0 0
          %2415 = vmatprep.subr.bf16.mxu0 0
          %2416 = vmatpush1.bf16.msra.mxu0 0
          %2417 = vmatprep.subr.bf16.mxu0 0
          %2418 = vmatpush1.bf16.msra.mxu0 0
          %2419 = vmatprep.subr.bf16.mxu0 0
          %2420 = vmatpush1.bf16.msra.mxu0 0
          %2421 = vmatprep.subr.bf16.mxu0 0
          %2422 = vmatpush1.bf16.msra.mxu0 0
          %2423 = vmatprep.subr.bf16.mxu0 0
          %2424 = vmatpush1.bf16.msra.mxu0 0
          %2425 = vmatprep.subr.bf16.mxu0 0
          %2426 = vmatpush1.bf16.msra.mxu0 0
          %2427 = vmatprep.subr.bf16.mxu0 0
          %2428 = vmatpush1.bf16.msra.mxu0 0
          %2429 = vmatprep.subr.bf16.mxu0 0
          %2430 = vmatpush1.bf16.msra.mxu0 0
          %2431 = vmatprep.subr.bf16.mxu0 0
          %2432 = vmatpush1.bf16.msra.mxu0 0
          %2433 = vmatprep.mubr.bf16.mxu0 0
          %2434 = vmatmul.mubr.bf16.gmra.mrb[0].mxu0 %v1193
          %v2435 = vpop.f32.mrb[0].mxu0
          %v2436 = vadd.f32 %v2092, %v2435
          %v2437 = vpop.f32.mrb[0].mxu0
          %v2438 = vadd.f32 %v2094, %v2437
          %v2439 = vpop.f32.mrb[0].mxu0
          %v2440 = vadd.f32 %v2096, %v2439
          %v2441 = vpop.f32.mrb[0].mxu0
          %v2442 = vadd.f32 %v2098, %v2441
          %2443 = vdwg.mxu0
          %2444 = vmatprep.subr.bf16.mxu0 %v1962
          %2445 = vmatpush1.bf16.msra.mxu0 %v1961
          %2446 = vmatprep.subr.bf16.mxu0 0
          %2447 = vmatpush1.bf16.msra.mxu0 0
          %2448 = vmatprep.subr.bf16.mxu0 0
          %2449 = vmatpush1.bf16.msra.mxu0 0
          %2450 = vmatprep.subr.bf16.mxu0 0
          %2451 = vmatpush1.bf16.msra.mxu0 0
          %2452 = vmatprep.subr.bf16.mxu0 0
          %2453 = vmatpush1.bf16.msra.mxu0 0
          %2454 = vmatprep.subr.bf16.mxu0 0
          %2455 = vmatpush1.bf16.msra.mxu0 0
          %2456 = vmatprep.subr.bf16.mxu0 0
          %2457 = vmatpush1.bf16.msra.mxu0 0
          %2458 = vmatprep.subr.bf16.mxu0 0
          %2459 = vmatpush1.bf16.msra.mxu0 0
          %2460 = vmatprep.subr.bf16.mxu0 0
          %2461 = vmatpush1.bf16.msra.mxu0 0
          %2462 = vmatprep.subr.bf16.mxu0 0
          %2463 = vmatpush1.bf16.msra.mxu0 0
          %2464 = vmatprep.subr.bf16.mxu0 0
          %2465 = vmatpush1.bf16.msra.mxu0 0
          %2466 = vmatprep.subr.bf16.mxu0 0
          %2467 = vmatpush1.bf16.msra.mxu0 0
          %2468 = vmatprep.subr.bf16.mxu0 0
          %2469 = vmatpush1.bf16.msra.mxu0 0
          %2470 = vmatprep.subr.bf16.mxu0 0
          %2471 = vmatpush1.bf16.msra.mxu0 0
          %2472 = vmatprep.subr.bf16.mxu0 0
          %2473 = vmatpush1.bf16.msra.mxu0 0
          %2474 = vmatprep.subr.bf16.mxu0 0
          %2475 = vmatpush1.bf16.msra.mxu0 0
          %2476 = vmatprep.mubr.bf16.mxu0 0
          %2477 = vmatmul.mubr.bf16.gmra.mrb[0].mxu0 %v1193
          %v2478 = vpop.f32.mrb[0].mxu0
          %v2479 = vadd.f32 %v2135, %v2478
          %v2480 = vpop.f32.mrb[0].mxu0
          %v2481 = vadd.f32 %v2137, %v2480
          %v2482 = vpop.f32.mrb[0].mxu0
          %v2483 = vadd.f32 %v2139, %v2482
          %v2484 = vpop.f32.mrb[0].mxu0
          %v2485 = vadd.f32 %v2141, %v2484
          %2486 = vdwg.mxu0
          %2487 = vmatprep.subr.bf16.mxu0 %v1964
          %2488 = vmatpush1.bf16.msra.mxu0 %v1963
          %2489 = vmatprep.subr.bf16.mxu0 0
          %2490 = vmatpush1.bf16.msra.mxu0 0
          %2491 = vmatprep.subr.bf16.mxu0 0
          %2492 = vmatpush1.bf16.msra.mxu0 0
          %2493 = vmatprep.subr.bf16.mxu0 0
          %2494 = vmatpush1.bf16.msra.mxu0 0
          %2495 = vmatprep.subr.bf16.mxu0 0
          %2496 = vmatpush1.bf16.msra.mxu0 0
          %2497 = vmatprep.subr.bf16.mxu0 0
          %2498 = vmatpush1.bf16.msra.mxu0 0
          %2499 = vmatprep.subr.bf16.mxu0 0
          %2500 = vmatpush1.bf16.msra.mxu0 0
          %2501 = vmatprep.subr.bf16.mxu0 0
          %2502 = vmatpush1.bf16.msra.mxu0 0
          %2503 = vmatprep.subr.bf16.mxu0 0
          %2504 = vmatpush1.bf16.msra.mxu0 0
          %2505 = vmatprep.subr.bf16.mxu0 0
          %2506 = vmatpush1.bf16.msra.mxu0 0
          %2507 = vmatprep.subr.bf16.mxu0 0
          %2508 = vmatpush1.bf16.msra.mxu0 0
          %2509 = vmatprep.subr.bf16.mxu0 0
          %2510 = vmatpush1.bf16.msra.mxu0 0
          %2511 = vmatprep.subr.bf16.mxu0 0
          %2512 = vmatpush1.bf16.msra.mxu0 0
          %2513 = vmatprep.subr.bf16.mxu0 0
          %2514 = vmatpush1.bf16.msra.mxu0 0
          %2515 = vmatprep.subr.bf16.mxu0 0
          %2516 = vmatpush1.bf16.msra.mxu0 0
          %2517 = vmatprep.subr.bf16.mxu0 0
          %2518 = vmatpush1.bf16.msra.mxu0 0
          %2519 = vmatprep.mubr.bf16.mxu0 0
          %2520 = vmatmul.mubr.bf16.gmra.mrb[0].mxu0 %v1193
          %v2521 = vpop.f32.mrb[0].mxu0
          %v2522 = vadd.f32 %v2178, %v2521
          %v2523 = vpop.f32.mrb[0].mxu0
          %v2524 = vadd.f32 %v2180, %v2523
          %v2525 = vpop.f32.mrb[0].mxu0
          %v2526 = vadd.f32 %v2182, %v2525
          %v2527 = vpop.f32.mrb[0].mxu0
          %v2528 = vadd.f32 %v2184, %v2527
          %2529 = vdwg.mxu0
          %2530 = vmatprep.subr.bf16.mxu0 %v1966
          %2531 = vmatpush1.bf16.msra.mxu0 %v1965
          %2532 = vmatprep.subr.bf16.mxu0 0
          %2533 = vmatpush1.bf16.msra.mxu0 0
          %2534 = vmatprep.subr.bf16.mxu0 0
          %2535 = vmatpush1.bf16.msra.mxu0 0
          %2536 = vmatprep.subr.bf16.mxu0 0
          %2537 = vmatpush1.bf16.msra.mxu0 0
          %2538 = vmatprep.subr.bf16.mxu0 0
          %2539 = vmatpush1.bf16.msra.mxu0 0
          %2540 = vmatprep.subr.bf16.mxu0 0
          %2541 = vmatpush1.bf16.msra.mxu0 0
          %2542 = vmatprep.subr.bf16.mxu0 0
          %2543 = vmatpush1.bf16.msra.mxu0 0
          %2544 = vmatprep.subr.bf16.mxu0 0
          %2545 = vmatpush1.bf16.msra.mxu0 0
          %2546 = vmatprep.subr.bf16.mxu0 0
          %2547 = vmatpush1.bf16.msra.mxu0 0
          %2548 = vmatprep.subr.bf16.mxu0 0
          %2549 = vmatpush1.bf16.msra.mxu0 0
          %2550 = vmatprep.subr.bf16.mxu0 0
          %2551 = vmatpush1.bf16.msra.mxu0 0
          %2552 = vmatprep.subr.bf16.mxu0 0
          %2553 = vmatpush1.bf16.msra.mxu0 0
          %2554 = vmatprep.subr.bf16.mxu0 0
          %2555 = vmatpush1.bf16.msra.mxu0 0
          %2556 = vmatprep.subr.bf16.mxu0 0
          %2557 = vmatpush1.bf16.msra.mxu0 0
          %2558 = vmatprep.subr.bf16.mxu0 0
          %2559 = vmatpush1.bf16.msra.mxu0 0
          %2560 = vmatprep.subr.bf16.mxu0 0
          %2561 = vmatpush1.bf16.msra.mxu0 0
          %2562 = vmatprep.mubr.bf16.mxu0 0
          %2563 = vmatmul.mubr.bf16.gmra.mrb[0].mxu0 %v1193
          %v2564 = vpop.f32.mrb[0].mxu0
          %v2565 = vadd.f32 %v2221, %v2564
          %v2566 = vpop.f32.mrb[0].mxu0
          %v2567 = vadd.f32 %v2223, %v2566
          %v2568 = vpop.f32.mrb[0].mxu0
          %v2569 = vadd.f32 %v2225, %v2568
          %v2570 = vpop.f32.mrb[0].mxu0
          %v2571 = vadd.f32 %v2227, %v2570
          %2572 = vdwg.mxu0
          %2573 = vmatprep.subr.bf16.mxu0 %v1968
          %2574 = vmatpush1.bf16.msra.mxu0 %v1967
          %2575 = vmatprep.subr.bf16.mxu0 0
          %2576 = vmatpush1.bf16.msra.mxu0 0
          %2577 = vmatprep.subr.bf16.mxu0 0
          %2578 = vmatpush1.bf16.msra.mxu0 0
          %2579 = vmatprep.subr.bf16.mxu0 0
          %2580 = vmatpush1.bf16.msra.mxu0 0
          %2581 = vmatprep.subr.bf16.mxu0 0
          %2582 = vmatpush1.bf16.msra.mxu0 0
          %2583 = vmatprep.subr.bf16.mxu0 0
          %2584 = vmatpush1.bf16.msra.mxu0 0
          %2585 = vmatprep.subr.bf16.mxu0 0
          %2586 = vmatpush1.bf16.msra.mxu0 0
          %2587 = vmatprep.subr.bf16.mxu0 0
          %2588 = vmatpush1.bf16.msra.mxu0 0
          %2589 = vmatprep.subr.bf16.mxu0 0
          %2590 = vmatpush1.bf16.msra.mxu0 0
          %2591 = vmatprep.subr.bf16.mxu0 0
          %2592 = vmatpush1.bf16.msra.mxu0 0
          %2593 = vmatprep.subr.bf16.mxu0 0
          %2594 = vmatpush1.bf16.msra.mxu0 0
          %2595 = vmatprep.subr.bf16.mxu0 0
          %2596 = vmatpush1.bf16.msra.mxu0 0
          %2597 = vmatprep.subr.bf16.mxu0 0
          %2598 = vmatpush1.bf16.msra.mxu0 0
          %2599 = vmatprep.subr.bf16.mxu0 0
          %2600 = vmatpush1.bf16.msra.mxu0 0
          %2601 = vmatprep.subr.bf16.mxu0 0
          %2602 = vmatpush1.bf16.msra.mxu0 0
          %2603 = vmatprep.subr.bf16.mxu0 0
          %2604 = vmatpush1.bf16.msra.mxu0 0
          %2605 = vmatprep.mubr.bf16.mxu0 0
          %2606 = vmatmul.mubr.bf16.gmra.mrb[0].mxu0 %v1193
          %v2607 = vpop.f32.mrb[0].mxu0
          %v2608 = vadd.f32 %v2264, %v2607
          %v2609 = vpop.f32.mrb[0].mxu0
          %v2610 = vadd.f32 %v2266, %v2609
          %v2611 = vpop.f32.mrb[0].mxu0
          %v2612 = vadd.f32 %v2268, %v2611
          %v2613 = vpop.f32.mrb[0].mxu0
          %v2614 = vadd.f32 %v2270, %v2613
          %2615 = vdwg.mxu0
          %2616 = vmatprep.subr.bf16.mxu0 %v1970
          %2617 = vmatpush1.bf16.msra.mxu0 %v1969
          %2618 = vmatprep.subr.bf16.mxu0 0
          %2619 = vmatpush1.bf16.msra.mxu0 0
          %2620 = vmatprep.subr.bf16.mxu0 0
          %2621 = vmatpush1.bf16.msra.mxu0 0
          %2622 = vmatprep.subr.bf16.mxu0 0
          %2623 = vmatpush1.bf16.msra.mxu0 0
          %2624 = vmatprep.subr.bf16.mxu0 0
          %2625 = vmatpush1.bf16.msra.mxu0 0
          %2626 = vmatprep.subr.bf16.mxu0 0
          %2627 = vmatpush1.bf16.msra.mxu0 0
          %2628 = vmatprep.subr.bf16.mxu0 0
          %2629 = vmatpush1.bf16.msra.mxu0 0
          %2630 = vmatprep.subr.bf16.mxu0 0
          %2631 = vmatpush1.bf16.msra.mxu0 0
          %2632 = vmatprep.subr.bf16.mxu0 0
          %2633 = vmatpush1.bf16.msra.mxu0 0
          %2634 = vmatprep.subr.bf16.mxu0 0
          %2635 = vmatpush1.bf16.msra.mxu0 0
          %2636 = vmatprep.subr.bf16.mxu0 0
          %2637 = vmatpush1.bf16.msra.mxu0 0
          %2638 = vmatprep.subr.bf16.mxu0 0
          %2639 = vmatpush1.bf16.msra.mxu0 0
          %2640 = vmatprep.subr.bf16.mxu0 0
          %2641 = vmatpush1.bf16.msra.mxu0 0
          %2642 = vmatprep.subr.bf16.mxu0 0
          %2643 = vmatpush1.bf16.msra.mxu0 0
          %2644 = vmatprep.subr.bf16.mxu0 0
          %2645 = vmatpush1.bf16.msra.mxu0 0
          %2646 = vmatprep.subr.bf16.mxu0 0
          %2647 = vmatpush1.bf16.msra.mxu0 0
          %2648 = vmatprep.mubr.bf16.mxu0 0
          %2649 = vmatmul.mubr.bf16.gmra.mrb[0].mxu0 %v1193
          %v2650 = vpop.f32.mrb[0].mxu0
          %v2651 = vadd.f32 %v2307, %v2650
          %v2652 = vpop.f32.mrb[0].mxu0
          %v2653 = vadd.f32 %v2309, %v2652
          %v2654 = vpop.f32.mrb[0].mxu0
          %v2655 = vadd.f32 %v2311, %v2654
          %v2656 = vpop.f32.mrb[0].mxu0
          %v2657 = vadd.f32 %v2313, %v2656
          %2658 = vdwg.mxu0
          %v2659 = vlaneseq
          %v2660 = vshrl.u32 %v2659, 7
          %v2661 = vsub.s32 1, %v2660
          %v2662 = vrot.slane %v673, %v2661
          %v2663 = vlaneseq
          %v2664 = vshrl.u32 %v2663, 7
          %v2665 = vsub.s32 1, %v2664
          %v2666 = vrot.slane %v674, %v2665
          %v2667 = vlaneseq
          %v2668 = vshrl.u32 %v2667, 7
          %v2669 = vsub.s32 1, %v2668
          %v2670 = vrot.slane %v675, %v2669
          %v2671 = vlaneseq
          %v2672 = vshrl.u32 %v2671, 7
          %v2673 = vsub.s32 1, %v2672
          %v2674 = vrot.slane %v676, %v2673
          %v2675 = vlaneseq
          %v2676 = vshrl.u32 %v2675, 7
          %v2677 = vsub.s32 1, %v2676
          %v2678 = vrot.slane %v677, %v2677
          %v2679 = vlaneseq
          %v2680 = vshrl.u32 %v2679, 7
          %v2681 = vsub.s32 1, %v2680
          %v2682 = vrot.slane %v678, %v2681
          %v2683 = vlaneseq
          %v2684 = vshrl.u32 %v2683, 7
          %v2685 = vsub.s32 1, %v2684
          %v2686 = vrot.slane %v679, %v2685
          %v2687 = vlaneseq
          %v2688 = vshrl.u32 %v2687, 7
          %v2689 = vsub.s32 1, %v2688
          %v2690 = vrot.slane %v680, %v2689
          %v2691 = vlaneseq
          %v2692 = vshrl.u32 %v2691, 7
          %v2693 = vsub.s32 1, %v2692
          %v2694 = vrot.slane %v681, %v2693
          %v2695 = vlaneseq
          %v2696 = vshrl.u32 %v2695, 7
          %v2697 = vsub.s32 1, %v2696
          %v2698 = vrot.slane %v682, %v2697
          %v2699 = vlaneseq
          %v2700 = vshrl.u32 %v2699, 7
          %v2701 = vsub.s32 1, %v2700
          %v2702 = vrot.slane %v683, %v2701
          %v2703 = vlaneseq
          %v2704 = vshrl.u32 %v2703, 7
          %v2705 = vsub.s32 1, %v2704
          %v2706 = vrot.slane %v684, %v2705
          %v2707 = vlaneseq
          %v2708 = vshrl.u32 %v2707, 7
          %v2709 = vsub.s32 1, %v2708
          %v2710 = vrot.slane %v685, %v2709
          %v2711 = vlaneseq
          %v2712 = vshrl.u32 %v2711, 7
          %v2713 = vsub.s32 1, %v2712
          %v2714 = vrot.slane %v686, %v2713
          %v2715 = vlaneseq
          %v2716 = vshrl.u32 %v2715, 7
          %v2717 = vsub.s32 1, %v2716
          %v2718 = vrot.slane %v687, %v2717
          %v2719 = vlaneseq
          %v2720 = vshrl.u32 %v2719, 7
          %v2721 = vsub.s32 1, %v2720
          %v2722 = vrot.slane %v688, %v2721
          %vm2723 = vcmp.eq.s32.totalorder %v698, %v2662
          %vm2724 = vcmp.eq.s32.totalorder %v698, %v2666
          %vm2725 = vcmp.eq.s32.totalorder %v698, %v2670
          %vm2726 = vcmp.eq.s32.totalorder %v698, %v2674
          %vm2727 = vcmp.eq.s32.totalorder %v698, %v2678
          %vm2728 = vcmp.eq.s32.totalorder %v698, %v2682
          %vm2729 = vcmp.eq.s32.totalorder %v698, %v2686
          %vm2730 = vcmp.eq.s32.totalorder %v698, %v2690
          %vm2731 = vcmp.eq.s32.totalorder %v698, %v2694
          %vm2732 = vcmp.eq.s32.totalorder %v698, %v2698
          %vm2733 = vcmp.eq.s32.totalorder %v698, %v2702
          %vm2734 = vcmp.eq.s32.totalorder %v698, %v2706
          %vm2735 = vcmp.eq.s32.totalorder %v698, %v2710
          %vm2736 = vcmp.eq.s32.totalorder %v698, %v2714
          %vm2737 = vcmp.eq.s32.totalorder %v698, %v2718
          %vm2738 = vcmp.eq.s32.totalorder %v698, %v2722
          %vm2739 = vcmp.eq.s32.totalorder %v699, %v2662
          %vm2740 = vcmp.eq.s32.totalorder %v699, %v2666
          %vm2741 = vcmp.eq.s32.totalorder %v699, %v2670
          %vm2742 = vcmp.eq.s32.totalorder %v699, %v2674
          %vm2743 = vcmp.eq.s32.totalorder %v699, %v2678
          %vm2744 = vcmp.eq.s32.totalorder %v699, %v2682
          %vm2745 = vcmp.eq.s32.totalorder %v699, %v2686
          %vm2746 = vcmp.eq.s32.totalorder %v699, %v2690
          %vm2747 = vcmp.eq.s32.totalorder %v699, %v2694
          %vm2748 = vcmp.eq.s32.totalorder %v699, %v2698
          %vm2749 = vcmp.eq.s32.totalorder %v699, %v2702
          %vm2750 = vcmp.eq.s32.totalorder %v699, %v2706
          %vm2751 = vcmp.eq.s32.totalorder %v699, %v2710
          %vm2752 = vcmp.eq.s32.totalorder %v699, %v2714
          %vm2753 = vcmp.eq.s32.totalorder %v699, %v2718
          %vm2754 = vcmp.eq.s32.totalorder %v699, %v2722
          %v2755 = vsel %vm2723, %v2350, 0.0
          %v2756 = vsel %vm2724, %v2352, 0.0
          %v2757 = vsel %vm2725, %v2393, 0.0
          %v2758 = vsel %vm2726, %v2395, 0.0
          %v2759 = vsel %vm2727, %v2436, 0.0
          %v2760 = vsel %vm2728, %v2438, 0.0
          %v2761 = vsel %vm2729, %v2479, 0.0
          %v2762 = vsel %vm2730, %v2481, 0.0
          %v2763 = vsel %vm2731, %v2522, 0.0
          %v2764 = vsel %vm2732, %v2524, 0.0
          %v2765 = vsel %vm2733, %v2565, 0.0
          %v2766 = vsel %vm2734, %v2567, 0.0
          %v2767 = vsel %vm2735, %v2608, 0.0
          %v2768 = vsel %vm2736, %v2610, 0.0
          %v2769 = vsel %vm2737, %v2651, 0.0
          %v2770 = vsel %vm2738, %v2653, 0.0
          %v2771 = vsel %vm2739, %v2354, 0.0
          %v2772 = vsel %vm2740, %v2356, 0.0
          %v2773 = vsel %vm2741, %v2397, 0.0
          %v2774 = vsel %vm2742, %v2399, 0.0
          %v2775 = vsel %vm2743, %v2440, 0.0
          %v2776 = vsel %vm2744, %v2442, 0.0
          %v2777 = vsel %vm2745, %v2483, 0.0
          %v2778 = vsel %vm2746, %v2485, 0.0
          %v2779 = vsel %vm2747, %v2526, 0.0
          %v2780 = vsel %vm2748, %v2528, 0.0
          %v2781 = vsel %vm2749, %v2569, 0.0
          %v2782 = vsel %vm2750, %v2571, 0.0
          %v2783 = vsel %vm2751, %v2612, 0.0
          %v2784 = vsel %vm2752, %v2614, 0.0
          %v2785 = vsel %vm2753, %v2655, 0.0
          %v2786 = vsel %vm2754, %v2657, 0.0
          %v2787 = vadd.f32 %v2755, %v2771
          %v2788 = vrot.slane %v2787, 4
          %v2789 = vadd.f32 %v2787, %v2788
          %v2790 = vrot.slane %v2789, 2
          %v2791 = vadd.f32 %v2789, %v2790
          %v2792 = vrot.slane %v2791, 1
          %v2793 = vadd.f32 %v2791, %v2792
          %v2794 = vadd.f32 %v2756, %v2772
          %v2795 = vrot.slane %v2794, 4
          %v2796 = vadd.f32 %v2794, %v2795
          %v2797 = vrot.slane %v2796, 2
          %v2798 = vadd.f32 %v2796, %v2797
          %v2799 = vrot.slane %v2798, 1
          %v2800 = vadd.f32 %v2798, %v2799
          %v2801 = vadd.f32 %v2757, %v2773
          %v2802 = vrot.slane %v2801, 4
          %v2803 = vadd.f32 %v2801, %v2802
          %v2804 = vrot.slane %v2803, 2
          %v2805 = vadd.f32 %v2803, %v2804
          %v2806 = vrot.slane %v2805, 1
          %v2807 = vadd.f32 %v2805, %v2806
          %v2808 = vadd.f32 %v2758, %v2774
          %v2809 = vrot.slane %v2808, 4
          %v2810 = vadd.f32 %v2808, %v2809
          %v2811 = vrot.slane %v2810, 2
          %v2812 = vadd.f32 %v2810, %v2811
          %v2813 = vrot.slane %v2812, 1
          %v2814 = vadd.f32 %v2812, %v2813
          %v2815 = vadd.f32 %v2759, %v2775
          %v2816 = vrot.slane %v2815, 4
          %v2817 = vadd.f32 %v2815, %v2816
          %v2818 = vrot.slane %v2817, 2
          %v2819 = vadd.f32 %v2817, %v2818
          %v2820 = vrot.slane %v2819, 1
          %v2821 = vadd.f32 %v2819, %v2820
          %v2822 = vadd.f32 %v2760, %v2776
          %v2823 = vrot.slane %v2822, 4
          %v2824 = vadd.f32 %v2822, %v2823
          %v2825 = vrot.slane %v2824, 2
          %v2826 = vadd.f32 %v2824, %v2825
          %v2827 = vrot.slane %v2826, 1
          %v2828 = vadd.f32 %v2826, %v2827
          %v2829 = vadd.f32 %v2761, %v2777
          %v2830 = vrot.slane %v2829, 4
          %v2831 = vadd.f32 %v2829, %v2830
          %v2832 = vrot.slane %v2831, 2
          %v2833 = vadd.f32 %v2831, %v2832
          %v2834 = vrot.slane %v2833, 1
          %v2835 = vadd.f32 %v2833, %v2834
          %v2836 = vadd.f32 %v2762, %v2778
          %v2837 = vrot.slane %v2836, 4
          %v2838 = vadd.f32 %v2836, %v2837
          %v2839 = vrot.slane %v2838, 2
          %v2840 = vadd.f32 %v2838, %v2839
          %v2841 = vrot.slane %v2840, 1
          %v2842 = vadd.f32 %v2840, %v2841
          %v2843 = vadd.f32 %v2763, %v2779
          %v2844 = vrot.slane %v2843, 4
          %v2845 = vadd.f32 %v2843, %v2844
          %v2846 = vrot.slane %v2845, 2
          %v2847 = vadd.f32 %v2845, %v2846
          %v2848 = vrot.slane %v2847, 1
          %v2849 = vadd.f32 %v2847, %v2848
          %v2850 = vadd.f32 %v2764, %v2780
          %v2851 = vrot.slane %v2850, 4
          %v2852 = vadd.f32 %v2850, %v2851
          %v2853 = vrot.slane %v2852, 2
          %v2854 = vadd.f32 %v2852, %v2853
          %v2855 = vrot.slane %v2854, 1
          %v2856 = vadd.f32 %v2854, %v2855
          %v2857 = vadd.f32 %v2765, %v2781
          %v2858 = vrot.slane %v2857, 4
          %v2859 = vadd.f32 %v2857, %v2858
          %v2860 = vrot.slane %v2859, 2
          %v2861 = vadd.f32 %v2859, %v2860
          %v2862 = vrot.slane %v2861, 1
          %v2863 = vadd.f32 %v2861, %v2862
          %v2864 = vadd.f32 %v2766, %v2782
          %v2865 = vrot.slane %v2864, 4
          %v2866 = vadd.f32 %v2864, %v2865
          %v2867 = vrot.slane %v2866, 2
          %v2868 = vadd.f32 %v2866, %v2867
          %v2869 = vrot.slane %v2868, 1
          %v2870 = vadd.f32 %v2868, %v2869
          %v2871 = vadd.f32 %v2767, %v2783
          %v2872 = vrot.slane %v2871, 4
          %v2873 = vadd.f32 %v2871, %v2872
          %v2874 = vrot.slane %v2873, 2
          %v2875 = vadd.f32 %v2873, %v2874
          %v2876 = vrot.slane %v2875, 1
          %v2877 = vadd.f32 %v2875, %v2876
          %v2878 = vadd.f32 %v2768, %v2784
          %v2879 = vrot.slane %v2878, 4
          %v2880 = vadd.f32 %v2878, %v2879
          %v2881 = vrot.slane %v2880, 2
          %v2882 = vadd.f32 %v2880, %v2881
          %v2883 = vrot.slane %v2882, 1
          %v2884 = vadd.f32 %v2882, %v2883
          %v2885 = vadd.f32 %v2769, %v2785
          %v2886 = vrot.slane %v2885, 4
          %v2887 = vadd.f32 %v2885, %v2886
          %v2888 = vrot.slane %v2887, 2
          %v2889 = vadd.f32 %v2887, %v2888
          %v2890 = vrot.slane %v2889, 1
          %v2891 = vadd.f32 %v2889, %v2890
          %v2892 = vadd.f32 %v2770, %v2786
          %v2893 = vrot.slane %v2892, 4
          %v2894 = vadd.f32 %v2892, %v2893
          %v2895 = vrot.slane %v2894, 2
          %v2896 = vadd.f32 %v2894, %v2895
          %v2897 = vrot.slane %v2896, 1
          %v2898 = vadd.f32 %v2896, %v2897
          %v2899 = vsub.f32 0.22222222, %v2793
          %v2900 = vsub.f32 0.22222222, %v2800
          %v2901 = vsub.f32 0.22222222, %v2807
          %v2902 = vsub.f32 0.22222222, %v2814
          %v2903 = vsub.f32 0.22222222, %v2821
          %v2904 = vsub.f32 0.22222222, %v2828
          %v2905 = vsub.f32 0.22222222, %v2835
          %v2906 = vsub.f32 0.22222222, %v2842
          %v2907 = vsub.f32 0.22222222, %v2849
          %v2908 = vsub.f32 0.22222222, %v2856
          %v2909 = vsub.f32 0.22222222, %v2863
          %v2910 = vsub.f32 0.22222222, %v2870
          %v2911 = vsub.f32 0.22222222, %v2877
          %v2912 = vsub.f32 0.22222222, %v2884
          %v2913 = vsub.f32 0.22222222, %v2891
          %v2914 = vsub.f32 0.22222222, %v2898
          %v2915 = vmul.f32 %v2899, %v2899
          %v2916 = vmul.f32 %v2900, %v2900
          %v2917 = vmul.f32 %v2901, %v2901
          %v2918 = vmul.f32 %v2902, %v2902
          %v2919 = vmul.f32 %v2903, %v2903
          %v2920 = vmul.f32 %v2904, %v2904
          %v2921 = vmul.f32 %v2905, %v2905
          %v2922 = vmul.f32 %v2906, %v2906
          %v2923 = vmul.f32 %v2907, %v2907
          %v2924 = vmul.f32 %v2908, %v2908
          %v2925 = vmul.f32 %v2909, %v2909
          %v2926 = vmul.f32 %v2910, %v2910
          %v2927 = vmul.f32 %v2911, %v2911
          %v2928 = vmul.f32 %v2912, %v2912
          %v2929 = vmul.f32 %v2913, %v2913
          %v2930 = vmul.f32 %v2914, %v2914
          %v2931 = vadd.f32 %v1811, %v2915
          %v2932 = vadd.f32 %v1812, %v2916
          %v2933 = vadd.f32 %v1813, %v2917
          %v2934 = vadd.f32 %v1814, %v2918
          %v2935 = vadd.f32 %v1815, %v2919
          %v2936 = vadd.f32 %v1816, %v2920
          %v2937 = vadd.f32 %v1817, %v2921
          %v2938 = vadd.f32 %v1818, %v2922
          %v2939 = vadd.f32 %v1819, %v2923
          %v2940 = vadd.f32 %v1820, %v2924
          %v2941 = vadd.f32 %v1821, %v2925
          %v2942 = vadd.f32 %v1822, %v2926
          %v2943 = vadd.f32 %v1823, %v2927
          %v2944 = vadd.f32 %v1824, %v2928
          %v2945 = vadd.f32 %v1825, %v2929
          %v2946 = vadd.f32 %v1826, %v2930
          %v2947 = vlaneseq
          %v2948 = vshrl.u32 %v2947, 7
          %v2949 = vsub.s32 2, %v2948
          %v2950 = vrot.slane %v657, %v2949
          %v2951 = vlaneseq
          %v2952 = vshrl.u32 %v2951, 7
          %v2953 = vsub.s32 2, %v2952
          %v2954 = vrot.slane %v658, %v2953
          %v2955 = vlaneseq
          %v2956 = vshrl.u32 %v2955, 7
          %v2957 = vsub.s32 2, %v2956
          %v2958 = vrot.slane %v659, %v2957
          %v2959 = vlaneseq
          %v2960 = vshrl.u32 %v2959, 7
          %v2961 = vsub.s32 2, %v2960
          %v2962 = vrot.slane %v660, %v2961
          %v2963 = vlaneseq
          %v2964 = vshrl.u32 %v2963, 7
          %v2965 = vsub.s32 2, %v2964
          %v2966 = vrot.slane %v661, %v2965
          %v2967 = vlaneseq
          %v2968 = vshrl.u32 %v2967, 7
          %v2969 = vsub.s32 2, %v2968
          %v2970 = vrot.slane %v662, %v2969
          %v2971 = vlaneseq
          %v2972 = vshrl.u32 %v2971, 7
          %v2973 = vsub.s32 2, %v2972
          %v2974 = vrot.slane %v663, %v2973
          %v2975 = vlaneseq
          %v2976 = vshrl.u32 %v2975, 7
          %v2977 = vsub.s32 2, %v2976
          %v2978 = vrot.slane %v664, %v2977
          %v2979 = vlaneseq
          %v2980 = vshrl.u32 %v2979, 7
          %v2981 = vsub.s32 2, %v2980
          %v2982 = vrot.slane %v665, %v2981
          %v2983 = vlaneseq
          %v2984 = vshrl.u32 %v2983, 7
          %v2985 = vsub.s32 2, %v2984
          %v2986 = vrot.slane %v666, %v2985
          %v2987 = vlaneseq
          %v2988 = vshrl.u32 %v2987, 7
          %v2989 = vsub.s32 2, %v2988
          %v2990 = vrot.slane %v667, %v2989
          %v2991 = vlaneseq
          %v2992 = vshrl.u32 %v2991, 7
          %v2993 = vsub.s32 2, %v2992
          %v2994 = vrot.slane %v668, %v2993
          %v2995 = vlaneseq
          %v2996 = vshrl.u32 %v2995, 7
          %v2997 = vsub.s32 2, %v2996
          %v2998 = vrot.slane %v669, %v2997
          %v2999 = vlaneseq
          %v3000 = vshrl.u32 %v2999, 7
          %v3001 = vsub.s32 2, %v3000
          %v3002 = vrot.slane %v670, %v3001
          %v3003 = vlaneseq
          %v3004 = vshrl.u32 %v3003, 7
          %v3005 = vsub.s32 2, %v3004
          %v3006 = vrot.slane %v671, %v3005
          %v3007 = vlaneseq
          %v3008 = vshrl.u32 %v3007, 7
          %v3009 = vsub.s32 2, %v3008
          %v3010 = vrot.slane %v672, %v3009
          %vm3011 = vcmp.eq.s32.totalorder %v698, %v2950
          %vm3012 = vcmp.eq.s32.totalorder %v698, %v2954
          %vm3013 = vcmp.eq.s32.totalorder %v698, %v2958
          %vm3014 = vcmp.eq.s32.totalorder %v698, %v2962
          %vm3015 = vcmp.eq.s32.totalorder %v698, %v2966
          %vm3016 = vcmp.eq.s32.totalorder %v698, %v2970
          %vm3017 = vcmp.eq.s32.totalorder %v698, %v2974
          %vm3018 = vcmp.eq.s32.totalorder %v698, %v2978
          %vm3019 = vcmp.eq.s32.totalorder %v698, %v2982
          %vm3020 = vcmp.eq.s32.totalorder %v698, %v2986
          %vm3021 = vcmp.eq.s32.totalorder %v698, %v2990
          %vm3022 = vcmp.eq.s32.totalorder %v698, %v2994
          %vm3023 = vcmp.eq.s32.totalorder %v698, %v2998
          %vm3024 = vcmp.eq.s32.totalorder %v698, %v3002
          %vm3025 = vcmp.eq.s32.totalorder %v698, %v3006
          %vm3026 = vcmp.eq.s32.totalorder %v698, %v3010
          %vm3027 = vcmp.eq.s32.totalorder %v699, %v2950
          %vm3028 = vcmp.eq.s32.totalorder %v699, %v2954
          %vm3029 = vcmp.eq.s32.totalorder %v699, %v2958
          %vm3030 = vcmp.eq.s32.totalorder %v699, %v2962
          %vm3031 = vcmp.eq.s32.totalorder %v699, %v2966
          %vm3032 = vcmp.eq.s32.totalorder %v699, %v2970
          %vm3033 = vcmp.eq.s32.totalorder %v699, %v2974
          %vm3034 = vcmp.eq.s32.totalorder %v699, %v2978
          %vm3035 = vcmp.eq.s32.totalorder %v699, %v2982
          %vm3036 = vcmp.eq.s32.totalorder %v699, %v2986
          %vm3037 = vcmp.eq.s32.totalorder %v699, %v2990
          %vm3038 = vcmp.eq.s32.totalorder %v699, %v2994
          %vm3039 = vcmp.eq.s32.totalorder %v699, %v2998
          %vm3040 = vcmp.eq.s32.totalorder %v699, %v3002
          %vm3041 = vcmp.eq.s32.totalorder %v699, %v3006
          %vm3042 = vcmp.eq.s32.totalorder %v699, %v3010
          %v3043 = vsel %vm3011, 1.0, 0.0
          %v3044 = vsel %vm3012, 1.0, 0.0
          %v3045 = vsel %vm3013, 1.0, 0.0
          %v3046 = vsel %vm3014, 1.0, 0.0
          %v3047 = vsel %vm3015, 1.0, 0.0
          %v3048 = vsel %vm3016, 1.0, 0.0
          %v3049 = vsel %vm3017, 1.0, 0.0
          %v3050 = vsel %vm3018, 1.0, 0.0
          %v3051 = vsel %vm3019, 1.0, 0.0
          %v3052 = vsel %vm3020, 1.0, 0.0
          %v3053 = vsel %vm3021, 1.0, 0.0
          %v3054 = vsel %vm3022, 1.0, 0.0
          %v3055 = vsel %vm3023, 1.0, 0.0
          %v3056 = vsel %vm3024, 1.0, 0.0
          %v3057 = vsel %vm3025, 1.0, 0.0
          %v3058 = vsel %vm3026, 1.0, 0.0
          %v3059 = vsel %vm3027, 1.0, 0.0
          %v3060 = vsel %vm3028, 1.0, 0.0
          %v3061 = vsel %vm3029, 1.0, 0.0
          %v3062 = vsel %vm3030, 1.0, 0.0
          %v3063 = vsel %vm3031, 1.0, 0.0
          %v3064 = vsel %vm3032, 1.0, 0.0
          %v3065 = vsel %vm3033, 1.0, 0.0
          %v3066 = vsel %vm3034, 1.0, 0.0
          %v3067 = vsel %vm3035, 1.0, 0.0
          %v3068 = vsel %vm3036, 1.0, 0.0
          %v3069 = vsel %vm3037, 1.0, 0.0
          %v3070 = vsel %vm3038, 1.0, 0.0
          %v3071 = vsel %vm3039, 1.0, 0.0
          %v3072 = vsel %vm3040, 1.0, 0.0
          %v3073 = vsel %vm3041, 1.0, 0.0
          %v3074 = vsel %vm3042, 1.0, 0.0
          %v3075 = vpack.c.bf16 %v3059, %v3043
          %v3076 = vpack.c.bf16 %v3060, %v3044
          %v3077 = vpack.c.bf16 %v3061, %v3045
          %v3078 = vpack.c.bf16 %v3062, %v3046
          %v3079 = vpack.c.bf16 %v3063, %v3047
          %v3080 = vpack.c.bf16 %v3064, %v3048
          %v3081 = vpack.c.bf16 %v3065, %v3049
          %v3082 = vpack.c.bf16 %v3066, %v3050
          %v3083 = vpack.c.bf16 %v3067, %v3051
          %v3084 = vpack.c.bf16 %v3068, %v3052
          %v3085 = vpack.c.bf16 %v3069, %v3053
          %v3086 = vpack.c.bf16 %v3070, %v3054
          %v3087 = vpack.c.bf16 %v3071, %v3055
          %v3088 = vpack.c.bf16 %v3072, %v3056
          %v3089 = vpack.c.bf16 %v3073, %v3057
          %v3090 = vpack.c.bf16 %v3074, %v3058
          %3091 = vmatprep.subr.bf16.mxu0 %v3076
          %3092 = vmatpush1.bf16.msra.mxu0 %v3075
          %3093 = vmatprep.subr.bf16.mxu0 0
          %3094 = vmatpush1.bf16.msra.mxu0 0
          %3095 = vmatprep.subr.bf16.mxu0 0
          %3096 = vmatpush1.bf16.msra.mxu0 0
          %3097 = vmatprep.subr.bf16.mxu0 0
          %3098 = vmatpush1.bf16.msra.mxu0 0
          %3099 = vmatprep.subr.bf16.mxu0 0
          %3100 = vmatpush1.bf16.msra.mxu0 0
          %3101 = vmatprep.subr.bf16.mxu0 0
          %3102 = vmatpush1.bf16.msra.mxu0 0
          %3103 = vmatprep.subr.bf16.mxu0 0
          %3104 = vmatpush1.bf16.msra.mxu0 0
          %3105 = vmatprep.subr.bf16.mxu0 0
          %3106 = vmatpush1.bf16.msra.mxu0 0
          %3107 = vmatprep.subr.bf16.mxu0 0
          %3108 = vmatpush1.bf16.msra.mxu0 0
          %3109 = vmatprep.subr.bf16.mxu0 0
          %3110 = vmatpush1.bf16.msra.mxu0 0
          %3111 = vmatprep.subr.bf16.mxu0 0
          %3112 = vmatpush1.bf16.msra.mxu0 0
          %3113 = vmatprep.subr.bf16.mxu0 0
          %3114 = vmatpush1.bf16.msra.mxu0 0
          %3115 = vmatprep.subr.bf16.mxu0 0
          %3116 = vmatpush1.bf16.msra.mxu0 0
          %3117 = vmatprep.subr.bf16.mxu0 0
          %3118 = vmatpush1.bf16.msra.mxu0 0
          %3119 = vmatprep.subr.bf16.mxu0 0
          %3120 = vmatpush1.bf16.msra.mxu0 0
          %3121 = vmatprep.subr.bf16.mxu0 0
          %3122 = vmatpush1.bf16.msra.mxu0 0
          %3123 = vmatprep.mubr.bf16.mxu0 0
          %3124 = vmatmul.mubr.bf16.gmra.mrb[0].mxu0 %v846
          %v3125 = vpop.f32.mrb[0].mxu0
          %v3126 = vadd.f32 0.0, %v3125
          %v3127 = vpop.f32.mrb[0].mxu0
          %v3128 = vadd.f32 0.0, %v3127
          %v3129 = vpop.f32.mrb[0].mxu0
          %v3130 = vadd.f32 0.0, %v3129
          %v3131 = vpop.f32.mrb[0].mxu0
          %v3132 = vadd.f32 0.0, %v3131
          %3133 = vdwg.mxu0
          %3134 = vmatprep.subr.bf16.mxu0 %v3078
          %3135 = vmatpush1.bf16.msra.mxu0 %v3077
          %3136 = vmatprep.subr.bf16.mxu0 0
          %3137 = vmatpush1.bf16.msra.mxu0 0
          %3138 = vmatprep.subr.bf16.mxu0 0
          %3139 = vmatpush1.bf16.msra.mxu0 0
          %3140 = vmatprep.subr.bf16.mxu0 0
          %3141 = vmatpush1.bf16.msra.mxu0 0
          %3142 = vmatprep.subr.bf16.mxu0 0
          %3143 = vmatpush1.bf16.msra.mxu0 0
          %3144 = vmatprep.subr.bf16.mxu0 0
          %3145 = vmatpush1.bf16.msra.mxu0 0
          %3146 = vmatprep.subr.bf16.mxu0 0
          %3147 = vmatpush1.bf16.msra.mxu0 0
          %3148 = vmatprep.subr.bf16.mxu0 0
          %3149 = vmatpush1.bf16.msra.mxu0 0
          %3150 = vmatprep.subr.bf16.mxu0 0
          %3151 = vmatpush1.bf16.msra.mxu0 0
          %3152 = vmatprep.subr.bf16.mxu0 0
          %3153 = vmatpush1.bf16.msra.mxu0 0
          %3154 = vmatprep.subr.bf16.mxu0 0
          %3155 = vmatpush1.bf16.msra.mxu0 0
          %3156 = vmatprep.subr.bf16.mxu0 0
          %3157 = vmatpush1.bf16.msra.mxu0 0
          %3158 = vmatprep.subr.bf16.mxu0 0
          %3159 = vmatpush1.bf16.msra.mxu0 0
          %3160 = vmatprep.subr.bf16.mxu0 0
          %3161 = vmatpush1.bf16.msra.mxu0 0
          %3162 = vmatprep.subr.bf16.mxu0 0
          %3163 = vmatpush1.bf16.msra.mxu0 0
          %3164 = vmatprep.subr.bf16.mxu0 0
          %3165 = vmatpush1.bf16.msra.mxu0 0
          %3166 = vmatprep.mubr.bf16.mxu0 0
          %3167 = vmatmul.mubr.bf16.gmra.mrb[0].mxu0 %v846
          %v3168 = vpop.f32.mrb[0].mxu0
          %v3169 = vadd.f32 0.0, %v3168
          %v3170 = vpop.f32.mrb[0].mxu0
          %v3171 = vadd.f32 0.0, %v3170
          %v3172 = vpop.f32.mrb[0].mxu0
          %v3173 = vadd.f32 0.0, %v3172
          %v3174 = vpop.f32.mrb[0].mxu0
          %v3175 = vadd.f32 0.0, %v3174
          %3176 = vdwg.mxu0
          %3177 = vmatprep.subr.bf16.mxu0 %v3080
          %3178 = vmatpush1.bf16.msra.mxu0 %v3079
          %3179 = vmatprep.subr.bf16.mxu0 0
          %3180 = vmatpush1.bf16.msra.mxu0 0
          %3181 = vmatprep.subr.bf16.mxu0 0
          %3182 = vmatpush1.bf16.msra.mxu0 0
          %3183 = vmatprep.subr.bf16.mxu0 0
          %3184 = vmatpush1.bf16.msra.mxu0 0
          %3185 = vmatprep.subr.bf16.mxu0 0
          %3186 = vmatpush1.bf16.msra.mxu0 0
          %3187 = vmatprep.subr.bf16.mxu0 0
          %3188 = vmatpush1.bf16.msra.mxu0 0
          %3189 = vmatprep.subr.bf16.mxu0 0
          %3190 = vmatpush1.bf16.msra.mxu0 0
          %3191 = vmatprep.subr.bf16.mxu0 0
          %3192 = vmatpush1.bf16.msra.mxu0 0
          %3193 = vmatprep.subr.bf16.mxu0 0
          %3194 = vmatpush1.bf16.msra.mxu0 0
          %3195 = vmatprep.subr.bf16.mxu0 0
          %3196 = vmatpush1.bf16.msra.mxu0 0
          %3197 = vmatprep.subr.bf16.mxu0 0
          %3198 = vmatpush1.bf16.msra.mxu0 0
          %3199 = vmatprep.subr.bf16.mxu0 0
          %3200 = vmatpush1.bf16.msra.mxu0 0
          %3201 = vmatprep.subr.bf16.mxu0 0
          %3202 = vmatpush1.bf16.msra.mxu0 0
          %3203 = vmatprep.subr.bf16.mxu0 0
          %3204 = vmatpush1.bf16.msra.mxu0 0
          %3205 = vmatprep.subr.bf16.mxu0 0
          %3206 = vmatpush1.bf16.msra.mxu0 0
          %3207 = vmatprep.subr.bf16.mxu0 0
          %3208 = vmatpush1.bf16.msra.mxu0 0
          %3209 = vmatprep.mubr.bf16.mxu0 0
          %3210 = vmatmul.mubr.bf16.gmra.mrb[0].mxu0 %v846
          %v3211 = vpop.f32.mrb[0].mxu0
          %v3212 = vadd.f32 0.0, %v3211
          %v3213 = vpop.f32.mrb[0].mxu0
          %v3214 = vadd.f32 0.0, %v3213
          %v3215 = vpop.f32.mrb[0].mxu0
          %v3216 = vadd.f32 0.0, %v3215
          %v3217 = vpop.f32.mrb[0].mxu0
          %v3218 = vadd.f32 0.0, %v3217
          %3219 = vdwg.mxu0
          %3220 = vmatprep.subr.bf16.mxu0 %v3082
          %3221 = vmatpush1.bf16.msra.mxu0 %v3081
          %3222 = vmatprep.subr.bf16.mxu0 0
          %3223 = vmatpush1.bf16.msra.mxu0 0
          %3224 = vmatprep.subr.bf16.mxu0 0
          %3225 = vmatpush1.bf16.msra.mxu0 0
          %3226 = vmatprep.subr.bf16.mxu0 0
          %3227 = vmatpush1.bf16.msra.mxu0 0
          %3228 = vmatprep.subr.bf16.mxu0 0
          %3229 = vmatpush1.bf16.msra.mxu0 0
          %3230 = vmatprep.subr.bf16.mxu0 0
          %3231 = vmatpush1.bf16.msra.mxu0 0
          %3232 = vmatprep.subr.bf16.mxu0 0
          %3233 = vmatpush1.bf16.msra.mxu0 0
          %3234 = vmatprep.subr.bf16.mxu0 0
          %3235 = vmatpush1.bf16.msra.mxu0 0
          %3236 = vmatprep.subr.bf16.mxu0 0
          %3237 = vmatpush1.bf16.msra.mxu0 0
          %3238 = vmatprep.subr.bf16.mxu0 0
          %3239 = vmatpush1.bf16.msra.mxu0 0
          %3240 = vmatprep.subr.bf16.mxu0 0
          %3241 = vmatpush1.bf16.msra.mxu0 0
          %3242 = vmatprep.subr.bf16.mxu0 0
          %3243 = vmatpush1.bf16.msra.mxu0 0
          %3244 = vmatprep.subr.bf16.mxu0 0
          %3245 = vmatpush1.bf16.msra.mxu0 0
          %3246 = vmatprep.subr.bf16.mxu0 0
          %3247 = vmatpush1.bf16.msra.mxu0 0
          %3248 = vmatprep.subr.bf16.mxu0 0
          %3249 = vmatpush1.bf16.msra.mxu0 0
          %3250 = vmatprep.subr.bf16.mxu0 0
          %3251 = vmatpush1.bf16.msra.mxu0 0
          %3252 = vmatprep.mubr.bf16.mxu0 0
          %3253 = vmatmul.mubr.bf16.gmra.mrb[0].mxu0 %v846
          %v3254 = vpop.f32.mrb[0].mxu0
          %v3255 = vadd.f32 0.0, %v3254
          %v3256 = vpop.f32.mrb[0].mxu0
          %v3257 = vadd.f32 0.0, %v3256
          %v3258 = vpop.f32.mrb[0].mxu0
          %v3259 = vadd.f32 0.0, %v3258
          %v3260 = vpop.f32.mrb[0].mxu0
          %v3261 = vadd.f32 0.0, %v3260
          %3262 = vdwg.mxu0
          %3263 = vmatprep.subr.bf16.mxu0 %v3084
          %3264 = vmatpush1.bf16.msra.mxu0 %v3083
          %3265 = vmatprep.subr.bf16.mxu0 0
          %3266 = vmatpush1.bf16.msra.mxu0 0
          %3267 = vmatprep.subr.bf16.mxu0 0
          %3268 = vmatpush1.bf16.msra.mxu0 0
          %3269 = vmatprep.subr.bf16.mxu0 0
          %3270 = vmatpush1.bf16.msra.mxu0 0
          %3271 = vmatprep.subr.bf16.mxu0 0
          %3272 = vmatpush1.bf16.msra.mxu0 0
          %3273 = vmatprep.subr.bf16.mxu0 0
          %3274 = vmatpush1.bf16.msra.mxu0 0
          %3275 = vmatprep.subr.bf16.mxu0 0
          %3276 = vmatpush1.bf16.msra.mxu0 0
          %3277 = vmatprep.subr.bf16.mxu0 0
          %3278 = vmatpush1.bf16.msra.mxu0 0
          %3279 = vmatprep.subr.bf16.mxu0 0
          %3280 = vmatpush1.bf16.msra.mxu0 0
          %3281 = vmatprep.subr.bf16.mxu0 0
          %3282 = vmatpush1.bf16.msra.mxu0 0
          %3283 = vmatprep.subr.bf16.mxu0 0
          %3284 = vmatpush1.bf16.msra.mxu0 0
          %3285 = vmatprep.subr.bf16.mxu0 0
          %3286 = vmatpush1.bf16.msra.mxu0 0
          %3287 = vmatprep.subr.bf16.mxu0 0
          %3288 = vmatpush1.bf16.msra.mxu0 0
          %3289 = vmatprep.subr.bf16.mxu0 0
          %3290 = vmatpush1.bf16.msra.mxu0 0
          %3291 = vmatprep.subr.bf16.mxu0 0
          %3292 = vmatpush1.bf16.msra.mxu0 0
          %3293 = vmatprep.subr.bf16.mxu0 0
          %3294 = vmatpush1.bf16.msra.mxu0 0
          %3295 = vmatprep.mubr.bf16.mxu0 0
          %3296 = vmatmul.mubr.bf16.gmra.mrb[0].mxu0 %v846
          %v3297 = vpop.f32.mrb[0].mxu0
          %v3298 = vadd.f32 0.0, %v3297
          %v3299 = vpop.f32.mrb[0].mxu0
          %v3300 = vadd.f32 0.0, %v3299
          %v3301 = vpop.f32.mrb[0].mxu0
          %v3302 = vadd.f32 0.0, %v3301
          %v3303 = vpop.f32.mrb[0].mxu0
          %v3304 = vadd.f32 0.0, %v3303
          %3305 = vdwg.mxu0
          %3306 = vmatprep.subr.bf16.mxu0 %v3086
          %3307 = vmatpush1.bf16.msra.mxu0 %v3085
          %3308 = vmatprep.subr.bf16.mxu0 0
          %3309 = vmatpush1.bf16.msra.mxu0 0
          %3310 = vmatprep.subr.bf16.mxu0 0
          %3311 = vmatpush1.bf16.msra.mxu0 0
          %3312 = vmatprep.subr.bf16.mxu0 0
          %3313 = vmatpush1.bf16.msra.mxu0 0
          %3314 = vmatprep.subr.bf16.mxu0 0
          %3315 = vmatpush1.bf16.msra.mxu0 0
          %3316 = vmatprep.subr.bf16.mxu0 0
          %3317 = vmatpush1.bf16.msra.mxu0 0
          %3318 = vmatprep.subr.bf16.mxu0 0
          %3319 = vmatpush1.bf16.msra.mxu0 0
          %3320 = vmatprep.subr.bf16.mxu0 0
          %3321 = vmatpush1.bf16.msra.mxu0 0
          %3322 = vmatprep.subr.bf16.mxu0 0
          %3323 = vmatpush1.bf16.msra.mxu0 0
          %3324 = vmatprep.subr.bf16.mxu0 0
          %3325 = vmatpush1.bf16.msra.mxu0 0
          %3326 = vmatprep.subr.bf16.mxu0 0
          %3327 = vmatpush1.bf16.msra.mxu0 0
          %3328 = vmatprep.subr.bf16.mxu0 0
          %3329 = vmatpush1.bf16.msra.mxu0 0
          %3330 = vmatprep.subr.bf16.mxu0 0
          %3331 = vmatpush1.bf16.msra.mxu0 0
          %3332 = vmatprep.subr.bf16.mxu0 0
          %3333 = vmatpush1.bf16.msra.mxu0 0
          %3334 = vmatprep.subr.bf16.mxu0 0
          %3335 = vmatpush1.bf16.msra.mxu0 0
          %3336 = vmatprep.subr.bf16.mxu0 0
          %3337 = vmatpush1.bf16.msra.mxu0 0
          %3338 = vmatprep.mubr.bf16.mxu0 0
          %3339 = vmatmul.mubr.bf16.gmra.mrb[0].mxu0 %v846
          %v3340 = vpop.f32.mrb[0].mxu0
          %v3341 = vadd.f32 0.0, %v3340
          %v3342 = vpop.f32.mrb[0].mxu0
          %v3343 = vadd.f32 0.0, %v3342
          %v3344 = vpop.f32.mrb[0].mxu0
          %v3345 = vadd.f32 0.0, %v3344
          %v3346 = vpop.f32.mrb[0].mxu0
          %v3347 = vadd.f32 0.0, %v3346
          %3348 = vdwg.mxu0
          %3349 = vmatprep.subr.bf16.mxu0 %v3088
          %3350 = vmatpush1.bf16.msra.mxu0 %v3087
          %3351 = vmatprep.subr.bf16.mxu0 0
          %3352 = vmatpush1.bf16.msra.mxu0 0
          %3353 = vmatprep.subr.bf16.mxu0 0
          %3354 = vmatpush1.bf16.msra.mxu0 0
          %3355 = vmatprep.subr.bf16.mxu0 0
          %3356 = vmatpush1.bf16.msra.mxu0 0
          %3357 = vmatprep.subr.bf16.mxu0 0
          %3358 = vmatpush1.bf16.msra.mxu0 0
          %3359 = vmatprep.subr.bf16.mxu0 0
          %3360 = vmatpush1.bf16.msra.mxu0 0
          %3361 = vmatprep.subr.bf16.mxu0 0
          %3362 = vmatpush1.bf16.msra.mxu0 0
          %3363 = vmatprep.subr.bf16.mxu0 0
          %3364 = vmatpush1.bf16.msra.mxu0 0
          %3365 = vmatprep.subr.bf16.mxu0 0
          %3366 = vmatpush1.bf16.msra.mxu0 0
          %3367 = vmatprep.subr.bf16.mxu0 0
          %3368 = vmatpush1.bf16.msra.mxu0 0
          %3369 = vmatprep.subr.bf16.mxu0 0
          %3370 = vmatpush1.bf16.msra.mxu0 0
          %3371 = vmatprep.subr.bf16.mxu0 0
          %3372 = vmatpush1.bf16.msra.mxu0 0
          %3373 = vmatprep.subr.bf16.mxu0 0
          %3374 = vmatpush1.bf16.msra.mxu0 0
          %3375 = vmatprep.subr.bf16.mxu0 0
          %3376 = vmatpush1.bf16.msra.mxu0 0
          %3377 = vmatprep.subr.bf16.mxu0 0
          %3378 = vmatpush1.bf16.msra.mxu0 0
          %3379 = vmatprep.subr.bf16.mxu0 0
          %3380 = vmatpush1.bf16.msra.mxu0 0
          %3381 = vmatprep.mubr.bf16.mxu0 0
          %3382 = vmatmul.mubr.bf16.gmra.mrb[0].mxu0 %v846
          %v3383 = vpop.f32.mrb[0].mxu0
          %v3384 = vadd.f32 0.0, %v3383
          %v3385 = vpop.f32.mrb[0].mxu0
          %v3386 = vadd.f32 0.0, %v3385
          %v3387 = vpop.f32.mrb[0].mxu0
          %v3388 = vadd.f32 0.0, %v3387
          %v3389 = vpop.f32.mrb[0].mxu0
          %v3390 = vadd.f32 0.0, %v3389
          %3391 = vdwg.mxu0
          %3392 = vmatprep.subr.bf16.mxu0 %v3090
          %3393 = vmatpush1.bf16.msra.mxu0 %v3089
          %3394 = vmatprep.subr.bf16.mxu0 0
          %3395 = vmatpush1.bf16.msra.mxu0 0
          %3396 = vmatprep.subr.bf16.mxu0 0
          %3397 = vmatpush1.bf16.msra.mxu0 0
          %3398 = vmatprep.subr.bf16.mxu0 0
          %3399 = vmatpush1.bf16.msra.mxu0 0
          %3400 = vmatprep.subr.bf16.mxu0 0
          %3401 = vmatpush1.bf16.msra.mxu0 0
          %3402 = vmatprep.subr.bf16.mxu0 0
          %3403 = vmatpush1.bf16.msra.mxu0 0
          %3404 = vmatprep.subr.bf16.mxu0 0
          %3405 = vmatpush1.bf16.msra.mxu0 0
          %3406 = vmatprep.subr.bf16.mxu0 0
          %3407 = vmatpush1.bf16.msra.mxu0 0
          %3408 = vmatprep.subr.bf16.mxu0 0
          %3409 = vmatpush1.bf16.msra.mxu0 0
          %3410 = vmatprep.subr.bf16.mxu0 0
          %3411 = vmatpush1.bf16.msra.mxu0 0
          %3412 = vmatprep.subr.bf16.mxu0 0
          %3413 = vmatpush1.bf16.msra.mxu0 0
          %3414 = vmatprep.subr.bf16.mxu0 0
          %3415 = vmatpush1.bf16.msra.mxu0 0
          %3416 = vmatprep.subr.bf16.mxu0 0
          %3417 = vmatpush1.bf16.msra.mxu0 0
          %3418 = vmatprep.subr.bf16.mxu0 0
          %3419 = vmatpush1.bf16.msra.mxu0 0
          %3420 = vmatprep.subr.bf16.mxu0 0
          %3421 = vmatpush1.bf16.msra.mxu0 0
          %3422 = vmatprep.subr.bf16.mxu0 0
          %3423 = vmatpush1.bf16.msra.mxu0 0
          %3424 = vmatprep.mubr.bf16.mxu0 0
          %3425 = vmatmul.mubr.bf16.gmra.mrb[0].mxu0 %v846
          %v3426 = vpop.f32.mrb[0].mxu0
          %v3427 = vadd.f32 0.0, %v3426
          %v3428 = vpop.f32.mrb[0].mxu0
          %v3429 = vadd.f32 0.0, %v3428
          %v3430 = vpop.f32.mrb[0].mxu0
          %v3431 = vadd.f32 0.0, %v3430
          %v3432 = vpop.f32.mrb[0].mxu0
          %v3433 = vadd.f32 0.0, %v3432
          %3434 = vdwg.mxu0
          %3435 = vmatprep.subr.bf16.mxu0 %v3076
          %3436 = vmatpush1.bf16.msra.mxu0 %v3075
          %3437 = vmatprep.subr.bf16.mxu0 0
          %3438 = vmatpush1.bf16.msra.mxu0 0
          %3439 = vmatprep.subr.bf16.mxu0 0
          %3440 = vmatpush1.bf16.msra.mxu0 0
          %3441 = vmatprep.subr.bf16.mxu0 0
          %3442 = vmatpush1.bf16.msra.mxu0 0
          %3443 = vmatprep.subr.bf16.mxu0 0
          %3444 = vmatpush1.bf16.msra.mxu0 0
          %3445 = vmatprep.subr.bf16.mxu0 0
          %3446 = vmatpush1.bf16.msra.mxu0 0
          %3447 = vmatprep.subr.bf16.mxu0 0
          %3448 = vmatpush1.bf16.msra.mxu0 0
          %3449 = vmatprep.subr.bf16.mxu0 0
          %3450 = vmatpush1.bf16.msra.mxu0 0
          %3451 = vmatprep.subr.bf16.mxu0 0
          %3452 = vmatpush1.bf16.msra.mxu0 0
          %3453 = vmatprep.subr.bf16.mxu0 0
          %3454 = vmatpush1.bf16.msra.mxu0 0
          %3455 = vmatprep.subr.bf16.mxu0 0
          %3456 = vmatpush1.bf16.msra.mxu0 0
          %3457 = vmatprep.subr.bf16.mxu0 0
          %3458 = vmatpush1.bf16.msra.mxu0 0
          %3459 = vmatprep.subr.bf16.mxu0 0
          %3460 = vmatpush1.bf16.msra.mxu0 0
          %3461 = vmatprep.subr.bf16.mxu0 0
          %3462 = vmatpush1.bf16.msra.mxu0 0
          %3463 = vmatprep.subr.bf16.mxu0 0
          %3464 = vmatpush1.bf16.msra.mxu0 0
          %3465 = vmatprep.subr.bf16.mxu0 0
          %3466 = vmatpush1.bf16.msra.mxu0 0
          %3467 = vmatprep.mubr.bf16.mxu0 0
          %3468 = vmatmul.mubr.bf16.gmra.mrb[0].mxu0 %v1193
          %v3469 = vpop.f32.mrb[0].mxu0
          %v3470 = vadd.f32 %v3126, %v3469
          %v3471 = vpop.f32.mrb[0].mxu0
          %v3472 = vadd.f32 %v3128, %v3471
          %v3473 = vpop.f32.mrb[0].mxu0
          %v3474 = vadd.f32 %v3130, %v3473
          %v3475 = vpop.f32.mrb[0].mxu0
          %v3476 = vadd.f32 %v3132, %v3475
          %3477 = vdwg.mxu0
          %3478 = vmatprep.subr.bf16.mxu0 %v3078
          %3479 = vmatpush1.bf16.msra.mxu0 %v3077
          %3480 = vmatprep.subr.bf16.mxu0 0
          %3481 = vmatpush1.bf16.msra.mxu0 0
          %3482 = vmatprep.subr.bf16.mxu0 0
          %3483 = vmatpush1.bf16.msra.mxu0 0
          %3484 = vmatprep.subr.bf16.mxu0 0
          %3485 = vmatpush1.bf16.msra.mxu0 0
          %3486 = vmatprep.subr.bf16.mxu0 0
          %3487 = vmatpush1.bf16.msra.mxu0 0
          %3488 = vmatprep.subr.bf16.mxu0 0
          %3489 = vmatpush1.bf16.msra.mxu0 0
          %3490 = vmatprep.subr.bf16.mxu0 0
          %3491 = vmatpush1.bf16.msra.mxu0 0
          %3492 = vmatprep.subr.bf16.mxu0 0
          %3493 = vmatpush1.bf16.msra.mxu0 0
          %3494 = vmatprep.subr.bf16.mxu0 0
          %3495 = vmatpush1.bf16.msra.mxu0 0
          %3496 = vmatprep.subr.bf16.mxu0 0
          %3497 = vmatpush1.bf16.msra.mxu0 0
          %3498 = vmatprep.subr.bf16.mxu0 0
          %3499 = vmatpush1.bf16.msra.mxu0 0
          %3500 = vmatprep.subr.bf16.mxu0 0
          %3501 = vmatpush1.bf16.msra.mxu0 0
          %3502 = vmatprep.subr.bf16.mxu0 0
          %3503 = vmatpush1.bf16.msra.mxu0 0
          %3504 = vmatprep.subr.bf16.mxu0 0
          %3505 = vmatpush1.bf16.msra.mxu0 0
          %3506 = vmatprep.subr.bf16.mxu0 0
          %3507 = vmatpush1.bf16.msra.mxu0 0
          %3508 = vmatprep.subr.bf16.mxu0 0
          %3509 = vmatpush1.bf16.msra.mxu0 0
          %3510 = vmatprep.mubr.bf16.mxu0 0
          %3511 = vmatmul.mubr.bf16.gmra.mrb[0].mxu0 %v1193
          %v3512 = vpop.f32.mrb[0].mxu0
          %v3513 = vadd.f32 %v3169, %v3512
          %v3514 = vpop.f32.mrb[0].mxu0
          %v3515 = vadd.f32 %v3171, %v3514
          %v3516 = vpop.f32.mrb[0].mxu0
          %v3517 = vadd.f32 %v3173, %v3516
          %v3518 = vpop.f32.mrb[0].mxu0
          %v3519 = vadd.f32 %v3175, %v3518
          %3520 = vdwg.mxu0
          %3521 = vmatprep.subr.bf16.mxu0 %v3080
          %3522 = vmatpush1.bf16.msra.mxu0 %v3079
          %3523 = vmatprep.subr.bf16.mxu0 0
          %3524 = vmatpush1.bf16.msra.mxu0 0
          %3525 = vmatprep.subr.bf16.mxu0 0
          %3526 = vmatpush1.bf16.msra.mxu0 0
          %3527 = vmatprep.subr.bf16.mxu0 0
          %3528 = vmatpush1.bf16.msra.mxu0 0
          %3529 = vmatprep.subr.bf16.mxu0 0
          %3530 = vmatpush1.bf16.msra.mxu0 0
          %3531 = vmatprep.subr.bf16.mxu0 0
          %3532 = vmatpush1.bf16.msra.mxu0 0
          %3533 = vmatprep.subr.bf16.mxu0 0
          %3534 = vmatpush1.bf16.msra.mxu0 0
          %3535 = vmatprep.subr.bf16.mxu0 0
          %3536 = vmatpush1.bf16.msra.mxu0 0
          %3537 = vmatprep.subr.bf16.mxu0 0
          %3538 = vmatpush1.bf16.msra.mxu0 0
          %3539 = vmatprep.subr.bf16.mxu0 0
          %3540 = vmatpush1.bf16.msra.mxu0 0
          %3541 = vmatprep.subr.bf16.mxu0 0
          %3542 = vmatpush1.bf16.msra.mxu0 0
          %3543 = vmatprep.subr.bf16.mxu0 0
          %3544 = vmatpush1.bf16.msra.mxu0 0
          %3545 = vmatprep.subr.bf16.mxu0 0
          %3546 = vmatpush1.bf16.msra.mxu0 0
          %3547 = vmatprep.subr.bf16.mxu0 0
          %3548 = vmatpush1.bf16.msra.mxu0 0
          %3549 = vmatprep.subr.bf16.mxu0 0
          %3550 = vmatpush1.bf16.msra.mxu0 0
          %3551 = vmatprep.subr.bf16.mxu0 0
          %3552 = vmatpush1.bf16.msra.mxu0 0
          %3553 = vmatprep.mubr.bf16.mxu0 0
          %3554 = vmatmul.mubr.bf16.gmra.mrb[0].mxu0 %v1193
          %v3555 = vpop.f32.mrb[0].mxu0
          %v3556 = vadd.f32 %v3212, %v3555
          %v3557 = vpop.f32.mrb[0].mxu0
          %v3558 = vadd.f32 %v3214, %v3557
          %v3559 = vpop.f32.mrb[0].mxu0
          %v3560 = vadd.f32 %v3216, %v3559
          %v3561 = vpop.f32.mrb[0].mxu0
          %v3562 = vadd.f32 %v3218, %v3561
          %3563 = vdwg.mxu0
          %3564 = vmatprep.subr.bf16.mxu0 %v3082
          %3565 = vmatpush1.bf16.msra.mxu0 %v3081
          %3566 = vmatprep.subr.bf16.mxu0 0
          %3567 = vmatpush1.bf16.msra.mxu0 0
          %3568 = vmatprep.subr.bf16.mxu0 0
          %3569 = vmatpush1.bf16.msra.mxu0 0
          %3570 = vmatprep.subr.bf16.mxu0 0
          %3571 = vmatpush1.bf16.msra.mxu0 0
          %3572 = vmatprep.subr.bf16.mxu0 0
          %3573 = vmatpush1.bf16.msra.mxu0 0
          %3574 = vmatprep.subr.bf16.mxu0 0
          %3575 = vmatpush1.bf16.msra.mxu0 0
          %3576 = vmatprep.subr.bf16.mxu0 0
          %3577 = vmatpush1.bf16.msra.mxu0 0
          %3578 = vmatprep.subr.bf16.mxu0 0
          %3579 = vmatpush1.bf16.msra.mxu0 0
          %3580 = vmatprep.subr.bf16.mxu0 0
          %3581 = vmatpush1.bf16.msra.mxu0 0
          %3582 = vmatprep.subr.bf16.mxu0 0
          %3583 = vmatpush1.bf16.msra.mxu0 0
          %3584 = vmatprep.subr.bf16.mxu0 0
          %3585 = vmatpush1.bf16.msra.mxu0 0
          %3586 = vmatprep.subr.bf16.mxu0 0
          %3587 = vmatpush1.bf16.msra.mxu0 0
          %3588 = vmatprep.subr.bf16.mxu0 0
          %3589 = vmatpush1.bf16.msra.mxu0 0
          %3590 = vmatprep.subr.bf16.mxu0 0
          %3591 = vmatpush1.bf16.msra.mxu0 0
          %3592 = vmatprep.subr.bf16.mxu0 0
          %3593 = vmatpush1.bf16.msra.mxu0 0
          %3594 = vmatprep.subr.bf16.mxu0 0
          %3595 = vmatpush1.bf16.msra.mxu0 0
          %3596 = vmatprep.mubr.bf16.mxu0 0
          %3597 = vmatmul.mubr.bf16.gmra.mrb[0].mxu0 %v1193
          %v3598 = vpop.f32.mrb[0].mxu0
          %v3599 = vadd.f32 %v3255, %v3598
          %v3600 = vpop.f32.mrb[0].mxu0
          %v3601 = vadd.f32 %v3257, %v3600
          %v3602 = vpop.f32.mrb[0].mxu0
          %v3603 = vadd.f32 %v3259, %v3602
          %v3604 = vpop.f32.mrb[0].mxu0
          %v3605 = vadd.f32 %v3261, %v3604
          %3606 = vdwg.mxu0
          %3607 = vmatprep.subr.bf16.mxu0 %v3084
          %3608 = vmatpush1.bf16.msra.mxu0 %v3083
          %3609 = vmatprep.subr.bf16.mxu0 0
          %3610 = vmatpush1.bf16.msra.mxu0 0
          %3611 = vmatprep.subr.bf16.mxu0 0
          %3612 = vmatpush1.bf16.msra.mxu0 0
          %3613 = vmatprep.subr.bf16.mxu0 0
          %3614 = vmatpush1.bf16.msra.mxu0 0
          %3615 = vmatprep.subr.bf16.mxu0 0
          %3616 = vmatpush1.bf16.msra.mxu0 0
          %3617 = vmatprep.subr.bf16.mxu0 0
          %3618 = vmatpush1.bf16.msra.mxu0 0
          %3619 = vmatprep.subr.bf16.mxu0 0
          %3620 = vmatpush1.bf16.msra.mxu0 0
          %3621 = vmatprep.subr.bf16.mxu0 0
          %3622 = vmatpush1.bf16.msra.mxu0 0
          %3623 = vmatprep.subr.bf16.mxu0 0
          %3624 = vmatpush1.bf16.msra.mxu0 0
          %3625 = vmatprep.subr.bf16.mxu0 0
          %3626 = vmatpush1.bf16.msra.mxu0 0
          %3627 = vmatprep.subr.bf16.mxu0 0
          %3628 = vmatpush1.bf16.msra.mxu0 0
          %3629 = vmatprep.subr.bf16.mxu0 0
          %3630 = vmatpush1.bf16.msra.mxu0 0
          %3631 = vmatprep.subr.bf16.mxu0 0
          %3632 = vmatpush1.bf16.msra.mxu0 0
          %3633 = vmatprep.subr.bf16.mxu0 0
          %3634 = vmatpush1.bf16.msra.mxu0 0
          %3635 = vmatprep.subr.bf16.mxu0 0
          %3636 = vmatpush1.bf16.msra.mxu0 0
          %3637 = vmatprep.subr.bf16.mxu0 0
          %3638 = vmatpush1.bf16.msra.mxu0 0
          %3639 = vmatprep.mubr.bf16.mxu0 0
          %3640 = vmatmul.mubr.bf16.gmra.mrb[0].mxu0 %v1193
          %v3641 = vpop.f32.mrb[0].mxu0
          %v3642 = vadd.f32 %v3298, %v3641
          %v3643 = vpop.f32.mrb[0].mxu0
          %v3644 = vadd.f32 %v3300, %v3643
          %v3645 = vpop.f32.mrb[0].mxu0
          %v3646 = vadd.f32 %v3302, %v3645
          %v3647 = vpop.f32.mrb[0].mxu0
          %v3648 = vadd.f32 %v3304, %v3647
          %3649 = vdwg.mxu0
          %3650 = vmatprep.subr.bf16.mxu0 %v3086
          %3651 = vmatpush1.bf16.msra.mxu0 %v3085
          %3652 = vmatprep.subr.bf16.mxu0 0
          %3653 = vmatpush1.bf16.msra.mxu0 0
          %3654 = vmatprep.subr.bf16.mxu0 0
          %3655 = vmatpush1.bf16.msra.mxu0 0
          %3656 = vmatprep.subr.bf16.mxu0 0
          %3657 = vmatpush1.bf16.msra.mxu0 0
          %3658 = vmatprep.subr.bf16.mxu0 0
          %3659 = vmatpush1.bf16.msra.mxu0 0
          %3660 = vmatprep.subr.bf16.mxu0 0
          %3661 = vmatpush1.bf16.msra.mxu0 0
          %3662 = vmatprep.subr.bf16.mxu0 0
          %3663 = vmatpush1.bf16.msra.mxu0 0
          %3664 = vmatprep.subr.bf16.mxu0 0
          %3665 = vmatpush1.bf16.msra.mxu0 0
          %3666 = vmatprep.subr.bf16.mxu0 0
          %3667 = vmatpush1.bf16.msra.mxu0 0
          %3668 = vmatprep.subr.bf16.mxu0 0
          %3669 = vmatpush1.bf16.msra.mxu0 0
          %3670 = vmatprep.subr.bf16.mxu0 0
          %3671 = vmatpush1.bf16.msra.mxu0 0
          %3672 = vmatprep.subr.bf16.mxu0 0
          %3673 = vmatpush1.bf16.msra.mxu0 0
          %3674 = vmatprep.subr.bf16.mxu0 0
          %3675 = vmatpush1.bf16.msra.mxu0 0
          %3676 = vmatprep.subr.bf16.mxu0 0
          %3677 = vmatpush1.bf16.msra.mxu0 0
          %3678 = vmatprep.subr.bf16.mxu0 0
          %3679 = vmatpush1.bf16.msra.mxu0 0
          %3680 = vmatprep.subr.bf16.mxu0 0
          %3681 = vmatpush1.bf16.msra.mxu0 0
          %3682 = vmatprep.mubr.bf16.mxu0 0
          %3683 = vmatmul.mubr.bf16.gmra.mrb[0].mxu0 %v1193
          %v3684 = vpop.f32.mrb[0].mxu0
          %v3685 = vadd.f32 %v3341, %v3684
          %v3686 = vpop.f32.mrb[0].mxu0
          %v3687 = vadd.f32 %v3343, %v3686
          %v3688 = vpop.f32.mrb[0].mxu0
          %v3689 = vadd.f32 %v3345, %v3688
          %v3690 = vpop.f32.mrb[0].mxu0
          %v3691 = vadd.f32 %v3347, %v3690
          %3692 = vdwg.mxu0
          %3693 = vmatprep.subr.bf16.mxu0 %v3088
          %3694 = vmatpush1.bf16.msra.mxu0 %v3087
          %3695 = vmatprep.subr.bf16.mxu0 0
          %3696 = vmatpush1.bf16.msra.mxu0 0
          %3697 = vmatprep.subr.bf16.mxu0 0
          %3698 = vmatpush1.bf16.msra.mxu0 0
          %3699 = vmatprep.subr.bf16.mxu0 0
          %3700 = vmatpush1.bf16.msra.mxu0 0
          %3701 = vmatprep.subr.bf16.mxu0 0
          %3702 = vmatpush1.bf16.msra.mxu0 0
          %3703 = vmatprep.subr.bf16.mxu0 0
          %3704 = vmatpush1.bf16.msra.mxu0 0
          %3705 = vmatprep.subr.bf16.mxu0 0
          %3706 = vmatpush1.bf16.msra.mxu0 0
          %3707 = vmatprep.subr.bf16.mxu0 0
          %3708 = vmatpush1.bf16.msra.mxu0 0
          %3709 = vmatprep.subr.bf16.mxu0 0
          %3710 = vmatpush1.bf16.msra.mxu0 0
          %3711 = vmatprep.subr.bf16.mxu0 0
          %3712 = vmatpush1.bf16.msra.mxu0 0
          %3713 = vmatprep.subr.bf16.mxu0 0
          %3714 = vmatpush1.bf16.msra.mxu0 0
          %3715 = vmatprep.subr.bf16.mxu0 0
          %3716 = vmatpush1.bf16.msra.mxu0 0
          %3717 = vmatprep.subr.bf16.mxu0 0
          %3718 = vmatpush1.bf16.msra.mxu0 0
          %3719 = vmatprep.subr.bf16.mxu0 0
          %3720 = vmatpush1.bf16.msra.mxu0 0
          %3721 = vmatprep.subr.bf16.mxu0 0
          %3722 = vmatpush1.bf16.msra.mxu0 0
          %3723 = vmatprep.subr.bf16.mxu0 0
          %3724 = vmatpush1.bf16.msra.mxu0 0
          %3725 = vmatprep.mubr.bf16.mxu0 0
          %3726 = vmatmul.mubr.bf16.gmra.mrb[0].mxu0 %v1193
          %v3727 = vpop.f32.mrb[0].mxu0
          %v3728 = vadd.f32 %v3384, %v3727
          %v3729 = vpop.f32.mrb[0].mxu0
          %v3730 = vadd.f32 %v3386, %v3729
          %v3731 = vpop.f32.mrb[0].mxu0
          %v3732 = vadd.f32 %v3388, %v3731
          %v3733 = vpop.f32.mrb[0].mxu0
          %v3734 = vadd.f32 %v3390, %v3733
          %3735 = vdwg.mxu0
          %3736 = vmatprep.subr.bf16.mxu0 %v3090
          %3737 = vmatpush1.bf16.msra.mxu0 %v3089
          %3738 = vmatprep.subr.bf16.mxu0 0
          %3739 = vmatpush1.bf16.msra.mxu0 0
          %3740 = vmatprep.subr.bf16.mxu0 0
          %3741 = vmatpush1.bf16.msra.mxu0 0
          %3742 = vmatprep.subr.bf16.mxu0 0
          %3743 = vmatpush1.bf16.msra.mxu0 0
          %3744 = vmatprep.subr.bf16.mxu0 0
          %3745 = vmatpush1.bf16.msra.mxu0 0
          %3746 = vmatprep.subr.bf16.mxu0 0
          %3747 = vmatpush1.bf16.msra.mxu0 0
          %3748 = vmatprep.subr.bf16.mxu0 0
          %3749 = vmatpush1.bf16.msra.mxu0 0
          %3750 = vmatprep.subr.bf16.mxu0 0
          %3751 = vmatpush1.bf16.msra.mxu0 0
          %3752 = vmatprep.subr.bf16.mxu0 0
          %3753 = vmatpush1.bf16.msra.mxu0 0
          %3754 = vmatprep.subr.bf16.mxu0 0
          %3755 = vmatpush1.bf16.msra.mxu0 0
          %3756 = vmatprep.subr.bf16.mxu0 0
          %3757 = vmatpush1.bf16.msra.mxu0 0
          %3758 = vmatprep.subr.bf16.mxu0 0
          %3759 = vmatpush1.bf16.msra.mxu0 0
          %3760 = vmatprep.subr.bf16.mxu0 0
          %3761 = vmatpush1.bf16.msra.mxu0 0
          %3762 = vmatprep.subr.bf16.mxu0 0
          %3763 = vmatpush1.bf16.msra.mxu0 0
          %3764 = vmatprep.subr.bf16.mxu0 0
          %3765 = vmatpush1.bf16.msra.mxu0 0
          %3766 = vmatprep.subr.bf16.mxu0 0
          %3767 = vmatpush1.bf16.msra.mxu0 0
          %3768 = vmatprep.mubr.bf16.mxu0 0
          %3769 = vmatmul.mubr.bf16.gmra.mrb[0].mxu0 %v1193
          %v3770 = vpop.f32.mrb[0].mxu0
          %v3771 = vadd.f32 %v3427, %v3770
          %v3772 = vpop.f32.mrb[0].mxu0
          %v3773 = vadd.f32 %v3429, %v3772
          %v3774 = vpop.f32.mrb[0].mxu0
          %v3775 = vadd.f32 %v3431, %v3774
          %v3776 = vpop.f32.mrb[0].mxu0
          %v3777 = vadd.f32 %v3433, %v3776
          %3778 = vdwg.mxu0
          %v3779 = vlaneseq
          %v3780 = vshrl.u32 %v3779, 7
          %v3781 = vsub.s32 2, %v3780
          %v3782 = vrot.slane %v673, %v3781
          %v3783 = vlaneseq
          %v3784 = vshrl.u32 %v3783, 7
          %v3785 = vsub.s32 2, %v3784
          %v3786 = vrot.slane %v674, %v3785
          %v3787 = vlaneseq
          %v3788 = vshrl.u32 %v3787, 7
          %v3789 = vsub.s32 2, %v3788
          %v3790 = vrot.slane %v675, %v3789
          %v3791 = vlaneseq
          %v3792 = vshrl.u32 %v3791, 7
          %v3793 = vsub.s32 2, %v3792
          %v3794 = vrot.slane %v676, %v3793
          %v3795 = vlaneseq
          %v3796 = vshrl.u32 %v3795, 7
          %v3797 = vsub.s32 2, %v3796
          %v3798 = vrot.slane %v677, %v3797
          %v3799 = vlaneseq
          %v3800 = vshrl.u32 %v3799, 7
          %v3801 = vsub.s32 2, %v3800
          %v3802 = vrot.slane %v678, %v3801
          %v3803 = vlaneseq
          %v3804 = vshrl.u32 %v3803, 7
          %v3805 = vsub.s32 2, %v3804
          %v3806 = vrot.slane %v679, %v3805
          %v3807 = vlaneseq
          %v3808 = vshrl.u32 %v3807, 7
          %v3809 = vsub.s32 2, %v3808
          %v3810 = vrot.slane %v680, %v3809
          %v3811 = vlaneseq
          %v3812 = vshrl.u32 %v3811, 7
          %v3813 = vsub.s32 2, %v3812
          %v3814 = vrot.slane %v681, %v3813
          %v3815 = vlaneseq
          %v3816 = vshrl.u32 %v3815, 7
          %v3817 = vsub.s32 2, %v3816
          %v3818 = vrot.slane %v682, %v3817
          %v3819 = vlaneseq
          %v3820 = vshrl.u32 %v3819, 7
          %v3821 = vsub.s32 2, %v3820
          %v3822 = vrot.slane %v683, %v3821
          %v3823 = vlaneseq
          %v3824 = vshrl.u32 %v3823, 7
          %v3825 = vsub.s32 2, %v3824
          %v3826 = vrot.slane %v684, %v3825
          %v3827 = vlaneseq
          %v3828 = vshrl.u32 %v3827, 7
          %v3829 = vsub.s32 2, %v3828
          %v3830 = vrot.slane %v685, %v3829
          %v3831 = vlaneseq
          %v3832 = vshrl.u32 %v3831, 7
          %v3833 = vsub.s32 2, %v3832
          %v3834 = vrot.slane %v686, %v3833
          %v3835 = vlaneseq
          %v3836 = vshrl.u32 %v3835, 7
          %v3837 = vsub.s32 2, %v3836
          %v3838 = vrot.slane %v687, %v3837
          %v3839 = vlaneseq
          %v3840 = vshrl.u32 %v3839, 7
          %v3841 = vsub.s32 2, %v3840
          %v3842 = vrot.slane %v688, %v3841
          %vm3843 = vcmp.eq.s32.totalorder %v698, %v3782
          %vm3844 = vcmp.eq.s32.totalorder %v698, %v3786
          %vm3845 = vcmp.eq.s32.totalorder %v698, %v3790
          %vm3846 = vcmp.eq.s32.totalorder %v698, %v3794
          %vm3847 = vcmp.eq.s32.totalorder %v698, %v3798
          %vm3848 = vcmp.eq.s32.totalorder %v698, %v3802
          %vm3849 = vcmp.eq.s32.totalorder %v698, %v3806
          %vm3850 = vcmp.eq.s32.totalorder %v698, %v3810
          %vm3851 = vcmp.eq.s32.totalorder %v698, %v3814
          %vm3852 = vcmp.eq.s32.totalorder %v698, %v3818
          %vm3853 = vcmp.eq.s32.totalorder %v698, %v3822
          %vm3854 = vcmp.eq.s32.totalorder %v698, %v3826
          %vm3855 = vcmp.eq.s32.totalorder %v698, %v3830
          %vm3856 = vcmp.eq.s32.totalorder %v698, %v3834
          %vm3857 = vcmp.eq.s32.totalorder %v698, %v3838
          %vm3858 = vcmp.eq.s32.totalorder %v698, %v3842
          %vm3859 = vcmp.eq.s32.totalorder %v699, %v3782
          %vm3860 = vcmp.eq.s32.totalorder %v699, %v3786
          %vm3861 = vcmp.eq.s32.totalorder %v699, %v3790
          %vm3862 = vcmp.eq.s32.totalorder %v699, %v3794
          %vm3863 = vcmp.eq.s32.totalorder %v699, %v3798
          %vm3864 = vcmp.eq.s32.totalorder %v699, %v3802
          %vm3865 = vcmp.eq.s32.totalorder %v699, %v3806
          %vm3866 = vcmp.eq.s32.totalorder %v699, %v3810
          %vm3867 = vcmp.eq.s32.totalorder %v699, %v3814
          %vm3868 = vcmp.eq.s32.totalorder %v699, %v3818
          %vm3869 = vcmp.eq.s32.totalorder %v699, %v3822
          %vm3870 = vcmp.eq.s32.totalorder %v699, %v3826
          %vm3871 = vcmp.eq.s32.totalorder %v699, %v3830
          %vm3872 = vcmp.eq.s32.totalorder %v699, %v3834
          %vm3873 = vcmp.eq.s32.totalorder %v699, %v3838
          %vm3874 = vcmp.eq.s32.totalorder %v699, %v3842
          %v3875 = vsel %vm3843, %v3470, 0.0
          %v3876 = vsel %vm3844, %v3472, 0.0
          %v3877 = vsel %vm3845, %v3513, 0.0
          %v3878 = vsel %vm3846, %v3515, 0.0
          %v3879 = vsel %vm3847, %v3556, 0.0
          %v3880 = vsel %vm3848, %v3558, 0.0
          %v3881 = vsel %vm3849, %v3599, 0.0
          %v3882 = vsel %vm3850, %v3601, 0.0
          %v3883 = vsel %vm3851, %v3642, 0.0
          %v3884 = vsel %vm3852, %v3644, 0.0
          %v3885 = vsel %vm3853, %v3685, 0.0
          %v3886 = vsel %vm3854, %v3687, 0.0
          %v3887 = vsel %vm3855, %v3728, 0.0
          %v3888 = vsel %vm3856, %v3730, 0.0
          %v3889 = vsel %vm3857, %v3771, 0.0
          %v3890 = vsel %vm3858, %v3773, 0.0
          %v3891 = vsel %vm3859, %v3474, 0.0
          %v3892 = vsel %vm3860, %v3476, 0.0
          %v3893 = vsel %vm3861, %v3517, 0.0
          %v3894 = vsel %vm3862, %v3519, 0.0
          %v3895 = vsel %vm3863, %v3560, 0.0
          %v3896 = vsel %vm3864, %v3562, 0.0
          %v3897 = vsel %vm3865, %v3603, 0.0
          %v3898 = vsel %vm3866, %v3605, 0.0
          %v3899 = vsel %vm3867, %v3646, 0.0
          %v3900 = vsel %vm3868, %v3648, 0.0
          %v3901 = vsel %vm3869, %v3689, 0.0
          %v3902 = vsel %vm3870, %v3691, 0.0
          %v3903 = vsel %vm3871, %v3732, 0.0
          %v3904 = vsel %vm3872, %v3734, 0.0
          %v3905 = vsel %vm3873, %v3775, 0.0
          %v3906 = vsel %vm3874, %v3777, 0.0
          %v3907 = vadd.f32 %v3875, %v3891
          %v3908 = vrot.slane %v3907, 4
          %v3909 = vadd.f32 %v3907, %v3908
          %v3910 = vrot.slane %v3909, 2
          %v3911 = vadd.f32 %v3909, %v3910
          %v3912 = vrot.slane %v3911, 1
          %v3913 = vadd.f32 %v3911, %v3912
          %v3914 = vadd.f32 %v3876, %v3892
          %v3915 = vrot.slane %v3914, 4
          %v3916 = vadd.f32 %v3914, %v3915
          %v3917 = vrot.slane %v3916, 2
          %v3918 = vadd.f32 %v3916, %v3917
          %v3919 = vrot.slane %v3918, 1
          %v3920 = vadd.f32 %v3918, %v3919
          %v3921 = vadd.f32 %v3877, %v3893
          %v3922 = vrot.slane %v3921, 4
          %v3923 = vadd.f32 %v3921, %v3922
          %v3924 = vrot.slane %v3923, 2
          %v3925 = vadd.f32 %v3923, %v3924
          %v3926 = vrot.slane %v3925, 1
          %v3927 = vadd.f32 %v3925, %v3926
          %v3928 = vadd.f32 %v3878, %v3894
          %v3929 = vrot.slane %v3928, 4
          %v3930 = vadd.f32 %v3928, %v3929
          %v3931 = vrot.slane %v3930, 2
          %v3932 = vadd.f32 %v3930, %v3931
          %v3933 = vrot.slane %v3932, 1
          %v3934 = vadd.f32 %v3932, %v3933
          %v3935 = vadd.f32 %v3879, %v3895
          %v3936 = vrot.slane %v3935, 4
          %v3937 = vadd.f32 %v3935, %v3936
          %v3938 = vrot.slane %v3937, 2
          %v3939 = vadd.f32 %v3937, %v3938
          %v3940 = vrot.slane %v3939, 1
          %v3941 = vadd.f32 %v3939, %v3940
          %v3942 = vadd.f32 %v3880, %v3896
          %v3943 = vrot.slane %v3942, 4
          %v3944 = vadd.f32 %v3942, %v3943
          %v3945 = vrot.slane %v3944, 2
          %v3946 = vadd.f32 %v3944, %v3945
          %v3947 = vrot.slane %v3946, 1
          %v3948 = vadd.f32 %v3946, %v3947
          %v3949 = vadd.f32 %v3881, %v3897
          %v3950 = vrot.slane %v3949, 4
          %v3951 = vadd.f32 %v3949, %v3950
          %v3952 = vrot.slane %v3951, 2
          %v3953 = vadd.f32 %v3951, %v3952
          %v3954 = vrot.slane %v3953, 1
          %v3955 = vadd.f32 %v3953, %v3954
          %v3956 = vadd.f32 %v3882, %v3898
          %v3957 = vrot.slane %v3956, 4
          %v3958 = vadd.f32 %v3956, %v3957
          %v3959 = vrot.slane %v3958, 2
          %v3960 = vadd.f32 %v3958, %v3959
          %v3961 = vrot.slane %v3960, 1
          %v3962 = vadd.f32 %v3960, %v3961
          %v3963 = vadd.f32 %v3883, %v3899
          %v3964 = vrot.slane %v3963, 4
          %v3965 = vadd.f32 %v3963, %v3964
          %v3966 = vrot.slane %v3965, 2
          %v3967 = vadd.f32 %v3965, %v3966
          %v3968 = vrot.slane %v3967, 1
          %v3969 = vadd.f32 %v3967, %v3968
          %v3970 = vadd.f32 %v3884, %v3900
          %v3971 = vrot.slane %v3970, 4
          %v3972 = vadd.f32 %v3970, %v3971
          %v3973 = vrot.slane %v3972, 2
          %v3974 = vadd.f32 %v3972, %v3973
          %v3975 = vrot.slane %v3974, 1
          %v3976 = vadd.f32 %v3974, %v3975
          %v3977 = vadd.f32 %v3885, %v3901
          %v3978 = vrot.slane %v3977, 4
          %v3979 = vadd.f32 %v3977, %v3978
          %v3980 = vrot.slane %v3979, 2
          %v3981 = vadd.f32 %v3979, %v3980
          %v3982 = vrot.slane %v3981, 1
          %v3983 = vadd.f32 %v3981, %v3982
          %v3984 = vadd.f32 %v3886, %v3902
          %v3985 = vrot.slane %v3984, 4
          %v3986 = vadd.f32 %v3984, %v3985
          %v3987 = vrot.slane %v3986, 2
          %v3988 = vadd.f32 %v3986, %v3987
          %v3989 = vrot.slane %v3988, 1
          %v3990 = vadd.f32 %v3988, %v3989
          %v3991 = vadd.f32 %v3887, %v3903
          %v3992 = vrot.slane %v3991, 4
          %v3993 = vadd.f32 %v3991, %v3992
          %v3994 = vrot.slane %v3993, 2
          %v3995 = vadd.f32 %v3993, %v3994
          %v3996 = vrot.slane %v3995, 1
          %v3997 = vadd.f32 %v3995, %v3996
          %v3998 = vadd.f32 %v3888, %v3904
          %v3999 = vrot.slane %v3998, 4
          %v4000 = vadd.f32 %v3998, %v3999
          %v4001 = vrot.slane %v4000, 2
          %v4002 = vadd.f32 %v4000, %v4001
          %v4003 = vrot.slane %v4002, 1
          %v4004 = vadd.f32 %v4002, %v4003
          %v4005 = vadd.f32 %v3889, %v3905
          %v4006 = vrot.slane %v4005, 4
          %v4007 = vadd.f32 %v4005, %v4006
          %v4008 = vrot.slane %v4007, 2
          %v4009 = vadd.f32 %v4007, %v4008
          %v4010 = vrot.slane %v4009, 1
          %v4011 = vadd.f32 %v4009, %v4010
          %v4012 = vadd.f32 %v3890, %v3906
          %v4013 = vrot.slane %v4012, 4
          %v4014 = vadd.f32 %v4012, %v4013
          %v4015 = vrot.slane %v4014, 2
          %v4016 = vadd.f32 %v4014, %v4015
          %v4017 = vrot.slane %v4016, 1
          %v4018 = vadd.f32 %v4016, %v4017
          %v4019 = vsub.f32 0.33333334, %v3913
          %v4020 = vsub.f32 0.33333334, %v3920
          %v4021 = vsub.f32 0.33333334, %v3927
          %v4022 = vsub.f32 0.33333334, %v3934
          %v4023 = vsub.f32 0.33333334, %v3941
          %v4024 = vsub.f32 0.33333334, %v3948
          %v4025 = vsub.f32 0.33333334, %v3955
          %v4026 = vsub.f32 0.33333334, %v3962
          %v4027 = vsub.f32 0.33333334, %v3969
          %v4028 = vsub.f32 0.33333334, %v3976
          %v4029 = vsub.f32 0.33333334, %v3983
          %v4030 = vsub.f32 0.33333334, %v3990
          %v4031 = vsub.f32 0.33333334, %v3997
          %v4032 = vsub.f32 0.33333334, %v4004
          %v4033 = vsub.f32 0.33333334, %v4011
          %v4034 = vsub.f32 0.33333334, %v4018
          %v4035 = vmul.f32 %v4019, %v4019
          %v4036 = vmul.f32 %v4020, %v4020
          %v4037 = vmul.f32 %v4021, %v4021
          %v4038 = vmul.f32 %v4022, %v4022
          %v4039 = vmul.f32 %v4023, %v4023
          %v4040 = vmul.f32 %v4024, %v4024
          %v4041 = vmul.f32 %v4025, %v4025
          %v4042 = vmul.f32 %v4026, %v4026
          %v4043 = vmul.f32 %v4027, %v4027
          %v4044 = vmul.f32 %v4028, %v4028
          %v4045 = vmul.f32 %v4029, %v4029
          %v4046 = vmul.f32 %v4030, %v4030
          %v4047 = vmul.f32 %v4031, %v4031
          %v4048 = vmul.f32 %v4032, %v4032
          %v4049 = vmul.f32 %v4033, %v4033
          %v4050 = vmul.f32 %v4034, %v4034
          %v4051 = vadd.f32 %v2931, %v4035
          %v4052 = vadd.f32 %v2932, %v4036
          %v4053 = vadd.f32 %v2933, %v4037
          %v4054 = vadd.f32 %v2934, %v4038
          %v4055 = vadd.f32 %v2935, %v4039
          %v4056 = vadd.f32 %v2936, %v4040
          %v4057 = vadd.f32 %v2937, %v4041
          %v4058 = vadd.f32 %v2938, %v4042
          %v4059 = vadd.f32 %v2939, %v4043
          %v4060 = vadd.f32 %v2940, %v4044
          %v4061 = vadd.f32 %v2941, %v4045
          %v4062 = vadd.f32 %v2942, %v4046
          %v4063 = vadd.f32 %v2943, %v4047
          %v4064 = vadd.f32 %v2944, %v4048
          %v4065 = vadd.f32 %v2945, %v4049
          %v4066 = vadd.f32 %v2946, %v4050
          %v4067 = vlaneseq
          %v4068 = vshrl.u32 %v4067, 7
          %v4069 = vsub.s32 3, %v4068
          %v4070 = vrot.slane %v657, %v4069
          %v4071 = vlaneseq
          %v4072 = vshrl.u32 %v4071, 7
          %v4073 = vsub.s32 3, %v4072
          %v4074 = vrot.slane %v658, %v4073
          %v4075 = vlaneseq
          %v4076 = vshrl.u32 %v4075, 7
          %v4077 = vsub.s32 3, %v4076
          %v4078 = vrot.slane %v659, %v4077
          %v4079 = vlaneseq
          %v4080 = vshrl.u32 %v4079, 7
          %v4081 = vsub.s32 3, %v4080
          %v4082 = vrot.slane %v660, %v4081
          %v4083 = vlaneseq
          %v4084 = vshrl.u32 %v4083, 7
          %v4085 = vsub.s32 3, %v4084
          %v4086 = vrot.slane %v661, %v4085
          %v4087 = vlaneseq
          %v4088 = vshrl.u32 %v4087, 7
          %v4089 = vsub.s32 3, %v4088
          %v4090 = vrot.slane %v662, %v4089
          %v4091 = vlaneseq
          %v4092 = vshrl.u32 %v4091, 7
          %v4093 = vsub.s32 3, %v4092
          %v4094 = vrot.slane %v663, %v4093
          %v4095 = vlaneseq
          %v4096 = vshrl.u32 %v4095, 7
          %v4097 = vsub.s32 3, %v4096
          %v4098 = vrot.slane %v664, %v4097
          %v4099 = vlaneseq
          %v4100 = vshrl.u32 %v4099, 7
          %v4101 = vsub.s32 3, %v4100
          %v4102 = vrot.slane %v665, %v4101
          %v4103 = vlaneseq
          %v4104 = vshrl.u32 %v4103, 7
          %v4105 = vsub.s32 3, %v4104
          %v4106 = vrot.slane %v666, %v4105
          %v4107 = vlaneseq
          %v4108 = vshrl.u32 %v4107, 7
          %v4109 = vsub.s32 3, %v4108
          %v4110 = vrot.slane %v667, %v4109
          %v4111 = vlaneseq
          %v4112 = vshrl.u32 %v4111, 7
          %v4113 = vsub.s32 3, %v4112
          %v4114 = vrot.slane %v668, %v4113
          %v4115 = vlaneseq
          %v4116 = vshrl.u32 %v4115, 7
          %v4117 = vsub.s32 3, %v4116
          %v4118 = vrot.slane %v669, %v4117
          %v4119 = vlaneseq
          %v4120 = vshrl.u32 %v4119, 7
          %v4121 = vsub.s32 3, %v4120
          %v4122 = vrot.slane %v670, %v4121
          %v4123 = vlaneseq
          %v4124 = vshrl.u32 %v4123, 7
          %v4125 = vsub.s32 3, %v4124
          %v4126 = vrot.slane %v671, %v4125
          %v4127 = vlaneseq
          %v4128 = vshrl.u32 %v4127, 7
          %v4129 = vsub.s32 3, %v4128
          %v4130 = vrot.slane %v672, %v4129
          %vm4131 = vcmp.eq.s32.totalorder %v698, %v4070
          %vm4132 = vcmp.eq.s32.totalorder %v698, %v4074
          %vm4133 = vcmp.eq.s32.totalorder %v698, %v4078
          %vm4134 = vcmp.eq.s32.totalorder %v698, %v4082
          %vm4135 = vcmp.eq.s32.totalorder %v698, %v4086
          %vm4136 = vcmp.eq.s32.totalorder %v698, %v4090
          %vm4137 = vcmp.eq.s32.totalorder %v698, %v4094
          %vm4138 = vcmp.eq.s32.totalorder %v698, %v4098
          %vm4139 = vcmp.eq.s32.totalorder %v698, %v4102
          %vm4140 = vcmp.eq.s32.totalorder %v698, %v4106
          %vm4141 = vcmp.eq.s32.totalorder %v698, %v4110
          %vm4142 = vcmp.eq.s32.totalorder %v698, %v4114
          %vm4143 = vcmp.eq.s32.totalorder %v698, %v4118
          %vm4144 = vcmp.eq.s32.totalorder %v698, %v4122
          %vm4145 = vcmp.eq.s32.totalorder %v698, %v4126
          %vm4146 = vcmp.eq.s32.totalorder %v698, %v4130
          %vm4147 = vcmp.eq.s32.totalorder %v699, %v4070
          %vm4148 = vcmp.eq.s32.totalorder %v699, %v4074
          %vm4149 = vcmp.eq.s32.totalorder %v699, %v4078
          %vm4150 = vcmp.eq.s32.totalorder %v699, %v4082
          %vm4151 = vcmp.eq.s32.totalorder %v699, %v4086
          %vm4152 = vcmp.eq.s32.totalorder %v699, %v4090
          %vm4153 = vcmp.eq.s32.totalorder %v699, %v4094
          %vm4154 = vcmp.eq.s32.totalorder %v699, %v4098
          %vm4155 = vcmp.eq.s32.totalorder %v699, %v4102
          %vm4156 = vcmp.eq.s32.totalorder %v699, %v4106
          %vm4157 = vcmp.eq.s32.totalorder %v699, %v4110
          %vm4158 = vcmp.eq.s32.totalorder %v699, %v4114
          %vm4159 = vcmp.eq.s32.totalorder %v699, %v4118
          %vm4160 = vcmp.eq.s32.totalorder %v699, %v4122
          %vm4161 = vcmp.eq.s32.totalorder %v699, %v4126
          %vm4162 = vcmp.eq.s32.totalorder %v699, %v4130
          %v4163 = vsel %vm4131, 1.0, 0.0
          %v4164 = vsel %vm4132, 1.0, 0.0
          %v4165 = vsel %vm4133, 1.0, 0.0
          %v4166 = vsel %vm4134, 1.0, 0.0
          %v4167 = vsel %vm4135, 1.0, 0.0
          %v4168 = vsel %vm4136, 1.0, 0.0
          %v4169 = vsel %vm4137, 1.0, 0.0
          %v4170 = vsel %vm4138, 1.0, 0.0
          %v4171 = vsel %vm4139, 1.0, 0.0
          %v4172 = vsel %vm4140, 1.0, 0.0
          %v4173 = vsel %vm4141, 1.0, 0.0
          %v4174 = vsel %vm4142, 1.0, 0.0
          %v4175 = vsel %vm4143, 1.0, 0.0
          %v4176 = vsel %vm4144, 1.0, 0.0
          %v4177 = vsel %vm4145, 1.0, 0.0
          %v4178 = vsel %vm4146, 1.0, 0.0
          %v4179 = vsel %vm4147, 1.0, 0.0
          %v4180 = vsel %vm4148, 1.0, 0.0
          %v4181 = vsel %vm4149, 1.0, 0.0
          %v4182 = vsel %vm4150, 1.0, 0.0
          %v4183 = vsel %vm4151, 1.0, 0.0
          %v4184 = vsel %vm4152, 1.0, 0.0
          %v4185 = vsel %vm4153, 1.0, 0.0
          %v4186 = vsel %vm4154, 1.0, 0.0
          %v4187 = vsel %vm4155, 1.0, 0.0
          %v4188 = vsel %vm4156, 1.0, 0.0
          %v4189 = vsel %vm4157, 1.0, 0.0
          %v4190 = vsel %vm4158, 1.0, 0.0
          %v4191 = vsel %vm4159, 1.0, 0.0
          %v4192 = vsel %vm4160, 1.0, 0.0
          %v4193 = vsel %vm4161, 1.0, 0.0
          %v4194 = vsel %vm4162, 1.0, 0.0
          %v4195 = vpack.c.bf16 %v4179, %v4163
          %v4196 = vpack.c.bf16 %v4180, %v4164
          %v4197 = vpack.c.bf16 %v4181, %v4165
          %v4198 = vpack.c.bf16 %v4182, %v4166
          %v4199 = vpack.c.bf16 %v4183, %v4167
          %v4200 = vpack.c.bf16 %v4184, %v4168
          %v4201 = vpack.c.bf16 %v4185, %v4169
          %v4202 = vpack.c.bf16 %v4186, %v4170
          %v4203 = vpack.c.bf16 %v4187, %v4171
          %v4204 = vpack.c.bf16 %v4188, %v4172
          %v4205 = vpack.c.bf16 %v4189, %v4173
          %v4206 = vpack.c.bf16 %v4190, %v4174
          %v4207 = vpack.c.bf16 %v4191, %v4175
          %v4208 = vpack.c.bf16 %v4192, %v4176
          %v4209 = vpack.c.bf16 %v4193, %v4177
          %v4210 = vpack.c.bf16 %v4194, %v4178
          %4211 = vmatprep.subr.bf16.mxu0 %v4196
          %4212 = vmatpush1.bf16.msra.mxu0 %v4195
          %4213 = vmatprep.subr.bf16.mxu0 0
          %4214 = vmatpush1.bf16.msra.mxu0 0
          %4215 = vmatprep.subr.bf16.mxu0 0
          %4216 = vmatpush1.bf16.msra.mxu0 0
          %4217 = vmatprep.subr.bf16.mxu0 0
          %4218 = vmatpush1.bf16.msra.mxu0 0
          %4219 = vmatprep.subr.bf16.mxu0 0
          %4220 = vmatpush1.bf16.msra.mxu0 0
          %4221 = vmatprep.subr.bf16.mxu0 0
          %4222 = vmatpush1.bf16.msra.mxu0 0
          %4223 = vmatprep.subr.bf16.mxu0 0
          %4224 = vmatpush1.bf16.msra.mxu0 0
          %4225 = vmatprep.subr.bf16.mxu0 0
          %4226 = vmatpush1.bf16.msra.mxu0 0
          %4227 = vmatprep.subr.bf16.mxu0 0
          %4228 = vmatpush1.bf16.msra.mxu0 0
          %4229 = vmatprep.subr.bf16.mxu0 0
          %4230 = vmatpush1.bf16.msra.mxu0 0
          %4231 = vmatprep.subr.bf16.mxu0 0
          %4232 = vmatpush1.bf16.msra.mxu0 0
          %4233 = vmatprep.subr.bf16.mxu0 0
          %4234 = vmatpush1.bf16.msra.mxu0 0
          %4235 = vmatprep.subr.bf16.mxu0 0
          %4236 = vmatpush1.bf16.msra.mxu0 0
          %4237 = vmatprep.subr.bf16.mxu0 0
          %4238 = vmatpush1.bf16.msra.mxu0 0
          %4239 = vmatprep.subr.bf16.mxu0 0
          %4240 = vmatpush1.bf16.msra.mxu0 0
          %4241 = vmatprep.subr.bf16.mxu0 0
          %4242 = vmatpush1.bf16.msra.mxu0 0
          %4243 = vmatprep.mubr.bf16.mxu0 0
          %4244 = vmatmul.mubr.bf16.gmra.mrb[0].mxu0 %v846
          %v4245 = vpop.f32.mrb[0].mxu0
          %v4246 = vadd.f32 0.0, %v4245
          %v4247 = vpop.f32.mrb[0].mxu0
          %v4248 = vadd.f32 0.0, %v4247
          %v4249 = vpop.f32.mrb[0].mxu0
          %v4250 = vadd.f32 0.0, %v4249
          %v4251 = vpop.f32.mrb[0].mxu0
          %v4252 = vadd.f32 0.0, %v4251
          %4253 = vdwg.mxu0
          %4254 = vmatprep.subr.bf16.mxu0 %v4198
          %4255 = vmatpush1.bf16.msra.mxu0 %v4197
          %4256 = vmatprep.subr.bf16.mxu0 0
          %4257 = vmatpush1.bf16.msra.mxu0 0
          %4258 = vmatprep.subr.bf16.mxu0 0
          %4259 = vmatpush1.bf16.msra.mxu0 0
          %4260 = vmatprep.subr.bf16.mxu0 0
          %4261 = vmatpush1.bf16.msra.mxu0 0
          %4262 = vmatprep.subr.bf16.mxu0 0
          %4263 = vmatpush1.bf16.msra.mxu0 0
          %4264 = vmatprep.subr.bf16.mxu0 0
          %4265 = vmatpush1.bf16.msra.mxu0 0
          %4266 = vmatprep.subr.bf16.mxu0 0
          %4267 = vmatpush1.bf16.msra.mxu0 0
          %4268 = vmatprep.subr.bf16.mxu0 0
          %4269 = vmatpush1.bf16.msra.mxu0 0
          %4270 = vmatprep.subr.bf16.mxu0 0
          %4271 = vmatpush1.bf16.msra.mxu0 0
          %4272 = vmatprep.subr.bf16.mxu0 0
          %4273 = vmatpush1.bf16.msra.mxu0 0
          %4274 = vmatprep.subr.bf16.mxu0 0
          %4275 = vmatpush1.bf16.msra.mxu0 0
          %4276 = vmatprep.subr.bf16.mxu0 0
          %4277 = vmatpush1.bf16.msra.mxu0 0
          %4278 = vmatprep.subr.bf16.mxu0 0
          %4279 = vmatpush1.bf16.msra.mxu0 0
          %4280 = vmatprep.subr.bf16.mxu0 0
          %4281 = vmatpush1.bf16.msra.mxu0 0
          %4282 = vmatprep.subr.bf16.mxu0 0
          %4283 = vmatpush1.bf16.msra.mxu0 0
          %4284 = vmatprep.subr.bf16.mxu0 0
          %4285 = vmatpush1.bf16.msra.mxu0 0
          %4286 = vmatprep.mubr.bf16.mxu0 0
          %4287 = vmatmul.mubr.bf16.gmra.mrb[0].mxu0 %v846
          %v4288 = vpop.f32.mrb[0].mxu0
          %v4289 = vadd.f32 0.0, %v4288
          %v4290 = vpop.f32.mrb[0].mxu0
          %v4291 = vadd.f32 0.0, %v4290
          %v4292 = vpop.f32.mrb[0].mxu0
          %v4293 = vadd.f32 0.0, %v4292
          %v4294 = vpop.f32.mrb[0].mxu0
          %v4295 = vadd.f32 0.0, %v4294
          %4296 = vdwg.mxu0
          %4297 = vmatprep.subr.bf16.mxu0 %v4200
          %4298 = vmatpush1.bf16.msra.mxu0 %v4199
          %4299 = vmatprep.subr.bf16.mxu0 0
          %4300 = vmatpush1.bf16.msra.mxu0 0
          %4301 = vmatprep.subr.bf16.mxu0 0
          %4302 = vmatpush1.bf16.msra.mxu0 0
          %4303 = vmatprep.subr.bf16.mxu0 0
          %4304 = vmatpush1.bf16.msra.mxu0 0
          %4305 = vmatprep.subr.bf16.mxu0 0
          %4306 = vmatpush1.bf16.msra.mxu0 0
          %4307 = vmatprep.subr.bf16.mxu0 0
          %4308 = vmatpush1.bf16.msra.mxu0 0
          %4309 = vmatprep.subr.bf16.mxu0 0
          %4310 = vmatpush1.bf16.msra.mxu0 0
          %4311 = vmatprep.subr.bf16.mxu0 0
          %4312 = vmatpush1.bf16.msra.mxu0 0
          %4313 = vmatprep.subr.bf16.mxu0 0
          %4314 = vmatpush1.bf16.msra.mxu0 0
          %4315 = vmatprep.subr.bf16.mxu0 0
          %4316 = vmatpush1.bf16.msra.mxu0 0
          %4317 = vmatprep.subr.bf16.mxu0 0
          %4318 = vmatpush1.bf16.msra.mxu0 0
          %4319 = vmatprep.subr.bf16.mxu0 0
          %4320 = vmatpush1.bf16.msra.mxu0 0
          %4321 = vmatprep.subr.bf16.mxu0 0
          %4322 = vmatpush1.bf16.msra.mxu0 0
          %4323 = vmatprep.subr.bf16.mxu0 0
          %4324 = vmatpush1.bf16.msra.mxu0 0
          %4325 = vmatprep.subr.bf16.mxu0 0
          %4326 = vmatpush1.bf16.msra.mxu0 0
          %4327 = vmatprep.subr.bf16.mxu0 0
          %4328 = vmatpush1.bf16.msra.mxu0 0
          %4329 = vmatprep.mubr.bf16.mxu0 0
          %4330 = vmatmul.mubr.bf16.gmra.mrb[0].mxu0 %v846
          %v4331 = vpop.f32.mrb[0].mxu0
          %v4332 = vadd.f32 0.0, %v4331
          %v4333 = vpop.f32.mrb[0].mxu0
          %v4334 = vadd.f32 0.0, %v4333
          %v4335 = vpop.f32.mrb[0].mxu0
          %v4336 = vadd.f32 0.0, %v4335
          %v4337 = vpop.f32.mrb[0].mxu0
          %v4338 = vadd.f32 0.0, %v4337
          %4339 = vdwg.mxu0
          %4340 = vmatprep.subr.bf16.mxu0 %v4202
          %4341 = vmatpush1.bf16.msra.mxu0 %v4201
          %4342 = vmatprep.subr.bf16.mxu0 0
          %4343 = vmatpush1.bf16.msra.mxu0 0
          %4344 = vmatprep.subr.bf16.mxu0 0
          %4345 = vmatpush1.bf16.msra.mxu0 0
          %4346 = vmatprep.subr.bf16.mxu0 0
          %4347 = vmatpush1.bf16.msra.mxu0 0
          %4348 = vmatprep.subr.bf16.mxu0 0
          %4349 = vmatpush1.bf16.msra.mxu0 0
          %4350 = vmatprep.subr.bf16.mxu0 0
          %4351 = vmatpush1.bf16.msra.mxu0 0
          %4352 = vmatprep.subr.bf16.mxu0 0
          %4353 = vmatpush1.bf16.msra.mxu0 0
          %4354 = vmatprep.subr.bf16.mxu0 0
          %4355 = vmatpush1.bf16.msra.mxu0 0
          %4356 = vmatprep.subr.bf16.mxu0 0
          %4357 = vmatpush1.bf16.msra.mxu0 0
          %4358 = vmatprep.subr.bf16.mxu0 0
          %4359 = vmatpush1.bf16.msra.mxu0 0
          %4360 = vmatprep.subr.bf16.mxu0 0
          %4361 = vmatpush1.bf16.msra.mxu0 0
          %4362 = vmatprep.subr.bf16.mxu0 0
          %4363 = vmatpush1.bf16.msra.mxu0 0
          %4364 = vmatprep.subr.bf16.mxu0 0
          %4365 = vmatpush1.bf16.msra.mxu0 0
          %4366 = vmatprep.subr.bf16.mxu0 0
          %4367 = vmatpush1.bf16.msra.mxu0 0
          %4368 = vmatprep.subr.bf16.mxu0 0
          %4369 = vmatpush1.bf16.msra.mxu0 0
          %4370 = vmatprep.subr.bf16.mxu0 0
          %4371 = vmatpush1.bf16.msra.mxu0 0
          %4372 = vmatprep.mubr.bf16.mxu0 0
          %4373 = vmatmul.mubr.bf16.gmra.mrb[0].mxu0 %v846
          %v4374 = vpop.f32.mrb[0].mxu0
          %v4375 = vadd.f32 0.0, %v4374
          %v4376 = vpop.f32.mrb[0].mxu0
          %v4377 = vadd.f32 0.0, %v4376
          %v4378 = vpop.f32.mrb[0].mxu0
          %v4379 = vadd.f32 0.0, %v4378
          %v4380 = vpop.f32.mrb[0].mxu0
          %v4381 = vadd.f32 0.0, %v4380
          %4382 = vdwg.mxu0
          %4383 = vmatprep.subr.bf16.mxu0 %v4204
          %4384 = vmatpush1.bf16.msra.mxu0 %v4203
          %4385 = vmatprep.subr.bf16.mxu0 0
          %4386 = vmatpush1.bf16.msra.mxu0 0
          %4387 = vmatprep.subr.bf16.mxu0 0
          %4388 = vmatpush1.bf16.msra.mxu0 0
          %4389 = vmatprep.subr.bf16.mxu0 0
          %4390 = vmatpush1.bf16.msra.mxu0 0
          %4391 = vmatprep.subr.bf16.mxu0 0
          %4392 = vmatpush1.bf16.msra.mxu0 0
          %4393 = vmatprep.subr.bf16.mxu0 0
          %4394 = vmatpush1.bf16.msra.mxu0 0
          %4395 = vmatprep.subr.bf16.mxu0 0
          %4396 = vmatpush1.bf16.msra.mxu0 0
          %4397 = vmatprep.subr.bf16.mxu0 0
          %4398 = vmatpush1.bf16.msra.mxu0 0
          %4399 = vmatprep.subr.bf16.mxu0 0
          %4400 = vmatpush1.bf16.msra.mxu0 0
          %4401 = vmatprep.subr.bf16.mxu0 0
          %4402 = vmatpush1.bf16.msra.mxu0 0
          %4403 = vmatprep.subr.bf16.mxu0 0
          %4404 = vmatpush1.bf16.msra.mxu0 0
          %4405 = vmatprep.subr.bf16.mxu0 0
          %4406 = vmatpush1.bf16.msra.mxu0 0
          %4407 = vmatprep.subr.bf16.mxu0 0
          %4408 = vmatpush1.bf16.msra.mxu0 0
          %4409 = vmatprep.subr.bf16.mxu0 0
          %4410 = vmatpush1.bf16.msra.mxu0 0
          %4411 = vmatprep.subr.bf16.mxu0 0
          %4412 = vmatpush1.bf16.msra.mxu0 0
          %4413 = vmatprep.subr.bf16.mxu0 0
          %4414 = vmatpush1.bf16.msra.mxu0 0
          %4415 = vmatprep.mubr.bf16.mxu0 0
          %4416 = vmatmul.mubr.bf16.gmra.mrb[0].mxu0 %v846
          %v4417 = vpop.f32.mrb[0].mxu0
          %v4418 = vadd.f32 0.0, %v4417
          %v4419 = vpop.f32.mrb[0].mxu0
          %v4420 = vadd.f32 0.0, %v4419
          %v4421 = vpop.f32.mrb[0].mxu0
          %v4422 = vadd.f32 0.0, %v4421
          %v4423 = vpop.f32.mrb[0].mxu0
          %v4424 = vadd.f32 0.0, %v4423
          %4425 = vdwg.mxu0
          %4426 = vmatprep.subr.bf16.mxu0 %v4206
          %4427 = vmatpush1.bf16.msra.mxu0 %v4205
          %4428 = vmatprep.subr.bf16.mxu0 0
          %4429 = vmatpush1.bf16.msra.mxu0 0
          %4430 = vmatprep.subr.bf16.mxu0 0
          %4431 = vmatpush1.bf16.msra.mxu0 0
          %4432 = vmatprep.subr.bf16.mxu0 0
          %4433 = vmatpush1.bf16.msra.mxu0 0
          %4434 = vmatprep.subr.bf16.mxu0 0
          %4435 = vmatpush1.bf16.msra.mxu0 0
          %4436 = vmatprep.subr.bf16.mxu0 0
          %4437 = vmatpush1.bf16.msra.mxu0 0
          %4438 = vmatprep.subr.bf16.mxu0 0
          %4439 = vmatpush1.bf16.msra.mxu0 0
          %4440 = vmatprep.subr.bf16.mxu0 0
          %4441 = vmatpush1.bf16.msra.mxu0 0
          %4442 = vmatprep.subr.bf16.mxu0 0
          %4443 = vmatpush1.bf16.msra.mxu0 0
          %4444 = vmatprep.subr.bf16.mxu0 0
          %4445 = vmatpush1.bf16.msra.mxu0 0
          %4446 = vmatprep.subr.bf16.mxu0 0
          %4447 = vmatpush1.bf16.msra.mxu0 0
          %4448 = vmatprep.subr.bf16.mxu0 0
          %4449 = vmatpush1.bf16.msra.mxu0 0
          %4450 = vmatprep.subr.bf16.mxu0 0
          %4451 = vmatpush1.bf16.msra.mxu0 0
          %4452 = vmatprep.subr.bf16.mxu0 0
          %4453 = vmatpush1.bf16.msra.mxu0 0
          %4454 = vmatprep.subr.bf16.mxu0 0
          %4455 = vmatpush1.bf16.msra.mxu0 0
          %4456 = vmatprep.subr.bf16.mxu0 0
          %4457 = vmatpush1.bf16.msra.mxu0 0
          %4458 = vmatprep.mubr.bf16.mxu0 0
          %4459 = vmatmul.mubr.bf16.gmra.mrb[0].mxu0 %v846
          %v4460 = vpop.f32.mrb[0].mxu0
          %v4461 = vadd.f32 0.0, %v4460
          %v4462 = vpop.f32.mrb[0].mxu0
          %v4463 = vadd.f32 0.0, %v4462
          %v4464 = vpop.f32.mrb[0].mxu0
          %v4465 = vadd.f32 0.0, %v4464
          %v4466 = vpop.f32.mrb[0].mxu0
          %v4467 = vadd.f32 0.0, %v4466
          %4468 = vdwg.mxu0
          %4469 = vmatprep.subr.bf16.mxu0 %v4208
          %4470 = vmatpush1.bf16.msra.mxu0 %v4207
          %4471 = vmatprep.subr.bf16.mxu0 0
          %4472 = vmatpush1.bf16.msra.mxu0 0
          %4473 = vmatprep.subr.bf16.mxu0 0
          %4474 = vmatpush1.bf16.msra.mxu0 0
          %4475 = vmatprep.subr.bf16.mxu0 0
          %4476 = vmatpush1.bf16.msra.mxu0 0
          %4477 = vmatprep.subr.bf16.mxu0 0
          %4478 = vmatpush1.bf16.msra.mxu0 0
          %4479 = vmatprep.subr.bf16.mxu0 0
          %4480 = vmatpush1.bf16.msra.mxu0 0
          %4481 = vmatprep.subr.bf16.mxu0 0
          %4482 = vmatpush1.bf16.msra.mxu0 0
          %4483 = vmatprep.subr.bf16.mxu0 0
          %4484 = vmatpush1.bf16.msra.mxu0 0
          %4485 = vmatprep.subr.bf16.mxu0 0
          %4486 = vmatpush1.bf16.msra.mxu0 0
          %4487 = vmatprep.subr.bf16.mxu0 0
          %4488 = vmatpush1.bf16.msra.mxu0 0
          %4489 = vmatprep.subr.bf16.mxu0 0
          %4490 = vmatpush1.bf16.msra.mxu0 0
          %4491 = vmatprep.subr.bf16.mxu0 0
          %4492 = vmatpush1.bf16.msra.mxu0 0
          %4493 = vmatprep.subr.bf16.mxu0 0
          %4494 = vmatpush1.bf16.msra.mxu0 0
          %4495 = vmatprep.subr.bf16.mxu0 0
          %4496 = vmatpush1.bf16.msra.mxu0 0
          %4497 = vmatprep.subr.bf16.mxu0 0
          %4498 = vmatpush1.bf16.msra.mxu0 0
          %4499 = vmatprep.subr.bf16.mxu0 0
          %4500 = vmatpush1.bf16.msra.mxu0 0
          %4501 = vmatprep.mubr.bf16.mxu0 0
          %4502 = vmatmul.mubr.bf16.gmra.mrb[0].mxu0 %v846
          %v4503 = vpop.f32.mrb[0].mxu0
          %v4504 = vadd.f32 0.0, %v4503
          %v4505 = vpop.f32.mrb[0].mxu0
          %v4506 = vadd.f32 0.0, %v4505
          %v4507 = vpop.f32.mrb[0].mxu0
          %v4508 = vadd.f32 0.0, %v4507
          %v4509 = vpop.f32.mrb[0].mxu0
          %v4510 = vadd.f32 0.0, %v4509
          %4511 = vdwg.mxu0
          %4512 = vmatprep.subr.bf16.mxu0 %v4210
          %4513 = vmatpush1.bf16.msra.mxu0 %v4209
          %4514 = vmatprep.subr.bf16.mxu0 0
          %4515 = vmatpush1.bf16.msra.mxu0 0
          %4516 = vmatprep.subr.bf16.mxu0 0
          %4517 = vmatpush1.bf16.msra.mxu0 0
          %4518 = vmatprep.subr.bf16.mxu0 0
          %4519 = vmatpush1.bf16.msra.mxu0 0
          %4520 = vmatprep.subr.bf16.mxu0 0
          %4521 = vmatpush1.bf16.msra.mxu0 0
          %4522 = vmatprep.subr.bf16.mxu0 0
          %4523 = vmatpush1.bf16.msra.mxu0 0
          %4524 = vmatprep.subr.bf16.mxu0 0
          %4525 = vmatpush1.bf16.msra.mxu0 0
          %4526 = vmatprep.subr.bf16.mxu0 0
          %4527 = vmatpush1.bf16.msra.mxu0 0
          %4528 = vmatprep.subr.bf16.mxu0 0
          %4529 = vmatpush1.bf16.msra.mxu0 0
          %4530 = vmatprep.subr.bf16.mxu0 0
          %4531 = vmatpush1.bf16.msra.mxu0 0
          %4532 = vmatprep.subr.bf16.mxu0 0
          %4533 = vmatpush1.bf16.msra.mxu0 0
          %4534 = vmatprep.subr.bf16.mxu0 0
          %4535 = vmatpush1.bf16.msra.mxu0 0
          %4536 = vmatprep.subr.bf16.mxu0 0
          %4537 = vmatpush1.bf16.msra.mxu0 0
          %4538 = vmatprep.subr.bf16.mxu0 0
          %4539 = vmatpush1.bf16.msra.mxu0 0
          %4540 = vmatprep.subr.bf16.mxu0 0
          %4541 = vmatpush1.bf16.msra.mxu0 0
          %4542 = vmatprep.subr.bf16.mxu0 0
          %4543 = vmatpush1.bf16.msra.mxu0 0
          %4544 = vmatprep.mubr.bf16.mxu0 0
          %4545 = vmatmul.mubr.bf16.gmra.mrb[0].mxu0 %v846
          %v4546 = vpop.f32.mrb[0].mxu0
          %v4547 = vadd.f32 0.0, %v4546
          %v4548 = vpop.f32.mrb[0].mxu0
          %v4549 = vadd.f32 0.0, %v4548
          %v4550 = vpop.f32.mrb[0].mxu0
          %v4551 = vadd.f32 0.0, %v4550
          %v4552 = vpop.f32.mrb[0].mxu0
          %v4553 = vadd.f32 0.0, %v4552
          %4554 = vdwg.mxu0
          %4555 = vmatprep.subr.bf16.mxu0 %v4196
          %4556 = vmatpush1.bf16.msra.mxu0 %v4195
          %4557 = vmatprep.subr.bf16.mxu0 0
          %4558 = vmatpush1.bf16.msra.mxu0 0
          %4559 = vmatprep.subr.bf16.mxu0 0
          %4560 = vmatpush1.bf16.msra.mxu0 0
          %4561 = vmatprep.subr.bf16.mxu0 0
          %4562 = vmatpush1.bf16.msra.mxu0 0
          %4563 = vmatprep.subr.bf16.mxu0 0
          %4564 = vmatpush1.bf16.msra.mxu0 0
          %4565 = vmatprep.subr.bf16.mxu0 0
          %4566 = vmatpush1.bf16.msra.mxu0 0
          %4567 = vmatprep.subr.bf16.mxu0 0
          %4568 = vmatpush1.bf16.msra.mxu0 0
          %4569 = vmatprep.subr.bf16.mxu0 0
          %4570 = vmatpush1.bf16.msra.mxu0 0
          %4571 = vmatprep.subr.bf16.mxu0 0
          %4572 = vmatpush1.bf16.msra.mxu0 0
          %4573 = vmatprep.subr.bf16.mxu0 0
          %4574 = vmatpush1.bf16.msra.mxu0 0
          %4575 = vmatprep.subr.bf16.mxu0 0
          %4576 = vmatpush1.bf16.msra.mxu0 0
          %4577 = vmatprep.subr.bf16.mxu0 0
          %4578 = vmatpush1.bf16.msra.mxu0 0
          %4579 = vmatprep.subr.bf16.mxu0 0
          %4580 = vmatpush1.bf16.msra.mxu0 0
          %4581 = vmatprep.subr.bf16.mxu0 0
          %4582 = vmatpush1.bf16.msra.mxu0 0
          %4583 = vmatprep.subr.bf16.mxu0 0
          %4584 = vmatpush1.bf16.msra.mxu0 0
          %4585 = vmatprep.subr.bf16.mxu0 0
          %4586 = vmatpush1.bf16.msra.mxu0 0
          %4587 = vmatprep.mubr.bf16.mxu0 0
          %4588 = vmatmul.mubr.bf16.gmra.mrb[0].mxu0 %v1193
          %v4589 = vpop.f32.mrb[0].mxu0
          %v4590 = vadd.f32 %v4246, %v4589
          %v4591 = vpop.f32.mrb[0].mxu0
          %v4592 = vadd.f32 %v4248, %v4591
          %v4593 = vpop.f32.mrb[0].mxu0
          %v4594 = vadd.f32 %v4250, %v4593
          %v4595 = vpop.f32.mrb[0].mxu0
          %v4596 = vadd.f32 %v4252, %v4595
          %4597 = vdwg.mxu0
          %4598 = vmatprep.subr.bf16.mxu0 %v4198
          %4599 = vmatpush1.bf16.msra.mxu0 %v4197
          %4600 = vmatprep.subr.bf16.mxu0 0
          %4601 = vmatpush1.bf16.msra.mxu0 0
          %4602 = vmatprep.subr.bf16.mxu0 0
          %4603 = vmatpush1.bf16.msra.mxu0 0
          %4604 = vmatprep.subr.bf16.mxu0 0
          %4605 = vmatpush1.bf16.msra.mxu0 0
          %4606 = vmatprep.subr.bf16.mxu0 0
          %4607 = vmatpush1.bf16.msra.mxu0 0
          %4608 = vmatprep.subr.bf16.mxu0 0
          %4609 = vmatpush1.bf16.msra.mxu0 0
          %4610 = vmatprep.subr.bf16.mxu0 0
          %4611 = vmatpush1.bf16.msra.mxu0 0
          %4612 = vmatprep.subr.bf16.mxu0 0
          %4613 = vmatpush1.bf16.msra.mxu0 0
          %4614 = vmatprep.subr.bf16.mxu0 0
          %4615 = vmatpush1.bf16.msra.mxu0 0
          %4616 = vmatprep.subr.bf16.mxu0 0
          %4617 = vmatpush1.bf16.msra.mxu0 0
          %4618 = vmatprep.subr.bf16.mxu0 0
          %4619 = vmatpush1.bf16.msra.mxu0 0
          %4620 = vmatprep.subr.bf16.mxu0 0
          %4621 = vmatpush1.bf16.msra.mxu0 0
          %4622 = vmatprep.subr.bf16.mxu0 0
          %4623 = vmatpush1.bf16.msra.mxu0 0
          %4624 = vmatprep.subr.bf16.mxu0 0
          %4625 = vmatpush1.bf16.msra.mxu0 0
          %4626 = vmatprep.subr.bf16.mxu0 0
          %4627 = vmatpush1.bf16.msra.mxu0 0
          %4628 = vmatprep.subr.bf16.mxu0 0
          %4629 = vmatpush1.bf16.msra.mxu0 0
          %4630 = vmatprep.mubr.bf16.mxu0 0
          %4631 = vmatmul.mubr.bf16.gmra.mrb[0].mxu0 %v1193
          %v4632 = vpop.f32.mrb[0].mxu0
          %v4633 = vadd.f32 %v4289, %v4632
          %v4634 = vpop.f32.mrb[0].mxu0
          %v4635 = vadd.f32 %v4291, %v4634
          %v4636 = vpop.f32.mrb[0].mxu0
          %v4637 = vadd.f32 %v4293, %v4636
          %v4638 = vpop.f32.mrb[0].mxu0
          %v4639 = vadd.f32 %v4295, %v4638
          %4640 = vdwg.mxu0
          %4641 = vmatprep.subr.bf16.mxu0 %v4200
          %4642 = vmatpush1.bf16.msra.mxu0 %v4199
          %4643 = vmatprep.subr.bf16.mxu0 0
          %4644 = vmatpush1.bf16.msra.mxu0 0
          %4645 = vmatprep.subr.bf16.mxu0 0
          %4646 = vmatpush1.bf16.msra.mxu0 0
          %4647 = vmatprep.subr.bf16.mxu0 0
          %4648 = vmatpush1.bf16.msra.mxu0 0
          %4649 = vmatprep.subr.bf16.mxu0 0
          %4650 = vmatpush1.bf16.msra.mxu0 0
          %4651 = vmatprep.subr.bf16.mxu0 0
          %4652 = vmatpush1.bf16.msra.mxu0 0
          %4653 = vmatprep.subr.bf16.mxu0 0
          %4654 = vmatpush1.bf16.msra.mxu0 0
          %4655 = vmatprep.subr.bf16.mxu0 0
          %4656 = vmatpush1.bf16.msra.mxu0 0
          %4657 = vmatprep.subr.bf16.mxu0 0
          %4658 = vmatpush1.bf16.msra.mxu0 0
          %4659 = vmatprep.subr.bf16.mxu0 0
          %4660 = vmatpush1.bf16.msra.mxu0 0
          %4661 = vmatprep.subr.bf16.mxu0 0
          %4662 = vmatpush1.bf16.msra.mxu0 0
          %4663 = vmatprep.subr.bf16.mxu0 0
          %4664 = vmatpush1.bf16.msra.mxu0 0
          %4665 = vmatprep.subr.bf16.mxu0 0
          %4666 = vmatpush1.bf16.msra.mxu0 0
          %4667 = vmatprep.subr.bf16.mxu0 0
          %4668 = vmatpush1.bf16.msra.mxu0 0
          %4669 = vmatprep.subr.bf16.mxu0 0
          %4670 = vmatpush1.bf16.msra.mxu0 0
          %4671 = vmatprep.subr.bf16.mxu0 0
          %4672 = vmatpush1.bf16.msra.mxu0 0
          %4673 = vmatprep.mubr.bf16.mxu0 0
          %4674 = vmatmul.mubr.bf16.gmra.mrb[0].mxu0 %v1193
          %v4675 = vpop.f32.mrb[0].mxu0
          %v4676 = vadd.f32 %v4332, %v4675
          %v4677 = vpop.f32.mrb[0].mxu0
          %v4678 = vadd.f32 %v4334, %v4677
          %v4679 = vpop.f32.mrb[0].mxu0
          %v4680 = vadd.f32 %v4336, %v4679
          %v4681 = vpop.f32.mrb[0].mxu0
          %v4682 = vadd.f32 %v4338, %v4681
          %4683 = vdwg.mxu0
          %4684 = vmatprep.subr.bf16.mxu0 %v4202
          %4685 = vmatpush1.bf16.msra.mxu0 %v4201
          %4686 = vmatprep.subr.bf16.mxu0 0
          %4687 = vmatpush1.bf16.msra.mxu0 0
          %4688 = vmatprep.subr.bf16.mxu0 0
          %4689 = vmatpush1.bf16.msra.mxu0 0
          %4690 = vmatprep.subr.bf16.mxu0 0
          %4691 = vmatpush1.bf16.msra.mxu0 0
          %4692 = vmatprep.subr.bf16.mxu0 0
          %4693 = vmatpush1.bf16.msra.mxu0 0
          %4694 = vmatprep.subr.bf16.mxu0 0
          %4695 = vmatpush1.bf16.msra.mxu0 0
          %4696 = vmatprep.subr.bf16.mxu0 0
          %4697 = vmatpush1.bf16.msra.mxu0 0
          %4698 = vmatprep.subr.bf16.mxu0 0
          %4699 = vmatpush1.bf16.msra.mxu0 0
          %4700 = vmatprep.subr.bf16.mxu0 0
          %4701 = vmatpush1.bf16.msra.mxu0 0
          %4702 = vmatprep.subr.bf16.mxu0 0
          %4703 = vmatpush1.bf16.msra.mxu0 0
          %4704 = vmatprep.subr.bf16.mxu0 0
          %4705 = vmatpush1.bf16.msra.mxu0 0
          %4706 = vmatprep.subr.bf16.mxu0 0
          %4707 = vmatpush1.bf16.msra.mxu0 0
          %4708 = vmatprep.subr.bf16.mxu0 0
          %4709 = vmatpush1.bf16.msra.mxu0 0
          %4710 = vmatprep.subr.bf16.mxu0 0
          %4711 = vmatpush1.bf16.msra.mxu0 0
          %4712 = vmatprep.subr.bf16.mxu0 0
          %4713 = vmatpush1.bf16.msra.mxu0 0
          %4714 = vmatprep.subr.bf16.mxu0 0
          %4715 = vmatpush1.bf16.msra.mxu0 0
          %4716 = vmatprep.mubr.bf16.mxu0 0
          %4717 = vmatmul.mubr.bf16.gmra.mrb[0].mxu0 %v1193
          %v4718 = vpop.f32.mrb[0].mxu0
          %v4719 = vadd.f32 %v4375, %v4718
          %v4720 = vpop.f32.mrb[0].mxu0
          %v4721 = vadd.f32 %v4377, %v4720
          %v4722 = vpop.f32.mrb[0].mxu0
          %v4723 = vadd.f32 %v4379, %v4722
          %v4724 = vpop.f32.mrb[0].mxu0
          %v4725 = vadd.f32 %v4381, %v4724
          %4726 = vdwg.mxu0
          %4727 = vmatprep.subr.bf16.mxu0 %v4204
          %4728 = vmatpush1.bf16.msra.mxu0 %v4203
          %4729 = vmatprep.subr.bf16.mxu0 0
          %4730 = vmatpush1.bf16.msra.mxu0 0
          %4731 = vmatprep.subr.bf16.mxu0 0
          %4732 = vmatpush1.bf16.msra.mxu0 0
          %4733 = vmatprep.subr.bf16.mxu0 0
          %4734 = vmatpush1.bf16.msra.mxu0 0
          %4735 = vmatprep.subr.bf16.mxu0 0
          %4736 = vmatpush1.bf16.msra.mxu0 0
          %4737 = vmatprep.subr.bf16.mxu0 0
          %4738 = vmatpush1.bf16.msra.mxu0 0
          %4739 = vmatprep.subr.bf16.mxu0 0
          %4740 = vmatpush1.bf16.msra.mxu0 0
          %4741 = vmatprep.subr.bf16.mxu0 0
          %4742 = vmatpush1.bf16.msra.mxu0 0
          %4743 = vmatprep.subr.bf16.mxu0 0
          %4744 = vmatpush1.bf16.msra.mxu0 0
          %4745 = vmatprep.subr.bf16.mxu0 0
          %4746 = vmatpush1.bf16.msra.mxu0 0
          %4747 = vmatprep.subr.bf16.mxu0 0
          %4748 = vmatpush1.bf16.msra.mxu0 0
          %4749 = vmatprep.subr.bf16.mxu0 0
          %4750 = vmatpush1.bf16.msra.mxu0 0
          %4751 = vmatprep.subr.bf16.mxu0 0
          %4752 = vmatpush1.bf16.msra.mxu0 0
          %4753 = vmatprep.subr.bf16.mxu0 0
          %4754 = vmatpush1.bf16.msra.mxu0 0
          %4755 = vmatprep.subr.bf16.mxu0 0
          %4756 = vmatpush1.bf16.msra.mxu0 0
          %4757 = vmatprep.subr.bf16.mxu0 0
          %4758 = vmatpush1.bf16.msra.mxu0 0
          %4759 = vmatprep.mubr.bf16.mxu0 0
          %4760 = vmatmul.mubr.bf16.gmra.mrb[0].mxu0 %v1193
          %v4761 = vpop.f32.mrb[0].mxu0
          %v4762 = vadd.f32 %v4418, %v4761
          %v4763 = vpop.f32.mrb[0].mxu0
          %v4764 = vadd.f32 %v4420, %v4763
          %v4765 = vpop.f32.mrb[0].mxu0
          %v4766 = vadd.f32 %v4422, %v4765
          %v4767 = vpop.f32.mrb[0].mxu0
          %v4768 = vadd.f32 %v4424, %v4767
          %4769 = vdwg.mxu0
          %4770 = vmatprep.subr.bf16.mxu0 %v4206
          %4771 = vmatpush1.bf16.msra.mxu0 %v4205
          %4772 = vmatprep.subr.bf16.mxu0 0
          %4773 = vmatpush1.bf16.msra.mxu0 0
          %4774 = vmatprep.subr.bf16.mxu0 0
          %4775 = vmatpush1.bf16.msra.mxu0 0
          %4776 = vmatprep.subr.bf16.mxu0 0
          %4777 = vmatpush1.bf16.msra.mxu0 0
          %4778 = vmatprep.subr.bf16.mxu0 0
          %4779 = vmatpush1.bf16.msra.mxu0 0
          %4780 = vmatprep.subr.bf16.mxu0 0
          %4781 = vmatpush1.bf16.msra.mxu0 0
          %4782 = vmatprep.subr.bf16.mxu0 0
          %4783 = vmatpush1.bf16.msra.mxu0 0
          %4784 = vmatprep.subr.bf16.mxu0 0
          %4785 = vmatpush1.bf16.msra.mxu0 0
          %4786 = vmatprep.subr.bf16.mxu0 0
          %4787 = vmatpush1.bf16.msra.mxu0 0
          %4788 = vmatprep.subr.bf16.mxu0 0
          %4789 = vmatpush1.bf16.msra.mxu0 0
          %4790 = vmatprep.subr.bf16.mxu0 0
          %4791 = vmatpush1.bf16.msra.mxu0 0
          %4792 = vmatprep.subr.bf16.mxu0 0
          %4793 = vmatpush1.bf16.msra.mxu0 0
          %4794 = vmatprep.subr.bf16.mxu0 0
          %4795 = vmatpush1.bf16.msra.mxu0 0
          %4796 = vmatprep.subr.bf16.mxu0 0
          %4797 = vmatpush1.bf16.msra.mxu0 0
          %4798 = vmatprep.subr.bf16.mxu0 0
          %4799 = vmatpush1.bf16.msra.mxu0 0
          %4800 = vmatprep.subr.bf16.mxu0 0
          %4801 = vmatpush1.bf16.msra.mxu0 0
          %4802 = vmatprep.mubr.bf16.mxu0 0
          %4803 = vmatmul.mubr.bf16.gmra.mrb[0].mxu0 %v1193
          %v4804 = vpop.f32.mrb[0].mxu0
          %v4805 = vadd.f32 %v4461, %v4804
          %v4806 = vpop.f32.mrb[0].mxu0
          %v4807 = vadd.f32 %v4463, %v4806
          %v4808 = vpop.f32.mrb[0].mxu0
          %v4809 = vadd.f32 %v4465, %v4808
          %v4810 = vpop.f32.mrb[0].mxu0
          %v4811 = vadd.f32 %v4467, %v4810
          %4812 = vdwg.mxu0
          %4813 = vmatprep.subr.bf16.mxu0 %v4208
          %4814 = vmatpush1.bf16.msra.mxu0 %v4207
          %4815 = vmatprep.subr.bf16.mxu0 0
          %4816 = vmatpush1.bf16.msra.mxu0 0
          %4817 = vmatprep.subr.bf16.mxu0 0
          %4818 = vmatpush1.bf16.msra.mxu0 0
          %4819 = vmatprep.subr.bf16.mxu0 0
          %4820 = vmatpush1.bf16.msra.mxu0 0
          %4821 = vmatprep.subr.bf16.mxu0 0
          %4822 = vmatpush1.bf16.msra.mxu0 0
          %4823 = vmatprep.subr.bf16.mxu0 0
          %4824 = vmatpush1.bf16.msra.mxu0 0
          %4825 = vmatprep.subr.bf16.mxu0 0
          %4826 = vmatpush1.bf16.msra.mxu0 0
          %4827 = vmatprep.subr.bf16.mxu0 0
          %4828 = vmatpush1.bf16.msra.mxu0 0
          %4829 = vmatprep.subr.bf16.mxu0 0
          %4830 = vmatpush1.bf16.msra.mxu0 0
          %4831 = vmatprep.subr.bf16.mxu0 0
          %4832 = vmatpush1.bf16.msra.mxu0 0
          %4833 = vmatprep.subr.bf16.mxu0 0
          %4834 = vmatpush1.bf16.msra.mxu0 0
          %4835 = vmatprep.subr.bf16.mxu0 0
          %4836 = vmatpush1.bf16.msra.mxu0 0
          %4837 = vmatprep.subr.bf16.mxu0 0
          %4838 = vmatpush1.bf16.msra.mxu0 0
          %4839 = vmatprep.subr.bf16.mxu0 0
          %4840 = vmatpush1.bf16.msra.mxu0 0
          %4841 = vmatprep.subr.bf16.mxu0 0
          %4842 = vmatpush1.bf16.msra.mxu0 0
          %4843 = vmatprep.subr.bf16.mxu0 0
          %4844 = vmatpush1.bf16.msra.mxu0 0
          %4845 = vmatprep.mubr.bf16.mxu0 0
          %4846 = vmatmul.mubr.bf16.gmra.mrb[0].mxu0 %v1193
          %v4847 = vpop.f32.mrb[0].mxu0
          %v4848 = vadd.f32 %v4504, %v4847
          %v4849 = vpop.f32.mrb[0].mxu0
          %v4850 = vadd.f32 %v4506, %v4849
          %v4851 = vpop.f32.mrb[0].mxu0
          %v4852 = vadd.f32 %v4508, %v4851
          %v4853 = vpop.f32.mrb[0].mxu0
          %v4854 = vadd.f32 %v4510, %v4853
          %4855 = vdwg.mxu0
          %4856 = vmatprep.subr.bf16.mxu0 %v4210
          %4857 = vmatpush1.bf16.msra.mxu0 %v4209
          %4858 = vmatprep.subr.bf16.mxu0 0
          %4859 = vmatpush1.bf16.msra.mxu0 0
          %4860 = vmatprep.subr.bf16.mxu0 0
          %4861 = vmatpush1.bf16.msra.mxu0 0
          %4862 = vmatprep.subr.bf16.mxu0 0
          %4863 = vmatpush1.bf16.msra.mxu0 0
          %4864 = vmatprep.subr.bf16.mxu0 0
          %4865 = vmatpush1.bf16.msra.mxu0 0
          %4866 = vmatprep.subr.bf16.mxu0 0
          %4867 = vmatpush1.bf16.msra.mxu0 0
          %4868 = vmatprep.subr.bf16.mxu0 0
          %4869 = vmatpush1.bf16.msra.mxu0 0
          %4870 = vmatprep.subr.bf16.mxu0 0
          %4871 = vmatpush1.bf16.msra.mxu0 0
          %4872 = vmatprep.subr.bf16.mxu0 0
          %4873 = vmatpush1.bf16.msra.mxu0 0
          %4874 = vmatprep.subr.bf16.mxu0 0
          %4875 = vmatpush1.bf16.msra.mxu0 0
          %4876 = vmatprep.subr.bf16.mxu0 0
          %4877 = vmatpush1.bf16.msra.mxu0 0
          %4878 = vmatprep.subr.bf16.mxu0 0
          %4879 = vmatpush1.bf16.msra.mxu0 0
          %4880 = vmatprep.subr.bf16.mxu0 0
          %4881 = vmatpush1.bf16.msra.mxu0 0
          %4882 = vmatprep.subr.bf16.mxu0 0
          %4883 = vmatpush1.bf16.msra.mxu0 0
          %4884 = vmatprep.subr.bf16.mxu0 0
          %4885 = vmatpush1.bf16.msra.mxu0 0
          %4886 = vmatprep.subr.bf16.mxu0 0
          %4887 = vmatpush1.bf16.msra.mxu0 0
          %4888 = vmatprep.mubr.bf16.mxu0 0
          %4889 = vmatmul.mubr.bf16.gmra.mrb[0].mxu0 %v1193
          %v4890 = vpop.f32.mrb[0].mxu0
          %v4891 = vadd.f32 %v4547, %v4890
          %v4892 = vpop.f32.mrb[0].mxu0
          %v4893 = vadd.f32 %v4549, %v4892
          %v4894 = vpop.f32.mrb[0].mxu0
          %v4895 = vadd.f32 %v4551, %v4894
          %v4896 = vpop.f32.mrb[0].mxu0
          %v4897 = vadd.f32 %v4553, %v4896
          %4898 = vdwg.mxu0
          %v4899 = vlaneseq
          %v4900 = vshrl.u32 %v4899, 7
          %v4901 = vsub.s32 3, %v4900
          %v4902 = vrot.slane %v673, %v4901
          %v4903 = vlaneseq
          %v4904 = vshrl.u32 %v4903, 7
          %v4905 = vsub.s32 3, %v4904
          %v4906 = vrot.slane %v674, %v4905
          %v4907 = vlaneseq
          %v4908 = vshrl.u32 %v4907, 7
          %v4909 = vsub.s32 3, %v4908
          %v4910 = vrot.slane %v675, %v4909
          %v4911 = vlaneseq
          %v4912 = vshrl.u32 %v4911, 7
          %v4913 = vsub.s32 3, %v4912
          %v4914 = vrot.slane %v676, %v4913
          %v4915 = vlaneseq
          %v4916 = vshrl.u32 %v4915, 7
          %v4917 = vsub.s32 3, %v4916
          %v4918 = vrot.slane %v677, %v4917
          %v4919 = vlaneseq
          %v4920 = vshrl.u32 %v4919, 7
          %v4921 = vsub.s32 3, %v4920
          %v4922 = vrot.slane %v678, %v4921
          %v4923 = vlaneseq
          %v4924 = vshrl.u32 %v4923, 7
          %v4925 = vsub.s32 3, %v4924
          %v4926 = vrot.slane %v679, %v4925
          %v4927 = vlaneseq
          %v4928 = vshrl.u32 %v4927, 7
          %v4929 = vsub.s32 3, %v4928
          %v4930 = vrot.slane %v680, %v4929
          %v4931 = vlaneseq
          %v4932 = vshrl.u32 %v4931, 7
          %v4933 = vsub.s32 3, %v4932
          %v4934 = vrot.slane %v681, %v4933
          %v4935 = vlaneseq
          %v4936 = vshrl.u32 %v4935, 7
          %v4937 = vsub.s32 3, %v4936
          %v4938 = vrot.slane %v682, %v4937
          %v4939 = vlaneseq
          %v4940 = vshrl.u32 %v4939, 7
          %v4941 = vsub.s32 3, %v4940
          %v4942 = vrot.slane %v683, %v4941
          %v4943 = vlaneseq
          %v4944 = vshrl.u32 %v4943, 7
          %v4945 = vsub.s32 3, %v4944
          %v4946 = vrot.slane %v684, %v4945
          %v4947 = vlaneseq
          %v4948 = vshrl.u32 %v4947, 7
          %v4949 = vsub.s32 3, %v4948
          %v4950 = vrot.slane %v685, %v4949
          %v4951 = vlaneseq
          %v4952 = vshrl.u32 %v4951, 7
          %v4953 = vsub.s32 3, %v4952
          %v4954 = vrot.slane %v686, %v4953
          %v4955 = vlaneseq
          %v4956 = vshrl.u32 %v4955, 7
          %v4957 = vsub.s32 3, %v4956
          %v4958 = vrot.slane %v687, %v4957
          %v4959 = vlaneseq
          %v4960 = vshrl.u32 %v4959, 7
          %v4961 = vsub.s32 3, %v4960
          %v4962 = vrot.slane %v688, %v4961
          %vm4963 = vcmp.eq.s32.totalorder %v698, %v4902
          %vm4964 = vcmp.eq.s32.totalorder %v698, %v4906
          %vm4965 = vcmp.eq.s32.totalorder %v698, %v4910
          %vm4966 = vcmp.eq.s32.totalorder %v698, %v4914
          %vm4967 = vcmp.eq.s32.totalorder %v698, %v4918
          %vm4968 = vcmp.eq.s32.totalorder %v698, %v4922
          %vm4969 = vcmp.eq.s32.totalorder %v698, %v4926
          %vm4970 = vcmp.eq.s32.totalorder %v698, %v4930
          %vm4971 = vcmp.eq.s32.totalorder %v698, %v4934
          %vm4972 = vcmp.eq.s32.totalorder %v698, %v4938
          %vm4973 = vcmp.eq.s32.totalorder %v698, %v4942
          %vm4974 = vcmp.eq.s32.totalorder %v698, %v4946
          %vm4975 = vcmp.eq.s32.totalorder %v698, %v4950
          %vm4976 = vcmp.eq.s32.totalorder %v698, %v4954
          %vm4977 = vcmp.eq.s32.totalorder %v698, %v4958
          %vm4978 = vcmp.eq.s32.totalorder %v698, %v4962
          %vm4979 = vcmp.eq.s32.totalorder %v699, %v4902
          %vm4980 = vcmp.eq.s32.totalorder %v699, %v4906
          %vm4981 = vcmp.eq.s32.totalorder %v699, %v4910
          %vm4982 = vcmp.eq.s32.totalorder %v699, %v4914
          %vm4983 = vcmp.eq.s32.totalorder %v699, %v4918
          %vm4984 = vcmp.eq.s32.totalorder %v699, %v4922
          %vm4985 = vcmp.eq.s32.totalorder %v699, %v4926
          %vm4986 = vcmp.eq.s32.totalorder %v699, %v4930
          %vm4987 = vcmp.eq.s32.totalorder %v699, %v4934
          %vm4988 = vcmp.eq.s32.totalorder %v699, %v4938
          %vm4989 = vcmp.eq.s32.totalorder %v699, %v4942
          %vm4990 = vcmp.eq.s32.totalorder %v699, %v4946
          %vm4991 = vcmp.eq.s32.totalorder %v699, %v4950
          %vm4992 = vcmp.eq.s32.totalorder %v699, %v4954
          %vm4993 = vcmp.eq.s32.totalorder %v699, %v4958
          %vm4994 = vcmp.eq.s32.totalorder %v699, %v4962
          %v4995 = vsel %vm4963, %v4590, 0.0
          %v4996 = vsel %vm4964, %v4592, 0.0
          %v4997 = vsel %vm4965, %v4633, 0.0
          %v4998 = vsel %vm4966, %v4635, 0.0
          %v4999 = vsel %vm4967, %v4676, 0.0
          %v5000 = vsel %vm4968, %v4678, 0.0
          %v5001 = vsel %vm4969, %v4719, 0.0
          %v5002 = vsel %vm4970, %v4721, 0.0
          %v5003 = vsel %vm4971, %v4762, 0.0
          %v5004 = vsel %vm4972, %v4764, 0.0
          %v5005 = vsel %vm4973, %v4805, 0.0
          %v5006 = vsel %vm4974, %v4807, 0.0
          %v5007 = vsel %vm4975, %v4848, 0.0
          %v5008 = vsel %vm4976, %v4850, 0.0
          %v5009 = vsel %vm4977, %v4891, 0.0
          %v5010 = vsel %vm4978, %v4893, 0.0
          %v5011 = vsel %vm4979, %v4594, 0.0
          %v5012 = vsel %vm4980, %v4596, 0.0
          %v5013 = vsel %vm4981, %v4637, 0.0
          %v5014 = vsel %vm4982, %v4639, 0.0
          %v5015 = vsel %vm4983, %v4680, 0.0
          %v5016 = vsel %vm4984, %v4682, 0.0
          %v5017 = vsel %vm4985, %v4723, 0.0
          %v5018 = vsel %vm4986, %v4725, 0.0
          %v5019 = vsel %vm4987, %v4766, 0.0
          %v5020 = vsel %vm4988, %v4768, 0.0
          %v5021 = vsel %vm4989, %v4809, 0.0
          %v5022 = vsel %vm4990, %v4811, 0.0
          %v5023 = vsel %vm4991, %v4852, 0.0
          %v5024 = vsel %vm4992, %v4854, 0.0
          %v5025 = vsel %vm4993, %v4895, 0.0
          %v5026 = vsel %vm4994, %v4897, 0.0
          %v5027 = vadd.f32 %v4995, %v5011
          %v5028 = vrot.slane %v5027, 4
          %v5029 = vadd.f32 %v5027, %v5028
          %v5030 = vrot.slane %v5029, 2
          %v5031 = vadd.f32 %v5029, %v5030
          %v5032 = vrot.slane %v5031, 1
          %v5033 = vadd.f32 %v5031, %v5032
          %v5034 = vadd.f32 %v4996, %v5012
          %v5035 = vrot.slane %v5034, 4
          %v5036 = vadd.f32 %v5034, %v5035
          %v5037 = vrot.slane %v5036, 2
          %v5038 = vadd.f32 %v5036, %v5037
          %v5039 = vrot.slane %v5038, 1
          %v5040 = vadd.f32 %v5038, %v5039
          %v5041 = vadd.f32 %v4997, %v5013
          %v5042 = vrot.slane %v5041, 4
          %v5043 = vadd.f32 %v5041, %v5042
          %v5044 = vrot.slane %v5043, 2
          %v5045 = vadd.f32 %v5043, %v5044
          %v5046 = vrot.slane %v5045, 1
          %v5047 = vadd.f32 %v5045, %v5046
          %v5048 = vadd.f32 %v4998, %v5014
          %v5049 = vrot.slane %v5048, 4
          %v5050 = vadd.f32 %v5048, %v5049
          %v5051 = vrot.slane %v5050, 2
          %v5052 = vadd.f32 %v5050, %v5051
          %v5053 = vrot.slane %v5052, 1
          %v5054 = vadd.f32 %v5052, %v5053
          %v5055 = vadd.f32 %v4999, %v5015
          %v5056 = vrot.slane %v5055, 4
          %v5057 = vadd.f32 %v5055, %v5056
          %v5058 = vrot.slane %v5057, 2
          %v5059 = vadd.f32 %v5057, %v5058
          %v5060 = vrot.slane %v5059, 1
          %v5061 = vadd.f32 %v5059, %v5060
          %v5062 = vadd.f32 %v5000, %v5016
          %v5063 = vrot.slane %v5062, 4
          %v5064 = vadd.f32 %v5062, %v5063
          %v5065 = vrot.slane %v5064, 2
          %v5066 = vadd.f32 %v5064, %v5065
          %v5067 = vrot.slane %v5066, 1
          %v5068 = vadd.f32 %v5066, %v5067
          %v5069 = vadd.f32 %v5001, %v5017
          %v5070 = vrot.slane %v5069, 4
          %v5071 = vadd.f32 %v5069, %v5070
          %v5072 = vrot.slane %v5071, 2
          %v5073 = vadd.f32 %v5071, %v5072
          %v5074 = vrot.slane %v5073, 1
          %v5075 = vadd.f32 %v5073, %v5074
          %v5076 = vadd.f32 %v5002, %v5018
          %v5077 = vrot.slane %v5076, 4
          %v5078 = vadd.f32 %v5076, %v5077
          %v5079 = vrot.slane %v5078, 2
          %v5080 = vadd.f32 %v5078, %v5079
          %v5081 = vrot.slane %v5080, 1
          %v5082 = vadd.f32 %v5080, %v5081
          %v5083 = vadd.f32 %v5003, %v5019
          %v5084 = vrot.slane %v5083, 4
          %v5085 = vadd.f32 %v5083, %v5084
          %v5086 = vrot.slane %v5085, 2
          %v5087 = vadd.f32 %v5085, %v5086
          %v5088 = vrot.slane %v5087, 1
          %v5089 = vadd.f32 %v5087, %v5088
          %v5090 = vadd.f32 %v5004, %v5020
          %v5091 = vrot.slane %v5090, 4
          %v5092 = vadd.f32 %v5090, %v5091
          %v5093 = vrot.slane %v5092, 2
          %v5094 = vadd.f32 %v5092, %v5093
          %v5095 = vrot.slane %v5094, 1
          %v5096 = vadd.f32 %v5094, %v5095
          %v5097 = vadd.f32 %v5005, %v5021
          %v5098 = vrot.slane %v5097, 4
          %v5099 = vadd.f32 %v5097, %v5098
          %v5100 = vrot.slane %v5099, 2
          %v5101 = vadd.f32 %v5099, %v5100
          %v5102 = vrot.slane %v5101, 1
          %v5103 = vadd.f32 %v5101, %v5102
          %v5104 = vadd.f32 %v5006, %v5022
          %v5105 = vrot.slane %v5104, 4
          %v5106 = vadd.f32 %v5104, %v5105
          %v5107 = vrot.slane %v5106, 2
          %v5108 = vadd.f32 %v5106, %v5107
          %v5109 = vrot.slane %v5108, 1
          %v5110 = vadd.f32 %v5108, %v5109
          %v5111 = vadd.f32 %v5007, %v5023
          %v5112 = vrot.slane %v5111, 4
          %v5113 = vadd.f32 %v5111, %v5112
          %v5114 = vrot.slane %v5113, 2
          %v5115 = vadd.f32 %v5113, %v5114
          %v5116 = vrot.slane %v5115, 1
          %v5117 = vadd.f32 %v5115, %v5116
          %v5118 = vadd.f32 %v5008, %v5024
          %v5119 = vrot.slane %v5118, 4
          %v5120 = vadd.f32 %v5118, %v5119
          %v5121 = vrot.slane %v5120, 2
          %v5122 = vadd.f32 %v5120, %v5121
          %v5123 = vrot.slane %v5122, 1
          %v5124 = vadd.f32 %v5122, %v5123
          %v5125 = vadd.f32 %v5009, %v5025
          %v5126 = vrot.slane %v5125, 4
          %v5127 = vadd.f32 %v5125, %v5126
          %v5128 = vrot.slane %v5127, 2
          %v5129 = vadd.f32 %v5127, %v5128
          %v5130 = vrot.slane %v5129, 1
          %v5131 = vadd.f32 %v5129, %v5130
          %v5132 = vadd.f32 %v5010, %v5026
          %v5133 = vrot.slane %v5132, 4
          %v5134 = vadd.f32 %v5132, %v5133
          %v5135 = vrot.slane %v5134, 2
          %v5136 = vadd.f32 %v5134, %v5135
          %v5137 = vrot.slane %v5136, 1
          %v5138 = vadd.f32 %v5136, %v5137
          %v5139 = vsub.f32 0.44444445, %v5033
          %v5140 = vsub.f32 0.44444445, %v5040
          %v5141 = vsub.f32 0.44444445, %v5047
          %v5142 = vsub.f32 0.44444445, %v5054
          %v5143 = vsub.f32 0.44444445, %v5061
          %v5144 = vsub.f32 0.44444445, %v5068
          %v5145 = vsub.f32 0.44444445, %v5075
          %v5146 = vsub.f32 0.44444445, %v5082
          %v5147 = vsub.f32 0.44444445, %v5089
          %v5148 = vsub.f32 0.44444445, %v5096
          %v5149 = vsub.f32 0.44444445, %v5103
          %v5150 = vsub.f32 0.44444445, %v5110
          %v5151 = vsub.f32 0.44444445, %v5117
          %v5152 = vsub.f32 0.44444445, %v5124
          %v5153 = vsub.f32 0.44444445, %v5131
          %v5154 = vsub.f32 0.44444445, %v5138
          %v5155 = vmul.f32 %v5139, %v5139
          %v5156 = vmul.f32 %v5140, %v5140
          %v5157 = vmul.f32 %v5141, %v5141
          %v5158 = vmul.f32 %v5142, %v5142
          %v5159 = vmul.f32 %v5143, %v5143
          %v5160 = vmul.f32 %v5144, %v5144
          %v5161 = vmul.f32 %v5145, %v5145
          %v5162 = vmul.f32 %v5146, %v5146
          %v5163 = vmul.f32 %v5147, %v5147
          %v5164 = vmul.f32 %v5148, %v5148
          %v5165 = vmul.f32 %v5149, %v5149
          %v5166 = vmul.f32 %v5150, %v5150
          %v5167 = vmul.f32 %v5151, %v5151
          %v5168 = vmul.f32 %v5152, %v5152
          %v5169 = vmul.f32 %v5153, %v5153
          %v5170 = vmul.f32 %v5154, %v5154
          %v5171 = vadd.f32 %v4051, %v5155
          %v5172 = vadd.f32 %v4052, %v5156
          %v5173 = vadd.f32 %v4053, %v5157
          %v5174 = vadd.f32 %v4054, %v5158
          %v5175 = vadd.f32 %v4055, %v5159
          %v5176 = vadd.f32 %v4056, %v5160
          %v5177 = vadd.f32 %v4057, %v5161
          %v5178 = vadd.f32 %v4058, %v5162
          %v5179 = vadd.f32 %v4059, %v5163
          %v5180 = vadd.f32 %v4060, %v5164
          %v5181 = vadd.f32 %v4061, %v5165
          %v5182 = vadd.f32 %v4062, %v5166
          %v5183 = vadd.f32 %v4063, %v5167
          %v5184 = vadd.f32 %v4064, %v5168
          %v5185 = vadd.f32 %v4065, %v5169
          %v5186 = vadd.f32 %v4066, %v5170
          %v5187 = vlaneseq
          %v5188 = vshrl.u32 %v5187, 7
          %v5189 = vsub.s32 4, %v5188
          %v5190 = vrot.slane %v657, %v5189
          %v5191 = vlaneseq
          %v5192 = vshrl.u32 %v5191, 7
          %v5193 = vsub.s32 4, %v5192
          %v5194 = vrot.slane %v658, %v5193
          %v5195 = vlaneseq
          %v5196 = vshrl.u32 %v5195, 7
          %v5197 = vsub.s32 4, %v5196
          %v5198 = vrot.slane %v659, %v5197
          %v5199 = vlaneseq
          %v5200 = vshrl.u32 %v5199, 7
          %v5201 = vsub.s32 4, %v5200
          %v5202 = vrot.slane %v660, %v5201
          %v5203 = vlaneseq
          %v5204 = vshrl.u32 %v5203, 7
          %v5205 = vsub.s32 4, %v5204
          %v5206 = vrot.slane %v661, %v5205
          %v5207 = vlaneseq
          %v5208 = vshrl.u32 %v5207, 7
          %v5209 = vsub.s32 4, %v5208
          %v5210 = vrot.slane %v662, %v5209
          %v5211 = vlaneseq
          %v5212 = vshrl.u32 %v5211, 7
          %v5213 = vsub.s32 4, %v5212
          %v5214 = vrot.slane %v663, %v5213
          %v5215 = vlaneseq
          %v5216 = vshrl.u32 %v5215, 7
          %v5217 = vsub.s32 4, %v5216
          %v5218 = vrot.slane %v664, %v5217
          %v5219 = vlaneseq
          %v5220 = vshrl.u32 %v5219, 7
          %v5221 = vsub.s32 4, %v5220
          %v5222 = vrot.slane %v665, %v5221
          %v5223 = vlaneseq
          %v5224 = vshrl.u32 %v5223, 7
          %v5225 = vsub.s32 4, %v5224
          %v5226 = vrot.slane %v666, %v5225
          %v5227 = vlaneseq
          %v5228 = vshrl.u32 %v5227, 7
          %v5229 = vsub.s32 4, %v5228
          %v5230 = vrot.slane %v667, %v5229
          %v5231 = vlaneseq
          %v5232 = vshrl.u32 %v5231, 7
          %v5233 = vsub.s32 4, %v5232
          %v5234 = vrot.slane %v668, %v5233
          %v5235 = vlaneseq
          %v5236 = vshrl.u32 %v5235, 7
          %v5237 = vsub.s32 4, %v5236
          %v5238 = vrot.slane %v669, %v5237
          %v5239 = vlaneseq
          %v5240 = vshrl.u32 %v5239, 7
          %v5241 = vsub.s32 4, %v5240
          %v5242 = vrot.slane %v670, %v5241
          %v5243 = vlaneseq
          %v5244 = vshrl.u32 %v5243, 7
          %v5245 = vsub.s32 4, %v5244
          %v5246 = vrot.slane %v671, %v5245
          %v5247 = vlaneseq
          %v5248 = vshrl.u32 %v5247, 7
          %v5249 = vsub.s32 4, %v5248
          %v5250 = vrot.slane %v672, %v5249
          %vm5251 = vcmp.eq.s32.totalorder %v698, %v5190
          %vm5252 = vcmp.eq.s32.totalorder %v698, %v5194
          %vm5253 = vcmp.eq.s32.totalorder %v698, %v5198
          %vm5254 = vcmp.eq.s32.totalorder %v698, %v5202
          %vm5255 = vcmp.eq.s32.totalorder %v698, %v5206
          %vm5256 = vcmp.eq.s32.totalorder %v698, %v5210
          %vm5257 = vcmp.eq.s32.totalorder %v698, %v5214
          %vm5258 = vcmp.eq.s32.totalorder %v698, %v5218
          %vm5259 = vcmp.eq.s32.totalorder %v698, %v5222
          %vm5260 = vcmp.eq.s32.totalorder %v698, %v5226
          %vm5261 = vcmp.eq.s32.totalorder %v698, %v5230
          %vm5262 = vcmp.eq.s32.totalorder %v698, %v5234
          %vm5263 = vcmp.eq.s32.totalorder %v698, %v5238
          %vm5264 = vcmp.eq.s32.totalorder %v698, %v5242
          %vm5265 = vcmp.eq.s32.totalorder %v698, %v5246
          %vm5266 = vcmp.eq.s32.totalorder %v698, %v5250
          %vm5267 = vcmp.eq.s32.totalorder %v699, %v5190
          %vm5268 = vcmp.eq.s32.totalorder %v699, %v5194
          %vm5269 = vcmp.eq.s32.totalorder %v699, %v5198
          %vm5270 = vcmp.eq.s32.totalorder %v699, %v5202
          %vm5271 = vcmp.eq.s32.totalorder %v699, %v5206
          %vm5272 = vcmp.eq.s32.totalorder %v699, %v5210
          %vm5273 = vcmp.eq.s32.totalorder %v699, %v5214
          %vm5274 = vcmp.eq.s32.totalorder %v699, %v5218
          %vm5275 = vcmp.eq.s32.totalorder %v699, %v5222
          %vm5276 = vcmp.eq.s32.totalorder %v699, %v5226
          %vm5277 = vcmp.eq.s32.totalorder %v699, %v5230
          %vm5278 = vcmp.eq.s32.totalorder %v699, %v5234
          %vm5279 = vcmp.eq.s32.totalorder %v699, %v5238
          %vm5280 = vcmp.eq.s32.totalorder %v699, %v5242
          %vm5281 = vcmp.eq.s32.totalorder %v699, %v5246
          %vm5282 = vcmp.eq.s32.totalorder %v699, %v5250
          %v5283 = vsel %vm5251, 1.0, 0.0
          %v5284 = vsel %vm5252, 1.0, 0.0
          %v5285 = vsel %vm5253, 1.0, 0.0
          %v5286 = vsel %vm5254, 1.0, 0.0
          %v5287 = vsel %vm5255, 1.0, 0.0
          %v5288 = vsel %vm5256, 1.0, 0.0
          %v5289 = vsel %vm5257, 1.0, 0.0
          %v5290 = vsel %vm5258, 1.0, 0.0
          %v5291 = vsel %vm5259, 1.0, 0.0
          %v5292 = vsel %vm5260, 1.0, 0.0
          %v5293 = vsel %vm5261, 1.0, 0.0
          %v5294 = vsel %vm5262, 1.0, 0.0
          %v5295 = vsel %vm5263, 1.0, 0.0
          %v5296 = vsel %vm5264, 1.0, 0.0
          %v5297 = vsel %vm5265, 1.0, 0.0
          %v5298 = vsel %vm5266, 1.0, 0.0
          %v5299 = vsel %vm5267, 1.0, 0.0
          %v5300 = vsel %vm5268, 1.0, 0.0
          %v5301 = vsel %vm5269, 1.0, 0.0
          %v5302 = vsel %vm5270, 1.0, 0.0
          %v5303 = vsel %vm5271, 1.0, 0.0
          %v5304 = vsel %vm5272, 1.0, 0.0
          %v5305 = vsel %vm5273, 1.0, 0.0
          %v5306 = vsel %vm5274, 1.0, 0.0
          %v5307 = vsel %vm5275, 1.0, 0.0
          %v5308 = vsel %vm5276, 1.0, 0.0
          %v5309 = vsel %vm5277, 1.0, 0.0
          %v5310 = vsel %vm5278, 1.0, 0.0
          %v5311 = vsel %vm5279, 1.0, 0.0
          %v5312 = vsel %vm5280, 1.0, 0.0
          %v5313 = vsel %vm5281, 1.0, 0.0
          %v5314 = vsel %vm5282, 1.0, 0.0
          %v5315 = vpack.c.bf16 %v5299, %v5283
          %v5316 = vpack.c.bf16 %v5300, %v5284
          %v5317 = vpack.c.bf16 %v5301, %v5285
          %v5318 = vpack.c.bf16 %v5302, %v5286
          %v5319 = vpack.c.bf16 %v5303, %v5287
          %v5320 = vpack.c.bf16 %v5304, %v5288
          %v5321 = vpack.c.bf16 %v5305, %v5289
          %v5322 = vpack.c.bf16 %v5306, %v5290
          %v5323 = vpack.c.bf16 %v5307, %v5291
          %v5324 = vpack.c.bf16 %v5308, %v5292
          %v5325 = vpack.c.bf16 %v5309, %v5293
          %v5326 = vpack.c.bf16 %v5310, %v5294
          %v5327 = vpack.c.bf16 %v5311, %v5295
          %v5328 = vpack.c.bf16 %v5312, %v5296
          %v5329 = vpack.c.bf16 %v5313, %v5297
          %v5330 = vpack.c.bf16 %v5314, %v5298
          %5331 = vmatprep.subr.bf16.mxu0 %v5316
          %5332 = vmatpush1.bf16.msra.mxu0 %v5315
          %5333 = vmatprep.subr.bf16.mxu0 0
          %5334 = vmatpush1.bf16.msra.mxu0 0
          %5335 = vmatprep.subr.bf16.mxu0 0
          %5336 = vmatpush1.bf16.msra.mxu0 0
          %5337 = vmatprep.subr.bf16.mxu0 0
          %5338 = vmatpush1.bf16.msra.mxu0 0
          %5339 = vmatprep.subr.bf16.mxu0 0
          %5340 = vmatpush1.bf16.msra.mxu0 0
          %5341 = vmatprep.subr.bf16.mxu0 0
          %5342 = vmatpush1.bf16.msra.mxu0 0
          %5343 = vmatprep.subr.bf16.mxu0 0
          %5344 = vmatpush1.bf16.msra.mxu0 0
          %5345 = vmatprep.subr.bf16.mxu0 0
          %5346 = vmatpush1.bf16.msra.mxu0 0
          %5347 = vmatprep.subr.bf16.mxu0 0
          %5348 = vmatpush1.bf16.msra.mxu0 0
          %5349 = vmatprep.subr.bf16.mxu0 0
          %5350 = vmatpush1.bf16.msra.mxu0 0
          %5351 = vmatprep.subr.bf16.mxu0 0
          %5352 = vmatpush1.bf16.msra.mxu0 0
          %5353 = vmatprep.subr.bf16.mxu0 0
          %5354 = vmatpush1.bf16.msra.mxu0 0
          %5355 = vmatprep.subr.bf16.mxu0 0
          %5356 = vmatpush1.bf16.msra.mxu0 0
          %5357 = vmatprep.subr.bf16.mxu0 0
          %5358 = vmatpush1.bf16.msra.mxu0 0
          %5359 = vmatprep.subr.bf16.mxu0 0
          %5360 = vmatpush1.bf16.msra.mxu0 0
          %5361 = vmatprep.subr.bf16.mxu0 0
          %5362 = vmatpush1.bf16.msra.mxu0 0
          %5363 = vmatprep.mubr.bf16.mxu0 0
          %5364 = vmatmul.mubr.bf16.gmra.mrb[0].mxu0 %v846
          %v5365 = vpop.f32.mrb[0].mxu0
          %v5366 = vadd.f32 0.0, %v5365
          %v5367 = vpop.f32.mrb[0].mxu0
          %v5368 = vadd.f32 0.0, %v5367
          %v5369 = vpop.f32.mrb[0].mxu0
          %v5370 = vadd.f32 0.0, %v5369
          %v5371 = vpop.f32.mrb[0].mxu0
          %v5372 = vadd.f32 0.0, %v5371
          %5373 = vdwg.mxu0
          %5374 = vmatprep.subr.bf16.mxu0 %v5318
          %5375 = vmatpush1.bf16.msra.mxu0 %v5317
          %5376 = vmatprep.subr.bf16.mxu0 0
          %5377 = vmatpush1.bf16.msra.mxu0 0
          %5378 = vmatprep.subr.bf16.mxu0 0
          %5379 = vmatpush1.bf16.msra.mxu0 0
          %5380 = vmatprep.subr.bf16.mxu0 0
          %5381 = vmatpush1.bf16.msra.mxu0 0
          %5382 = vmatprep.subr.bf16.mxu0 0
          %5383 = vmatpush1.bf16.msra.mxu0 0
          %5384 = vmatprep.subr.bf16.mxu0 0
          %5385 = vmatpush1.bf16.msra.mxu0 0
          %5386 = vmatprep.subr.bf16.mxu0 0
          %5387 = vmatpush1.bf16.msra.mxu0 0
          %5388 = vmatprep.subr.bf16.mxu0 0
          %5389 = vmatpush1.bf16.msra.mxu0 0
          %5390 = vmatprep.subr.bf16.mxu0 0
          %5391 = vmatpush1.bf16.msra.mxu0 0
          %5392 = vmatprep.subr.bf16.mxu0 0
          %5393 = vmatpush1.bf16.msra.mxu0 0
          %5394 = vmatprep.subr.bf16.mxu0 0
          %5395 = vmatpush1.bf16.msra.mxu0 0
          %5396 = vmatprep.subr.bf16.mxu0 0
          %5397 = vmatpush1.bf16.msra.mxu0 0
          %5398 = vmatprep.subr.bf16.mxu0 0
          %5399 = vmatpush1.bf16.msra.mxu0 0
          %5400 = vmatprep.subr.bf16.mxu0 0
          %5401 = vmatpush1.bf16.msra.mxu0 0
          %5402 = vmatprep.subr.bf16.mxu0 0
          %5403 = vmatpush1.bf16.msra.mxu0 0
          %5404 = vmatprep.subr.bf16.mxu0 0
          %5405 = vmatpush1.bf16.msra.mxu0 0
          %5406 = vmatprep.mubr.bf16.mxu0 0
          %5407 = vmatmul.mubr.bf16.gmra.mrb[0].mxu0 %v846
          %v5408 = vpop.f32.mrb[0].mxu0
          %v5409 = vadd.f32 0.0, %v5408
          %v5410 = vpop.f32.mrb[0].mxu0
          %v5411 = vadd.f32 0.0, %v5410
          %v5412 = vpop.f32.mrb[0].mxu0
          %v5413 = vadd.f32 0.0, %v5412
          %v5414 = vpop.f32.mrb[0].mxu0
          %v5415 = vadd.f32 0.0, %v5414
          %5416 = vdwg.mxu0
          %5417 = vmatprep.subr.bf16.mxu0 %v5320
          %5418 = vmatpush1.bf16.msra.mxu0 %v5319
          %5419 = vmatprep.subr.bf16.mxu0 0
          %5420 = vmatpush1.bf16.msra.mxu0 0
          %5421 = vmatprep.subr.bf16.mxu0 0
          %5422 = vmatpush1.bf16.msra.mxu0 0
          %5423 = vmatprep.subr.bf16.mxu0 0
          %5424 = vmatpush1.bf16.msra.mxu0 0
          %5425 = vmatprep.subr.bf16.mxu0 0
          %5426 = vmatpush1.bf16.msra.mxu0 0
          %5427 = vmatprep.subr.bf16.mxu0 0
          %5428 = vmatpush1.bf16.msra.mxu0 0
          %5429 = vmatprep.subr.bf16.mxu0 0
          %5430 = vmatpush1.bf16.msra.mxu0 0
          %5431 = vmatprep.subr.bf16.mxu0 0
          %5432 = vmatpush1.bf16.msra.mxu0 0
          %5433 = vmatprep.subr.bf16.mxu0 0
          %5434 = vmatpush1.bf16.msra.mxu0 0
          %5435 = vmatprep.subr.bf16.mxu0 0
          %5436 = vmatpush1.bf16.msra.mxu0 0
          %5437 = vmatprep.subr.bf16.mxu0 0
          %5438 = vmatpush1.bf16.msra.mxu0 0
          %5439 = vmatprep.subr.bf16.mxu0 0
          %5440 = vmatpush1.bf16.msra.mxu0 0
          %5441 = vmatprep.subr.bf16.mxu0 0
          %5442 = vmatpush1.bf16.msra.mxu0 0
          %5443 = vmatprep.subr.bf16.mxu0 0
          %5444 = vmatpush1.bf16.msra.mxu0 0
          %5445 = vmatprep.subr.bf16.mxu0 0
          %5446 = vmatpush1.bf16.msra.mxu0 0
          %5447 = vmatprep.subr.bf16.mxu0 0
          %5448 = vmatpush1.bf16.msra.mxu0 0
          %5449 = vmatprep.mubr.bf16.mxu0 0
          %5450 = vmatmul.mubr.bf16.gmra.mrb[0].mxu0 %v846
          %v5451 = vpop.f32.mrb[0].mxu0
          %v5452 = vadd.f32 0.0, %v5451
          %v5453 = vpop.f32.mrb[0].mxu0
          %v5454 = vadd.f32 0.0, %v5453
          %v5455 = vpop.f32.mrb[0].mxu0
          %v5456 = vadd.f32 0.0, %v5455
          %v5457 = vpop.f32.mrb[0].mxu0
          %v5458 = vadd.f32 0.0, %v5457
          %5459 = vdwg.mxu0
          %5460 = vmatprep.subr.bf16.mxu0 %v5322
          %5461 = vmatpush1.bf16.msra.mxu0 %v5321
          %5462 = vmatprep.subr.bf16.mxu0 0
          %5463 = vmatpush1.bf16.msra.mxu0 0
          %5464 = vmatprep.subr.bf16.mxu0 0
          %5465 = vmatpush1.bf16.msra.mxu0 0
          %5466 = vmatprep.subr.bf16.mxu0 0
          %5467 = vmatpush1.bf16.msra.mxu0 0
          %5468 = vmatprep.subr.bf16.mxu0 0
          %5469 = vmatpush1.bf16.msra.mxu0 0
          %5470 = vmatprep.subr.bf16.mxu0 0
          %5471 = vmatpush1.bf16.msra.mxu0 0
          %5472 = vmatprep.subr.bf16.mxu0 0
          %5473 = vmatpush1.bf16.msra.mxu0 0
          %5474 = vmatprep.subr.bf16.mxu0 0
          %5475 = vmatpush1.bf16.msra.mxu0 0
          %5476 = vmatprep.subr.bf16.mxu0 0
          %5477 = vmatpush1.bf16.msra.mxu0 0
          %5478 = vmatprep.subr.bf16.mxu0 0
          %5479 = vmatpush1.bf16.msra.mxu0 0
          %5480 = vmatprep.subr.bf16.mxu0 0
          %5481 = vmatpush1.bf16.msra.mxu0 0
          %5482 = vmatprep.subr.bf16.mxu0 0
          %5483 = vmatpush1.bf16.msra.mxu0 0
          %5484 = vmatprep.subr.bf16.mxu0 0
          %5485 = vmatpush1.bf16.msra.mxu0 0
          %5486 = vmatprep.subr.bf16.mxu0 0
          %5487 = vmatpush1.bf16.msra.mxu0 0
          %5488 = vmatprep.subr.bf16.mxu0 0
          %5489 = vmatpush1.bf16.msra.mxu0 0
          %5490 = vmatprep.subr.bf16.mxu0 0
          %5491 = vmatpush1.bf16.msra.mxu0 0
          %5492 = vmatprep.mubr.bf16.mxu0 0
          %5493 = vmatmul.mubr.bf16.gmra.mrb[0].mxu0 %v846
          %v5494 = vpop.f32.mrb[0].mxu0
          %v5495 = vadd.f32 0.0, %v5494
          %v5496 = vpop.f32.mrb[0].mxu0
          %v5497 = vadd.f32 0.0, %v5496
          %v5498 = vpop.f32.mrb[0].mxu0
          %v5499 = vadd.f32 0.0, %v5498
          %v5500 = vpop.f32.mrb[0].mxu0
          %v5501 = vadd.f32 0.0, %v5500
          %5502 = vdwg.mxu0
          %5503 = vmatprep.subr.bf16.mxu0 %v5324
          %5504 = vmatpush1.bf16.msra.mxu0 %v5323
          %5505 = vmatprep.subr.bf16.mxu0 0
          %5506 = vmatpush1.bf16.msra.mxu0 0
          %5507 = vmatprep.subr.bf16.mxu0 0
          %5508 = vmatpush1.bf16.msra.mxu0 0
          %5509 = vmatprep.subr.bf16.mxu0 0
          %5510 = vmatpush1.bf16.msra.mxu0 0
          %5511 = vmatprep.subr.bf16.mxu0 0
          %5512 = vmatpush1.bf16.msra.mxu0 0
          %5513 = vmatprep.subr.bf16.mxu0 0
          %5514 = vmatpush1.bf16.msra.mxu0 0
          %5515 = vmatprep.subr.bf16.mxu0 0
          %5516 = vmatpush1.bf16.msra.mxu0 0
          %5517 = vmatprep.subr.bf16.mxu0 0
          %5518 = vmatpush1.bf16.msra.mxu0 0
          %5519 = vmatprep.subr.bf16.mxu0 0
          %5520 = vmatpush1.bf16.msra.mxu0 0
          %5521 = vmatprep.subr.bf16.mxu0 0
          %5522 = vmatpush1.bf16.msra.mxu0 0
          %5523 = vmatprep.subr.bf16.mxu0 0
          %5524 = vmatpush1.bf16.msra.mxu0 0
          %5525 = vmatprep.subr.bf16.mxu0 0
          %5526 = vmatpush1.bf16.msra.mxu0 0
          %5527 = vmatprep.subr.bf16.mxu0 0
          %5528 = vmatpush1.bf16.msra.mxu0 0
          %5529 = vmatprep.subr.bf16.mxu0 0
          %5530 = vmatpush1.bf16.msra.mxu0 0
          %5531 = vmatprep.subr.bf16.mxu0 0
          %5532 = vmatpush1.bf16.msra.mxu0 0
          %5533 = vmatprep.subr.bf16.mxu0 0
          %5534 = vmatpush1.bf16.msra.mxu0 0
          %5535 = vmatprep.mubr.bf16.mxu0 0
          %5536 = vmatmul.mubr.bf16.gmra.mrb[0].mxu0 %v846
          %v5537 = vpop.f32.mrb[0].mxu0
          %v5538 = vadd.f32 0.0, %v5537
          %v5539 = vpop.f32.mrb[0].mxu0
          %v5540 = vadd.f32 0.0, %v5539
          %v5541 = vpop.f32.mrb[0].mxu0
          %v5542 = vadd.f32 0.0, %v5541
          %v5543 = vpop.f32.mrb[0].mxu0
          %v5544 = vadd.f32 0.0, %v5543
          %5545 = vdwg.mxu0
          %5546 = vmatprep.subr.bf16.mxu0 %v5326
          %5547 = vmatpush1.bf16.msra.mxu0 %v5325
          %5548 = vmatprep.subr.bf16.mxu0 0
          %5549 = vmatpush1.bf16.msra.mxu0 0
          %5550 = vmatprep.subr.bf16.mxu0 0
          %5551 = vmatpush1.bf16.msra.mxu0 0
          %5552 = vmatprep.subr.bf16.mxu0 0
          %5553 = vmatpush1.bf16.msra.mxu0 0
          %5554 = vmatprep.subr.bf16.mxu0 0
          %5555 = vmatpush1.bf16.msra.mxu0 0
          %5556 = vmatprep.subr.bf16.mxu0 0
          %5557 = vmatpush1.bf16.msra.mxu0 0
          %5558 = vmatprep.subr.bf16.mxu0 0
          %5559 = vmatpush1.bf16.msra.mxu0 0
          %5560 = vmatprep.subr.bf16.mxu0 0
          %5561 = vmatpush1.bf16.msra.mxu0 0
          %5562 = vmatprep.subr.bf16.mxu0 0
          %5563 = vmatpush1.bf16.msra.mxu0 0
          %5564 = vmatprep.subr.bf16.mxu0 0
          %5565 = vmatpush1.bf16.msra.mxu0 0
          %5566 = vmatprep.subr.bf16.mxu0 0
          %5567 = vmatpush1.bf16.msra.mxu0 0
          %5568 = vmatprep.subr.bf16.mxu0 0
          %5569 = vmatpush1.bf16.msra.mxu0 0
          %5570 = vmatprep.subr.bf16.mxu0 0
          %5571 = vmatpush1.bf16.msra.mxu0 0
          %5572 = vmatprep.subr.bf16.mxu0 0
          %5573 = vmatpush1.bf16.msra.mxu0 0
          %5574 = vmatprep.subr.bf16.mxu0 0
          %5575 = vmatpush1.bf16.msra.mxu0 0
          %5576 = vmatprep.subr.bf16.mxu0 0
          %5577 = vmatpush1.bf16.msra.mxu0 0
          %5578 = vmatprep.mubr.bf16.mxu0 0
          %5579 = vmatmul.mubr.bf16.gmra.mrb[0].mxu0 %v846
          %v5580 = vpop.f32.mrb[0].mxu0
          %v5581 = vadd.f32 0.0, %v5580
          %v5582 = vpop.f32.mrb[0].mxu0
          %v5583 = vadd.f32 0.0, %v5582
          %v5584 = vpop.f32.mrb[0].mxu0
          %v5585 = vadd.f32 0.0, %v5584
          %v5586 = vpop.f32.mrb[0].mxu0
          %v5587 = vadd.f32 0.0, %v5586
          %5588 = vdwg.mxu0
          %5589 = vmatprep.subr.bf16.mxu0 %v5328
          %5590 = vmatpush1.bf16.msra.mxu0 %v5327
          %5591 = vmatprep.subr.bf16.mxu0 0
          %5592 = vmatpush1.bf16.msra.mxu0 0
          %5593 = vmatprep.subr.bf16.mxu0 0
          %5594 = vmatpush1.bf16.msra.mxu0 0
          %5595 = vmatprep.subr.bf16.mxu0 0
          %5596 = vmatpush1.bf16.msra.mxu0 0
          %5597 = vmatprep.subr.bf16.mxu0 0
          %5598 = vmatpush1.bf16.msra.mxu0 0
          %5599 = vmatprep.subr.bf16.mxu0 0
          %5600 = vmatpush1.bf16.msra.mxu0 0
          %5601 = vmatprep.subr.bf16.mxu0 0
          %5602 = vmatpush1.bf16.msra.mxu0 0
          %5603 = vmatprep.subr.bf16.mxu0 0
          %5604 = vmatpush1.bf16.msra.mxu0 0
          %5605 = vmatprep.subr.bf16.mxu0 0
          %5606 = vmatpush1.bf16.msra.mxu0 0
          %5607 = vmatprep.subr.bf16.mxu0 0
          %5608 = vmatpush1.bf16.msra.mxu0 0
          %5609 = vmatprep.subr.bf16.mxu0 0
          %5610 = vmatpush1.bf16.msra.mxu0 0
          %5611 = vmatprep.subr.bf16.mxu0 0
          %5612 = vmatpush1.bf16.msra.mxu0 0
          %5613 = vmatprep.subr.bf16.mxu0 0
          %5614 = vmatpush1.bf16.msra.mxu0 0
          %5615 = vmatprep.subr.bf16.mxu0 0
          %5616 = vmatpush1.bf16.msra.mxu0 0
          %5617 = vmatprep.subr.bf16.mxu0 0
          %5618 = vmatpush1.bf16.msra.mxu0 0
          %5619 = vmatprep.subr.bf16.mxu0 0
          %5620 = vmatpush1.bf16.msra.mxu0 0
          %5621 = vmatprep.mubr.bf16.mxu0 0
          %5622 = vmatmul.mubr.bf16.gmra.mrb[0].mxu0 %v846
          %v5623 = vpop.f32.mrb[0].mxu0
          %v5624 = vadd.f32 0.0, %v5623
          %v5625 = vpop.f32.mrb[0].mxu0
          %v5626 = vadd.f32 0.0, %v5625
          %v5627 = vpop.f32.mrb[0].mxu0
          %v5628 = vadd.f32 0.0, %v5627
          %v5629 = vpop.f32.mrb[0].mxu0
          %v5630 = vadd.f32 0.0, %v5629
          %5631 = vdwg.mxu0
          %5632 = vmatprep.subr.bf16.mxu0 %v5330
          %5633 = vmatpush1.bf16.msra.mxu0 %v5329
          %5634 = vmatprep.subr.bf16.mxu0 0
          %5635 = vmatpush1.bf16.msra.mxu0 0
          %5636 = vmatprep.subr.bf16.mxu0 0
          %5637 = vmatpush1.bf16.msra.mxu0 0
          %5638 = vmatprep.subr.bf16.mxu0 0
          %5639 = vmatpush1.bf16.msra.mxu0 0
          %5640 = vmatprep.subr.bf16.mxu0 0
          %5641 = vmatpush1.bf16.msra.mxu0 0
          %5642 = vmatprep.subr.bf16.mxu0 0
          %5643 = vmatpush1.bf16.msra.mxu0 0
          %5644 = vmatprep.subr.bf16.mxu0 0
          %5645 = vmatpush1.bf16.msra.mxu0 0
          %5646 = vmatprep.subr.bf16.mxu0 0
          %5647 = vmatpush1.bf16.msra.mxu0 0
          %5648 = vmatprep.subr.bf16.mxu0 0
          %5649 = vmatpush1.bf16.msra.mxu0 0
          %5650 = vmatprep.subr.bf16.mxu0 0
          %5651 = vmatpush1.bf16.msra.mxu0 0
          %5652 = vmatprep.subr.bf16.mxu0 0
          %5653 = vmatpush1.bf16.msra.mxu0 0
          %5654 = vmatprep.subr.bf16.mxu0 0
          %5655 = vmatpush1.bf16.msra.mxu0 0
          %5656 = vmatprep.subr.bf16.mxu0 0
          %5657 = vmatpush1.bf16.msra.mxu0 0
          %5658 = vmatprep.subr.bf16.mxu0 0
          %5659 = vmatpush1.bf16.msra.mxu0 0
          %5660 = vmatprep.subr.bf16.mxu0 0
          %5661 = vmatpush1.bf16.msra.mxu0 0
          %5662 = vmatprep.subr.bf16.mxu0 0
          %5663 = vmatpush1.bf16.msra.mxu0 0
          %5664 = vmatprep.mubr.bf16.mxu0 0
          %5665 = vmatmul.mubr.bf16.gmra.mrb[0].mxu0 %v846
          %v5666 = vpop.f32.mrb[0].mxu0
          %v5667 = vadd.f32 0.0, %v5666
          %v5668 = vpop.f32.mrb[0].mxu0
          %v5669 = vadd.f32 0.0, %v5668
          %v5670 = vpop.f32.mrb[0].mxu0
          %v5671 = vadd.f32 0.0, %v5670
          %v5672 = vpop.f32.mrb[0].mxu0
          %v5673 = vadd.f32 0.0, %v5672
          %5674 = vdwg.mxu0
          %5675 = vmatprep.subr.bf16.mxu0 %v5316
          %5676 = vmatpush1.bf16.msra.mxu0 %v5315
          %5677 = vmatprep.subr.bf16.mxu0 0
          %5678 = vmatpush1.bf16.msra.mxu0 0
          %5679 = vmatprep.subr.bf16.mxu0 0
          %5680 = vmatpush1.bf16.msra.mxu0 0
          %5681 = vmatprep.subr.bf16.mxu0 0
          %5682 = vmatpush1.bf16.msra.mxu0 0
          %5683 = vmatprep.subr.bf16.mxu0 0
          %5684 = vmatpush1.bf16.msra.mxu0 0
          %5685 = vmatprep.subr.bf16.mxu0 0
          %5686 = vmatpush1.bf16.msra.mxu0 0
          %5687 = vmatprep.subr.bf16.mxu0 0
          %5688 = vmatpush1.bf16.msra.mxu0 0
          %5689 = vmatprep.subr.bf16.mxu0 0
          %5690 = vmatpush1.bf16.msra.mxu0 0
          %5691 = vmatprep.subr.bf16.mxu0 0
          %5692 = vmatpush1.bf16.msra.mxu0 0
          %5693 = vmatprep.subr.bf16.mxu0 0
          %5694 = vmatpush1.bf16.msra.mxu0 0
          %5695 = vmatprep.subr.bf16.mxu0 0
          %5696 = vmatpush1.bf16.msra.mxu0 0
          %5697 = vmatprep.subr.bf16.mxu0 0
          %5698 = vmatpush1.bf16.msra.mxu0 0
          %5699 = vmatprep.subr.bf16.mxu0 0
          %5700 = vmatpush1.bf16.msra.mxu0 0
          %5701 = vmatprep.subr.bf16.mxu0 0
          %5702 = vmatpush1.bf16.msra.mxu0 0
          %5703 = vmatprep.subr.bf16.mxu0 0
          %5704 = vmatpush1.bf16.msra.mxu0 0
          %5705 = vmatprep.subr.bf16.mxu0 0
          %5706 = vmatpush1.bf16.msra.mxu0 0
          %5707 = vmatprep.mubr.bf16.mxu0 0
          %5708 = vmatmul.mubr.bf16.gmra.mrb[0].mxu0 %v1193
          %v5709 = vpop.f32.mrb[0].mxu0
          %v5710 = vadd.f32 %v5366, %v5709
          %v5711 = vpop.f32.mrb[0].mxu0
          %v5712 = vadd.f32 %v5368, %v5711
          %v5713 = vpop.f32.mrb[0].mxu0
          %v5714 = vadd.f32 %v5370, %v5713
          %v5715 = vpop.f32.mrb[0].mxu0
          %v5716 = vadd.f32 %v5372, %v5715
          %5717 = vdwg.mxu0
          %5718 = vmatprep.subr.bf16.mxu0 %v5318
          %5719 = vmatpush1.bf16.msra.mxu0 %v5317
          %5720 = vmatprep.subr.bf16.mxu0 0
          %5721 = vmatpush1.bf16.msra.mxu0 0
          %5722 = vmatprep.subr.bf16.mxu0 0
          %5723 = vmatpush1.bf16.msra.mxu0 0
          %5724 = vmatprep.subr.bf16.mxu0 0
          %5725 = vmatpush1.bf16.msra.mxu0 0
          %5726 = vmatprep.subr.bf16.mxu0 0
          %5727 = vmatpush1.bf16.msra.mxu0 0
          %5728 = vmatprep.subr.bf16.mxu0 0
          %5729 = vmatpush1.bf16.msra.mxu0 0
          %5730 = vmatprep.subr.bf16.mxu0 0
          %5731 = vmatpush1.bf16.msra.mxu0 0
          %5732 = vmatprep.subr.bf16.mxu0 0
          %5733 = vmatpush1.bf16.msra.mxu0 0
          %5734 = vmatprep.subr.bf16.mxu0 0
          %5735 = vmatpush1.bf16.msra.mxu0 0
          %5736 = vmatprep.subr.bf16.mxu0 0
          %5737 = vmatpush1.bf16.msra.mxu0 0
          %5738 = vmatprep.subr.bf16.mxu0 0
          %5739 = vmatpush1.bf16.msra.mxu0 0
          %5740 = vmatprep.subr.bf16.mxu0 0
          %5741 = vmatpush1.bf16.msra.mxu0 0
          %5742 = vmatprep.subr.bf16.mxu0 0
          %5743 = vmatpush1.bf16.msra.mxu0 0
          %5744 = vmatprep.subr.bf16.mxu0 0
          %5745 = vmatpush1.bf16.msra.mxu0 0
          %5746 = vmatprep.subr.bf16.mxu0 0
          %5747 = vmatpush1.bf16.msra.mxu0 0
          %5748 = vmatprep.subr.bf16.mxu0 0
          %5749 = vmatpush1.bf16.msra.mxu0 0
          %5750 = vmatprep.mubr.bf16.mxu0 0
          %5751 = vmatmul.mubr.bf16.gmra.mrb[0].mxu0 %v1193
          %v5752 = vpop.f32.mrb[0].mxu0
          %v5753 = vadd.f32 %v5409, %v5752
          %v5754 = vpop.f32.mrb[0].mxu0
          %v5755 = vadd.f32 %v5411, %v5754
          %v5756 = vpop.f32.mrb[0].mxu0
          %v5757 = vadd.f32 %v5413, %v5756
          %v5758 = vpop.f32.mrb[0].mxu0
          %v5759 = vadd.f32 %v5415, %v5758
          %5760 = vdwg.mxu0
          %5761 = vmatprep.subr.bf16.mxu0 %v5320
          %5762 = vmatpush1.bf16.msra.mxu0 %v5319
          %5763 = vmatprep.subr.bf16.mxu0 0
          %5764 = vmatpush1.bf16.msra.mxu0 0
          %5765 = vmatprep.subr.bf16.mxu0 0
          %5766 = vmatpush1.bf16.msra.mxu0 0
          %5767 = vmatprep.subr.bf16.mxu0 0
          %5768 = vmatpush1.bf16.msra.mxu0 0
          %5769 = vmatprep.subr.bf16.mxu0 0
          %5770 = vmatpush1.bf16.msra.mxu0 0
          %5771 = vmatprep.subr.bf16.mxu0 0
          %5772 = vmatpush1.bf16.msra.mxu0 0
          %5773 = vmatprep.subr.bf16.mxu0 0
          %5774 = vmatpush1.bf16.msra.mxu0 0
          %5775 = vmatprep.subr.bf16.mxu0 0
          %5776 = vmatpush1.bf16.msra.mxu0 0
          %5777 = vmatprep.subr.bf16.mxu0 0
          %5778 = vmatpush1.bf16.msra.mxu0 0
          %5779 = vmatprep.subr.bf16.mxu0 0
          %5780 = vmatpush1.bf16.msra.mxu0 0
          %5781 = vmatprep.subr.bf16.mxu0 0
          %5782 = vmatpush1.bf16.msra.mxu0 0
          %5783 = vmatprep.subr.bf16.mxu0 0
          %5784 = vmatpush1.bf16.msra.mxu0 0
          %5785 = vmatprep.subr.bf16.mxu0 0
          %5786 = vmatpush1.bf16.msra.mxu0 0
          %5787 = vmatprep.subr.bf16.mxu0 0
          %5788 = vmatpush1.bf16.msra.mxu0 0
          %5789 = vmatprep.subr.bf16.mxu0 0
          %5790 = vmatpush1.bf16.msra.mxu0 0
          %5791 = vmatprep.subr.bf16.mxu0 0
          %5792 = vmatpush1.bf16.msra.mxu0 0
          %5793 = vmatprep.mubr.bf16.mxu0 0
          %5794 = vmatmul.mubr.bf16.gmra.mrb[0].mxu0 %v1193
          %v5795 = vpop.f32.mrb[0].mxu0
          %v5796 = vadd.f32 %v5452, %v5795
          %v5797 = vpop.f32.mrb[0].mxu0
          %v5798 = vadd.f32 %v5454, %v5797
          %v5799 = vpop.f32.mrb[0].mxu0
          %v5800 = vadd.f32 %v5456, %v5799
          %v5801 = vpop.f32.mrb[0].mxu0
          %v5802 = vadd.f32 %v5458, %v5801
          %5803 = vdwg.mxu0
          %5804 = vmatprep.subr.bf16.mxu0 %v5322
          %5805 = vmatpush1.bf16.msra.mxu0 %v5321
          %5806 = vmatprep.subr.bf16.mxu0 0
          %5807 = vmatpush1.bf16.msra.mxu0 0
          %5808 = vmatprep.subr.bf16.mxu0 0
          %5809 = vmatpush1.bf16.msra.mxu0 0
          %5810 = vmatprep.subr.bf16.mxu0 0
          %5811 = vmatpush1.bf16.msra.mxu0 0
          %5812 = vmatprep.subr.bf16.mxu0 0
          %5813 = vmatpush1.bf16.msra.mxu0 0
          %5814 = vmatprep.subr.bf16.mxu0 0
          %5815 = vmatpush1.bf16.msra.mxu0 0
          %5816 = vmatprep.subr.bf16.mxu0 0
          %5817 = vmatpush1.bf16.msra.mxu0 0
          %5818 = vmatprep.subr.bf16.mxu0 0
          %5819 = vmatpush1.bf16.msra.mxu0 0
          %5820 = vmatprep.subr.bf16.mxu0 0
          %5821 = vmatpush1.bf16.msra.mxu0 0
          %5822 = vmatprep.subr.bf16.mxu0 0
          %5823 = vmatpush1.bf16.msra.mxu0 0
          %5824 = vmatprep.subr.bf16.mxu0 0
          %5825 = vmatpush1.bf16.msra.mxu0 0
          %5826 = vmatprep.subr.bf16.mxu0 0
          %5827 = vmatpush1.bf16.msra.mxu0 0
          %5828 = vmatprep.subr.bf16.mxu0 0
          %5829 = vmatpush1.bf16.msra.mxu0 0
          %5830 = vmatprep.subr.bf16.mxu0 0
          %5831 = vmatpush1.bf16.msra.mxu0 0
          %5832 = vmatprep.subr.bf16.mxu0 0
          %5833 = vmatpush1.bf16.msra.mxu0 0
          %5834 = vmatprep.subr.bf16.mxu0 0
          %5835 = vmatpush1.bf16.msra.mxu0 0
          %5836 = vmatprep.mubr.bf16.mxu0 0
          %5837 = vmatmul.mubr.bf16.gmra.mrb[0].mxu0 %v1193
          %v5838 = vpop.f32.mrb[0].mxu0
          %v5839 = vadd.f32 %v5495, %v5838
          %v5840 = vpop.f32.mrb[0].mxu0
          %v5841 = vadd.f32 %v5497, %v5840
          %v5842 = vpop.f32.mrb[0].mxu0
          %v5843 = vadd.f32 %v5499, %v5842
          %v5844 = vpop.f32.mrb[0].mxu0
          %v5845 = vadd.f32 %v5501, %v5844
          %5846 = vdwg.mxu0
          %5847 = vmatprep.subr.bf16.mxu0 %v5324
          %5848 = vmatpush1.bf16.msra.mxu0 %v5323
          %5849 = vmatprep.subr.bf16.mxu0 0
          %5850 = vmatpush1.bf16.msra.mxu0 0
          %5851 = vmatprep.subr.bf16.mxu0 0
          %5852 = vmatpush1.bf16.msra.mxu0 0
          %5853 = vmatprep.subr.bf16.mxu0 0
          %5854 = vmatpush1.bf16.msra.mxu0 0
          %5855 = vmatprep.subr.bf16.mxu0 0
          %5856 = vmatpush1.bf16.msra.mxu0 0
          %5857 = vmatprep.subr.bf16.mxu0 0
          %5858 = vmatpush1.bf16.msra.mxu0 0
          %5859 = vmatprep.subr.bf16.mxu0 0
          %5860 = vmatpush1.bf16.msra.mxu0 0
          %5861 = vmatprep.subr.bf16.mxu0 0
          %5862 = vmatpush1.bf16.msra.mxu0 0
          %5863 = vmatprep.subr.bf16.mxu0 0
          %5864 = vmatpush1.bf16.msra.mxu0 0
          %5865 = vmatprep.subr.bf16.mxu0 0
          %5866 = vmatpush1.bf16.msra.mxu0 0
          %5867 = vmatprep.subr.bf16.mxu0 0
          %5868 = vmatpush1.bf16.msra.mxu0 0
          %5869 = vmatprep.subr.bf16.mxu0 0
          %5870 = vmatpush1.bf16.msra.mxu0 0
          %5871 = vmatprep.subr.bf16.mxu0 0
          %5872 = vmatpush1.bf16.msra.mxu0 0
          %5873 = vmatprep.subr.bf16.mxu0 0
          %5874 = vmatpush1.bf16.msra.mxu0 0
          %5875 = vmatprep.subr.bf16.mxu0 0
          %5876 = vmatpush1.bf16.msra.mxu0 0
          %5877 = vmatprep.subr.bf16.mxu0 0
          %5878 = vmatpush1.bf16.msra.mxu0 0
          %5879 = vmatprep.mubr.bf16.mxu0 0
          %5880 = vmatmul.mubr.bf16.gmra.mrb[0].mxu0 %v1193
          %v5881 = vpop.f32.mrb[0].mxu0
          %v5882 = vadd.f32 %v5538, %v5881
          %v5883 = vpop.f32.mrb[0].mxu0
          %v5884 = vadd.f32 %v5540, %v5883
          %v5885 = vpop.f32.mrb[0].mxu0
          %v5886 = vadd.f32 %v5542, %v5885
          %v5887 = vpop.f32.mrb[0].mxu0
          %v5888 = vadd.f32 %v5544, %v5887
          %5889 = vdwg.mxu0
          %5890 = vmatprep.subr.bf16.mxu0 %v5326
          %5891 = vmatpush1.bf16.msra.mxu0 %v5325
          %5892 = vmatprep.subr.bf16.mxu0 0
          %5893 = vmatpush1.bf16.msra.mxu0 0
          %5894 = vmatprep.subr.bf16.mxu0 0
          %5895 = vmatpush1.bf16.msra.mxu0 0
          %5896 = vmatprep.subr.bf16.mxu0 0
          %5897 = vmatpush1.bf16.msra.mxu0 0
          %5898 = vmatprep.subr.bf16.mxu0 0
          %5899 = vmatpush1.bf16.msra.mxu0 0
          %5900 = vmatprep.subr.bf16.mxu0 0
          %5901 = vmatpush1.bf16.msra.mxu0 0
          %5902 = vmatprep.subr.bf16.mxu0 0
          %5903 = vmatpush1.bf16.msra.mxu0 0
          %5904 = vmatprep.subr.bf16.mxu0 0
          %5905 = vmatpush1.bf16.msra.mxu0 0
          %5906 = vmatprep.subr.bf16.mxu0 0
          %5907 = vmatpush1.bf16.msra.mxu0 0
          %5908 = vmatprep.subr.bf16.mxu0 0
          %5909 = vmatpush1.bf16.msra.mxu0 0
          %5910 = vmatprep.subr.bf16.mxu0 0
          %5911 = vmatpush1.bf16.msra.mxu0 0
          %5912 = vmatprep.subr.bf16.mxu0 0
          %5913 = vmatpush1.bf16.msra.mxu0 0
          %5914 = vmatprep.subr.bf16.mxu0 0
          %5915 = vmatpush1.bf16.msra.mxu0 0
          %5916 = vmatprep.subr.bf16.mxu0 0
          %5917 = vmatpush1.bf16.msra.mxu0 0
          %5918 = vmatprep.subr.bf16.mxu0 0
          %5919 = vmatpush1.bf16.msra.mxu0 0
          %5920 = vmatprep.subr.bf16.mxu0 0
          %5921 = vmatpush1.bf16.msra.mxu0 0
          %5922 = vmatprep.mubr.bf16.mxu0 0
          %5923 = vmatmul.mubr.bf16.gmra.mrb[0].mxu0 %v1193
          %v5924 = vpop.f32.mrb[0].mxu0
          %v5925 = vadd.f32 %v5581, %v5924
          %v5926 = vpop.f32.mrb[0].mxu0
          %v5927 = vadd.f32 %v5583, %v5926
          %v5928 = vpop.f32.mrb[0].mxu0
          %v5929 = vadd.f32 %v5585, %v5928
          %v5930 = vpop.f32.mrb[0].mxu0
          %v5931 = vadd.f32 %v5587, %v5930
          %5932 = vdwg.mxu0
          %5933 = vmatprep.subr.bf16.mxu0 %v5328
          %5934 = vmatpush1.bf16.msra.mxu0 %v5327
          %5935 = vmatprep.subr.bf16.mxu0 0
          %5936 = vmatpush1.bf16.msra.mxu0 0
          %5937 = vmatprep.subr.bf16.mxu0 0
          %5938 = vmatpush1.bf16.msra.mxu0 0
          %5939 = vmatprep.subr.bf16.mxu0 0
          %5940 = vmatpush1.bf16.msra.mxu0 0
          %5941 = vmatprep.subr.bf16.mxu0 0
          %5942 = vmatpush1.bf16.msra.mxu0 0
          %5943 = vmatprep.subr.bf16.mxu0 0
          %5944 = vmatpush1.bf16.msra.mxu0 0
          %5945 = vmatprep.subr.bf16.mxu0 0
          %5946 = vmatpush1.bf16.msra.mxu0 0
          %5947 = vmatprep.subr.bf16.mxu0 0
          %5948 = vmatpush1.bf16.msra.mxu0 0
          %5949 = vmatprep.subr.bf16.mxu0 0
          %5950 = vmatpush1.bf16.msra.mxu0 0
          %5951 = vmatprep.subr.bf16.mxu0 0
          %5952 = vmatpush1.bf16.msra.mxu0 0
          %5953 = vmatprep.subr.bf16.mxu0 0
          %5954 = vmatpush1.bf16.msra.mxu0 0
          %5955 = vmatprep.subr.bf16.mxu0 0
          %5956 = vmatpush1.bf16.msra.mxu0 0
          %5957 = vmatprep.subr.bf16.mxu0 0
          %5958 = vmatpush1.bf16.msra.mxu0 0
          %5959 = vmatprep.subr.bf16.mxu0 0
          %5960 = vmatpush1.bf16.msra.mxu0 0
          %5961 = vmatprep.subr.bf16.mxu0 0
          %5962 = vmatpush1.bf16.msra.mxu0 0
          %5963 = vmatprep.subr.bf16.mxu0 0
          %5964 = vmatpush1.bf16.msra.mxu0 0
          %5965 = vmatprep.mubr.bf16.mxu0 0
          %5966 = vmatmul.mubr.bf16.gmra.mrb[0].mxu0 %v1193
          %v5967 = vpop.f32.mrb[0].mxu0
          %v5968 = vadd.f32 %v5624, %v5967
          %v5969 = vpop.f32.mrb[0].mxu0
          %v5970 = vadd.f32 %v5626, %v5969
          %v5971 = vpop.f32.mrb[0].mxu0
          %v5972 = vadd.f32 %v5628, %v5971
          %v5973 = vpop.f32.mrb[0].mxu0
          %v5974 = vadd.f32 %v5630, %v5973
          %5975 = vdwg.mxu0
          %5976 = vmatprep.subr.bf16.mxu0 %v5330
          %5977 = vmatpush1.bf16.msra.mxu0 %v5329
          %5978 = vmatprep.subr.bf16.mxu0 0
          %5979 = vmatpush1.bf16.msra.mxu0 0
          %5980 = vmatprep.subr.bf16.mxu0 0
          %5981 = vmatpush1.bf16.msra.mxu0 0
          %5982 = vmatprep.subr.bf16.mxu0 0
          %5983 = vmatpush1.bf16.msra.mxu0 0
          %5984 = vmatprep.subr.bf16.mxu0 0
          %5985 = vmatpush1.bf16.msra.mxu0 0
          %5986 = vmatprep.subr.bf16.mxu0 0
          %5987 = vmatpush1.bf16.msra.mxu0 0
          %5988 = vmatprep.subr.bf16.mxu0 0
          %5989 = vmatpush1.bf16.msra.mxu0 0
          %5990 = vmatprep.subr.bf16.mxu0 0
          %5991 = vmatpush1.bf16.msra.mxu0 0
          %5992 = vmatprep.subr.bf16.mxu0 0
          %5993 = vmatpush1.bf16.msra.mxu0 0
          %5994 = vmatprep.subr.bf16.mxu0 0
          %5995 = vmatpush1.bf16.msra.mxu0 0
          %5996 = vmatprep.subr.bf16.mxu0 0
          %5997 = vmatpush1.bf16.msra.mxu0 0
          %5998 = vmatprep.subr.bf16.mxu0 0
          %5999 = vmatpush1.bf16.msra.mxu0 0
          %6000 = vmatprep.subr.bf16.mxu0 0
          %6001 = vmatpush1.bf16.msra.mxu0 0
          %6002 = vmatprep.subr.bf16.mxu0 0
          %6003 = vmatpush1.bf16.msra.mxu0 0
          %6004 = vmatprep.subr.bf16.mxu0 0
          %6005 = vmatpush1.bf16.msra.mxu0 0
          %6006 = vmatprep.subr.bf16.mxu0 0
          %6007 = vmatpush1.bf16.msra.mxu0 0
          %6008 = vmatprep.mubr.bf16.mxu0 0
          %6009 = vmatmul.mubr.bf16.gmra.mrb[0].mxu0 %v1193
          %v6010 = vpop.f32.mrb[0].mxu0
          %v6011 = vadd.f32 %v5667, %v6010
          %v6012 = vpop.f32.mrb[0].mxu0
          %v6013 = vadd.f32 %v5669, %v6012
          %v6014 = vpop.f32.mrb[0].mxu0
          %v6015 = vadd.f32 %v5671, %v6014
          %v6016 = vpop.f32.mrb[0].mxu0
          %v6017 = vadd.f32 %v5673, %v6016
          %6018 = vdwg.mxu0
          %v6019 = vlaneseq
          %v6020 = vshrl.u32 %v6019, 7
          %v6021 = vsub.s32 4, %v6020
          %v6022 = vrot.slane %v673, %v6021
          %v6023 = vlaneseq
          %v6024 = vshrl.u32 %v6023, 7
          %v6025 = vsub.s32 4, %v6024
          %v6026 = vrot.slane %v674, %v6025
          %v6027 = vlaneseq
          %v6028 = vshrl.u32 %v6027, 7
          %v6029 = vsub.s32 4, %v6028
          %v6030 = vrot.slane %v675, %v6029
          %v6031 = vlaneseq
          %v6032 = vshrl.u32 %v6031, 7
          %v6033 = vsub.s32 4, %v6032
          %v6034 = vrot.slane %v676, %v6033
          %v6035 = vlaneseq
          %v6036 = vshrl.u32 %v6035, 7
          %v6037 = vsub.s32 4, %v6036
          %v6038 = vrot.slane %v677, %v6037
          %v6039 = vlaneseq
          %v6040 = vshrl.u32 %v6039, 7
          %v6041 = vsub.s32 4, %v6040
          %v6042 = vrot.slane %v678, %v6041
          %v6043 = vlaneseq
          %v6044 = vshrl.u32 %v6043, 7
          %v6045 = vsub.s32 4, %v6044
          %v6046 = vrot.slane %v679, %v6045
          %v6047 = vlaneseq
          %v6048 = vshrl.u32 %v6047, 7
          %v6049 = vsub.s32 4, %v6048
          %v6050 = vrot.slane %v680, %v6049
          %v6051 = vlaneseq
          %v6052 = vshrl.u32 %v6051, 7
          %v6053 = vsub.s32 4, %v6052
          %v6054 = vrot.slane %v681, %v6053
          %v6055 = vlaneseq
          %v6056 = vshrl.u32 %v6055, 7
          %v6057 = vsub.s32 4, %v6056
          %v6058 = vrot.slane %v682, %v6057
          %v6059 = vlaneseq
          %v6060 = vshrl.u32 %v6059, 7
          %v6061 = vsub.s32 4, %v6060
          %v6062 = vrot.slane %v683, %v6061
          %v6063 = vlaneseq
          %v6064 = vshrl.u32 %v6063, 7
          %v6065 = vsub.s32 4, %v6064
          %v6066 = vrot.slane %v684, %v6065
          %v6067 = vlaneseq
          %v6068 = vshrl.u32 %v6067, 7
          %v6069 = vsub.s32 4, %v6068
          %v6070 = vrot.slane %v685, %v6069
          %v6071 = vlaneseq
          %v6072 = vshrl.u32 %v6071, 7
          %v6073 = vsub.s32 4, %v6072
          %v6074 = vrot.slane %v686, %v6073
          %v6075 = vlaneseq
          %v6076 = vshrl.u32 %v6075, 7
          %v6077 = vsub.s32 4, %v6076
          %v6078 = vrot.slane %v687, %v6077
          %v6079 = vlaneseq
          %v6080 = vshrl.u32 %v6079, 7
          %v6081 = vsub.s32 4, %v6080
          %v6082 = vrot.slane %v688, %v6081
          %vm6083 = vcmp.eq.s32.totalorder %v698, %v6022
          %vm6084 = vcmp.eq.s32.totalorder %v698, %v6026
          %vm6085 = vcmp.eq.s32.totalorder %v698, %v6030
          %vm6086 = vcmp.eq.s32.totalorder %v698, %v6034
          %vm6087 = vcmp.eq.s32.totalorder %v698, %v6038
          %vm6088 = vcmp.eq.s32.totalorder %v698, %v6042
          %vm6089 = vcmp.eq.s32.totalorder %v698, %v6046
          %vm6090 = vcmp.eq.s32.totalorder %v698, %v6050
          %vm6091 = vcmp.eq.s32.totalorder %v698, %v6054
          %vm6092 = vcmp.eq.s32.totalorder %v698, %v6058
          %vm6093 = vcmp.eq.s32.totalorder %v698, %v6062
          %vm6094 = vcmp.eq.s32.totalorder %v698, %v6066
          %vm6095 = vcmp.eq.s32.totalorder %v698, %v6070
          %vm6096 = vcmp.eq.s32.totalorder %v698, %v6074
          %vm6097 = vcmp.eq.s32.totalorder %v698, %v6078
          %vm6098 = vcmp.eq.s32.totalorder %v698, %v6082
          %vm6099 = vcmp.eq.s32.totalorder %v699, %v6022
          %vm6100 = vcmp.eq.s32.totalorder %v699, %v6026
          %vm6101 = vcmp.eq.s32.totalorder %v699, %v6030
          %vm6102 = vcmp.eq.s32.totalorder %v699, %v6034
          %vm6103 = vcmp.eq.s32.totalorder %v699, %v6038
          %vm6104 = vcmp.eq.s32.totalorder %v699, %v6042
          %vm6105 = vcmp.eq.s32.totalorder %v699, %v6046
          %vm6106 = vcmp.eq.s32.totalorder %v699, %v6050
          %vm6107 = vcmp.eq.s32.totalorder %v699, %v6054
          %vm6108 = vcmp.eq.s32.totalorder %v699, %v6058
          %vm6109 = vcmp.eq.s32.totalorder %v699, %v6062
          %vm6110 = vcmp.eq.s32.totalorder %v699, %v6066
          %vm6111 = vcmp.eq.s32.totalorder %v699, %v6070
          %vm6112 = vcmp.eq.s32.totalorder %v699, %v6074
          %vm6113 = vcmp.eq.s32.totalorder %v699, %v6078
          %vm6114 = vcmp.eq.s32.totalorder %v699, %v6082
          %v6115 = vsel %vm6083, %v5710, 0.0
          %v6116 = vsel %vm6084, %v5712, 0.0
          %v6117 = vsel %vm6085, %v5753, 0.0
          %v6118 = vsel %vm6086, %v5755, 0.0
          %v6119 = vsel %vm6087, %v5796, 0.0
          %v6120 = vsel %vm6088, %v5798, 0.0
          %v6121 = vsel %vm6089, %v5839, 0.0
          %v6122 = vsel %vm6090, %v5841, 0.0
          %v6123 = vsel %vm6091, %v5882, 0.0
          %v6124 = vsel %vm6092, %v5884, 0.0
          %v6125 = vsel %vm6093, %v5925, 0.0
          %v6126 = vsel %vm6094, %v5927, 0.0
          %v6127 = vsel %vm6095, %v5968, 0.0
          %v6128 = vsel %vm6096, %v5970, 0.0
          %v6129 = vsel %vm6097, %v6011, 0.0
          %v6130 = vsel %vm6098, %v6013, 0.0
          %v6131 = vsel %vm6099, %v5714, 0.0
          %v6132 = vsel %vm6100, %v5716, 0.0
          %v6133 = vsel %vm6101, %v5757, 0.0
          %v6134 = vsel %vm6102, %v5759, 0.0
          %v6135 = vsel %vm6103, %v5800, 0.0
          %v6136 = vsel %vm6104, %v5802, 0.0
          %v6137 = vsel %vm6105, %v5843, 0.0
          %v6138 = vsel %vm6106, %v5845, 0.0
          %v6139 = vsel %vm6107, %v5886, 0.0
          %v6140 = vsel %vm6108, %v5888, 0.0
          %v6141 = vsel %vm6109, %v5929, 0.0
          %v6142 = vsel %vm6110, %v5931, 0.0
          %v6143 = vsel %vm6111, %v5972, 0.0
          %v6144 = vsel %vm6112, %v5974, 0.0
          %v6145 = vsel %vm6113, %v6015, 0.0
          %v6146 = vsel %vm6114, %v6017, 0.0
          %v6147 = vadd.f32 %v6115, %v6131
          %v6148 = vrot.slane %v6147, 4
          %v6149 = vadd.f32 %v6147, %v6148
          %v6150 = vrot.slane %v6149, 2
          %v6151 = vadd.f32 %v6149, %v6150
          %v6152 = vrot.slane %v6151, 1
          %v6153 = vadd.f32 %v6151, %v6152
          %v6154 = vadd.f32 %v6116, %v6132
          %v6155 = vrot.slane %v6154, 4
          %v6156 = vadd.f32 %v6154, %v6155
          %v6157 = vrot.slane %v6156, 2
          %v6158 = vadd.f32 %v6156, %v6157
          %v6159 = vrot.slane %v6158, 1
          %v6160 = vadd.f32 %v6158, %v6159
          %v6161 = vadd.f32 %v6117, %v6133
          %v6162 = vrot.slane %v6161, 4
          %v6163 = vadd.f32 %v6161, %v6162
          %v6164 = vrot.slane %v6163, 2
          %v6165 = vadd.f32 %v6163, %v6164
          %v6166 = vrot.slane %v6165, 1
          %v6167 = vadd.f32 %v6165, %v6166
          %v6168 = vadd.f32 %v6118, %v6134
          %v6169 = vrot.slane %v6168, 4
          %v6170 = vadd.f32 %v6168, %v6169
          %v6171 = vrot.slane %v6170, 2
          %v6172 = vadd.f32 %v6170, %v6171
          %v6173 = vrot.slane %v6172, 1
          %v6174 = vadd.f32 %v6172, %v6173
          %v6175 = vadd.f32 %v6119, %v6135
          %v6176 = vrot.slane %v6175, 4
          %v6177 = vadd.f32 %v6175, %v6176
          %v6178 = vrot.slane %v6177, 2
          %v6179 = vadd.f32 %v6177, %v6178
          %v6180 = vrot.slane %v6179, 1
          %v6181 = vadd.f32 %v6179, %v6180
          %v6182 = vadd.f32 %v6120, %v6136
          %v6183 = vrot.slane %v6182, 4
          %v6184 = vadd.f32 %v6182, %v6183
          %v6185 = vrot.slane %v6184, 2
          %v6186 = vadd.f32 %v6184, %v6185
          %v6187 = vrot.slane %v6186, 1
          %v6188 = vadd.f32 %v6186, %v6187
          %v6189 = vadd.f32 %v6121, %v6137
          %v6190 = vrot.slane %v6189, 4
          %v6191 = vadd.f32 %v6189, %v6190
          %v6192 = vrot.slane %v6191, 2
          %v6193 = vadd.f32 %v6191, %v6192
          %v6194 = vrot.slane %v6193, 1
          %v6195 = vadd.f32 %v6193, %v6194
          %v6196 = vadd.f32 %v6122, %v6138
          %v6197 = vrot.slane %v6196, 4
          %v6198 = vadd.f32 %v6196, %v6197
          %v6199 = vrot.slane %v6198, 2
          %v6200 = vadd.f32 %v6198, %v6199
          %v6201 = vrot.slane %v6200, 1
          %v6202 = vadd.f32 %v6200, %v6201
          %v6203 = vadd.f32 %v6123, %v6139
          %v6204 = vrot.slane %v6203, 4
          %v6205 = vadd.f32 %v6203, %v6204
          %v6206 = vrot.slane %v6205, 2
          %v6207 = vadd.f32 %v6205, %v6206
          %v6208 = vrot.slane %v6207, 1
          %v6209 = vadd.f32 %v6207, %v6208
          %v6210 = vadd.f32 %v6124, %v6140
          %v6211 = vrot.slane %v6210, 4
          %v6212 = vadd.f32 %v6210, %v6211
          %v6213 = vrot.slane %v6212, 2
          %v6214 = vadd.f32 %v6212, %v6213
          %v6215 = vrot.slane %v6214, 1
          %v6216 = vadd.f32 %v6214, %v6215
          %v6217 = vadd.f32 %v6125, %v6141
          %v6218 = vrot.slane %v6217, 4
          %v6219 = vadd.f32 %v6217, %v6218
          %v6220 = vrot.slane %v6219, 2
          %v6221 = vadd.f32 %v6219, %v6220
          %v6222 = vrot.slane %v6221, 1
          %v6223 = vadd.f32 %v6221, %v6222
          %v6224 = vadd.f32 %v6126, %v6142
          %v6225 = vrot.slane %v6224, 4
          %v6226 = vadd.f32 %v6224, %v6225
          %v6227 = vrot.slane %v6226, 2
          %v6228 = vadd.f32 %v6226, %v6227
          %v6229 = vrot.slane %v6228, 1
          %v6230 = vadd.f32 %v6228, %v6229
          %v6231 = vadd.f32 %v6127, %v6143
          %v6232 = vrot.slane %v6231, 4
          %v6233 = vadd.f32 %v6231, %v6232
          %v6234 = vrot.slane %v6233, 2
          %v6235 = vadd.f32 %v6233, %v6234
          %v6236 = vrot.slane %v6235, 1
          %v6237 = vadd.f32 %v6235, %v6236
          %v6238 = vadd.f32 %v6128, %v6144
          %v6239 = vrot.slane %v6238, 4
          %v6240 = vadd.f32 %v6238, %v6239
          %v6241 = vrot.slane %v6240, 2
          %v6242 = vadd.f32 %v6240, %v6241
          %v6243 = vrot.slane %v6242, 1
          %v6244 = vadd.f32 %v6242, %v6243
          %v6245 = vadd.f32 %v6129, %v6145
          %v6246 = vrot.slane %v6245, 4
          %v6247 = vadd.f32 %v6245, %v6246
          %v6248 = vrot.slane %v6247, 2
          %v6249 = vadd.f32 %v6247, %v6248
          %v6250 = vrot.slane %v6249, 1
          %v6251 = vadd.f32 %v6249, %v6250
          %v6252 = vadd.f32 %v6130, %v6146
          %v6253 = vrot.slane %v6252, 4
          %v6254 = vadd.f32 %v6252, %v6253
          %v6255 = vrot.slane %v6254, 2
          %v6256 = vadd.f32 %v6254, %v6255
          %v6257 = vrot.slane %v6256, 1
          %v6258 = vadd.f32 %v6256, %v6257
          %v6259 = vsub.f32 0.5555556, %v6153
          %v6260 = vsub.f32 0.5555556, %v6160
          %v6261 = vsub.f32 0.5555556, %v6167
          %v6262 = vsub.f32 0.5555556, %v6174
          %v6263 = vsub.f32 0.5555556, %v6181
          %v6264 = vsub.f32 0.5555556, %v6188
          %v6265 = vsub.f32 0.5555556, %v6195
          %v6266 = vsub.f32 0.5555556, %v6202
          %v6267 = vsub.f32 0.5555556, %v6209
          %v6268 = vsub.f32 0.5555556, %v6216
          %v6269 = vsub.f32 0.5555556, %v6223
          %v6270 = vsub.f32 0.5555556, %v6230
          %v6271 = vsub.f32 0.5555556, %v6237
          %v6272 = vsub.f32 0.5555556, %v6244
          %v6273 = vsub.f32 0.5555556, %v6251
          %v6274 = vsub.f32 0.5555556, %v6258
          %v6275 = vmul.f32 %v6259, %v6259
          %v6276 = vmul.f32 %v6260, %v6260
          %v6277 = vmul.f32 %v6261, %v6261
          %v6278 = vmul.f32 %v6262, %v6262
          %v6279 = vmul.f32 %v6263, %v6263
          %v6280 = vmul.f32 %v6264, %v6264
          %v6281 = vmul.f32 %v6265, %v6265
          %v6282 = vmul.f32 %v6266, %v6266
          %v6283 = vmul.f32 %v6267, %v6267
          %v6284 = vmul.f32 %v6268, %v6268
          %v6285 = vmul.f32 %v6269, %v6269
          %v6286 = vmul.f32 %v6270, %v6270
          %v6287 = vmul.f32 %v6271, %v6271
          %v6288 = vmul.f32 %v6272, %v6272
          %v6289 = vmul.f32 %v6273, %v6273
          %v6290 = vmul.f32 %v6274, %v6274
          %v6291 = vadd.f32 %v5171, %v6275
          %v6292 = vadd.f32 %v5172, %v6276
          %v6293 = vadd.f32 %v5173, %v6277
          %v6294 = vadd.f32 %v5174, %v6278
          %v6295 = vadd.f32 %v5175, %v6279
          %v6296 = vadd.f32 %v5176, %v6280
          %v6297 = vadd.f32 %v5177, %v6281
          %v6298 = vadd.f32 %v5178, %v6282
          %v6299 = vadd.f32 %v5179, %v6283
          %v6300 = vadd.f32 %v5180, %v6284
          %v6301 = vadd.f32 %v5181, %v6285
          %v6302 = vadd.f32 %v5182, %v6286
          %v6303 = vadd.f32 %v5183, %v6287
          %v6304 = vadd.f32 %v5184, %v6288
          %v6305 = vadd.f32 %v5185, %v6289
          %v6306 = vadd.f32 %v5186, %v6290
          %v6307 = vlaneseq
          %v6308 = vshrl.u32 %v6307, 7
          %v6309 = vsub.s32 5, %v6308
          %v6310 = vrot.slane %v657, %v6309
          %v6311 = vlaneseq
          %v6312 = vshrl.u32 %v6311, 7
          %v6313 = vsub.s32 5, %v6312
          %v6314 = vrot.slane %v658, %v6313
          %v6315 = vlaneseq
          %v6316 = vshrl.u32 %v6315, 7
          %v6317 = vsub.s32 5, %v6316
          %v6318 = vrot.slane %v659, %v6317
          %v6319 = vlaneseq
          %v6320 = vshrl.u32 %v6319, 7
          %v6321 = vsub.s32 5, %v6320
          %v6322 = vrot.slane %v660, %v6321
          %v6323 = vlaneseq
          %v6324 = vshrl.u32 %v6323, 7
          %v6325 = vsub.s32 5, %v6324
          %v6326 = vrot.slane %v661, %v6325
          %v6327 = vlaneseq
          %v6328 = vshrl.u32 %v6327, 7
          %v6329 = vsub.s32 5, %v6328
          %v6330 = vrot.slane %v662, %v6329
          %v6331 = vlaneseq
          %v6332 = vshrl.u32 %v6331, 7
          %v6333 = vsub.s32 5, %v6332
          %v6334 = vrot.slane %v663, %v6333
          %v6335 = vlaneseq
          %v6336 = vshrl.u32 %v6335, 7
          %v6337 = vsub.s32 5, %v6336
          %v6338 = vrot.slane %v664, %v6337
          %v6339 = vlaneseq
          %v6340 = vshrl.u32 %v6339, 7
          %v6341 = vsub.s32 5, %v6340
          %v6342 = vrot.slane %v665, %v6341
          %v6343 = vlaneseq
          %v6344 = vshrl.u32 %v6343, 7
          %v6345 = vsub.s32 5, %v6344
          %v6346 = vrot.slane %v666, %v6345
          %v6347 = vlaneseq
          %v6348 = vshrl.u32 %v6347, 7
          %v6349 = vsub.s32 5, %v6348
          %v6350 = vrot.slane %v667, %v6349
          %v6351 = vlaneseq
          %v6352 = vshrl.u32 %v6351, 7
          %v6353 = vsub.s32 5, %v6352
          %v6354 = vrot.slane %v668, %v6353
          %v6355 = vlaneseq
          %v6356 = vshrl.u32 %v6355, 7
          %v6357 = vsub.s32 5, %v6356
          %v6358 = vrot.slane %v669, %v6357
          %v6359 = vlaneseq
          %v6360 = vshrl.u32 %v6359, 7
          %v6361 = vsub.s32 5, %v6360
          %v6362 = vrot.slane %v670, %v6361
          %v6363 = vlaneseq
          %v6364 = vshrl.u32 %v6363, 7
          %v6365 = vsub.s32 5, %v6364
          %v6366 = vrot.slane %v671, %v6365
          %v6367 = vlaneseq
          %v6368 = vshrl.u32 %v6367, 7
          %v6369 = vsub.s32 5, %v6368
          %v6370 = vrot.slane %v672, %v6369
          %vm6371 = vcmp.eq.s32.totalorder %v698, %v6310
          %vm6372 = vcmp.eq.s32.totalorder %v698, %v6314
          %vm6373 = vcmp.eq.s32.totalorder %v698, %v6318
          %vm6374 = vcmp.eq.s32.totalorder %v698, %v6322
          %vm6375 = vcmp.eq.s32.totalorder %v698, %v6326
          %vm6376 = vcmp.eq.s32.totalorder %v698, %v6330
          %vm6377 = vcmp.eq.s32.totalorder %v698, %v6334
          %vm6378 = vcmp.eq.s32.totalorder %v698, %v6338
          %vm6379 = vcmp.eq.s32.totalorder %v698, %v6342
          %vm6380 = vcmp.eq.s32.totalorder %v698, %v6346
          %vm6381 = vcmp.eq.s32.totalorder %v698, %v6350
          %vm6382 = vcmp.eq.s32.totalorder %v698, %v6354
          %vm6383 = vcmp.eq.s32.totalorder %v698, %v6358
          %vm6384 = vcmp.eq.s32.totalorder %v698, %v6362
          %vm6385 = vcmp.eq.s32.totalorder %v698, %v6366
          %vm6386 = vcmp.eq.s32.totalorder %v698, %v6370
          %vm6387 = vcmp.eq.s32.totalorder %v699, %v6310
          %vm6388 = vcmp.eq.s32.totalorder %v699, %v6314
          %vm6389 = vcmp.eq.s32.totalorder %v699, %v6318
          %vm6390 = vcmp.eq.s32.totalorder %v699, %v6322
          %vm6391 = vcmp.eq.s32.totalorder %v699, %v6326
          %vm6392 = vcmp.eq.s32.totalorder %v699, %v6330
          %vm6393 = vcmp.eq.s32.totalorder %v699, %v6334
          %vm6394 = vcmp.eq.s32.totalorder %v699, %v6338
          %vm6395 = vcmp.eq.s32.totalorder %v699, %v6342
          %vm6396 = vcmp.eq.s32.totalorder %v699, %v6346
          %vm6397 = vcmp.eq.s32.totalorder %v699, %v6350
          %vm6398 = vcmp.eq.s32.totalorder %v699, %v6354
          %vm6399 = vcmp.eq.s32.totalorder %v699, %v6358
          %vm6400 = vcmp.eq.s32.totalorder %v699, %v6362
          %vm6401 = vcmp.eq.s32.totalorder %v699, %v6366
          %vm6402 = vcmp.eq.s32.totalorder %v699, %v6370
          %v6403 = vsel %vm6371, 1.0, 0.0
          %v6404 = vsel %vm6372, 1.0, 0.0
          %v6405 = vsel %vm6373, 1.0, 0.0
          %v6406 = vsel %vm6374, 1.0, 0.0
          %v6407 = vsel %vm6375, 1.0, 0.0
          %v6408 = vsel %vm6376, 1.0, 0.0
          %v6409 = vsel %vm6377, 1.0, 0.0
          %v6410 = vsel %vm6378, 1.0, 0.0
          %v6411 = vsel %vm6379, 1.0, 0.0
          %v6412 = vsel %vm6380, 1.0, 0.0
          %v6413 = vsel %vm6381, 1.0, 0.0
          %v6414 = vsel %vm6382, 1.0, 0.0
          %v6415 = vsel %vm6383, 1.0, 0.0
          %v6416 = vsel %vm6384, 1.0, 0.0
          %v6417 = vsel %vm6385, 1.0, 0.0
          %v6418 = vsel %vm6386, 1.0, 0.0
          %v6419 = vsel %vm6387, 1.0, 0.0
          %v6420 = vsel %vm6388, 1.0, 0.0
          %v6421 = vsel %vm6389, 1.0, 0.0
          %v6422 = vsel %vm6390, 1.0, 0.0
          %v6423 = vsel %vm6391, 1.0, 0.0
          %v6424 = vsel %vm6392, 1.0, 0.0
          %v6425 = vsel %vm6393, 1.0, 0.0
          %v6426 = vsel %vm6394, 1.0, 0.0
          %v6427 = vsel %vm6395, 1.0, 0.0
          %v6428 = vsel %vm6396, 1.0, 0.0
          %v6429 = vsel %vm6397, 1.0, 0.0
          %v6430 = vsel %vm6398, 1.0, 0.0
          %v6431 = vsel %vm6399, 1.0, 0.0
          %v6432 = vsel %vm6400, 1.0, 0.0
          %v6433 = vsel %vm6401, 1.0, 0.0
          %v6434 = vsel %vm6402, 1.0, 0.0
          %v6435 = vpack.c.bf16 %v6419, %v6403
          %v6436 = vpack.c.bf16 %v6420, %v6404
          %v6437 = vpack.c.bf16 %v6421, %v6405
          %v6438 = vpack.c.bf16 %v6422, %v6406
          %v6439 = vpack.c.bf16 %v6423, %v6407
          %v6440 = vpack.c.bf16 %v6424, %v6408
          %v6441 = vpack.c.bf16 %v6425, %v6409
          %v6442 = vpack.c.bf16 %v6426, %v6410
          %v6443 = vpack.c.bf16 %v6427, %v6411
          %v6444 = vpack.c.bf16 %v6428, %v6412
          %v6445 = vpack.c.bf16 %v6429, %v6413
          %v6446 = vpack.c.bf16 %v6430, %v6414
          %v6447 = vpack.c.bf16 %v6431, %v6415
          %v6448 = vpack.c.bf16 %v6432, %v6416
          %v6449 = vpack.c.bf16 %v6433, %v6417
          %v6450 = vpack.c.bf16 %v6434, %v6418
          %6451 = vmatprep.subr.bf16.mxu0 %v6436
          %6452 = vmatpush1.bf16.msra.mxu0 %v6435
          %6453 = vmatprep.subr.bf16.mxu0 0
          %6454 = vmatpush1.bf16.msra.mxu0 0
          %6455 = vmatprep.subr.bf16.mxu0 0
          %6456 = vmatpush1.bf16.msra.mxu0 0
          %6457 = vmatprep.subr.bf16.mxu0 0
          %6458 = vmatpush1.bf16.msra.mxu0 0
          %6459 = vmatprep.subr.bf16.mxu0 0
          %6460 = vmatpush1.bf16.msra.mxu0 0
          %6461 = vmatprep.subr.bf16.mxu0 0
          %6462 = vmatpush1.bf16.msra.mxu0 0
          %6463 = vmatprep.subr.bf16.mxu0 0
          %6464 = vmatpush1.bf16.msra.mxu0 0
          %6465 = vmatprep.subr.bf16.mxu0 0
          %6466 = vmatpush1.bf16.msra.mxu0 0
          %6467 = vmatprep.subr.bf16.mxu0 0
          %6468 = vmatpush1.bf16.msra.mxu0 0
          %6469 = vmatprep.subr.bf16.mxu0 0
          %6470 = vmatpush1.bf16.msra.mxu0 0
          %6471 = vmatprep.subr.bf16.mxu0 0
          %6472 = vmatpush1.bf16.msra.mxu0 0
          %6473 = vmatprep.subr.bf16.mxu0 0
          %6474 = vmatpush1.bf16.msra.mxu0 0
          %6475 = vmatprep.subr.bf16.mxu0 0
          %6476 = vmatpush1.bf16.msra.mxu0 0
          %6477 = vmatprep.subr.bf16.mxu0 0
          %6478 = vmatpush1.bf16.msra.mxu0 0
          %6479 = vmatprep.subr.bf16.mxu0 0
          %6480 = vmatpush1.bf16.msra.mxu0 0
          %6481 = vmatprep.subr.bf16.mxu0 0
          %6482 = vmatpush1.bf16.msra.mxu0 0
          %6483 = vmatprep.mubr.bf16.mxu0 0
          %6484 = vmatmul.mubr.bf16.gmra.mrb[0].mxu0 %v846
          %v6485 = vpop.f32.mrb[0].mxu0
          %v6486 = vadd.f32 0.0, %v6485
          %v6487 = vpop.f32.mrb[0].mxu0
          %v6488 = vadd.f32 0.0, %v6487
          %v6489 = vpop.f32.mrb[0].mxu0
          %v6490 = vadd.f32 0.0, %v6489
          %v6491 = vpop.f32.mrb[0].mxu0
          %v6492 = vadd.f32 0.0, %v6491
          %6493 = vdwg.mxu0
          %6494 = vmatprep.subr.bf16.mxu0 %v6438
          %6495 = vmatpush1.bf16.msra.mxu0 %v6437
          %6496 = vmatprep.subr.bf16.mxu0 0
          %6497 = vmatpush1.bf16.msra.mxu0 0
          %6498 = vmatprep.subr.bf16.mxu0 0
          %6499 = vmatpush1.bf16.msra.mxu0 0
          %6500 = vmatprep.subr.bf16.mxu0 0
          %6501 = vmatpush1.bf16.msra.mxu0 0
          %6502 = vmatprep.subr.bf16.mxu0 0
          %6503 = vmatpush1.bf16.msra.mxu0 0
          %6504 = vmatprep.subr.bf16.mxu0 0
          %6505 = vmatpush1.bf16.msra.mxu0 0
          %6506 = vmatprep.subr.bf16.mxu0 0
          %6507 = vmatpush1.bf16.msra.mxu0 0
          %6508 = vmatprep.subr.bf16.mxu0 0
          %6509 = vmatpush1.bf16.msra.mxu0 0
          %6510 = vmatprep.subr.bf16.mxu0 0
          %6511 = vmatpush1.bf16.msra.mxu0 0
          %6512 = vmatprep.subr.bf16.mxu0 0
          %6513 = vmatpush1.bf16.msra.mxu0 0
          %6514 = vmatprep.subr.bf16.mxu0 0
          %6515 = vmatpush1.bf16.msra.mxu0 0
          %6516 = vmatprep.subr.bf16.mxu0 0
          %6517 = vmatpush1.bf16.msra.mxu0 0
          %6518 = vmatprep.subr.bf16.mxu0 0
          %6519 = vmatpush1.bf16.msra.mxu0 0
          %6520 = vmatprep.subr.bf16.mxu0 0
          %6521 = vmatpush1.bf16.msra.mxu0 0
          %6522 = vmatprep.subr.bf16.mxu0 0
          %6523 = vmatpush1.bf16.msra.mxu0 0
          %6524 = vmatprep.subr.bf16.mxu0 0
          %6525 = vmatpush1.bf16.msra.mxu0 0
          %6526 = vmatprep.mubr.bf16.mxu0 0
          %6527 = vmatmul.mubr.bf16.gmra.mrb[0].mxu0 %v846
          %v6528 = vpop.f32.mrb[0].mxu0
          %v6529 = vadd.f32 0.0, %v6528
          %v6530 = vpop.f32.mrb[0].mxu0
          %v6531 = vadd.f32 0.0, %v6530
          %v6532 = vpop.f32.mrb[0].mxu0
          %v6533 = vadd.f32 0.0, %v6532
          %v6534 = vpop.f32.mrb[0].mxu0
          %v6535 = vadd.f32 0.0, %v6534
          %6536 = vdwg.mxu0
          %6537 = vmatprep.subr.bf16.mxu0 %v6440
          %6538 = vmatpush1.bf16.msra.mxu0 %v6439
          %6539 = vmatprep.subr.bf16.mxu0 0
          %6540 = vmatpush1.bf16.msra.mxu0 0
          %6541 = vmatprep.subr.bf16.mxu0 0
          %6542 = vmatpush1.bf16.msra.mxu0 0
          %6543 = vmatprep.subr.bf16.mxu0 0
          %6544 = vmatpush1.bf16.msra.mxu0 0
          %6545 = vmatprep.subr.bf16.mxu0 0
          %6546 = vmatpush1.bf16.msra.mxu0 0
          %6547 = vmatprep.subr.bf16.mxu0 0
          %6548 = vmatpush1.bf16.msra.mxu0 0
          %6549 = vmatprep.subr.bf16.mxu0 0
          %6550 = vmatpush1.bf16.msra.mxu0 0
          %6551 = vmatprep.subr.bf16.mxu0 0
          %6552 = vmatpush1.bf16.msra.mxu0 0
          %6553 = vmatprep.subr.bf16.mxu0 0
          %6554 = vmatpush1.bf16.msra.mxu0 0
          %6555 = vmatprep.subr.bf16.mxu0 0
          %6556 = vmatpush1.bf16.msra.mxu0 0
          %6557 = vmatprep.subr.bf16.mxu0 0
          %6558 = vmatpush1.bf16.msra.mxu0 0
          %6559 = vmatprep.subr.bf16.mxu0 0
          %6560 = vmatpush1.bf16.msra.mxu0 0
          %6561 = vmatprep.subr.bf16.mxu0 0
          %6562 = vmatpush1.bf16.msra.mxu0 0
          %6563 = vmatprep.subr.bf16.mxu0 0
          %6564 = vmatpush1.bf16.msra.mxu0 0
          %6565 = vmatprep.subr.bf16.mxu0 0
          %6566 = vmatpush1.bf16.msra.mxu0 0
          %6567 = vmatprep.subr.bf16.mxu0 0
          %6568 = vmatpush1.bf16.msra.mxu0 0
          %6569 = vmatprep.mubr.bf16.mxu0 0
          %6570 = vmatmul.mubr.bf16.gmra.mrb[0].mxu0 %v846
          %v6571 = vpop.f32.mrb[0].mxu0
          %v6572 = vadd.f32 0.0, %v6571
          %v6573 = vpop.f32.mrb[0].mxu0
          %v6574 = vadd.f32 0.0, %v6573
          %v6575 = vpop.f32.mrb[0].mxu0
          %v6576 = vadd.f32 0.0, %v6575
          %v6577 = vpop.f32.mrb[0].mxu0
          %v6578 = vadd.f32 0.0, %v6577
          %6579 = vdwg.mxu0
          %6580 = vmatprep.subr.bf16.mxu0 %v6442
          %6581 = vmatpush1.bf16.msra.mxu0 %v6441
          %6582 = vmatprep.subr.bf16.mxu0 0
          %6583 = vmatpush1.bf16.msra.mxu0 0
          %6584 = vmatprep.subr.bf16.mxu0 0
          %6585 = vmatpush1.bf16.msra.mxu0 0
          %6586 = vmatprep.subr.bf16.mxu0 0
          %6587 = vmatpush1.bf16.msra.mxu0 0
          %6588 = vmatprep.subr.bf16.mxu0 0
          %6589 = vmatpush1.bf16.msra.mxu0 0
          %6590 = vmatprep.subr.bf16.mxu0 0
          %6591 = vmatpush1.bf16.msra.mxu0 0
          %6592 = vmatprep.subr.bf16.mxu0 0
          %6593 = vmatpush1.bf16.msra.mxu0 0
          %6594 = vmatprep.subr.bf16.mxu0 0
          %6595 = vmatpush1.bf16.msra.mxu0 0
          %6596 = vmatprep.subr.bf16.mxu0 0
          %6597 = vmatpush1.bf16.msra.mxu0 0
          %6598 = vmatprep.subr.bf16.mxu0 0
          %6599 = vmatpush1.bf16.msra.mxu0 0
          %6600 = vmatprep.subr.bf16.mxu0 0
          %6601 = vmatpush1.bf16.msra.mxu0 0
          %6602 = vmatprep.subr.bf16.mxu0 0
          %6603 = vmatpush1.bf16.msra.mxu0 0
          %6604 = vmatprep.subr.bf16.mxu0 0
          %6605 = vmatpush1.bf16.msra.mxu0 0
          %6606 = vmatprep.subr.bf16.mxu0 0
          %6607 = vmatpush1.bf16.msra.mxu0 0
          %6608 = vmatprep.subr.bf16.mxu0 0
          %6609 = vmatpush1.bf16.msra.mxu0 0
          %6610 = vmatprep.subr.bf16.mxu0 0
          %6611 = vmatpush1.bf16.msra.mxu0 0
          %6612 = vmatprep.mubr.bf16.mxu0 0
          %6613 = vmatmul.mubr.bf16.gmra.mrb[0].mxu0 %v846
          %v6614 = vpop.f32.mrb[0].mxu0
          %v6615 = vadd.f32 0.0, %v6614
          %v6616 = vpop.f32.mrb[0].mxu0
          %v6617 = vadd.f32 0.0, %v6616
          %v6618 = vpop.f32.mrb[0].mxu0
          %v6619 = vadd.f32 0.0, %v6618
          %v6620 = vpop.f32.mrb[0].mxu0
          %v6621 = vadd.f32 0.0, %v6620
          %6622 = vdwg.mxu0
          %6623 = vmatprep.subr.bf16.mxu0 %v6444
          %6624 = vmatpush1.bf16.msra.mxu0 %v6443
          %6625 = vmatprep.subr.bf16.mxu0 0
          %6626 = vmatpush1.bf16.msra.mxu0 0
          %6627 = vmatprep.subr.bf16.mxu0 0
          %6628 = vmatpush1.bf16.msra.mxu0 0
          %6629 = vmatprep.subr.bf16.mxu0 0
          %6630 = vmatpush1.bf16.msra.mxu0 0
          %6631 = vmatprep.subr.bf16.mxu0 0
          %6632 = vmatpush1.bf16.msra.mxu0 0
          %6633 = vmatprep.subr.bf16.mxu0 0
          %6634 = vmatpush1.bf16.msra.mxu0 0
          %6635 = vmatprep.subr.bf16.mxu0 0
          %6636 = vmatpush1.bf16.msra.mxu0 0
          %6637 = vmatprep.subr.bf16.mxu0 0
          %6638 = vmatpush1.bf16.msra.mxu0 0
          %6639 = vmatprep.subr.bf16.mxu0 0
          %6640 = vmatpush1.bf16.msra.mxu0 0
          %6641 = vmatprep.subr.bf16.mxu0 0
          %6642 = vmatpush1.bf16.msra.mxu0 0
          %6643 = vmatprep.subr.bf16.mxu0 0
          %6644 = vmatpush1.bf16.msra.mxu0 0
          %6645 = vmatprep.subr.bf16.mxu0 0
          %6646 = vmatpush1.bf16.msra.mxu0 0
          %6647 = vmatprep.subr.bf16.mxu0 0
          %6648 = vmatpush1.bf16.msra.mxu0 0
          %6649 = vmatprep.subr.bf16.mxu0 0
          %6650 = vmatpush1.bf16.msra.mxu0 0
          %6651 = vmatprep.subr.bf16.mxu0 0
          %6652 = vmatpush1.bf16.msra.mxu0 0
          %6653 = vmatprep.subr.bf16.mxu0 0
          %6654 = vmatpush1.bf16.msra.mxu0 0
          %6655 = vmatprep.mubr.bf16.mxu0 0
          %6656 = vmatmul.mubr.bf16.gmra.mrb[0].mxu0 %v846
          %v6657 = vpop.f32.mrb[0].mxu0
          %v6658 = vadd.f32 0.0, %v6657
          %v6659 = vpop.f32.mrb[0].mxu0
          %v6660 = vadd.f32 0.0, %v6659
          %v6661 = vpop.f32.mrb[0].mxu0
          %v6662 = vadd.f32 0.0, %v6661
          %v6663 = vpop.f32.mrb[0].mxu0
          %v6664 = vadd.f32 0.0, %v6663
          %6665 = vdwg.mxu0
          %6666 = vmatprep.subr.bf16.mxu0 %v6446
          %6667 = vmatpush1.bf16.msra.mxu0 %v6445
          %6668 = vmatprep.subr.bf16.mxu0 0
          %6669 = vmatpush1.bf16.msra.mxu0 0
          %6670 = vmatprep.subr.bf16.mxu0 0
          %6671 = vmatpush1.bf16.msra.mxu0 0
          %6672 = vmatprep.subr.bf16.mxu0 0
          %6673 = vmatpush1.bf16.msra.mxu0 0
          %6674 = vmatprep.subr.bf16.mxu0 0
          %6675 = vmatpush1.bf16.msra.mxu0 0
          %6676 = vmatprep.subr.bf16.mxu0 0
          %6677 = vmatpush1.bf16.msra.mxu0 0
          %6678 = vmatprep.subr.bf16.mxu0 0
          %6679 = vmatpush1.bf16.msra.mxu0 0
          %6680 = vmatprep.subr.bf16.mxu0 0
          %6681 = vmatpush1.bf16.msra.mxu0 0
          %6682 = vmatprep.subr.bf16.mxu0 0
          %6683 = vmatpush1.bf16.msra.mxu0 0
          %6684 = vmatprep.subr.bf16.mxu0 0
          %6685 = vmatpush1.bf16.msra.mxu0 0
          %6686 = vmatprep.subr.bf16.mxu0 0
          %6687 = vmatpush1.bf16.msra.mxu0 0
          %6688 = vmatprep.subr.bf16.mxu0 0
          %6689 = vmatpush1.bf16.msra.mxu0 0
          %6690 = vmatprep.subr.bf16.mxu0 0
          %6691 = vmatpush1.bf16.msra.mxu0 0
          %6692 = vmatprep.subr.bf16.mxu0 0
          %6693 = vmatpush1.bf16.msra.mxu0 0
          %6694 = vmatprep.subr.bf16.mxu0 0
          %6695 = vmatpush1.bf16.msra.mxu0 0
          %6696 = vmatprep.subr.bf16.mxu0 0
          %6697 = vmatpush1.bf16.msra.mxu0 0
          %6698 = vmatprep.mubr.bf16.mxu0 0
          %6699 = vmatmul.mubr.bf16.gmra.mrb[0].mxu0 %v846
          %v6700 = vpop.f32.mrb[0].mxu0
          %v6701 = vadd.f32 0.0, %v6700
          %v6702 = vpop.f32.mrb[0].mxu0
          %v6703 = vadd.f32 0.0, %v6702
          %v6704 = vpop.f32.mrb[0].mxu0
          %v6705 = vadd.f32 0.0, %v6704
          %v6706 = vpop.f32.mrb[0].mxu0
          %v6707 = vadd.f32 0.0, %v6706
          %6708 = vdwg.mxu0
          %6709 = vmatprep.subr.bf16.mxu0 %v6448
          %6710 = vmatpush1.bf16.msra.mxu0 %v6447
          %6711 = vmatprep.subr.bf16.mxu0 0
          %6712 = vmatpush1.bf16.msra.mxu0 0
          %6713 = vmatprep.subr.bf16.mxu0 0
          %6714 = vmatpush1.bf16.msra.mxu0 0
          %6715 = vmatprep.subr.bf16.mxu0 0
          %6716 = vmatpush1.bf16.msra.mxu0 0
          %6717 = vmatprep.subr.bf16.mxu0 0
          %6718 = vmatpush1.bf16.msra.mxu0 0
          %6719 = vmatprep.subr.bf16.mxu0 0
          %6720 = vmatpush1.bf16.msra.mxu0 0
          %6721 = vmatprep.subr.bf16.mxu0 0
          %6722 = vmatpush1.bf16.msra.mxu0 0
          %6723 = vmatprep.subr.bf16.mxu0 0
          %6724 = vmatpush1.bf16.msra.mxu0 0
          %6725 = vmatprep.subr.bf16.mxu0 0
          %6726 = vmatpush1.bf16.msra.mxu0 0
          %6727 = vmatprep.subr.bf16.mxu0 0
          %6728 = vmatpush1.bf16.msra.mxu0 0
          %6729 = vmatprep.subr.bf16.mxu0 0
          %6730 = vmatpush1.bf16.msra.mxu0 0
          %6731 = vmatprep.subr.bf16.mxu0 0
          %6732 = vmatpush1.bf16.msra.mxu0 0
          %6733 = vmatprep.subr.bf16.mxu0 0
          %6734 = vmatpush1.bf16.msra.mxu0 0
          %6735 = vmatprep.subr.bf16.mxu0 0
          %6736 = vmatpush1.bf16.msra.mxu0 0
          %6737 = vmatprep.subr.bf16.mxu0 0
          %6738 = vmatpush1.bf16.msra.mxu0 0
          %6739 = vmatprep.subr.bf16.mxu0 0
          %6740 = vmatpush1.bf16.msra.mxu0 0
          %6741 = vmatprep.mubr.bf16.mxu0 0
          %6742 = vmatmul.mubr.bf16.gmra.mrb[0].mxu0 %v846
          %v6743 = vpop.f32.mrb[0].mxu0
          %v6744 = vadd.f32 0.0, %v6743
          %v6745 = vpop.f32.mrb[0].mxu0
          %v6746 = vadd.f32 0.0, %v6745
          %v6747 = vpop.f32.mrb[0].mxu0
          %v6748 = vadd.f32 0.0, %v6747
          %v6749 = vpop.f32.mrb[0].mxu0
          %v6750 = vadd.f32 0.0, %v6749
          %6751 = vdwg.mxu0
          %6752 = vmatprep.subr.bf16.mxu0 %v6450
          %6753 = vmatpush1.bf16.msra.mxu0 %v6449
          %6754 = vmatprep.subr.bf16.mxu0 0
          %6755 = vmatpush1.bf16.msra.mxu0 0
          %6756 = vmatprep.subr.bf16.mxu0 0
          %6757 = vmatpush1.bf16.msra.mxu0 0
          %6758 = vmatprep.subr.bf16.mxu0 0
          %6759 = vmatpush1.bf16.msra.mxu0 0
          %6760 = vmatprep.subr.bf16.mxu0 0
          %6761 = vmatpush1.bf16.msra.mxu0 0
          %6762 = vmatprep.subr.bf16.mxu0 0
          %6763 = vmatpush1.bf16.msra.mxu0 0
          %6764 = vmatprep.subr.bf16.mxu0 0
          %6765 = vmatpush1.bf16.msra.mxu0 0
          %6766 = vmatprep.subr.bf16.mxu0 0
          %6767 = vmatpush1.bf16.msra.mxu0 0
          %6768 = vmatprep.subr.bf16.mxu0 0
          %6769 = vmatpush1.bf16.msra.mxu0 0
          %6770 = vmatprep.subr.bf16.mxu0 0
          %6771 = vmatpush1.bf16.msra.mxu0 0
          %6772 = vmatprep.subr.bf16.mxu0 0
          %6773 = vmatpush1.bf16.msra.mxu0 0
          %6774 = vmatprep.subr.bf16.mxu0 0
          %6775 = vmatpush1.bf16.msra.mxu0 0
          %6776 = vmatprep.subr.bf16.mxu0 0
          %6777 = vmatpush1.bf16.msra.mxu0 0
          %6778 = vmatprep.subr.bf16.mxu0 0
          %6779 = vmatpush1.bf16.msra.mxu0 0
          %6780 = vmatprep.subr.bf16.mxu0 0
          %6781 = vmatpush1.bf16.msra.mxu0 0
          %6782 = vmatprep.subr.bf16.mxu0 0
          %6783 = vmatpush1.bf16.msra.mxu0 0
          %6784 = vmatprep.mubr.bf16.mxu0 0
          %6785 = vmatmul.mubr.bf16.gmra.mrb[0].mxu0 %v846
          %v6786 = vpop.f32.mrb[0].mxu0
          %v6787 = vadd.f32 0.0, %v6786
          %v6788 = vpop.f32.mrb[0].mxu0
          %v6789 = vadd.f32 0.0, %v6788
          %v6790 = vpop.f32.mrb[0].mxu0
          %v6791 = vadd.f32 0.0, %v6790
          %v6792 = vpop.f32.mrb[0].mxu0
          %v6793 = vadd.f32 0.0, %v6792
          %6794 = vdwg.mxu0
          %6795 = vmatprep.subr.bf16.mxu0 %v6436
          %6796 = vmatpush1.bf16.msra.mxu0 %v6435
          %6797 = vmatprep.subr.bf16.mxu0 0
          %6798 = vmatpush1.bf16.msra.mxu0 0
          %6799 = vmatprep.subr.bf16.mxu0 0
          %6800 = vmatpush1.bf16.msra.mxu0 0
          %6801 = vmatprep.subr.bf16.mxu0 0
          %6802 = vmatpush1.bf16.msra.mxu0 0
          %6803 = vmatprep.subr.bf16.mxu0 0
          %6804 = vmatpush1.bf16.msra.mxu0 0
          %6805 = vmatprep.subr.bf16.mxu0 0
          %6806 = vmatpush1.bf16.msra.mxu0 0
          %6807 = vmatprep.subr.bf16.mxu0 0
          %6808 = vmatpush1.bf16.msra.mxu0 0
          %6809 = vmatprep.subr.bf16.mxu0 0
          %6810 = vmatpush1.bf16.msra.mxu0 0
          %6811 = vmatprep.subr.bf16.mxu0 0
          %6812 = vmatpush1.bf16.msra.mxu0 0
          %6813 = vmatprep.subr.bf16.mxu0 0
          %6814 = vmatpush1.bf16.msra.mxu0 0
          %6815 = vmatprep.subr.bf16.mxu0 0
          %6816 = vmatpush1.bf16.msra.mxu0 0
          %6817 = vmatprep.subr.bf16.mxu0 0
          %6818 = vmatpush1.bf16.msra.mxu0 0
          %6819 = vmatprep.subr.bf16.mxu0 0
          %6820 = vmatpush1.bf16.msra.mxu0 0
          %6821 = vmatprep.subr.bf16.mxu0 0
          %6822 = vmatpush1.bf16.msra.mxu0 0
          %6823 = vmatprep.subr.bf16.mxu0 0
          %6824 = vmatpush1.bf16.msra.mxu0 0
          %6825 = vmatprep.subr.bf16.mxu0 0
          %6826 = vmatpush1.bf16.msra.mxu0 0
          %6827 = vmatprep.mubr.bf16.mxu0 0
          %6828 = vmatmul.mubr.bf16.gmra.mrb[0].mxu0 %v1193
          %v6829 = vpop.f32.mrb[0].mxu0
          %v6830 = vadd.f32 %v6486, %v6829
          %v6831 = vpop.f32.mrb[0].mxu0
          %v6832 = vadd.f32 %v6488, %v6831
          %v6833 = vpop.f32.mrb[0].mxu0
          %v6834 = vadd.f32 %v6490, %v6833
          %v6835 = vpop.f32.mrb[0].mxu0
          %v6836 = vadd.f32 %v6492, %v6835
          %6837 = vdwg.mxu0
          %6838 = vmatprep.subr.bf16.mxu0 %v6438
          %6839 = vmatpush1.bf16.msra.mxu0 %v6437
          %6840 = vmatprep.subr.bf16.mxu0 0
          %6841 = vmatpush1.bf16.msra.mxu0 0
          %6842 = vmatprep.subr.bf16.mxu0 0
          %6843 = vmatpush1.bf16.msra.mxu0 0
          %6844 = vmatprep.subr.bf16.mxu0 0
          %6845 = vmatpush1.bf16.msra.mxu0 0
          %6846 = vmatprep.subr.bf16.mxu0 0
          %6847 = vmatpush1.bf16.msra.mxu0 0
          %6848 = vmatprep.subr.bf16.mxu0 0
          %6849 = vmatpush1.bf16.msra.mxu0 0
          %6850 = vmatprep.subr.bf16.mxu0 0
          %6851 = vmatpush1.bf16.msra.mxu0 0
          %6852 = vmatprep.subr.bf16.mxu0 0
          %6853 = vmatpush1.bf16.msra.mxu0 0
          %6854 = vmatprep.subr.bf16.mxu0 0
          %6855 = vmatpush1.bf16.msra.mxu0 0
          %6856 = vmatprep.subr.bf16.mxu0 0
          %6857 = vmatpush1.bf16.msra.mxu0 0
          %6858 = vmatprep.subr.bf16.mxu0 0
          %6859 = vmatpush1.bf16.msra.mxu0 0
          %6860 = vmatprep.subr.bf16.mxu0 0
          %6861 = vmatpush1.bf16.msra.mxu0 0
          %6862 = vmatprep.subr.bf16.mxu0 0
          %6863 = vmatpush1.bf16.msra.mxu0 0
          %6864 = vmatprep.subr.bf16.mxu0 0
          %6865 = vmatpush1.bf16.msra.mxu0 0
          %6866 = vmatprep.subr.bf16.mxu0 0
          %6867 = vmatpush1.bf16.msra.mxu0 0
          %6868 = vmatprep.subr.bf16.mxu0 0
          %6869 = vmatpush1.bf16.msra.mxu0 0
          %6870 = vmatprep.mubr.bf16.mxu0 0
          %6871 = vmatmul.mubr.bf16.gmra.mrb[0].mxu0 %v1193
          %v6872 = vpop.f32.mrb[0].mxu0
          %v6873 = vadd.f32 %v6529, %v6872
          %v6874 = vpop.f32.mrb[0].mxu0
          %v6875 = vadd.f32 %v6531, %v6874
          %v6876 = vpop.f32.mrb[0].mxu0
          %v6877 = vadd.f32 %v6533, %v6876
          %v6878 = vpop.f32.mrb[0].mxu0
          %v6879 = vadd.f32 %v6535, %v6878
          %6880 = vdwg.mxu0
          %6881 = vmatprep.subr.bf16.mxu0 %v6440
          %6882 = vmatpush1.bf16.msra.mxu0 %v6439
          %6883 = vmatprep.subr.bf16.mxu0 0
          %6884 = vmatpush1.bf16.msra.mxu0 0
          %6885 = vmatprep.subr.bf16.mxu0 0
          %6886 = vmatpush1.bf16.msra.mxu0 0
          %6887 = vmatprep.subr.bf16.mxu0 0
          %6888 = vmatpush1.bf16.msra.mxu0 0
          %6889 = vmatprep.subr.bf16.mxu0 0
          %6890 = vmatpush1.bf16.msra.mxu0 0
          %6891 = vmatprep.subr.bf16.mxu0 0
          %6892 = vmatpush1.bf16.msra.mxu0 0
          %6893 = vmatprep.subr.bf16.mxu0 0
          %6894 = vmatpush1.bf16.msra.mxu0 0
          %6895 = vmatprep.subr.bf16.mxu0 0
          %6896 = vmatpush1.bf16.msra.mxu0 0
          %6897 = vmatprep.subr.bf16.mxu0 0
          %6898 = vmatpush1.bf16.msra.mxu0 0
          %6899 = vmatprep.subr.bf16.mxu0 0
          %6900 = vmatpush1.bf16.msra.mxu0 0
          %6901 = vmatprep.subr.bf16.mxu0 0
          %6902 = vmatpush1.bf16.msra.mxu0 0
          %6903 = vmatprep.subr.bf16.mxu0 0
          %6904 = vmatpush1.bf16.msra.mxu0 0
          %6905 = vmatprep.subr.bf16.mxu0 0
          %6906 = vmatpush1.bf16.msra.mxu0 0
          %6907 = vmatprep.subr.bf16.mxu0 0
          %6908 = vmatpush1.bf16.msra.mxu0 0
          %6909 = vmatprep.subr.bf16.mxu0 0
          %6910 = vmatpush1.bf16.msra.mxu0 0
          %6911 = vmatprep.subr.bf16.mxu0 0
          %6912 = vmatpush1.bf16.msra.mxu0 0
          %6913 = vmatprep.mubr.bf16.mxu0 0
          %6914 = vmatmul.mubr.bf16.gmra.mrb[0].mxu0 %v1193
          %v6915 = vpop.f32.mrb[0].mxu0
          %v6916 = vadd.f32 %v6572, %v6915
          %v6917 = vpop.f32.mrb[0].mxu0
          %v6918 = vadd.f32 %v6574, %v6917
          %v6919 = vpop.f32.mrb[0].mxu0
          %v6920 = vadd.f32 %v6576, %v6919
          %v6921 = vpop.f32.mrb[0].mxu0
          %v6922 = vadd.f32 %v6578, %v6921
          %6923 = vdwg.mxu0
          %6924 = vmatprep.subr.bf16.mxu0 %v6442
          %6925 = vmatpush1.bf16.msra.mxu0 %v6441
          %6926 = vmatprep.subr.bf16.mxu0 0
          %6927 = vmatpush1.bf16.msra.mxu0 0
          %6928 = vmatprep.subr.bf16.mxu0 0
          %6929 = vmatpush1.bf16.msra.mxu0 0
          %6930 = vmatprep.subr.bf16.mxu0 0
          %6931 = vmatpush1.bf16.msra.mxu0 0
          %6932 = vmatprep.subr.bf16.mxu0 0
          %6933 = vmatpush1.bf16.msra.mxu0 0
          %6934 = vmatprep.subr.bf16.mxu0 0
          %6935 = vmatpush1.bf16.msra.mxu0 0
          %6936 = vmatprep.subr.bf16.mxu0 0
          %6937 = vmatpush1.bf16.msra.mxu0 0
          %6938 = vmatprep.subr.bf16.mxu0 0
          %6939 = vmatpush1.bf16.msra.mxu0 0
          %6940 = vmatprep.subr.bf16.mxu0 0
          %6941 = vmatpush1.bf16.msra.mxu0 0
          %6942 = vmatprep.subr.bf16.mxu0 0
          %6943 = vmatpush1.bf16.msra.mxu0 0
          %6944 = vmatprep.subr.bf16.mxu0 0
          %6945 = vmatpush1.bf16.msra.mxu0 0
          %6946 = vmatprep.subr.bf16.mxu0 0
          %6947 = vmatpush1.bf16.msra.mxu0 0
          %6948 = vmatprep.subr.bf16.mxu0 0
          %6949 = vmatpush1.bf16.msra.mxu0 0
          %6950 = vmatprep.subr.bf16.mxu0 0
          %6951 = vmatpush1.bf16.msra.mxu0 0
          %6952 = vmatprep.subr.bf16.mxu0 0
          %6953 = vmatpush1.bf16.msra.mxu0 0
          %6954 = vmatprep.subr.bf16.mxu0 0
          %6955 = vmatpush1.bf16.msra.mxu0 0
          %6956 = vmatprep.mubr.bf16.mxu0 0
          %6957 = vmatmul.mubr.bf16.gmra.mrb[0].mxu0 %v1193
          %v6958 = vpop.f32.mrb[0].mxu0
          %v6959 = vadd.f32 %v6615, %v6958
          %v6960 = vpop.f32.mrb[0].mxu0
          %v6961 = vadd.f32 %v6617, %v6960
          %v6962 = vpop.f32.mrb[0].mxu0
          %v6963 = vadd.f32 %v6619, %v6962
          %v6964 = vpop.f32.mrb[0].mxu0
          %v6965 = vadd.f32 %v6621, %v6964
          %6966 = vdwg.mxu0
          %6967 = vmatprep.subr.bf16.mxu0 %v6444
          %6968 = vmatpush1.bf16.msra.mxu0 %v6443
          %6969 = vmatprep.subr.bf16.mxu0 0
          %6970 = vmatpush1.bf16.msra.mxu0 0
          %6971 = vmatprep.subr.bf16.mxu0 0
          %6972 = vmatpush1.bf16.msra.mxu0 0
          %6973 = vmatprep.subr.bf16.mxu0 0
          %6974 = vmatpush1.bf16.msra.mxu0 0
          %6975 = vmatprep.subr.bf16.mxu0 0
          %6976 = vmatpush1.bf16.msra.mxu0 0
          %6977 = vmatprep.subr.bf16.mxu0 0
          %6978 = vmatpush1.bf16.msra.mxu0 0
          %6979 = vmatprep.subr.bf16.mxu0 0
          %6980 = vmatpush1.bf16.msra.mxu0 0
          %6981 = vmatprep.subr.bf16.mxu0 0
          %6982 = vmatpush1.bf16.msra.mxu0 0
          %6983 = vmatprep.subr.bf16.mxu0 0
          %6984 = vmatpush1.bf16.msra.mxu0 0
          %6985 = vmatprep.subr.bf16.mxu0 0
          %6986 = vmatpush1.bf16.msra.mxu0 0
          %6987 = vmatprep.subr.bf16.mxu0 0
          %6988 = vmatpush1.bf16.msra.mxu0 0
          %6989 = vmatprep.subr.bf16.mxu0 0
          %6990 = vmatpush1.bf16.msra.mxu0 0
          %6991 = vmatprep.subr.bf16.mxu0 0
          %6992 = vmatpush1.bf16.msra.mxu0 0
          %6993 = vmatprep.subr.bf16.mxu0 0
          %6994 = vmatpush1.bf16.msra.mxu0 0
          %6995 = vmatprep.subr.bf16.mxu0 0
          %6996 = vmatpush1.bf16.msra.mxu0 0
          %6997 = vmatprep.subr.bf16.mxu0 0
          %6998 = vmatpush1.bf16.msra.mxu0 0
          %6999 = vmatprep.mubr.bf16.mxu0 0
          %7000 = vmatmul.mubr.bf16.gmra.mrb[0].mxu0 %v1193
          %v7001 = vpop.f32.mrb[0].mxu0
          %v7002 = vadd.f32 %v6658, %v7001
          %v7003 = vpop.f32.mrb[0].mxu0
          %v7004 = vadd.f32 %v6660, %v7003
          %v7005 = vpop.f32.mrb[0].mxu0
          %v7006 = vadd.f32 %v6662, %v7005
          %v7007 = vpop.f32.mrb[0].mxu0
          %v7008 = vadd.f32 %v6664, %v7007
          %7009 = vdwg.mxu0
          %7010 = vmatprep.subr.bf16.mxu0 %v6446
          %7011 = vmatpush1.bf16.msra.mxu0 %v6445
          %7012 = vmatprep.subr.bf16.mxu0 0
          %7013 = vmatpush1.bf16.msra.mxu0 0
          %7014 = vmatprep.subr.bf16.mxu0 0
          %7015 = vmatpush1.bf16.msra.mxu0 0
          %7016 = vmatprep.subr.bf16.mxu0 0
          %7017 = vmatpush1.bf16.msra.mxu0 0
          %7018 = vmatprep.subr.bf16.mxu0 0
          %7019 = vmatpush1.bf16.msra.mxu0 0
          %7020 = vmatprep.subr.bf16.mxu0 0
          %7021 = vmatpush1.bf16.msra.mxu0 0
          %7022 = vmatprep.subr.bf16.mxu0 0
          %7023 = vmatpush1.bf16.msra.mxu0 0
          %7024 = vmatprep.subr.bf16.mxu0 0
          %7025 = vmatpush1.bf16.msra.mxu0 0
          %7026 = vmatprep.subr.bf16.mxu0 0
          %7027 = vmatpush1.bf16.msra.mxu0 0
          %7028 = vmatprep.subr.bf16.mxu0 0
          %7029 = vmatpush1.bf16.msra.mxu0 0
          %7030 = vmatprep.subr.bf16.mxu0 0
          %7031 = vmatpush1.bf16.msra.mxu0 0
          %7032 = vmatprep.subr.bf16.mxu0 0
          %7033 = vmatpush1.bf16.msra.mxu0 0
          %7034 = vmatprep.subr.bf16.mxu0 0
          %7035 = vmatpush1.bf16.msra.mxu0 0
          %7036 = vmatprep.subr.bf16.mxu0 0
          %7037 = vmatpush1.bf16.msra.mxu0 0
          %7038 = vmatprep.subr.bf16.mxu0 0
          %7039 = vmatpush1.bf16.msra.mxu0 0
          %7040 = vmatprep.subr.bf16.mxu0 0
          %7041 = vmatpush1.bf16.msra.mxu0 0
          %7042 = vmatprep.mubr.bf16.mxu0 0
          %7043 = vmatmul.mubr.bf16.gmra.mrb[0].mxu0 %v1193
          %v7044 = vpop.f32.mrb[0].mxu0
          %v7045 = vadd.f32 %v6701, %v7044
          %v7046 = vpop.f32.mrb[0].mxu0
          %v7047 = vadd.f32 %v6703, %v7046
          %v7048 = vpop.f32.mrb[0].mxu0
          %v7049 = vadd.f32 %v6705, %v7048
          %v7050 = vpop.f32.mrb[0].mxu0
          %v7051 = vadd.f32 %v6707, %v7050
          %7052 = vdwg.mxu0
          %7053 = vmatprep.subr.bf16.mxu0 %v6448
          %7054 = vmatpush1.bf16.msra.mxu0 %v6447
          %7055 = vmatprep.subr.bf16.mxu0 0
          %7056 = vmatpush1.bf16.msra.mxu0 0
          %7057 = vmatprep.subr.bf16.mxu0 0
          %7058 = vmatpush1.bf16.msra.mxu0 0
          %7059 = vmatprep.subr.bf16.mxu0 0
          %7060 = vmatpush1.bf16.msra.mxu0 0
          %7061 = vmatprep.subr.bf16.mxu0 0
          %7062 = vmatpush1.bf16.msra.mxu0 0
          %7063 = vmatprep.subr.bf16.mxu0 0
          %7064 = vmatpush1.bf16.msra.mxu0 0
          %7065 = vmatprep.subr.bf16.mxu0 0
          %7066 = vmatpush1.bf16.msra.mxu0 0
          %7067 = vmatprep.subr.bf16.mxu0 0
          %7068 = vmatpush1.bf16.msra.mxu0 0
          %7069 = vmatprep.subr.bf16.mxu0 0
          %7070 = vmatpush1.bf16.msra.mxu0 0
          %7071 = vmatprep.subr.bf16.mxu0 0
          %7072 = vmatpush1.bf16.msra.mxu0 0
          %7073 = vmatprep.subr.bf16.mxu0 0
          %7074 = vmatpush1.bf16.msra.mxu0 0
          %7075 = vmatprep.subr.bf16.mxu0 0
          %7076 = vmatpush1.bf16.msra.mxu0 0
          %7077 = vmatprep.subr.bf16.mxu0 0
          %7078 = vmatpush1.bf16.msra.mxu0 0
          %7079 = vmatprep.subr.bf16.mxu0 0
          %7080 = vmatpush1.bf16.msra.mxu0 0
          %7081 = vmatprep.subr.bf16.mxu0 0
          %7082 = vmatpush1.bf16.msra.mxu0 0
          %7083 = vmatprep.subr.bf16.mxu0 0
          %7084 = vmatpush1.bf16.msra.mxu0 0
          %7085 = vmatprep.mubr.bf16.mxu0 0
          %7086 = vmatmul.mubr.bf16.gmra.mrb[0].mxu0 %v1193
          %v7087 = vpop.f32.mrb[0].mxu0
          %v7088 = vadd.f32 %v6744, %v7087
          %v7089 = vpop.f32.mrb[0].mxu0
          %v7090 = vadd.f32 %v6746, %v7089
          %v7091 = vpop.f32.mrb[0].mxu0
          %v7092 = vadd.f32 %v6748, %v7091
          %v7093 = vpop.f32.mrb[0].mxu0
          %v7094 = vadd.f32 %v6750, %v7093
          %7095 = vdwg.mxu0
          %7096 = vmatprep.subr.bf16.mxu0 %v6450
          %7097 = vmatpush1.bf16.msra.mxu0 %v6449
          %7098 = vmatprep.subr.bf16.mxu0 0
          %7099 = vmatpush1.bf16.msra.mxu0 0
          %7100 = vmatprep.subr.bf16.mxu0 0
          %7101 = vmatpush1.bf16.msra.mxu0 0
          %7102 = vmatprep.subr.bf16.mxu0 0
          %7103 = vmatpush1.bf16.msra.mxu0 0
          %7104 = vmatprep.subr.bf16.mxu0 0
          %7105 = vmatpush1.bf16.msra.mxu0 0
          %7106 = vmatprep.subr.bf16.mxu0 0
          %7107 = vmatpush1.bf16.msra.mxu0 0
          %7108 = vmatprep.subr.bf16.mxu0 0
          %7109 = vmatpush1.bf16.msra.mxu0 0
          %7110 = vmatprep.subr.bf16.mxu0 0
          %7111 = vmatpush1.bf16.msra.mxu0 0
          %7112 = vmatprep.subr.bf16.mxu0 0
          %7113 = vmatpush1.bf16.msra.mxu0 0
          %7114 = vmatprep.subr.bf16.mxu0 0
          %7115 = vmatpush1.bf16.msra.mxu0 0
          %7116 = vmatprep.subr.bf16.mxu0 0
          %7117 = vmatpush1.bf16.msra.mxu0 0
          %7118 = vmatprep.subr.bf16.mxu0 0
          %7119 = vmatpush1.bf16.msra.mxu0 0
          %7120 = vmatprep.subr.bf16.mxu0 0
          %7121 = vmatpush1.bf16.msra.mxu0 0
          %7122 = vmatprep.subr.bf16.mxu0 0
          %7123 = vmatpush1.bf16.msra.mxu0 0
          %7124 = vmatprep.subr.bf16.mxu0 0
          %7125 = vmatpush1.bf16.msra.mxu0 0
          %7126 = vmatprep.subr.bf16.mxu0 0
          %7127 = vmatpush1.bf16.msra.mxu0 0
          %7128 = vmatprep.mubr.bf16.mxu0 0
          %7129 = vmatmul.mubr.bf16.gmra.mrb[0].mxu0 %v1193
          %v7130 = vpop.f32.mrb[0].mxu0
          %v7131 = vadd.f32 %v6787, %v7130
          %v7132 = vpop.f32.mrb[0].mxu0
          %v7133 = vadd.f32 %v6789, %v7132
          %v7134 = vpop.f32.mrb[0].mxu0
          %v7135 = vadd.f32 %v6791, %v7134
          %v7136 = vpop.f32.mrb[0].mxu0
          %v7137 = vadd.f32 %v6793, %v7136
          %7138 = vdwg.mxu0
          %v7139 = vlaneseq
          %v7140 = vshrl.u32 %v7139, 7
          %v7141 = vsub.s32 5, %v7140
          %v7142 = vrot.slane %v673, %v7141
          %v7143 = vlaneseq
          %v7144 = vshrl.u32 %v7143, 7
          %v7145 = vsub.s32 5, %v7144
          %v7146 = vrot.slane %v674, %v7145
          %v7147 = vlaneseq
          %v7148 = vshrl.u32 %v7147, 7
          %v7149 = vsub.s32 5, %v7148
          %v7150 = vrot.slane %v675, %v7149
          %v7151 = vlaneseq
          %v7152 = vshrl.u32 %v7151, 7
          %v7153 = vsub.s32 5, %v7152
          %v7154 = vrot.slane %v676, %v7153
          %v7155 = vlaneseq
          %v7156 = vshrl.u32 %v7155, 7
          %v7157 = vsub.s32 5, %v7156
          %v7158 = vrot.slane %v677, %v7157
          %v7159 = vlaneseq
          %v7160 = vshrl.u32 %v7159, 7
          %v7161 = vsub.s32 5, %v7160
          %v7162 = vrot.slane %v678, %v7161
          %v7163 = vlaneseq
          %v7164 = vshrl.u32 %v7163, 7
          %v7165 = vsub.s32 5, %v7164
          %v7166 = vrot.slane %v679, %v7165
          %v7167 = vlaneseq
          %v7168 = vshrl.u32 %v7167, 7
          %v7169 = vsub.s32 5, %v7168
          %v7170 = vrot.slane %v680, %v7169
          %v7171 = vlaneseq
          %v7172 = vshrl.u32 %v7171, 7
          %v7173 = vsub.s32 5, %v7172
          %v7174 = vrot.slane %v681, %v7173
          %v7175 = vlaneseq
          %v7176 = vshrl.u32 %v7175, 7
          %v7177 = vsub.s32 5, %v7176
          %v7178 = vrot.slane %v682, %v7177
          %v7179 = vlaneseq
          %v7180 = vshrl.u32 %v7179, 7
          %v7181 = vsub.s32 5, %v7180
          %v7182 = vrot.slane %v683, %v7181
          %v7183 = vlaneseq
          %v7184 = vshrl.u32 %v7183, 7
          %v7185 = vsub.s32 5, %v7184
          %v7186 = vrot.slane %v684, %v7185
          %v7187 = vlaneseq
          %v7188 = vshrl.u32 %v7187, 7
          %v7189 = vsub.s32 5, %v7188
          %v7190 = vrot.slane %v685, %v7189
          %v7191 = vlaneseq
          %v7192 = vshrl.u32 %v7191, 7
          %v7193 = vsub.s32 5, %v7192
          %v7194 = vrot.slane %v686, %v7193
          %v7195 = vlaneseq
          %v7196 = vshrl.u32 %v7195, 7
          %v7197 = vsub.s32 5, %v7196
          %v7198 = vrot.slane %v687, %v7197
          %v7199 = vlaneseq
          %v7200 = vshrl.u32 %v7199, 7
          %v7201 = vsub.s32 5, %v7200
          %v7202 = vrot.slane %v688, %v7201
          %vm7203 = vcmp.eq.s32.totalorder %v698, %v7142
          %vm7204 = vcmp.eq.s32.totalorder %v698, %v7146
          %vm7205 = vcmp.eq.s32.totalorder %v698, %v7150
          %vm7206 = vcmp.eq.s32.totalorder %v698, %v7154
          %vm7207 = vcmp.eq.s32.totalorder %v698, %v7158
          %vm7208 = vcmp.eq.s32.totalorder %v698, %v7162
          %vm7209 = vcmp.eq.s32.totalorder %v698, %v7166
          %vm7210 = vcmp.eq.s32.totalorder %v698, %v7170
          %vm7211 = vcmp.eq.s32.totalorder %v698, %v7174
          %vm7212 = vcmp.eq.s32.totalorder %v698, %v7178
          %vm7213 = vcmp.eq.s32.totalorder %v698, %v7182
          %vm7214 = vcmp.eq.s32.totalorder %v698, %v7186
          %vm7215 = vcmp.eq.s32.totalorder %v698, %v7190
          %vm7216 = vcmp.eq.s32.totalorder %v698, %v7194
          %vm7217 = vcmp.eq.s32.totalorder %v698, %v7198
          %vm7218 = vcmp.eq.s32.totalorder %v698, %v7202
          %vm7219 = vcmp.eq.s32.totalorder %v699, %v7142
          %vm7220 = vcmp.eq.s32.totalorder %v699, %v7146
          %vm7221 = vcmp.eq.s32.totalorder %v699, %v7150
          %vm7222 = vcmp.eq.s32.totalorder %v699, %v7154
          %vm7223 = vcmp.eq.s32.totalorder %v699, %v7158
          %vm7224 = vcmp.eq.s32.totalorder %v699, %v7162
          %vm7225 = vcmp.eq.s32.totalorder %v699, %v7166
          %vm7226 = vcmp.eq.s32.totalorder %v699, %v7170
          %vm7227 = vcmp.eq.s32.totalorder %v699, %v7174
          %vm7228 = vcmp.eq.s32.totalorder %v699, %v7178
          %vm7229 = vcmp.eq.s32.totalorder %v699, %v7182
          %vm7230 = vcmp.eq.s32.totalorder %v699, %v7186
          %vm7231 = vcmp.eq.s32.totalorder %v699, %v7190
          %vm7232 = vcmp.eq.s32.totalorder %v699, %v7194
          %vm7233 = vcmp.eq.s32.totalorder %v699, %v7198
          %vm7234 = vcmp.eq.s32.totalorder %v699, %v7202
          %v7235 = vsel %vm7203, %v6830, 0.0
          %v7236 = vsel %vm7204, %v6832, 0.0
          %v7237 = vsel %vm7205, %v6873, 0.0
          %v7238 = vsel %vm7206, %v6875, 0.0
          %v7239 = vsel %vm7207, %v6916, 0.0
          %v7240 = vsel %vm7208, %v6918, 0.0
          %v7241 = vsel %vm7209, %v6959, 0.0
          %v7242 = vsel %vm7210, %v6961, 0.0
          %v7243 = vsel %vm7211, %v7002, 0.0
          %v7244 = vsel %vm7212, %v7004, 0.0
          %v7245 = vsel %vm7213, %v7045, 0.0
          %v7246 = vsel %vm7214, %v7047, 0.0
          %v7247 = vsel %vm7215, %v7088, 0.0
          %v7248 = vsel %vm7216, %v7090, 0.0
          %v7249 = vsel %vm7217, %v7131, 0.0
          %v7250 = vsel %vm7218, %v7133, 0.0
          %v7251 = vsel %vm7219, %v6834, 0.0
          %v7252 = vsel %vm7220, %v6836, 0.0
          %v7253 = vsel %vm7221, %v6877, 0.0
          %v7254 = vsel %vm7222, %v6879, 0.0
          %v7255 = vsel %vm7223, %v6920, 0.0
          %v7256 = vsel %vm7224, %v6922, 0.0
          %v7257 = vsel %vm7225, %v6963, 0.0
          %v7258 = vsel %vm7226, %v6965, 0.0
          %v7259 = vsel %vm7227, %v7006, 0.0
          %v7260 = vsel %vm7228, %v7008, 0.0
          %v7261 = vsel %vm7229, %v7049, 0.0
          %v7262 = vsel %vm7230, %v7051, 0.0
          %v7263 = vsel %vm7231, %v7092, 0.0
          %v7264 = vsel %vm7232, %v7094, 0.0
          %v7265 = vsel %vm7233, %v7135, 0.0
          %v7266 = vsel %vm7234, %v7137, 0.0
          %v7267 = vadd.f32 %v7235, %v7251
          %v7268 = vrot.slane %v7267, 4
          %v7269 = vadd.f32 %v7267, %v7268
          %v7270 = vrot.slane %v7269, 2
          %v7271 = vadd.f32 %v7269, %v7270
          %v7272 = vrot.slane %v7271, 1
          %v7273 = vadd.f32 %v7271, %v7272
          %v7274 = vadd.f32 %v7236, %v7252
          %v7275 = vrot.slane %v7274, 4
          %v7276 = vadd.f32 %v7274, %v7275
          %v7277 = vrot.slane %v7276, 2
          %v7278 = vadd.f32 %v7276, %v7277
          %v7279 = vrot.slane %v7278, 1
          %v7280 = vadd.f32 %v7278, %v7279
          %v7281 = vadd.f32 %v7237, %v7253
          %v7282 = vrot.slane %v7281, 4
          %v7283 = vadd.f32 %v7281, %v7282
          %v7284 = vrot.slane %v7283, 2
          %v7285 = vadd.f32 %v7283, %v7284
          %v7286 = vrot.slane %v7285, 1
          %v7287 = vadd.f32 %v7285, %v7286
          %v7288 = vadd.f32 %v7238, %v7254
          %v7289 = vrot.slane %v7288, 4
          %v7290 = vadd.f32 %v7288, %v7289
          %v7291 = vrot.slane %v7290, 2
          %v7292 = vadd.f32 %v7290, %v7291
          %v7293 = vrot.slane %v7292, 1
          %v7294 = vadd.f32 %v7292, %v7293
          %v7295 = vadd.f32 %v7239, %v7255
          %v7296 = vrot.slane %v7295, 4
          %v7297 = vadd.f32 %v7295, %v7296
          %v7298 = vrot.slane %v7297, 2
          %v7299 = vadd.f32 %v7297, %v7298
          %v7300 = vrot.slane %v7299, 1
          %v7301 = vadd.f32 %v7299, %v7300
          %v7302 = vadd.f32 %v7240, %v7256
          %v7303 = vrot.slane %v7302, 4
          %v7304 = vadd.f32 %v7302, %v7303
          %v7305 = vrot.slane %v7304, 2
          %v7306 = vadd.f32 %v7304, %v7305
          %v7307 = vrot.slane %v7306, 1
          %v7308 = vadd.f32 %v7306, %v7307
          %v7309 = vadd.f32 %v7241, %v7257
          %v7310 = vrot.slane %v7309, 4
          %v7311 = vadd.f32 %v7309, %v7310
          %v7312 = vrot.slane %v7311, 2
          %v7313 = vadd.f32 %v7311, %v7312
          %v7314 = vrot.slane %v7313, 1
          %v7315 = vadd.f32 %v7313, %v7314
          %v7316 = vadd.f32 %v7242, %v7258
          %v7317 = vrot.slane %v7316, 4
          %v7318 = vadd.f32 %v7316, %v7317
          %v7319 = vrot.slane %v7318, 2
          %v7320 = vadd.f32 %v7318, %v7319
          %v7321 = vrot.slane %v7320, 1
          %v7322 = vadd.f32 %v7320, %v7321
          %v7323 = vadd.f32 %v7243, %v7259
          %v7324 = vrot.slane %v7323, 4
          %v7325 = vadd.f32 %v7323, %v7324
          %v7326 = vrot.slane %v7325, 2
          %v7327 = vadd.f32 %v7325, %v7326
          %v7328 = vrot.slane %v7327, 1
          %v7329 = vadd.f32 %v7327, %v7328
          %v7330 = vadd.f32 %v7244, %v7260
          %v7331 = vrot.slane %v7330, 4
          %v7332 = vadd.f32 %v7330, %v7331
          %v7333 = vrot.slane %v7332, 2
          %v7334 = vadd.f32 %v7332, %v7333
          %v7335 = vrot.slane %v7334, 1
          %v7336 = vadd.f32 %v7334, %v7335
          %v7337 = vadd.f32 %v7245, %v7261
          %v7338 = vrot.slane %v7337, 4
          %v7339 = vadd.f32 %v7337, %v7338
          %v7340 = vrot.slane %v7339, 2
          %v7341 = vadd.f32 %v7339, %v7340
          %v7342 = vrot.slane %v7341, 1
          %v7343 = vadd.f32 %v7341, %v7342
          %v7344 = vadd.f32 %v7246, %v7262
          %v7345 = vrot.slane %v7344, 4
          %v7346 = vadd.f32 %v7344, %v7345
          %v7347 = vrot.slane %v7346, 2
          %v7348 = vadd.f32 %v7346, %v7347
          %v7349 = vrot.slane %v7348, 1
          %v7350 = vadd.f32 %v7348, %v7349
          %v7351 = vadd.f32 %v7247, %v7263
          %v7352 = vrot.slane %v7351, 4
          %v7353 = vadd.f32 %v7351, %v7352
          %v7354 = vrot.slane %v7353, 2
          %v7355 = vadd.f32 %v7353, %v7354
          %v7356 = vrot.slane %v7355, 1
          %v7357 = vadd.f32 %v7355, %v7356
          %v7358 = vadd.f32 %v7248, %v7264
          %v7359 = vrot.slane %v7358, 4
          %v7360 = vadd.f32 %v7358, %v7359
          %v7361 = vrot.slane %v7360, 2
          %v7362 = vadd.f32 %v7360, %v7361
          %v7363 = vrot.slane %v7362, 1
          %v7364 = vadd.f32 %v7362, %v7363
          %v7365 = vadd.f32 %v7249, %v7265
          %v7366 = vrot.slane %v7365, 4
          %v7367 = vadd.f32 %v7365, %v7366
          %v7368 = vrot.slane %v7367, 2
          %v7369 = vadd.f32 %v7367, %v7368
          %v7370 = vrot.slane %v7369, 1
          %v7371 = vadd.f32 %v7369, %v7370
          %v7372 = vadd.f32 %v7250, %v7266
          %v7373 = vrot.slane %v7372, 4
          %v7374 = vadd.f32 %v7372, %v7373
          %v7375 = vrot.slane %v7374, 2
          %v7376 = vadd.f32 %v7374, %v7375
          %v7377 = vrot.slane %v7376, 1
          %v7378 = vadd.f32 %v7376, %v7377
          %v7379 = vsub.f32 0.6666667, %v7273
          %v7380 = vsub.f32 0.6666667, %v7280
          %v7381 = vsub.f32 0.6666667, %v7287
          %v7382 = vsub.f32 0.6666667, %v7294
          %v7383 = vsub.f32 0.6666667, %v7301
          %v7384 = vsub.f32 0.6666667, %v7308
          %v7385 = vsub.f32 0.6666667, %v7315
          %v7386 = vsub.f32 0.6666667, %v7322
          %v7387 = vsub.f32 0.6666667, %v7329
          %v7388 = vsub.f32 0.6666667, %v7336
          %v7389 = vsub.f32 0.6666667, %v7343
          %v7390 = vsub.f32 0.6666667, %v7350
          %v7391 = vsub.f32 0.6666667, %v7357
          %v7392 = vsub.f32 0.6666667, %v7364
          %v7393 = vsub.f32 0.6666667, %v7371
          %v7394 = vsub.f32 0.6666667, %v7378
          %v7395 = vmul.f32 %v7379, %v7379
          %v7396 = vmul.f32 %v7380, %v7380
          %v7397 = vmul.f32 %v7381, %v7381
          %v7398 = vmul.f32 %v7382, %v7382
          %v7399 = vmul.f32 %v7383, %v7383
          %v7400 = vmul.f32 %v7384, %v7384
          %v7401 = vmul.f32 %v7385, %v7385
          %v7402 = vmul.f32 %v7386, %v7386
          %v7403 = vmul.f32 %v7387, %v7387
          %v7404 = vmul.f32 %v7388, %v7388
          %v7405 = vmul.f32 %v7389, %v7389
          %v7406 = vmul.f32 %v7390, %v7390
          %v7407 = vmul.f32 %v7391, %v7391
          %v7408 = vmul.f32 %v7392, %v7392
          %v7409 = vmul.f32 %v7393, %v7393
          %v7410 = vmul.f32 %v7394, %v7394
          %v7411 = vadd.f32 %v6291, %v7395
          %v7412 = vadd.f32 %v6292, %v7396
          %v7413 = vadd.f32 %v6293, %v7397
          %v7414 = vadd.f32 %v6294, %v7398
          %v7415 = vadd.f32 %v6295, %v7399
          %v7416 = vadd.f32 %v6296, %v7400
          %v7417 = vadd.f32 %v6297, %v7401
          %v7418 = vadd.f32 %v6298, %v7402
          %v7419 = vadd.f32 %v6299, %v7403
          %v7420 = vadd.f32 %v6300, %v7404
          %v7421 = vadd.f32 %v6301, %v7405
          %v7422 = vadd.f32 %v6302, %v7406
          %v7423 = vadd.f32 %v6303, %v7407
          %v7424 = vadd.f32 %v6304, %v7408
          %v7425 = vadd.f32 %v6305, %v7409
          %v7426 = vadd.f32 %v6306, %v7410
          %v7427 = vlaneseq
          %v7428 = vshrl.u32 %v7427, 7
          %v7429 = vsub.s32 6, %v7428
          %v7430 = vrot.slane %v657, %v7429
          %v7431 = vlaneseq
          %v7432 = vshrl.u32 %v7431, 7
          %v7433 = vsub.s32 6, %v7432
          %v7434 = vrot.slane %v658, %v7433
          %v7435 = vlaneseq
          %v7436 = vshrl.u32 %v7435, 7
          %v7437 = vsub.s32 6, %v7436
          %v7438 = vrot.slane %v659, %v7437
          %v7439 = vlaneseq
          %v7440 = vshrl.u32 %v7439, 7
          %v7441 = vsub.s32 6, %v7440
          %v7442 = vrot.slane %v660, %v7441
          %v7443 = vlaneseq
          %v7444 = vshrl.u32 %v7443, 7
          %v7445 = vsub.s32 6, %v7444
          %v7446 = vrot.slane %v661, %v7445
          %v7447 = vlaneseq
          %v7448 = vshrl.u32 %v7447, 7
          %v7449 = vsub.s32 6, %v7448
          %v7450 = vrot.slane %v662, %v7449
          %v7451 = vlaneseq
          %v7452 = vshrl.u32 %v7451, 7
          %v7453 = vsub.s32 6, %v7452
          %v7454 = vrot.slane %v663, %v7453
          %v7455 = vlaneseq
          %v7456 = vshrl.u32 %v7455, 7
          %v7457 = vsub.s32 6, %v7456
          %v7458 = vrot.slane %v664, %v7457
          %v7459 = vlaneseq
          %v7460 = vshrl.u32 %v7459, 7
          %v7461 = vsub.s32 6, %v7460
          %v7462 = vrot.slane %v665, %v7461
          %v7463 = vlaneseq
          %v7464 = vshrl.u32 %v7463, 7
          %v7465 = vsub.s32 6, %v7464
          %v7466 = vrot.slane %v666, %v7465
          %v7467 = vlaneseq
          %v7468 = vshrl.u32 %v7467, 7
          %v7469 = vsub.s32 6, %v7468
          %v7470 = vrot.slane %v667, %v7469
          %v7471 = vlaneseq
          %v7472 = vshrl.u32 %v7471, 7
          %v7473 = vsub.s32 6, %v7472
          %v7474 = vrot.slane %v668, %v7473
          %v7475 = vlaneseq
          %v7476 = vshrl.u32 %v7475, 7
          %v7477 = vsub.s32 6, %v7476
          %v7478 = vrot.slane %v669, %v7477
          %v7479 = vlaneseq
          %v7480 = vshrl.u32 %v7479, 7
          %v7481 = vsub.s32 6, %v7480
          %v7482 = vrot.slane %v670, %v7481
          %v7483 = vlaneseq
          %v7484 = vshrl.u32 %v7483, 7
          %v7485 = vsub.s32 6, %v7484
          %v7486 = vrot.slane %v671, %v7485
          %v7487 = vlaneseq
          %v7488 = vshrl.u32 %v7487, 7
          %v7489 = vsub.s32 6, %v7488
          %v7490 = vrot.slane %v672, %v7489
          %vm7491 = vcmp.eq.s32.totalorder %v698, %v7430
          %vm7492 = vcmp.eq.s32.totalorder %v698, %v7434
          %vm7493 = vcmp.eq.s32.totalorder %v698, %v7438
          %vm7494 = vcmp.eq.s32.totalorder %v698, %v7442
          %vm7495 = vcmp.eq.s32.totalorder %v698, %v7446
          %vm7496 = vcmp.eq.s32.totalorder %v698, %v7450
          %vm7497 = vcmp.eq.s32.totalorder %v698, %v7454
          %vm7498 = vcmp.eq.s32.totalorder %v698, %v7458
          %vm7499 = vcmp.eq.s32.totalorder %v698, %v7462
          %vm7500 = vcmp.eq.s32.totalorder %v698, %v7466
          %vm7501 = vcmp.eq.s32.totalorder %v698, %v7470
          %vm7502 = vcmp.eq.s32.totalorder %v698, %v7474
          %vm7503 = vcmp.eq.s32.totalorder %v698, %v7478
          %vm7504 = vcmp.eq.s32.totalorder %v698, %v7482
          %vm7505 = vcmp.eq.s32.totalorder %v698, %v7486
          %vm7506 = vcmp.eq.s32.totalorder %v698, %v7490
          %vm7507 = vcmp.eq.s32.totalorder %v699, %v7430
          %vm7508 = vcmp.eq.s32.totalorder %v699, %v7434
          %vm7509 = vcmp.eq.s32.totalorder %v699, %v7438
          %vm7510 = vcmp.eq.s32.totalorder %v699, %v7442
          %vm7511 = vcmp.eq.s32.totalorder %v699, %v7446
          %vm7512 = vcmp.eq.s32.totalorder %v699, %v7450
          %vm7513 = vcmp.eq.s32.totalorder %v699, %v7454
          %vm7514 = vcmp.eq.s32.totalorder %v699, %v7458
          %vm7515 = vcmp.eq.s32.totalorder %v699, %v7462
          %vm7516 = vcmp.eq.s32.totalorder %v699, %v7466
          %vm7517 = vcmp.eq.s32.totalorder %v699, %v7470
          %vm7518 = vcmp.eq.s32.totalorder %v699, %v7474
          %vm7519 = vcmp.eq.s32.totalorder %v699, %v7478
          %vm7520 = vcmp.eq.s32.totalorder %v699, %v7482
          %vm7521 = vcmp.eq.s32.totalorder %v699, %v7486
          %vm7522 = vcmp.eq.s32.totalorder %v699, %v7490
          %v7523 = vsel %vm7491, 1.0, 0.0
          %v7524 = vsel %vm7492, 1.0, 0.0
          %v7525 = vsel %vm7493, 1.0, 0.0
          %v7526 = vsel %vm7494, 1.0, 0.0
          %v7527 = vsel %vm7495, 1.0, 0.0
          %v7528 = vsel %vm7496, 1.0, 0.0
          %v7529 = vsel %vm7497, 1.0, 0.0
          %v7530 = vsel %vm7498, 1.0, 0.0
          %v7531 = vsel %vm7499, 1.0, 0.0
          %v7532 = vsel %vm7500, 1.0, 0.0
          %v7533 = vsel %vm7501, 1.0, 0.0
          %v7534 = vsel %vm7502, 1.0, 0.0
          %v7535 = vsel %vm7503, 1.0, 0.0
          %v7536 = vsel %vm7504, 1.0, 0.0
          %v7537 = vsel %vm7505, 1.0, 0.0
          %v7538 = vsel %vm7506, 1.0, 0.0
          %v7539 = vsel %vm7507, 1.0, 0.0
          %v7540 = vsel %vm7508, 1.0, 0.0
          %v7541 = vsel %vm7509, 1.0, 0.0
          %v7542 = vsel %vm7510, 1.0, 0.0
          %v7543 = vsel %vm7511, 1.0, 0.0
          %v7544 = vsel %vm7512, 1.0, 0.0
          %v7545 = vsel %vm7513, 1.0, 0.0
          %v7546 = vsel %vm7514, 1.0, 0.0
          %v7547 = vsel %vm7515, 1.0, 0.0
          %v7548 = vsel %vm7516, 1.0, 0.0
          %v7549 = vsel %vm7517, 1.0, 0.0
          %v7550 = vsel %vm7518, 1.0, 0.0
          %v7551 = vsel %vm7519, 1.0, 0.0
          %v7552 = vsel %vm7520, 1.0, 0.0
          %v7553 = vsel %vm7521, 1.0, 0.0
          %v7554 = vsel %vm7522, 1.0, 0.0
          %v7555 = vpack.c.bf16 %v7539, %v7523
          %v7556 = vpack.c.bf16 %v7540, %v7524
          %v7557 = vpack.c.bf16 %v7541, %v7525
          %v7558 = vpack.c.bf16 %v7542, %v7526
          %v7559 = vpack.c.bf16 %v7543, %v7527
          %v7560 = vpack.c.bf16 %v7544, %v7528
          %v7561 = vpack.c.bf16 %v7545, %v7529
          %v7562 = vpack.c.bf16 %v7546, %v7530
          %v7563 = vpack.c.bf16 %v7547, %v7531
          %v7564 = vpack.c.bf16 %v7548, %v7532
          %v7565 = vpack.c.bf16 %v7549, %v7533
          %v7566 = vpack.c.bf16 %v7550, %v7534
          %v7567 = vpack.c.bf16 %v7551, %v7535
          %v7568 = vpack.c.bf16 %v7552, %v7536
          %v7569 = vpack.c.bf16 %v7553, %v7537
          %v7570 = vpack.c.bf16 %v7554, %v7538
          %7571 = vmatprep.subr.bf16.mxu0 %v7556
          %7572 = vmatpush1.bf16.msra.mxu0 %v7555
          %7573 = vmatprep.subr.bf16.mxu0 0
          %7574 = vmatpush1.bf16.msra.mxu0 0
          %7575 = vmatprep.subr.bf16.mxu0 0
          %7576 = vmatpush1.bf16.msra.mxu0 0
          %7577 = vmatprep.subr.bf16.mxu0 0
          %7578 = vmatpush1.bf16.msra.mxu0 0
          %7579 = vmatprep.subr.bf16.mxu0 0
          %7580 = vmatpush1.bf16.msra.mxu0 0
          %7581 = vmatprep.subr.bf16.mxu0 0
          %7582 = vmatpush1.bf16.msra.mxu0 0
          %7583 = vmatprep.subr.bf16.mxu0 0
          %7584 = vmatpush1.bf16.msra.mxu0 0
          %7585 = vmatprep.subr.bf16.mxu0 0
          %7586 = vmatpush1.bf16.msra.mxu0 0
          %7587 = vmatprep.subr.bf16.mxu0 0
          %7588 = vmatpush1.bf16.msra.mxu0 0
          %7589 = vmatprep.subr.bf16.mxu0 0
          %7590 = vmatpush1.bf16.msra.mxu0 0
          %7591 = vmatprep.subr.bf16.mxu0 0
          %7592 = vmatpush1.bf16.msra.mxu0 0
          %7593 = vmatprep.subr.bf16.mxu0 0
          %7594 = vmatpush1.bf16.msra.mxu0 0
          %7595 = vmatprep.subr.bf16.mxu0 0
          %7596 = vmatpush1.bf16.msra.mxu0 0
          %7597 = vmatprep.subr.bf16.mxu0 0
          %7598 = vmatpush1.bf16.msra.mxu0 0
          %7599 = vmatprep.subr.bf16.mxu0 0
          %7600 = vmatpush1.bf16.msra.mxu0 0
          %7601 = vmatprep.subr.bf16.mxu0 0
          %7602 = vmatpush1.bf16.msra.mxu0 0
          %7603 = vmatprep.mubr.bf16.mxu0 0
          %7604 = vmatmul.mubr.bf16.gmra.mrb[0].mxu0 %v846
          %v7605 = vpop.f32.mrb[0].mxu0
          %v7606 = vadd.f32 0.0, %v7605
          %v7607 = vpop.f32.mrb[0].mxu0
          %v7608 = vadd.f32 0.0, %v7607
          %v7609 = vpop.f32.mrb[0].mxu0
          %v7610 = vadd.f32 0.0, %v7609
          %v7611 = vpop.f32.mrb[0].mxu0
          %v7612 = vadd.f32 0.0, %v7611
          %7613 = vdwg.mxu0
          %7614 = vmatprep.subr.bf16.mxu0 %v7558
          %7615 = vmatpush1.bf16.msra.mxu0 %v7557
          %7616 = vmatprep.subr.bf16.mxu0 0
          %7617 = vmatpush1.bf16.msra.mxu0 0
          %7618 = vmatprep.subr.bf16.mxu0 0
          %7619 = vmatpush1.bf16.msra.mxu0 0
          %7620 = vmatprep.subr.bf16.mxu0 0
          %7621 = vmatpush1.bf16.msra.mxu0 0
          %7622 = vmatprep.subr.bf16.mxu0 0
          %7623 = vmatpush1.bf16.msra.mxu0 0
          %7624 = vmatprep.subr.bf16.mxu0 0
          %7625 = vmatpush1.bf16.msra.mxu0 0
          %7626 = vmatprep.subr.bf16.mxu0 0
          %7627 = vmatpush1.bf16.msra.mxu0 0
          %7628 = vmatprep.subr.bf16.mxu0 0
          %7629 = vmatpush1.bf16.msra.mxu0 0
          %7630 = vmatprep.subr.bf16.mxu0 0
          %7631 = vmatpush1.bf16.msra.mxu0 0
          %7632 = vmatprep.subr.bf16.mxu0 0
          %7633 = vmatpush1.bf16.msra.mxu0 0
          %7634 = vmatprep.subr.bf16.mxu0 0
          %7635 = vmatpush1.bf16.msra.mxu0 0
          %7636 = vmatprep.subr.bf16.mxu0 0
          %7637 = vmatpush1.bf16.msra.mxu0 0
          %7638 = vmatprep.subr.bf16.mxu0 0
          %7639 = vmatpush1.bf16.msra.mxu0 0
          %7640 = vmatprep.subr.bf16.mxu0 0
          %7641 = vmatpush1.bf16.msra.mxu0 0
          %7642 = vmatprep.subr.bf16.mxu0 0
          %7643 = vmatpush1.bf16.msra.mxu0 0
          %7644 = vmatprep.subr.bf16.mxu0 0
          %7645 = vmatpush1.bf16.msra.mxu0 0
          %7646 = vmatprep.mubr.bf16.mxu0 0
          %7647 = vmatmul.mubr.bf16.gmra.mrb[0].mxu0 %v846
          %v7648 = vpop.f32.mrb[0].mxu0
          %v7649 = vadd.f32 0.0, %v7648
          %v7650 = vpop.f32.mrb[0].mxu0
          %v7651 = vadd.f32 0.0, %v7650
          %v7652 = vpop.f32.mrb[0].mxu0
          %v7653 = vadd.f32 0.0, %v7652
          %v7654 = vpop.f32.mrb[0].mxu0
          %v7655 = vadd.f32 0.0, %v7654
          %7656 = vdwg.mxu0
          %7657 = vmatprep.subr.bf16.mxu0 %v7560
          %7658 = vmatpush1.bf16.msra.mxu0 %v7559
          %7659 = vmatprep.subr.bf16.mxu0 0
          %7660 = vmatpush1.bf16.msra.mxu0 0
          %7661 = vmatprep.subr.bf16.mxu0 0
          %7662 = vmatpush1.bf16.msra.mxu0 0
          %7663 = vmatprep.subr.bf16.mxu0 0
          %7664 = vmatpush1.bf16.msra.mxu0 0
          %7665 = vmatprep.subr.bf16.mxu0 0
          %7666 = vmatpush1.bf16.msra.mxu0 0
          %7667 = vmatprep.subr.bf16.mxu0 0
          %7668 = vmatpush1.bf16.msra.mxu0 0
          %7669 = vmatprep.subr.bf16.mxu0 0
          %7670 = vmatpush1.bf16.msra.mxu0 0
          %7671 = vmatprep.subr.bf16.mxu0 0
          %7672 = vmatpush1.bf16.msra.mxu0 0
          %7673 = vmatprep.subr.bf16.mxu0 0
          %7674 = vmatpush1.bf16.msra.mxu0 0
          %7675 = vmatprep.subr.bf16.mxu0 0
          %7676 = vmatpush1.bf16.msra.mxu0 0
          %7677 = vmatprep.subr.bf16.mxu0 0
          %7678 = vmatpush1.bf16.msra.mxu0 0
          %7679 = vmatprep.subr.bf16.mxu0 0
          %7680 = vmatpush1.bf16.msra.mxu0 0
          %7681 = vmatprep.subr.bf16.mxu0 0
          %7682 = vmatpush1.bf16.msra.mxu0 0
          %7683 = vmatprep.subr.bf16.mxu0 0
          %7684 = vmatpush1.bf16.msra.mxu0 0
          %7685 = vmatprep.subr.bf16.mxu0 0
          %7686 = vmatpush1.bf16.msra.mxu0 0
          %7687 = vmatprep.subr.bf16.mxu0 0
          %7688 = vmatpush1.bf16.msra.mxu0 0
          %7689 = vmatprep.mubr.bf16.mxu0 0
          %7690 = vmatmul.mubr.bf16.gmra.mrb[0].mxu0 %v846
          %v7691 = vpop.f32.mrb[0].mxu0
          %v7692 = vadd.f32 0.0, %v7691
          %v7693 = vpop.f32.mrb[0].mxu0
          %v7694 = vadd.f32 0.0, %v7693
          %v7695 = vpop.f32.mrb[0].mxu0
          %v7696 = vadd.f32 0.0, %v7695
          %v7697 = vpop.f32.mrb[0].mxu0
          %v7698 = vadd.f32 0.0, %v7697
          %7699 = vdwg.mxu0
          %7700 = vmatprep.subr.bf16.mxu0 %v7562
          %7701 = vmatpush1.bf16.msra.mxu0 %v7561
          %7702 = vmatprep.subr.bf16.mxu0 0
          %7703 = vmatpush1.bf16.msra.mxu0 0
          %7704 = vmatprep.subr.bf16.mxu0 0
          %7705 = vmatpush1.bf16.msra.mxu0 0
          %7706 = vmatprep.subr.bf16.mxu0 0
          %7707 = vmatpush1.bf16.msra.mxu0 0
          %7708 = vmatprep.subr.bf16.mxu0 0
          %7709 = vmatpush1.bf16.msra.mxu0 0
          %7710 = vmatprep.subr.bf16.mxu0 0
          %7711 = vmatpush1.bf16.msra.mxu0 0
          %7712 = vmatprep.subr.bf16.mxu0 0
          %7713 = vmatpush1.bf16.msra.mxu0 0
          %7714 = vmatprep.subr.bf16.mxu0 0
          %7715 = vmatpush1.bf16.msra.mxu0 0
          %7716 = vmatprep.subr.bf16.mxu0 0
          %7717 = vmatpush1.bf16.msra.mxu0 0
          %7718 = vmatprep.subr.bf16.mxu0 0
          %7719 = vmatpush1.bf16.msra.mxu0 0
          %7720 = vmatprep.subr.bf16.mxu0 0
          %7721 = vmatpush1.bf16.msra.mxu0 0
          %7722 = vmatprep.subr.bf16.mxu0 0
          %7723 = vmatpush1.bf16.msra.mxu0 0
          %7724 = vmatprep.subr.bf16.mxu0 0
          %7725 = vmatpush1.bf16.msra.mxu0 0
          %7726 = vmatprep.subr.bf16.mxu0 0
          %7727 = vmatpush1.bf16.msra.mxu0 0
          %7728 = vmatprep.subr.bf16.mxu0 0
          %7729 = vmatpush1.bf16.msra.mxu0 0
          %7730 = vmatprep.subr.bf16.mxu0 0
          %7731 = vmatpush1.bf16.msra.mxu0 0
          %7732 = vmatprep.mubr.bf16.mxu0 0
          %7733 = vmatmul.mubr.bf16.gmra.mrb[0].mxu0 %v846
          %v7734 = vpop.f32.mrb[0].mxu0
          %v7735 = vadd.f32 0.0, %v7734
          %v7736 = vpop.f32.mrb[0].mxu0
          %v7737 = vadd.f32 0.0, %v7736
          %v7738 = vpop.f32.mrb[0].mxu0
          %v7739 = vadd.f32 0.0, %v7738
          %v7740 = vpop.f32.mrb[0].mxu0
          %v7741 = vadd.f32 0.0, %v7740
          %7742 = vdwg.mxu0
          %7743 = vmatprep.subr.bf16.mxu0 %v7564
          %7744 = vmatpush1.bf16.msra.mxu0 %v7563
          %7745 = vmatprep.subr.bf16.mxu0 0
          %7746 = vmatpush1.bf16.msra.mxu0 0
          %7747 = vmatprep.subr.bf16.mxu0 0
          %7748 = vmatpush1.bf16.msra.mxu0 0
          %7749 = vmatprep.subr.bf16.mxu0 0
          %7750 = vmatpush1.bf16.msra.mxu0 0
          %7751 = vmatprep.subr.bf16.mxu0 0
          %7752 = vmatpush1.bf16.msra.mxu0 0
          %7753 = vmatprep.subr.bf16.mxu0 0
          %7754 = vmatpush1.bf16.msra.mxu0 0
          %7755 = vmatprep.subr.bf16.mxu0 0
          %7756 = vmatpush1.bf16.msra.mxu0 0
          %7757 = vmatprep.subr.bf16.mxu0 0
          %7758 = vmatpush1.bf16.msra.mxu0 0
          %7759 = vmatprep.subr.bf16.mxu0 0
          %7760 = vmatpush1.bf16.msra.mxu0 0
          %7761 = vmatprep.subr.bf16.mxu0 0
          %7762 = vmatpush1.bf16.msra.mxu0 0
          %7763 = vmatprep.subr.bf16.mxu0 0
          %7764 = vmatpush1.bf16.msra.mxu0 0
          %7765 = vmatprep.subr.bf16.mxu0 0
          %7766 = vmatpush1.bf16.msra.mxu0 0
          %7767 = vmatprep.subr.bf16.mxu0 0
          %7768 = vmatpush1.bf16.msra.mxu0 0
          %7769 = vmatprep.subr.bf16.mxu0 0
          %7770 = vmatpush1.bf16.msra.mxu0 0
          %7771 = vmatprep.subr.bf16.mxu0 0
          %7772 = vmatpush1.bf16.msra.mxu0 0
          %7773 = vmatprep.subr.bf16.mxu0 0
          %7774 = vmatpush1.bf16.msra.mxu0 0
          %7775 = vmatprep.mubr.bf16.mxu0 0
          %7776 = vmatmul.mubr.bf16.gmra.mrb[0].mxu0 %v846
          %v7777 = vpop.f32.mrb[0].mxu0
          %v7778 = vadd.f32 0.0, %v7777
          %v7779 = vpop.f32.mrb[0].mxu0
          %v7780 = vadd.f32 0.0, %v7779
          %v7781 = vpop.f32.mrb[0].mxu0
          %v7782 = vadd.f32 0.0, %v7781
          %v7783 = vpop.f32.mrb[0].mxu0
          %v7784 = vadd.f32 0.0, %v7783
          %7785 = vdwg.mxu0
          %7786 = vmatprep.subr.bf16.mxu0 %v7566
          %7787 = vmatpush1.bf16.msra.mxu0 %v7565
          %7788 = vmatprep.subr.bf16.mxu0 0
          %7789 = vmatpush1.bf16.msra.mxu0 0
          %7790 = vmatprep.subr.bf16.mxu0 0
          %7791 = vmatpush1.bf16.msra.mxu0 0
          %7792 = vmatprep.subr.bf16.mxu0 0
          %7793 = vmatpush1.bf16.msra.mxu0 0
          %7794 = vmatprep.subr.bf16.mxu0 0
          %7795 = vmatpush1.bf16.msra.mxu0 0
          %7796 = vmatprep.subr.bf16.mxu0 0
          %7797 = vmatpush1.bf16.msra.mxu0 0
          %7798 = vmatprep.subr.bf16.mxu0 0
          %7799 = vmatpush1.bf16.msra.mxu0 0
          %7800 = vmatprep.subr.bf16.mxu0 0
          %7801 = vmatpush1.bf16.msra.mxu0 0
          %7802 = vmatprep.subr.bf16.mxu0 0
          %7803 = vmatpush1.bf16.msra.mxu0 0
          %7804 = vmatprep.subr.bf16.mxu0 0
          %7805 = vmatpush1.bf16.msra.mxu0 0
          %7806 = vmatprep.subr.bf16.mxu0 0
          %7807 = vmatpush1.bf16.msra.mxu0 0
          %7808 = vmatprep.subr.bf16.mxu0 0
          %7809 = vmatpush1.bf16.msra.mxu0 0
          %7810 = vmatprep.subr.bf16.mxu0 0
          %7811 = vmatpush1.bf16.msra.mxu0 0
          %7812 = vmatprep.subr.bf16.mxu0 0
          %7813 = vmatpush1.bf16.msra.mxu0 0
          %7814 = vmatprep.subr.bf16.mxu0 0
          %7815 = vmatpush1.bf16.msra.mxu0 0
          %7816 = vmatprep.subr.bf16.mxu0 0
          %7817 = vmatpush1.bf16.msra.mxu0 0
          %7818 = vmatprep.mubr.bf16.mxu0 0
          %7819 = vmatmul.mubr.bf16.gmra.mrb[0].mxu0 %v846
          %v7820 = vpop.f32.mrb[0].mxu0
          %v7821 = vadd.f32 0.0, %v7820
          %v7822 = vpop.f32.mrb[0].mxu0
          %v7823 = vadd.f32 0.0, %v7822
          %v7824 = vpop.f32.mrb[0].mxu0
          %v7825 = vadd.f32 0.0, %v7824
          %v7826 = vpop.f32.mrb[0].mxu0
          %v7827 = vadd.f32 0.0, %v7826
          %7828 = vdwg.mxu0
          %7829 = vmatprep.subr.bf16.mxu0 %v7568
          %7830 = vmatpush1.bf16.msra.mxu0 %v7567
          %7831 = vmatprep.subr.bf16.mxu0 0
          %7832 = vmatpush1.bf16.msra.mxu0 0
          %7833 = vmatprep.subr.bf16.mxu0 0
          %7834 = vmatpush1.bf16.msra.mxu0 0
          %7835 = vmatprep.subr.bf16.mxu0 0
          %7836 = vmatpush1.bf16.msra.mxu0 0
          %7837 = vmatprep.subr.bf16.mxu0 0
          %7838 = vmatpush1.bf16.msra.mxu0 0
          %7839 = vmatprep.subr.bf16.mxu0 0
          %7840 = vmatpush1.bf16.msra.mxu0 0
          %7841 = vmatprep.subr.bf16.mxu0 0
          %7842 = vmatpush1.bf16.msra.mxu0 0
          %7843 = vmatprep.subr.bf16.mxu0 0
          %7844 = vmatpush1.bf16.msra.mxu0 0
          %7845 = vmatprep.subr.bf16.mxu0 0
          %7846 = vmatpush1.bf16.msra.mxu0 0
          %7847 = vmatprep.subr.bf16.mxu0 0
          %7848 = vmatpush1.bf16.msra.mxu0 0
          %7849 = vmatprep.subr.bf16.mxu0 0
          %7850 = vmatpush1.bf16.msra.mxu0 0
          %7851 = vmatprep.subr.bf16.mxu0 0
          %7852 = vmatpush1.bf16.msra.mxu0 0
          %7853 = vmatprep.subr.bf16.mxu0 0
          %7854 = vmatpush1.bf16.msra.mxu0 0
          %7855 = vmatprep.subr.bf16.mxu0 0
          %7856 = vmatpush1.bf16.msra.mxu0 0
          %7857 = vmatprep.subr.bf16.mxu0 0
          %7858 = vmatpush1.bf16.msra.mxu0 0
          %7859 = vmatprep.subr.bf16.mxu0 0
          %7860 = vmatpush1.bf16.msra.mxu0 0
          %7861 = vmatprep.mubr.bf16.mxu0 0
          %7862 = vmatmul.mubr.bf16.gmra.mrb[0].mxu0 %v846
          %v7863 = vpop.f32.mrb[0].mxu0
          %v7864 = vadd.f32 0.0, %v7863
          %v7865 = vpop.f32.mrb[0].mxu0
          %v7866 = vadd.f32 0.0, %v7865
          %v7867 = vpop.f32.mrb[0].mxu0
          %v7868 = vadd.f32 0.0, %v7867
          %v7869 = vpop.f32.mrb[0].mxu0
          %v7870 = vadd.f32 0.0, %v7869
          %7871 = vdwg.mxu0
          %7872 = vmatprep.subr.bf16.mxu0 %v7570
          %7873 = vmatpush1.bf16.msra.mxu0 %v7569
          %7874 = vmatprep.subr.bf16.mxu0 0
          %7875 = vmatpush1.bf16.msra.mxu0 0
          %7876 = vmatprep.subr.bf16.mxu0 0
          %7877 = vmatpush1.bf16.msra.mxu0 0
          %7878 = vmatprep.subr.bf16.mxu0 0
          %7879 = vmatpush1.bf16.msra.mxu0 0
          %7880 = vmatprep.subr.bf16.mxu0 0
          %7881 = vmatpush1.bf16.msra.mxu0 0
          %7882 = vmatprep.subr.bf16.mxu0 0
          %7883 = vmatpush1.bf16.msra.mxu0 0
          %7884 = vmatprep.subr.bf16.mxu0 0
          %7885 = vmatpush1.bf16.msra.mxu0 0
          %7886 = vmatprep.subr.bf16.mxu0 0
          %7887 = vmatpush1.bf16.msra.mxu0 0
          %7888 = vmatprep.subr.bf16.mxu0 0
          %7889 = vmatpush1.bf16.msra.mxu0 0
          %7890 = vmatprep.subr.bf16.mxu0 0
          %7891 = vmatpush1.bf16.msra.mxu0 0
          %7892 = vmatprep.subr.bf16.mxu0 0
          %7893 = vmatpush1.bf16.msra.mxu0 0
          %7894 = vmatprep.subr.bf16.mxu0 0
          %7895 = vmatpush1.bf16.msra.mxu0 0
          %7896 = vmatprep.subr.bf16.mxu0 0
          %7897 = vmatpush1.bf16.msra.mxu0 0
          %7898 = vmatprep.subr.bf16.mxu0 0
          %7899 = vmatpush1.bf16.msra.mxu0 0
          %7900 = vmatprep.subr.bf16.mxu0 0
          %7901 = vmatpush1.bf16.msra.mxu0 0
          %7902 = vmatprep.subr.bf16.mxu0 0
          %7903 = vmatpush1.bf16.msra.mxu0 0
          %7904 = vmatprep.mubr.bf16.mxu0 0
          %7905 = vmatmul.mubr.bf16.gmra.mrb[0].mxu0 %v846
          %v7906 = vpop.f32.mrb[0].mxu0
          %v7907 = vadd.f32 0.0, %v7906
          %v7908 = vpop.f32.mrb[0].mxu0
          %v7909 = vadd.f32 0.0, %v7908
          %v7910 = vpop.f32.mrb[0].mxu0
          %v7911 = vadd.f32 0.0, %v7910
          %v7912 = vpop.f32.mrb[0].mxu0
          %v7913 = vadd.f32 0.0, %v7912
          %7914 = vdwg.mxu0
          %7915 = vmatprep.subr.bf16.mxu0 %v7556
          %7916 = vmatpush1.bf16.msra.mxu0 %v7555
          %7917 = vmatprep.subr.bf16.mxu0 0
          %7918 = vmatpush1.bf16.msra.mxu0 0
          %7919 = vmatprep.subr.bf16.mxu0 0
          %7920 = vmatpush1.bf16.msra.mxu0 0
          %7921 = vmatprep.subr.bf16.mxu0 0
          %7922 = vmatpush1.bf16.msra.mxu0 0
          %7923 = vmatprep.subr.bf16.mxu0 0
          %7924 = vmatpush1.bf16.msra.mxu0 0
          %7925 = vmatprep.subr.bf16.mxu0 0
          %7926 = vmatpush1.bf16.msra.mxu0 0
          %7927 = vmatprep.subr.bf16.mxu0 0
          %7928 = vmatpush1.bf16.msra.mxu0 0
          %7929 = vmatprep.subr.bf16.mxu0 0
          %7930 = vmatpush1.bf16.msra.mxu0 0
          %7931 = vmatprep.subr.bf16.mxu0 0
          %7932 = vmatpush1.bf16.msra.mxu0 0
          %7933 = vmatprep.subr.bf16.mxu0 0
          %7934 = vmatpush1.bf16.msra.mxu0 0
          %7935 = vmatprep.subr.bf16.mxu0 0
          %7936 = vmatpush1.bf16.msra.mxu0 0
          %7937 = vmatprep.subr.bf16.mxu0 0
          %7938 = vmatpush1.bf16.msra.mxu0 0
          %7939 = vmatprep.subr.bf16.mxu0 0
          %7940 = vmatpush1.bf16.msra.mxu0 0
          %7941 = vmatprep.subr.bf16.mxu0 0
          %7942 = vmatpush1.bf16.msra.mxu0 0
          %7943 = vmatprep.subr.bf16.mxu0 0
          %7944 = vmatpush1.bf16.msra.mxu0 0
          %7945 = vmatprep.subr.bf16.mxu0 0
          %7946 = vmatpush1.bf16.msra.mxu0 0
          %7947 = vmatprep.mubr.bf16.mxu0 0
          %7948 = vmatmul.mubr.bf16.gmra.mrb[0].mxu0 %v1193
          %v7949 = vpop.f32.mrb[0].mxu0
          %v7950 = vadd.f32 %v7606, %v7949
          %v7951 = vpop.f32.mrb[0].mxu0
          %v7952 = vadd.f32 %v7608, %v7951
          %v7953 = vpop.f32.mrb[0].mxu0
          %v7954 = vadd.f32 %v7610, %v7953
          %v7955 = vpop.f32.mrb[0].mxu0
          %v7956 = vadd.f32 %v7612, %v7955
          %7957 = vdwg.mxu0
          %7958 = vmatprep.subr.bf16.mxu0 %v7558
          %7959 = vmatpush1.bf16.msra.mxu0 %v7557
          %7960 = vmatprep.subr.bf16.mxu0 0
          %7961 = vmatpush1.bf16.msra.mxu0 0
          %7962 = vmatprep.subr.bf16.mxu0 0
          %7963 = vmatpush1.bf16.msra.mxu0 0
          %7964 = vmatprep.subr.bf16.mxu0 0
          %7965 = vmatpush1.bf16.msra.mxu0 0
          %7966 = vmatprep.subr.bf16.mxu0 0
          %7967 = vmatpush1.bf16.msra.mxu0 0
          %7968 = vmatprep.subr.bf16.mxu0 0
          %7969 = vmatpush1.bf16.msra.mxu0 0
          %7970 = vmatprep.subr.bf16.mxu0 0
          %7971 = vmatpush1.bf16.msra.mxu0 0
          %7972 = vmatprep.subr.bf16.mxu0 0
          %7973 = vmatpush1.bf16.msra.mxu0 0
          %7974 = vmatprep.subr.bf16.mxu0 0
          %7975 = vmatpush1.bf16.msra.mxu0 0
          %7976 = vmatprep.subr.bf16.mxu0 0
          %7977 = vmatpush1.bf16.msra.mxu0 0
          %7978 = vmatprep.subr.bf16.mxu0 0
          %7979 = vmatpush1.bf16.msra.mxu0 0
          %7980 = vmatprep.subr.bf16.mxu0 0
          %7981 = vmatpush1.bf16.msra.mxu0 0
          %7982 = vmatprep.subr.bf16.mxu0 0
          %7983 = vmatpush1.bf16.msra.mxu0 0
          %7984 = vmatprep.subr.bf16.mxu0 0
          %7985 = vmatpush1.bf16.msra.mxu0 0
          %7986 = vmatprep.subr.bf16.mxu0 0
          %7987 = vmatpush1.bf16.msra.mxu0 0
          %7988 = vmatprep.subr.bf16.mxu0 0
          %7989 = vmatpush1.bf16.msra.mxu0 0
          %7990 = vmatprep.mubr.bf16.mxu0 0
          %7991 = vmatmul.mubr.bf16.gmra.mrb[0].mxu0 %v1193
          %v7992 = vpop.f32.mrb[0].mxu0
          %v7993 = vadd.f32 %v7649, %v7992
          %v7994 = vpop.f32.mrb[0].mxu0
          %v7995 = vadd.f32 %v7651, %v7994
          %v7996 = vpop.f32.mrb[0].mxu0
          %v7997 = vadd.f32 %v7653, %v7996
          %v7998 = vpop.f32.mrb[0].mxu0
          %v7999 = vadd.f32 %v7655, %v7998
          %8000 = vdwg.mxu0
          %8001 = vmatprep.subr.bf16.mxu0 %v7560
          %8002 = vmatpush1.bf16.msra.mxu0 %v7559
          %8003 = vmatprep.subr.bf16.mxu0 0
          %8004 = vmatpush1.bf16.msra.mxu0 0
          %8005 = vmatprep.subr.bf16.mxu0 0
          %8006 = vmatpush1.bf16.msra.mxu0 0
          %8007 = vmatprep.subr.bf16.mxu0 0
          %8008 = vmatpush1.bf16.msra.mxu0 0
          %8009 = vmatprep.subr.bf16.mxu0 0
          %8010 = vmatpush1.bf16.msra.mxu0 0
          %8011 = vmatprep.subr.bf16.mxu0 0
          %8012 = vmatpush1.bf16.msra.mxu0 0
          %8013 = vmatprep.subr.bf16.mxu0 0
          %8014 = vmatpush1.bf16.msra.mxu0 0
          %8015 = vmatprep.subr.bf16.mxu0 0
          %8016 = vmatpush1.bf16.msra.mxu0 0
          %8017 = vmatprep.subr.bf16.mxu0 0
          %8018 = vmatpush1.bf16.msra.mxu0 0
          %8019 = vmatprep.subr.bf16.mxu0 0
          %8020 = vmatpush1.bf16.msra.mxu0 0
          %8021 = vmatprep.subr.bf16.mxu0 0
          %8022 = vmatpush1.bf16.msra.mxu0 0
          %8023 = vmatprep.subr.bf16.mxu0 0
          %8024 = vmatpush1.bf16.msra.mxu0 0
          %8025 = vmatprep.subr.bf16.mxu0 0
          %8026 = vmatpush1.bf16.msra.mxu0 0
          %8027 = vmatprep.subr.bf16.mxu0 0
          %8028 = vmatpush1.bf16.msra.mxu0 0
          %8029 = vmatprep.subr.bf16.mxu0 0
          %8030 = vmatpush1.bf16.msra.mxu0 0
          %8031 = vmatprep.subr.bf16.mxu0 0
          %8032 = vmatpush1.bf16.msra.mxu0 0
          %8033 = vmatprep.mubr.bf16.mxu0 0
          %8034 = vmatmul.mubr.bf16.gmra.mrb[0].mxu0 %v1193
          %v8035 = vpop.f32.mrb[0].mxu0
          %v8036 = vadd.f32 %v7692, %v8035
          %v8037 = vpop.f32.mrb[0].mxu0
          %v8038 = vadd.f32 %v7694, %v8037
          %v8039 = vpop.f32.mrb[0].mxu0
          %v8040 = vadd.f32 %v7696, %v8039
          %v8041 = vpop.f32.mrb[0].mxu0
          %v8042 = vadd.f32 %v7698, %v8041
          %8043 = vdwg.mxu0
          %8044 = vmatprep.subr.bf16.mxu0 %v7562
          %8045 = vmatpush1.bf16.msra.mxu0 %v7561
          %8046 = vmatprep.subr.bf16.mxu0 0
          %8047 = vmatpush1.bf16.msra.mxu0 0
          %8048 = vmatprep.subr.bf16.mxu0 0
          %8049 = vmatpush1.bf16.msra.mxu0 0
          %8050 = vmatprep.subr.bf16.mxu0 0
          %8051 = vmatpush1.bf16.msra.mxu0 0
          %8052 = vmatprep.subr.bf16.mxu0 0
          %8053 = vmatpush1.bf16.msra.mxu0 0
          %8054 = vmatprep.subr.bf16.mxu0 0
          %8055 = vmatpush1.bf16.msra.mxu0 0
          %8056 = vmatprep.subr.bf16.mxu0 0
          %8057 = vmatpush1.bf16.msra.mxu0 0
          %8058 = vmatprep.subr.bf16.mxu0 0
          %8059 = vmatpush1.bf16.msra.mxu0 0
          %8060 = vmatprep.subr.bf16.mxu0 0
          %8061 = vmatpush1.bf16.msra.mxu0 0
          %8062 = vmatprep.subr.bf16.mxu0 0
          %8063 = vmatpush1.bf16.msra.mxu0 0
          %8064 = vmatprep.subr.bf16.mxu0 0
          %8065 = vmatpush1.bf16.msra.mxu0 0
          %8066 = vmatprep.subr.bf16.mxu0 0
          %8067 = vmatpush1.bf16.msra.mxu0 0
          %8068 = vmatprep.subr.bf16.mxu0 0
          %8069 = vmatpush1.bf16.msra.mxu0 0
          %8070 = vmatprep.subr.bf16.mxu0 0
          %8071 = vmatpush1.bf16.msra.mxu0 0
          %8072 = vmatprep.subr.bf16.mxu0 0
          %8073 = vmatpush1.bf16.msra.mxu0 0
          %8074 = vmatprep.subr.bf16.mxu0 0
          %8075 = vmatpush1.bf16.msra.mxu0 0
          %8076 = vmatprep.mubr.bf16.mxu0 0
          %8077 = vmatmul.mubr.bf16.gmra.mrb[0].mxu0 %v1193
          %v8078 = vpop.f32.mrb[0].mxu0
          %v8079 = vadd.f32 %v7735, %v8078
          %v8080 = vpop.f32.mrb[0].mxu0
          %v8081 = vadd.f32 %v7737, %v8080
          %v8082 = vpop.f32.mrb[0].mxu0
          %v8083 = vadd.f32 %v7739, %v8082
          %v8084 = vpop.f32.mrb[0].mxu0
          %v8085 = vadd.f32 %v7741, %v8084
          %8086 = vdwg.mxu0
          %8087 = vmatprep.subr.bf16.mxu0 %v7564
          %8088 = vmatpush1.bf16.msra.mxu0 %v7563
          %8089 = vmatprep.subr.bf16.mxu0 0
          %8090 = vmatpush1.bf16.msra.mxu0 0
          %8091 = vmatprep.subr.bf16.mxu0 0
          %8092 = vmatpush1.bf16.msra.mxu0 0
          %8093 = vmatprep.subr.bf16.mxu0 0
          %8094 = vmatpush1.bf16.msra.mxu0 0
          %8095 = vmatprep.subr.bf16.mxu0 0
          %8096 = vmatpush1.bf16.msra.mxu0 0
          %8097 = vmatprep.subr.bf16.mxu0 0
          %8098 = vmatpush1.bf16.msra.mxu0 0
          %8099 = vmatprep.subr.bf16.mxu0 0
          %8100 = vmatpush1.bf16.msra.mxu0 0
          %8101 = vmatprep.subr.bf16.mxu0 0
          %8102 = vmatpush1.bf16.msra.mxu0 0
          %8103 = vmatprep.subr.bf16.mxu0 0
          %8104 = vmatpush1.bf16.msra.mxu0 0
          %8105 = vmatprep.subr.bf16.mxu0 0
          %8106 = vmatpush1.bf16.msra.mxu0 0
          %8107 = vmatprep.subr.bf16.mxu0 0
          %8108 = vmatpush1.bf16.msra.mxu0 0
          %8109 = vmatprep.subr.bf16.mxu0 0
          %8110 = vmatpush1.bf16.msra.mxu0 0
          %8111 = vmatprep.subr.bf16.mxu0 0
          %8112 = vmatpush1.bf16.msra.mxu0 0
          %8113 = vmatprep.subr.bf16.mxu0 0
          %8114 = vmatpush1.bf16.msra.mxu0 0
          %8115 = vmatprep.subr.bf16.mxu0 0
          %8116 = vmatpush1.bf16.msra.mxu0 0
          %8117 = vmatprep.subr.bf16.mxu0 0
          %8118 = vmatpush1.bf16.msra.mxu0 0
          %8119 = vmatprep.mubr.bf16.mxu0 0
          %8120 = vmatmul.mubr.bf16.gmra.mrb[0].mxu0 %v1193
          %v8121 = vpop.f32.mrb[0].mxu0
          %v8122 = vadd.f32 %v7778, %v8121
          %v8123 = vpop.f32.mrb[0].mxu0
          %v8124 = vadd.f32 %v7780, %v8123
          %v8125 = vpop.f32.mrb[0].mxu0
          %v8126 = vadd.f32 %v7782, %v8125
          %v8127 = vpop.f32.mrb[0].mxu0
          %v8128 = vadd.f32 %v7784, %v8127
          %8129 = vdwg.mxu0
          %8130 = vmatprep.subr.bf16.mxu0 %v7566
          %8131 = vmatpush1.bf16.msra.mxu0 %v7565
          %8132 = vmatprep.subr.bf16.mxu0 0
          %8133 = vmatpush1.bf16.msra.mxu0 0
          %8134 = vmatprep.subr.bf16.mxu0 0
          %8135 = vmatpush1.bf16.msra.mxu0 0
          %8136 = vmatprep.subr.bf16.mxu0 0
          %8137 = vmatpush1.bf16.msra.mxu0 0
          %8138 = vmatprep.subr.bf16.mxu0 0
          %8139 = vmatpush1.bf16.msra.mxu0 0
          %8140 = vmatprep.subr.bf16.mxu0 0
          %8141 = vmatpush1.bf16.msra.mxu0 0
          %8142 = vmatprep.subr.bf16.mxu0 0
          %8143 = vmatpush1.bf16.msra.mxu0 0
          %8144 = vmatprep.subr.bf16.mxu0 0
          %8145 = vmatpush1.bf16.msra.mxu0 0
          %8146 = vmatprep.subr.bf16.mxu0 0
          %8147 = vmatpush1.bf16.msra.mxu0 0
          %8148 = vmatprep.subr.bf16.mxu0 0
          %8149 = vmatpush1.bf16.msra.mxu0 0
          %8150 = vmatprep.subr.bf16.mxu0 0
          %8151 = vmatpush1.bf16.msra.mxu0 0
          %8152 = vmatprep.subr.bf16.mxu0 0
          %8153 = vmatpush1.bf16.msra.mxu0 0
          %8154 = vmatprep.subr.bf16.mxu0 0
          %8155 = vmatpush1.bf16.msra.mxu0 0
          %8156 = vmatprep.subr.bf16.mxu0 0
          %8157 = vmatpush1.bf16.msra.mxu0 0
          %8158 = vmatprep.subr.bf16.mxu0 0
          %8159 = vmatpush1.bf16.msra.mxu0 0
          %8160 = vmatprep.subr.bf16.mxu0 0
          %8161 = vmatpush1.bf16.msra.mxu0 0
          %8162 = vmatprep.mubr.bf16.mxu0 0
          %8163 = vmatmul.mubr.bf16.gmra.mrb[0].mxu0 %v1193
          %v8164 = vpop.f32.mrb[0].mxu0
          %v8165 = vadd.f32 %v7821, %v8164
          %v8166 = vpop.f32.mrb[0].mxu0
          %v8167 = vadd.f32 %v7823, %v8166
          %v8168 = vpop.f32.mrb[0].mxu0
          %v8169 = vadd.f32 %v7825, %v8168
          %v8170 = vpop.f32.mrb[0].mxu0
          %v8171 = vadd.f32 %v7827, %v8170
          %8172 = vdwg.mxu0
          %8173 = vmatprep.subr.bf16.mxu0 %v7568
          %8174 = vmatpush1.bf16.msra.mxu0 %v7567
          %8175 = vmatprep.subr.bf16.mxu0 0
          %8176 = vmatpush1.bf16.msra.mxu0 0
          %8177 = vmatprep.subr.bf16.mxu0 0
          %8178 = vmatpush1.bf16.msra.mxu0 0
          %8179 = vmatprep.subr.bf16.mxu0 0
          %8180 = vmatpush1.bf16.msra.mxu0 0
          %8181 = vmatprep.subr.bf16.mxu0 0
          %8182 = vmatpush1.bf16.msra.mxu0 0
          %8183 = vmatprep.subr.bf16.mxu0 0
          %8184 = vmatpush1.bf16.msra.mxu0 0
          %8185 = vmatprep.subr.bf16.mxu0 0
          %8186 = vmatpush1.bf16.msra.mxu0 0
          %8187 = vmatprep.subr.bf16.mxu0 0
          %8188 = vmatpush1.bf16.msra.mxu0 0
          %8189 = vmatprep.subr.bf16.mxu0 0
          %8190 = vmatpush1.bf16.msra.mxu0 0
          %8191 = vmatprep.subr.bf16.mxu0 0
          %8192 = vmatpush1.bf16.msra.mxu0 0
          %8193 = vmatprep.subr.bf16.mxu0 0
          %8194 = vmatpush1.bf16.msra.mxu0 0
          %8195 = vmatprep.subr.bf16.mxu0 0
          %8196 = vmatpush1.bf16.msra.mxu0 0
          %8197 = vmatprep.subr.bf16.mxu0 0
          %8198 = vmatpush1.bf16.msra.mxu0 0
          %8199 = vmatprep.subr.bf16.mxu0 0
          %8200 = vmatpush1.bf16.msra.mxu0 0
          %8201 = vmatprep.subr.bf16.mxu0 0
          %8202 = vmatpush1.bf16.msra.mxu0 0
          %8203 = vmatprep.subr.bf16.mxu0 0
          %8204 = vmatpush1.bf16.msra.mxu0 0
          %8205 = vmatprep.mubr.bf16.mxu0 0
          %8206 = vmatmul.mubr.bf16.gmra.mrb[0].mxu0 %v1193
          %v8207 = vpop.f32.mrb[0].mxu0
          %v8208 = vadd.f32 %v7864, %v8207
          %v8209 = vpop.f32.mrb[0].mxu0
          %v8210 = vadd.f32 %v7866, %v8209
          %v8211 = vpop.f32.mrb[0].mxu0
          %v8212 = vadd.f32 %v7868, %v8211
          %v8213 = vpop.f32.mrb[0].mxu0
          %v8214 = vadd.f32 %v7870, %v8213
          %8215 = vdwg.mxu0
          %8216 = vmatprep.subr.bf16.mxu0 %v7570
          %8217 = vmatpush1.bf16.msra.mxu0 %v7569
          %8218 = vmatprep.subr.bf16.mxu0 0
          %8219 = vmatpush1.bf16.msra.mxu0 0
          %8220 = vmatprep.subr.bf16.mxu0 0
          %8221 = vmatpush1.bf16.msra.mxu0 0
          %8222 = vmatprep.subr.bf16.mxu0 0
          %8223 = vmatpush1.bf16.msra.mxu0 0
          %8224 = vmatprep.subr.bf16.mxu0 0
          %8225 = vmatpush1.bf16.msra.mxu0 0
          %8226 = vmatprep.subr.bf16.mxu0 0
          %8227 = vmatpush1.bf16.msra.mxu0 0
          %8228 = vmatprep.subr.bf16.mxu0 0
          %8229 = vmatpush1.bf16.msra.mxu0 0
          %8230 = vmatprep.subr.bf16.mxu0 0
          %8231 = vmatpush1.bf16.msra.mxu0 0
          %8232 = vmatprep.subr.bf16.mxu0 0
          %8233 = vmatpush1.bf16.msra.mxu0 0
          %8234 = vmatprep.subr.bf16.mxu0 0
          %8235 = vmatpush1.bf16.msra.mxu0 0
          %8236 = vmatprep.subr.bf16.mxu0 0
          %8237 = vmatpush1.bf16.msra.mxu0 0
          %8238 = vmatprep.subr.bf16.mxu0 0
          %8239 = vmatpush1.bf16.msra.mxu0 0
          %8240 = vmatprep.subr.bf16.mxu0 0
          %8241 = vmatpush1.bf16.msra.mxu0 0
          %8242 = vmatprep.subr.bf16.mxu0 0
          %8243 = vmatpush1.bf16.msra.mxu0 0
          %8244 = vmatprep.subr.bf16.mxu0 0
          %8245 = vmatpush1.bf16.msra.mxu0 0
          %8246 = vmatprep.subr.bf16.mxu0 0
          %8247 = vmatpush1.bf16.msra.mxu0 0
          %8248 = vmatprep.mubr.bf16.mxu0 0
          %8249 = vmatmul.mubr.bf16.gmra.mrb[0].mxu0 %v1193
          %v8250 = vpop.f32.mrb[0].mxu0
          %v8251 = vadd.f32 %v7907, %v8250
          %v8252 = vpop.f32.mrb[0].mxu0
          %v8253 = vadd.f32 %v7909, %v8252
          %v8254 = vpop.f32.mrb[0].mxu0
          %v8255 = vadd.f32 %v7911, %v8254
          %v8256 = vpop.f32.mrb[0].mxu0
          %v8257 = vadd.f32 %v7913, %v8256
          %8258 = vdwg.mxu0
          %v8259 = vlaneseq
          %v8260 = vshrl.u32 %v8259, 7
          %v8261 = vsub.s32 6, %v8260
          %v8262 = vrot.slane %v673, %v8261
          %v8263 = vlaneseq
          %v8264 = vshrl.u32 %v8263, 7
          %v8265 = vsub.s32 6, %v8264
          %v8266 = vrot.slane %v674, %v8265
          %v8267 = vlaneseq
          %v8268 = vshrl.u32 %v8267, 7
          %v8269 = vsub.s32 6, %v8268
          %v8270 = vrot.slane %v675, %v8269
          %v8271 = vlaneseq
          %v8272 = vshrl.u32 %v8271, 7
          %v8273 = vsub.s32 6, %v8272
          %v8274 = vrot.slane %v676, %v8273
          %v8275 = vlaneseq
          %v8276 = vshrl.u32 %v8275, 7
          %v8277 = vsub.s32 6, %v8276
          %v8278 = vrot.slane %v677, %v8277
          %v8279 = vlaneseq
          %v8280 = vshrl.u32 %v8279, 7
          %v8281 = vsub.s32 6, %v8280
          %v8282 = vrot.slane %v678, %v8281
          %v8283 = vlaneseq
          %v8284 = vshrl.u32 %v8283, 7
          %v8285 = vsub.s32 6, %v8284
          %v8286 = vrot.slane %v679, %v8285
          %v8287 = vlaneseq
          %v8288 = vshrl.u32 %v8287, 7
          %v8289 = vsub.s32 6, %v8288
          %v8290 = vrot.slane %v680, %v8289
          %v8291 = vlaneseq
          %v8292 = vshrl.u32 %v8291, 7
          %v8293 = vsub.s32 6, %v8292
          %v8294 = vrot.slane %v681, %v8293
          %v8295 = vlaneseq
          %v8296 = vshrl.u32 %v8295, 7
          %v8297 = vsub.s32 6, %v8296
          %v8298 = vrot.slane %v682, %v8297
          %v8299 = vlaneseq
          %v8300 = vshrl.u32 %v8299, 7
          %v8301 = vsub.s32 6, %v8300
          %v8302 = vrot.slane %v683, %v8301
          %v8303 = vlaneseq
          %v8304 = vshrl.u32 %v8303, 7
          %v8305 = vsub.s32 6, %v8304
          %v8306 = vrot.slane %v684, %v8305
          %v8307 = vlaneseq
          %v8308 = vshrl.u32 %v8307, 7
          %v8309 = vsub.s32 6, %v8308
          %v8310 = vrot.slane %v685, %v8309
          %v8311 = vlaneseq
          %v8312 = vshrl.u32 %v8311, 7
          %v8313 = vsub.s32 6, %v8312
          %v8314 = vrot.slane %v686, %v8313
          %v8315 = vlaneseq
          %v8316 = vshrl.u32 %v8315, 7
          %v8317 = vsub.s32 6, %v8316
          %v8318 = vrot.slane %v687, %v8317
          %v8319 = vlaneseq
          %v8320 = vshrl.u32 %v8319, 7
          %v8321 = vsub.s32 6, %v8320
          %v8322 = vrot.slane %v688, %v8321
          %vm8323 = vcmp.eq.s32.totalorder %v698, %v8262
          %vm8324 = vcmp.eq.s32.totalorder %v698, %v8266
          %vm8325 = vcmp.eq.s32.totalorder %v698, %v8270
          %vm8326 = vcmp.eq.s32.totalorder %v698, %v8274
          %vm8327 = vcmp.eq.s32.totalorder %v698, %v8278
          %vm8328 = vcmp.eq.s32.totalorder %v698, %v8282
          %vm8329 = vcmp.eq.s32.totalorder %v698, %v8286
          %vm8330 = vcmp.eq.s32.totalorder %v698, %v8290
          %vm8331 = vcmp.eq.s32.totalorder %v698, %v8294
          %vm8332 = vcmp.eq.s32.totalorder %v698, %v8298
          %vm8333 = vcmp.eq.s32.totalorder %v698, %v8302
          %vm8334 = vcmp.eq.s32.totalorder %v698, %v8306
          %vm8335 = vcmp.eq.s32.totalorder %v698, %v8310
          %vm8336 = vcmp.eq.s32.totalorder %v698, %v8314
          %vm8337 = vcmp.eq.s32.totalorder %v698, %v8318
          %vm8338 = vcmp.eq.s32.totalorder %v698, %v8322
          %vm8339 = vcmp.eq.s32.totalorder %v699, %v8262
          %vm8340 = vcmp.eq.s32.totalorder %v699, %v8266
          %vm8341 = vcmp.eq.s32.totalorder %v699, %v8270
          %vm8342 = vcmp.eq.s32.totalorder %v699, %v8274
          %vm8343 = vcmp.eq.s32.totalorder %v699, %v8278
          %vm8344 = vcmp.eq.s32.totalorder %v699, %v8282
          %vm8345 = vcmp.eq.s32.totalorder %v699, %v8286
          %vm8346 = vcmp.eq.s32.totalorder %v699, %v8290
          %vm8347 = vcmp.eq.s32.totalorder %v699, %v8294
          %vm8348 = vcmp.eq.s32.totalorder %v699, %v8298
          %vm8349 = vcmp.eq.s32.totalorder %v699, %v8302
          %vm8350 = vcmp.eq.s32.totalorder %v699, %v8306
          %vm8351 = vcmp.eq.s32.totalorder %v699, %v8310
          %vm8352 = vcmp.eq.s32.totalorder %v699, %v8314
          %vm8353 = vcmp.eq.s32.totalorder %v699, %v8318
          %vm8354 = vcmp.eq.s32.totalorder %v699, %v8322
          %v8355 = vsel %vm8323, %v7950, 0.0
          %v8356 = vsel %vm8324, %v7952, 0.0
          %v8357 = vsel %vm8325, %v7993, 0.0
          %v8358 = vsel %vm8326, %v7995, 0.0
          %v8359 = vsel %vm8327, %v8036, 0.0
          %v8360 = vsel %vm8328, %v8038, 0.0
          %v8361 = vsel %vm8329, %v8079, 0.0
          %v8362 = vsel %vm8330, %v8081, 0.0
          %v8363 = vsel %vm8331, %v8122, 0.0
          %v8364 = vsel %vm8332, %v8124, 0.0
          %v8365 = vsel %vm8333, %v8165, 0.0
          %v8366 = vsel %vm8334, %v8167, 0.0
          %v8367 = vsel %vm8335, %v8208, 0.0
          %v8368 = vsel %vm8336, %v8210, 0.0
          %v8369 = vsel %vm8337, %v8251, 0.0
          %v8370 = vsel %vm8338, %v8253, 0.0
          %v8371 = vsel %vm8339, %v7954, 0.0
          %v8372 = vsel %vm8340, %v7956, 0.0
          %v8373 = vsel %vm8341, %v7997, 0.0
          %v8374 = vsel %vm8342, %v7999, 0.0
          %v8375 = vsel %vm8343, %v8040, 0.0
          %v8376 = vsel %vm8344, %v8042, 0.0
          %v8377 = vsel %vm8345, %v8083, 0.0
          %v8378 = vsel %vm8346, %v8085, 0.0
          %v8379 = vsel %vm8347, %v8126, 0.0
          %v8380 = vsel %vm8348, %v8128, 0.0
          %v8381 = vsel %vm8349, %v8169, 0.0
          %v8382 = vsel %vm8350, %v8171, 0.0
          %v8383 = vsel %vm8351, %v8212, 0.0
          %v8384 = vsel %vm8352, %v8214, 0.0
          %v8385 = vsel %vm8353, %v8255, 0.0
          %v8386 = vsel %vm8354, %v8257, 0.0
          %v8387 = vadd.f32 %v8355, %v8371
          %v8388 = vrot.slane %v8387, 4
          %v8389 = vadd.f32 %v8387, %v8388
          %v8390 = vrot.slane %v8389, 2
          %v8391 = vadd.f32 %v8389, %v8390
          %v8392 = vrot.slane %v8391, 1
          %v8393 = vadd.f32 %v8391, %v8392
          %v8394 = vadd.f32 %v8356, %v8372
          %v8395 = vrot.slane %v8394, 4
          %v8396 = vadd.f32 %v8394, %v8395
          %v8397 = vrot.slane %v8396, 2
          %v8398 = vadd.f32 %v8396, %v8397
          %v8399 = vrot.slane %v8398, 1
          %v8400 = vadd.f32 %v8398, %v8399
          %v8401 = vadd.f32 %v8357, %v8373
          %v8402 = vrot.slane %v8401, 4
          %v8403 = vadd.f32 %v8401, %v8402
          %v8404 = vrot.slane %v8403, 2
          %v8405 = vadd.f32 %v8403, %v8404
          %v8406 = vrot.slane %v8405, 1
          %v8407 = vadd.f32 %v8405, %v8406
          %v8408 = vadd.f32 %v8358, %v8374
          %v8409 = vrot.slane %v8408, 4
          %v8410 = vadd.f32 %v8408, %v8409
          %v8411 = vrot.slane %v8410, 2
          %v8412 = vadd.f32 %v8410, %v8411
          %v8413 = vrot.slane %v8412, 1
          %v8414 = vadd.f32 %v8412, %v8413
          %v8415 = vadd.f32 %v8359, %v8375
          %v8416 = vrot.slane %v8415, 4
          %v8417 = vadd.f32 %v8415, %v8416
          %v8418 = vrot.slane %v8417, 2
          %v8419 = vadd.f32 %v8417, %v8418
          %v8420 = vrot.slane %v8419, 1
          %v8421 = vadd.f32 %v8419, %v8420
          %v8422 = vadd.f32 %v8360, %v8376
          %v8423 = vrot.slane %v8422, 4
          %v8424 = vadd.f32 %v8422, %v8423
          %v8425 = vrot.slane %v8424, 2
          %v8426 = vadd.f32 %v8424, %v8425
          %v8427 = vrot.slane %v8426, 1
          %v8428 = vadd.f32 %v8426, %v8427
          %v8429 = vadd.f32 %v8361, %v8377
          %v8430 = vrot.slane %v8429, 4
          %v8431 = vadd.f32 %v8429, %v8430
          %v8432 = vrot.slane %v8431, 2
          %v8433 = vadd.f32 %v8431, %v8432
          %v8434 = vrot.slane %v8433, 1
          %v8435 = vadd.f32 %v8433, %v8434
          %v8436 = vadd.f32 %v8362, %v8378
          %v8437 = vrot.slane %v8436, 4
          %v8438 = vadd.f32 %v8436, %v8437
          %v8439 = vrot.slane %v8438, 2
          %v8440 = vadd.f32 %v8438, %v8439
          %v8441 = vrot.slane %v8440, 1
          %v8442 = vadd.f32 %v8440, %v8441
          %v8443 = vadd.f32 %v8363, %v8379
          %v8444 = vrot.slane %v8443, 4
          %v8445 = vadd.f32 %v8443, %v8444
          %v8446 = vrot.slane %v8445, 2
          %v8447 = vadd.f32 %v8445, %v8446
          %v8448 = vrot.slane %v8447, 1
          %v8449 = vadd.f32 %v8447, %v8448
          %v8450 = vadd.f32 %v8364, %v8380
          %v8451 = vrot.slane %v8450, 4
          %v8452 = vadd.f32 %v8450, %v8451
          %v8453 = vrot.slane %v8452, 2
          %v8454 = vadd.f32 %v8452, %v8453
          %v8455 = vrot.slane %v8454, 1
          %v8456 = vadd.f32 %v8454, %v8455
          %v8457 = vadd.f32 %v8365, %v8381
          %v8458 = vrot.slane %v8457, 4
          %v8459 = vadd.f32 %v8457, %v8458
          %v8460 = vrot.slane %v8459, 2
          %v8461 = vadd.f32 %v8459, %v8460
          %v8462 = vrot.slane %v8461, 1
          %v8463 = vadd.f32 %v8461, %v8462
          %v8464 = vadd.f32 %v8366, %v8382
          %v8465 = vrot.slane %v8464, 4
          %v8466 = vadd.f32 %v8464, %v8465
          %v8467 = vrot.slane %v8466, 2
          %v8468 = vadd.f32 %v8466, %v8467
          %v8469 = vrot.slane %v8468, 1
          %v8470 = vadd.f32 %v8468, %v8469
          %v8471 = vadd.f32 %v8367, %v8383
          %v8472 = vrot.slane %v8471, 4
          %v8473 = vadd.f32 %v8471, %v8472
          %v8474 = vrot.slane %v8473, 2
          %v8475 = vadd.f32 %v8473, %v8474
          %v8476 = vrot.slane %v8475, 1
          %v8477 = vadd.f32 %v8475, %v8476
          %v8478 = vadd.f32 %v8368, %v8384
          %v8479 = vrot.slane %v8478, 4
          %v8480 = vadd.f32 %v8478, %v8479
          %v8481 = vrot.slane %v8480, 2
          %v8482 = vadd.f32 %v8480, %v8481
          %v8483 = vrot.slane %v8482, 1
          %v8484 = vadd.f32 %v8482, %v8483
          %v8485 = vadd.f32 %v8369, %v8385
          %v8486 = vrot.slane %v8485, 4
          %v8487 = vadd.f32 %v8485, %v8486
          %v8488 = vrot.slane %v8487, 2
          %v8489 = vadd.f32 %v8487, %v8488
          %v8490 = vrot.slane %v8489, 1
          %v8491 = vadd.f32 %v8489, %v8490
          %v8492 = vadd.f32 %v8370, %v8386
          %v8493 = vrot.slane %v8492, 4
          %v8494 = vadd.f32 %v8492, %v8493
          %v8495 = vrot.slane %v8494, 2
          %v8496 = vadd.f32 %v8494, %v8495
          %v8497 = vrot.slane %v8496, 1
          %v8498 = vadd.f32 %v8496, %v8497
          %v8499 = vsub.f32 0.7777778, %v8393
          %v8500 = vsub.f32 0.7777778, %v8400
          %v8501 = vsub.f32 0.7777778, %v8407
          %v8502 = vsub.f32 0.7777778, %v8414
          %v8503 = vsub.f32 0.7777778, %v8421
          %v8504 = vsub.f32 0.7777778, %v8428
          %v8505 = vsub.f32 0.7777778, %v8435
          %v8506 = vsub.f32 0.7777778, %v8442
          %v8507 = vsub.f32 0.7777778, %v8449
          %v8508 = vsub.f32 0.7777778, %v8456
          %v8509 = vsub.f32 0.7777778, %v8463
          %v8510 = vsub.f32 0.7777778, %v8470
          %v8511 = vsub.f32 0.7777778, %v8477
          %v8512 = vsub.f32 0.7777778, %v8484
          %v8513 = vsub.f32 0.7777778, %v8491
          %v8514 = vsub.f32 0.7777778, %v8498
          %v8515 = vmul.f32 %v8499, %v8499
          %v8516 = vmul.f32 %v8500, %v8500
          %v8517 = vmul.f32 %v8501, %v8501
          %v8518 = vmul.f32 %v8502, %v8502
          %v8519 = vmul.f32 %v8503, %v8503
          %v8520 = vmul.f32 %v8504, %v8504
          %v8521 = vmul.f32 %v8505, %v8505
          %v8522 = vmul.f32 %v8506, %v8506
          %v8523 = vmul.f32 %v8507, %v8507
          %v8524 = vmul.f32 %v8508, %v8508
          %v8525 = vmul.f32 %v8509, %v8509
          %v8526 = vmul.f32 %v8510, %v8510
          %v8527 = vmul.f32 %v8511, %v8511
          %v8528 = vmul.f32 %v8512, %v8512
          %v8529 = vmul.f32 %v8513, %v8513
          %v8530 = vmul.f32 %v8514, %v8514
          %v8531 = vadd.f32 %v7411, %v8515
          %v8532 = vadd.f32 %v7412, %v8516
          %v8533 = vadd.f32 %v7413, %v8517
          %v8534 = vadd.f32 %v7414, %v8518
          %v8535 = vadd.f32 %v7415, %v8519
          %v8536 = vadd.f32 %v7416, %v8520
          %v8537 = vadd.f32 %v7417, %v8521
          %v8538 = vadd.f32 %v7418, %v8522
          %v8539 = vadd.f32 %v7419, %v8523
          %v8540 = vadd.f32 %v7420, %v8524
          %v8541 = vadd.f32 %v7421, %v8525
          %v8542 = vadd.f32 %v7422, %v8526
          %v8543 = vadd.f32 %v7423, %v8527
          %v8544 = vadd.f32 %v7424, %v8528
          %v8545 = vadd.f32 %v7425, %v8529
          %v8546 = vadd.f32 %v7426, %v8530
          %v8547 = vlaneseq
          %v8548 = vshrl.u32 %v8547, 7
          %v8549 = vsub.s32 7, %v8548
          %v8550 = vrot.slane %v657, %v8549
          %v8551 = vlaneseq
          %v8552 = vshrl.u32 %v8551, 7
          %v8553 = vsub.s32 7, %v8552
          %v8554 = vrot.slane %v658, %v8553
          %v8555 = vlaneseq
          %v8556 = vshrl.u32 %v8555, 7
          %v8557 = vsub.s32 7, %v8556
          %v8558 = vrot.slane %v659, %v8557
          %v8559 = vlaneseq
          %v8560 = vshrl.u32 %v8559, 7
          %v8561 = vsub.s32 7, %v8560
          %v8562 = vrot.slane %v660, %v8561
          %v8563 = vlaneseq
          %v8564 = vshrl.u32 %v8563, 7
          %v8565 = vsub.s32 7, %v8564
          %v8566 = vrot.slane %v661, %v8565
          %v8567 = vlaneseq
          %v8568 = vshrl.u32 %v8567, 7
          %v8569 = vsub.s32 7, %v8568
          %v8570 = vrot.slane %v662, %v8569
          %v8571 = vlaneseq
          %v8572 = vshrl.u32 %v8571, 7
          %v8573 = vsub.s32 7, %v8572
          %v8574 = vrot.slane %v663, %v8573
          %v8575 = vlaneseq
          %v8576 = vshrl.u32 %v8575, 7
          %v8577 = vsub.s32 7, %v8576
          %v8578 = vrot.slane %v664, %v8577
          %v8579 = vlaneseq
          %v8580 = vshrl.u32 %v8579, 7
          %v8581 = vsub.s32 7, %v8580
          %v8582 = vrot.slane %v665, %v8581
          %v8583 = vlaneseq
          %v8584 = vshrl.u32 %v8583, 7
          %v8585 = vsub.s32 7, %v8584
          %v8586 = vrot.slane %v666, %v8585
          %v8587 = vlaneseq
          %v8588 = vshrl.u32 %v8587, 7
          %v8589 = vsub.s32 7, %v8588
          %v8590 = vrot.slane %v667, %v8589
          %v8591 = vlaneseq
          %v8592 = vshrl.u32 %v8591, 7
          %v8593 = vsub.s32 7, %v8592
          %v8594 = vrot.slane %v668, %v8593
          %v8595 = vlaneseq
          %v8596 = vshrl.u32 %v8595, 7
          %v8597 = vsub.s32 7, %v8596
          %v8598 = vrot.slane %v669, %v8597
          %v8599 = vlaneseq
          %v8600 = vshrl.u32 %v8599, 7
          %v8601 = vsub.s32 7, %v8600
          %v8602 = vrot.slane %v670, %v8601
          %v8603 = vlaneseq
          %v8604 = vshrl.u32 %v8603, 7
          %v8605 = vsub.s32 7, %v8604
          %v8606 = vrot.slane %v671, %v8605
          %v8607 = vlaneseq
          %v8608 = vshrl.u32 %v8607, 7
          %v8609 = vsub.s32 7, %v8608
          %v8610 = vrot.slane %v672, %v8609
          %vm8611 = vcmp.eq.s32.totalorder %v698, %v8550
          %vm8612 = vcmp.eq.s32.totalorder %v698, %v8554
          %vm8613 = vcmp.eq.s32.totalorder %v698, %v8558
          %vm8614 = vcmp.eq.s32.totalorder %v698, %v8562
          %vm8615 = vcmp.eq.s32.totalorder %v698, %v8566
          %vm8616 = vcmp.eq.s32.totalorder %v698, %v8570
          %vm8617 = vcmp.eq.s32.totalorder %v698, %v8574
          %vm8618 = vcmp.eq.s32.totalorder %v698, %v8578
          %vm8619 = vcmp.eq.s32.totalorder %v698, %v8582
          %vm8620 = vcmp.eq.s32.totalorder %v698, %v8586
          %vm8621 = vcmp.eq.s32.totalorder %v698, %v8590
          %vm8622 = vcmp.eq.s32.totalorder %v698, %v8594
          %vm8623 = vcmp.eq.s32.totalorder %v698, %v8598
          %vm8624 = vcmp.eq.s32.totalorder %v698, %v8602
          %vm8625 = vcmp.eq.s32.totalorder %v698, %v8606
          %vm8626 = vcmp.eq.s32.totalorder %v698, %v8610
          %vm8627 = vcmp.eq.s32.totalorder %v699, %v8550
          %vm8628 = vcmp.eq.s32.totalorder %v699, %v8554
          %vm8629 = vcmp.eq.s32.totalorder %v699, %v8558
          %vm8630 = vcmp.eq.s32.totalorder %v699, %v8562
          %vm8631 = vcmp.eq.s32.totalorder %v699, %v8566
          %vm8632 = vcmp.eq.s32.totalorder %v699, %v8570
          %vm8633 = vcmp.eq.s32.totalorder %v699, %v8574
          %vm8634 = vcmp.eq.s32.totalorder %v699, %v8578
          %vm8635 = vcmp.eq.s32.totalorder %v699, %v8582
          %vm8636 = vcmp.eq.s32.totalorder %v699, %v8586
          %vm8637 = vcmp.eq.s32.totalorder %v699, %v8590
          %vm8638 = vcmp.eq.s32.totalorder %v699, %v8594
          %vm8639 = vcmp.eq.s32.totalorder %v699, %v8598
          %vm8640 = vcmp.eq.s32.totalorder %v699, %v8602
          %vm8641 = vcmp.eq.s32.totalorder %v699, %v8606
          %vm8642 = vcmp.eq.s32.totalorder %v699, %v8610
          %v8643 = vsel %vm8611, 1.0, 0.0
          %v8644 = vsel %vm8612, 1.0, 0.0
          %v8645 = vsel %vm8613, 1.0, 0.0
          %v8646 = vsel %vm8614, 1.0, 0.0
          %v8647 = vsel %vm8615, 1.0, 0.0
          %v8648 = vsel %vm8616, 1.0, 0.0
          %v8649 = vsel %vm8617, 1.0, 0.0
          %v8650 = vsel %vm8618, 1.0, 0.0
          %v8651 = vsel %vm8619, 1.0, 0.0
          %v8652 = vsel %vm8620, 1.0, 0.0
          %v8653 = vsel %vm8621, 1.0, 0.0
          %v8654 = vsel %vm8622, 1.0, 0.0
          %v8655 = vsel %vm8623, 1.0, 0.0
          %v8656 = vsel %vm8624, 1.0, 0.0
          %v8657 = vsel %vm8625, 1.0, 0.0
          %v8658 = vsel %vm8626, 1.0, 0.0
          %v8659 = vsel %vm8627, 1.0, 0.0
          %v8660 = vsel %vm8628, 1.0, 0.0
          %v8661 = vsel %vm8629, 1.0, 0.0
          %v8662 = vsel %vm8630, 1.0, 0.0
          %v8663 = vsel %vm8631, 1.0, 0.0
          %v8664 = vsel %vm8632, 1.0, 0.0
          %v8665 = vsel %vm8633, 1.0, 0.0
          %v8666 = vsel %vm8634, 1.0, 0.0
          %v8667 = vsel %vm8635, 1.0, 0.0
          %v8668 = vsel %vm8636, 1.0, 0.0
          %v8669 = vsel %vm8637, 1.0, 0.0
          %v8670 = vsel %vm8638, 1.0, 0.0
          %v8671 = vsel %vm8639, 1.0, 0.0
          %v8672 = vsel %vm8640, 1.0, 0.0
          %v8673 = vsel %vm8641, 1.0, 0.0
          %v8674 = vsel %vm8642, 1.0, 0.0
          %v8675 = vpack.c.bf16 %v8659, %v8643
          %v8676 = vpack.c.bf16 %v8660, %v8644
          %v8677 = vpack.c.bf16 %v8661, %v8645
          %v8678 = vpack.c.bf16 %v8662, %v8646
          %v8679 = vpack.c.bf16 %v8663, %v8647
          %v8680 = vpack.c.bf16 %v8664, %v8648
          %v8681 = vpack.c.bf16 %v8665, %v8649
          %v8682 = vpack.c.bf16 %v8666, %v8650
          %v8683 = vpack.c.bf16 %v8667, %v8651
          %v8684 = vpack.c.bf16 %v8668, %v8652
          %v8685 = vpack.c.bf16 %v8669, %v8653
          %v8686 = vpack.c.bf16 %v8670, %v8654
          %v8687 = vpack.c.bf16 %v8671, %v8655
          %v8688 = vpack.c.bf16 %v8672, %v8656
          %v8689 = vpack.c.bf16 %v8673, %v8657
          %v8690 = vpack.c.bf16 %v8674, %v8658
          %8691 = vmatprep.subr.bf16.mxu0 %v8676
          %8692 = vmatpush1.bf16.msra.mxu0 %v8675
          %8693 = vmatprep.subr.bf16.mxu0 0
          %8694 = vmatpush1.bf16.msra.mxu0 0
          %8695 = vmatprep.subr.bf16.mxu0 0
          %8696 = vmatpush1.bf16.msra.mxu0 0
          %8697 = vmatprep.subr.bf16.mxu0 0
          %8698 = vmatpush1.bf16.msra.mxu0 0
          %8699 = vmatprep.subr.bf16.mxu0 0
          %8700 = vmatpush1.bf16.msra.mxu0 0
          %8701 = vmatprep.subr.bf16.mxu0 0
          %8702 = vmatpush1.bf16.msra.mxu0 0
          %8703 = vmatprep.subr.bf16.mxu0 0
          %8704 = vmatpush1.bf16.msra.mxu0 0
          %8705 = vmatprep.subr.bf16.mxu0 0
          %8706 = vmatpush1.bf16.msra.mxu0 0
          %8707 = vmatprep.subr.bf16.mxu0 0
          %8708 = vmatpush1.bf16.msra.mxu0 0
          %8709 = vmatprep.subr.bf16.mxu0 0
          %8710 = vmatpush1.bf16.msra.mxu0 0
          %8711 = vmatprep.subr.bf16.mxu0 0
          %8712 = vmatpush1.bf16.msra.mxu0 0
          %8713 = vmatprep.subr.bf16.mxu0 0
          %8714 = vmatpush1.bf16.msra.mxu0 0
          %8715 = vmatprep.subr.bf16.mxu0 0
          %8716 = vmatpush1.bf16.msra.mxu0 0
          %8717 = vmatprep.subr.bf16.mxu0 0
          %8718 = vmatpush1.bf16.msra.mxu0 0
          %8719 = vmatprep.subr.bf16.mxu0 0
          %8720 = vmatpush1.bf16.msra.mxu0 0
          %8721 = vmatprep.subr.bf16.mxu0 0
          %8722 = vmatpush1.bf16.msra.mxu0 0
          %8723 = vmatprep.mubr.bf16.mxu0 0
          %8724 = vmatmul.mubr.bf16.gmra.mrb[0].mxu0 %v846
          %v8725 = vpop.f32.mrb[0].mxu0
          %v8726 = vadd.f32 0.0, %v8725
          %v8727 = vpop.f32.mrb[0].mxu0
          %v8728 = vadd.f32 0.0, %v8727
          %v8729 = vpop.f32.mrb[0].mxu0
          %v8730 = vadd.f32 0.0, %v8729
          %v8731 = vpop.f32.mrb[0].mxu0
          %v8732 = vadd.f32 0.0, %v8731
          %8733 = vdwg.mxu0
          %8734 = vmatprep.subr.bf16.mxu0 %v8678
          %8735 = vmatpush1.bf16.msra.mxu0 %v8677
          %8736 = vmatprep.subr.bf16.mxu0 0
          %8737 = vmatpush1.bf16.msra.mxu0 0
          %8738 = vmatprep.subr.bf16.mxu0 0
          %8739 = vmatpush1.bf16.msra.mxu0 0
          %8740 = vmatprep.subr.bf16.mxu0 0
          %8741 = vmatpush1.bf16.msra.mxu0 0
          %8742 = vmatprep.subr.bf16.mxu0 0
          %8743 = vmatpush1.bf16.msra.mxu0 0
          %8744 = vmatprep.subr.bf16.mxu0 0
          %8745 = vmatpush1.bf16.msra.mxu0 0
          %8746 = vmatprep.subr.bf16.mxu0 0
          %8747 = vmatpush1.bf16.msra.mxu0 0
          %8748 = vmatprep.subr.bf16.mxu0 0
          %8749 = vmatpush1.bf16.msra.mxu0 0
          %8750 = vmatprep.subr.bf16.mxu0 0
          %8751 = vmatpush1.bf16.msra.mxu0 0
          %8752 = vmatprep.subr.bf16.mxu0 0
          %8753 = vmatpush1.bf16.msra.mxu0 0
          %8754 = vmatprep.subr.bf16.mxu0 0
          %8755 = vmatpush1.bf16.msra.mxu0 0
          %8756 = vmatprep.subr.bf16.mxu0 0
          %8757 = vmatpush1.bf16.msra.mxu0 0
          %8758 = vmatprep.subr.bf16.mxu0 0
          %8759 = vmatpush1.bf16.msra.mxu0 0
          %8760 = vmatprep.subr.bf16.mxu0 0
          %8761 = vmatpush1.bf16.msra.mxu0 0
          %8762 = vmatprep.subr.bf16.mxu0 0
          %8763 = vmatpush1.bf16.msra.mxu0 0
          %8764 = vmatprep.subr.bf16.mxu0 0
          %8765 = vmatpush1.bf16.msra.mxu0 0
          %8766 = vmatprep.mubr.bf16.mxu0 0
          %8767 = vmatmul.mubr.bf16.gmra.mrb[0].mxu0 %v846
          %v8768 = vpop.f32.mrb[0].mxu0
          %v8769 = vadd.f32 0.0, %v8768
          %v8770 = vpop.f32.mrb[0].mxu0
          %v8771 = vadd.f32 0.0, %v8770
          %v8772 = vpop.f32.mrb[0].mxu0
          %v8773 = vadd.f32 0.0, %v8772
          %v8774 = vpop.f32.mrb[0].mxu0
          %v8775 = vadd.f32 0.0, %v8774
          %8776 = vdwg.mxu0
          %8777 = vmatprep.subr.bf16.mxu0 %v8680
          %8778 = vmatpush1.bf16.msra.mxu0 %v8679
          %8779 = vmatprep.subr.bf16.mxu0 0
          %8780 = vmatpush1.bf16.msra.mxu0 0
          %8781 = vmatprep.subr.bf16.mxu0 0
          %8782 = vmatpush1.bf16.msra.mxu0 0
          %8783 = vmatprep.subr.bf16.mxu0 0
          %8784 = vmatpush1.bf16.msra.mxu0 0
          %8785 = vmatprep.subr.bf16.mxu0 0
          %8786 = vmatpush1.bf16.msra.mxu0 0
          %8787 = vmatprep.subr.bf16.mxu0 0
          %8788 = vmatpush1.bf16.msra.mxu0 0
          %8789 = vmatprep.subr.bf16.mxu0 0
          %8790 = vmatpush1.bf16.msra.mxu0 0
          %8791 = vmatprep.subr.bf16.mxu0 0
          %8792 = vmatpush1.bf16.msra.mxu0 0
          %8793 = vmatprep.subr.bf16.mxu0 0
          %8794 = vmatpush1.bf16.msra.mxu0 0
          %8795 = vmatprep.subr.bf16.mxu0 0
          %8796 = vmatpush1.bf16.msra.mxu0 0
          %8797 = vmatprep.subr.bf16.mxu0 0
          %8798 = vmatpush1.bf16.msra.mxu0 0
          %8799 = vmatprep.subr.bf16.mxu0 0
          %8800 = vmatpush1.bf16.msra.mxu0 0
          %8801 = vmatprep.subr.bf16.mxu0 0
          %8802 = vmatpush1.bf16.msra.mxu0 0
          %8803 = vmatprep.subr.bf16.mxu0 0
          %8804 = vmatpush1.bf16.msra.mxu0 0
          %8805 = vmatprep.subr.bf16.mxu0 0
          %8806 = vmatpush1.bf16.msra.mxu0 0
          %8807 = vmatprep.subr.bf16.mxu0 0
          %8808 = vmatpush1.bf16.msra.mxu0 0
          %8809 = vmatprep.mubr.bf16.mxu0 0
          %8810 = vmatmul.mubr.bf16.gmra.mrb[0].mxu0 %v846
          %v8811 = vpop.f32.mrb[0].mxu0
          %v8812 = vadd.f32 0.0, %v8811
          %v8813 = vpop.f32.mrb[0].mxu0
          %v8814 = vadd.f32 0.0, %v8813
          %v8815 = vpop.f32.mrb[0].mxu0
          %v8816 = vadd.f32 0.0, %v8815
          %v8817 = vpop.f32.mrb[0].mxu0
          %v8818 = vadd.f32 0.0, %v8817
          %8819 = vdwg.mxu0
          %8820 = vmatprep.subr.bf16.mxu0 %v8682
          %8821 = vmatpush1.bf16.msra.mxu0 %v8681
          %8822 = vmatprep.subr.bf16.mxu0 0
          %8823 = vmatpush1.bf16.msra.mxu0 0
          %8824 = vmatprep.subr.bf16.mxu0 0
          %8825 = vmatpush1.bf16.msra.mxu0 0
          %8826 = vmatprep.subr.bf16.mxu0 0
          %8827 = vmatpush1.bf16.msra.mxu0 0
          %8828 = vmatprep.subr.bf16.mxu0 0
          %8829 = vmatpush1.bf16.msra.mxu0 0
          %8830 = vmatprep.subr.bf16.mxu0 0
          %8831 = vmatpush1.bf16.msra.mxu0 0
          %8832 = vmatprep.subr.bf16.mxu0 0
          %8833 = vmatpush1.bf16.msra.mxu0 0
          %8834 = vmatprep.subr.bf16.mxu0 0
          %8835 = vmatpush1.bf16.msra.mxu0 0
          %8836 = vmatprep.subr.bf16.mxu0 0
          %8837 = vmatpush1.bf16.msra.mxu0 0
          %8838 = vmatprep.subr.bf16.mxu0 0
          %8839 = vmatpush1.bf16.msra.mxu0 0
          %8840 = vmatprep.subr.bf16.mxu0 0
          %8841 = vmatpush1.bf16.msra.mxu0 0
          %8842 = vmatprep.subr.bf16.mxu0 0
          %8843 = vmatpush1.bf16.msra.mxu0 0
          %8844 = vmatprep.subr.bf16.mxu0 0
          %8845 = vmatpush1.bf16.msra.mxu0 0
          %8846 = vmatprep.subr.bf16.mxu0 0
          %8847 = vmatpush1.bf16.msra.mxu0 0
          %8848 = vmatprep.subr.bf16.mxu0 0
          %8849 = vmatpush1.bf16.msra.mxu0 0
          %8850 = vmatprep.subr.bf16.mxu0 0
          %8851 = vmatpush1.bf16.msra.mxu0 0
          %8852 = vmatprep.mubr.bf16.mxu0 0
          %8853 = vmatmul.mubr.bf16.gmra.mrb[0].mxu0 %v846
          %v8854 = vpop.f32.mrb[0].mxu0
          %v8855 = vadd.f32 0.0, %v8854
          %v8856 = vpop.f32.mrb[0].mxu0
          %v8857 = vadd.f32 0.0, %v8856
          %v8858 = vpop.f32.mrb[0].mxu0
          %v8859 = vadd.f32 0.0, %v8858
          %v8860 = vpop.f32.mrb[0].mxu0
          %v8861 = vadd.f32 0.0, %v8860
          %8862 = vdwg.mxu0
          %8863 = vmatprep.subr.bf16.mxu0 %v8684
          %8864 = vmatpush1.bf16.msra.mxu0 %v8683
          %8865 = vmatprep.subr.bf16.mxu0 0
          %8866 = vmatpush1.bf16.msra.mxu0 0
          %8867 = vmatprep.subr.bf16.mxu0 0
          %8868 = vmatpush1.bf16.msra.mxu0 0
          %8869 = vmatprep.subr.bf16.mxu0 0
          %8870 = vmatpush1.bf16.msra.mxu0 0
          %8871 = vmatprep.subr.bf16.mxu0 0
          %8872 = vmatpush1.bf16.msra.mxu0 0
          %8873 = vmatprep.subr.bf16.mxu0 0
          %8874 = vmatpush1.bf16.msra.mxu0 0
          %8875 = vmatprep.subr.bf16.mxu0 0
          %8876 = vmatpush1.bf16.msra.mxu0 0
          %8877 = vmatprep.subr.bf16.mxu0 0
          %8878 = vmatpush1.bf16.msra.mxu0 0
          %8879 = vmatprep.subr.bf16.mxu0 0
          %8880 = vmatpush1.bf16.msra.mxu0 0
          %8881 = vmatprep.subr.bf16.mxu0 0
          %8882 = vmatpush1.bf16.msra.mxu0 0
          %8883 = vmatprep.subr.bf16.mxu0 0
          %8884 = vmatpush1.bf16.msra.mxu0 0
          %8885 = vmatprep.subr.bf16.mxu0 0
          %8886 = vmatpush1.bf16.msra.mxu0 0
          %8887 = vmatprep.subr.bf16.mxu0 0
          %8888 = vmatpush1.bf16.msra.mxu0 0
          %8889 = vmatprep.subr.bf16.mxu0 0
          %8890 = vmatpush1.bf16.msra.mxu0 0
          %8891 = vmatprep.subr.bf16.mxu0 0
          %8892 = vmatpush1.bf16.msra.mxu0 0
          %8893 = vmatprep.subr.bf16.mxu0 0
          %8894 = vmatpush1.bf16.msra.mxu0 0
          %8895 = vmatprep.mubr.bf16.mxu0 0
          %8896 = vmatmul.mubr.bf16.gmra.mrb[0].mxu0 %v846
          %v8897 = vpop.f32.mrb[0].mxu0
          %v8898 = vadd.f32 0.0, %v8897
          %v8899 = vpop.f32.mrb[0].mxu0
          %v8900 = vadd.f32 0.0, %v8899
          %v8901 = vpop.f32.mrb[0].mxu0
          %v8902 = vadd.f32 0.0, %v8901
          %v8903 = vpop.f32.mrb[0].mxu0
          %v8904 = vadd.f32 0.0, %v8903
          %8905 = vdwg.mxu0
          %8906 = vmatprep.subr.bf16.mxu0 %v8686
          %8907 = vmatpush1.bf16.msra.mxu0 %v8685
          %8908 = vmatprep.subr.bf16.mxu0 0
          %8909 = vmatpush1.bf16.msra.mxu0 0
          %8910 = vmatprep.subr.bf16.mxu0 0
          %8911 = vmatpush1.bf16.msra.mxu0 0
          %8912 = vmatprep.subr.bf16.mxu0 0
          %8913 = vmatpush1.bf16.msra.mxu0 0
          %8914 = vmatprep.subr.bf16.mxu0 0
          %8915 = vmatpush1.bf16.msra.mxu0 0
          %8916 = vmatprep.subr.bf16.mxu0 0
          %8917 = vmatpush1.bf16.msra.mxu0 0
          %8918 = vmatprep.subr.bf16.mxu0 0
          %8919 = vmatpush1.bf16.msra.mxu0 0
          %8920 = vmatprep.subr.bf16.mxu0 0
          %8921 = vmatpush1.bf16.msra.mxu0 0
          %8922 = vmatprep.subr.bf16.mxu0 0
          %8923 = vmatpush1.bf16.msra.mxu0 0
          %8924 = vmatprep.subr.bf16.mxu0 0
          %8925 = vmatpush1.bf16.msra.mxu0 0
          %8926 = vmatprep.subr.bf16.mxu0 0
          %8927 = vmatpush1.bf16.msra.mxu0 0
          %8928 = vmatprep.subr.bf16.mxu0 0
          %8929 = vmatpush1.bf16.msra.mxu0 0
          %8930 = vmatprep.subr.bf16.mxu0 0
          %8931 = vmatpush1.bf16.msra.mxu0 0
          %8932 = vmatprep.subr.bf16.mxu0 0
          %8933 = vmatpush1.bf16.msra.mxu0 0
          %8934 = vmatprep.subr.bf16.mxu0 0
          %8935 = vmatpush1.bf16.msra.mxu0 0
          %8936 = vmatprep.subr.bf16.mxu0 0
          %8937 = vmatpush1.bf16.msra.mxu0 0
          %8938 = vmatprep.mubr.bf16.mxu0 0
          %8939 = vmatmul.mubr.bf16.gmra.mrb[0].mxu0 %v846
          %v8940 = vpop.f32.mrb[0].mxu0
          %v8941 = vadd.f32 0.0, %v8940
          %v8942 = vpop.f32.mrb[0].mxu0
          %v8943 = vadd.f32 0.0, %v8942
          %v8944 = vpop.f32.mrb[0].mxu0
          %v8945 = vadd.f32 0.0, %v8944
          %v8946 = vpop.f32.mrb[0].mxu0
          %v8947 = vadd.f32 0.0, %v8946
          %8948 = vdwg.mxu0
          %8949 = vmatprep.subr.bf16.mxu0 %v8688
          %8950 = vmatpush1.bf16.msra.mxu0 %v8687
          %8951 = vmatprep.subr.bf16.mxu0 0
          %8952 = vmatpush1.bf16.msra.mxu0 0
          %8953 = vmatprep.subr.bf16.mxu0 0
          %8954 = vmatpush1.bf16.msra.mxu0 0
          %8955 = vmatprep.subr.bf16.mxu0 0
          %8956 = vmatpush1.bf16.msra.mxu0 0
          %8957 = vmatprep.subr.bf16.mxu0 0
          %8958 = vmatpush1.bf16.msra.mxu0 0
          %8959 = vmatprep.subr.bf16.mxu0 0
          %8960 = vmatpush1.bf16.msra.mxu0 0
          %8961 = vmatprep.subr.bf16.mxu0 0
          %8962 = vmatpush1.bf16.msra.mxu0 0
          %8963 = vmatprep.subr.bf16.mxu0 0
          %8964 = vmatpush1.bf16.msra.mxu0 0
          %8965 = vmatprep.subr.bf16.mxu0 0
          %8966 = vmatpush1.bf16.msra.mxu0 0
          %8967 = vmatprep.subr.bf16.mxu0 0
          %8968 = vmatpush1.bf16.msra.mxu0 0
          %8969 = vmatprep.subr.bf16.mxu0 0
          %8970 = vmatpush1.bf16.msra.mxu0 0
          %8971 = vmatprep.subr.bf16.mxu0 0
          %8972 = vmatpush1.bf16.msra.mxu0 0
          %8973 = vmatprep.subr.bf16.mxu0 0
          %8974 = vmatpush1.bf16.msra.mxu0 0
          %8975 = vmatprep.subr.bf16.mxu0 0
          %8976 = vmatpush1.bf16.msra.mxu0 0
          %8977 = vmatprep.subr.bf16.mxu0 0
          %8978 = vmatpush1.bf16.msra.mxu0 0
          %8979 = vmatprep.subr.bf16.mxu0 0
          %8980 = vmatpush1.bf16.msra.mxu0 0
          %8981 = vmatprep.mubr.bf16.mxu0 0
          %8982 = vmatmul.mubr.bf16.gmra.mrb[0].mxu0 %v846
          %v8983 = vpop.f32.mrb[0].mxu0
          %v8984 = vadd.f32 0.0, %v8983
          %v8985 = vpop.f32.mrb[0].mxu0
          %v8986 = vadd.f32 0.0, %v8985
          %v8987 = vpop.f32.mrb[0].mxu0
          %v8988 = vadd.f32 0.0, %v8987
          %v8989 = vpop.f32.mrb[0].mxu0
          %v8990 = vadd.f32 0.0, %v8989
          %8991 = vdwg.mxu0
          %8992 = vmatprep.subr.bf16.mxu0 %v8690
          %8993 = vmatpush1.bf16.msra.mxu0 %v8689
          %8994 = vmatprep.subr.bf16.mxu0 0
          %8995 = vmatpush1.bf16.msra.mxu0 0
          %8996 = vmatprep.subr.bf16.mxu0 0
          %8997 = vmatpush1.bf16.msra.mxu0 0
          %8998 = vmatprep.subr.bf16.mxu0 0
          %8999 = vmatpush1.bf16.msra.mxu0 0
          %9000 = vmatprep.subr.bf16.mxu0 0
          %9001 = vmatpush1.bf16.msra.mxu0 0
          %9002 = vmatprep.subr.bf16.mxu0 0
          %9003 = vmatpush1.bf16.msra.mxu0 0
          %9004 = vmatprep.subr.bf16.mxu0 0
          %9005 = vmatpush1.bf16.msra.mxu0 0
          %9006 = vmatprep.subr.bf16.mxu0 0
          %9007 = vmatpush1.bf16.msra.mxu0 0
          %9008 = vmatprep.subr.bf16.mxu0 0
          %9009 = vmatpush1.bf16.msra.mxu0 0
          %9010 = vmatprep.subr.bf16.mxu0 0
          %9011 = vmatpush1.bf16.msra.mxu0 0
          %9012 = vmatprep.subr.bf16.mxu0 0
          %9013 = vmatpush1.bf16.msra.mxu0 0
          %9014 = vmatprep.subr.bf16.mxu0 0
          %9015 = vmatpush1.bf16.msra.mxu0 0
          %9016 = vmatprep.subr.bf16.mxu0 0
          %9017 = vmatpush1.bf16.msra.mxu0 0
          %9018 = vmatprep.subr.bf16.mxu0 0
          %9019 = vmatpush1.bf16.msra.mxu0 0
          %9020 = vmatprep.subr.bf16.mxu0 0
          %9021 = vmatpush1.bf16.msra.mxu0 0
          %9022 = vmatprep.subr.bf16.mxu0 0
          %9023 = vmatpush1.bf16.msra.mxu0 0
          %9024 = vmatprep.mubr.bf16.mxu0 0
          %9025 = vmatmul.mubr.bf16.gmra.mrb[0].mxu0 %v846
          %v9026 = vpop.f32.mrb[0].mxu0
          %v9027 = vadd.f32 0.0, %v9026
          %v9028 = vpop.f32.mrb[0].mxu0
          %v9029 = vadd.f32 0.0, %v9028
          %v9030 = vpop.f32.mrb[0].mxu0
          %v9031 = vadd.f32 0.0, %v9030
          %v9032 = vpop.f32.mrb[0].mxu0
          %v9033 = vadd.f32 0.0, %v9032
          %9034 = vdwg.mxu0
          %9035 = vmatprep.subr.bf16.mxu0 %v8676
          %9036 = vmatpush1.bf16.msra.mxu0 %v8675
          %9037 = vmatprep.subr.bf16.mxu0 0
          %9038 = vmatpush1.bf16.msra.mxu0 0
          %9039 = vmatprep.subr.bf16.mxu0 0
          %9040 = vmatpush1.bf16.msra.mxu0 0
          %9041 = vmatprep.subr.bf16.mxu0 0
          %9042 = vmatpush1.bf16.msra.mxu0 0
          %9043 = vmatprep.subr.bf16.mxu0 0
          %9044 = vmatpush1.bf16.msra.mxu0 0
          %9045 = vmatprep.subr.bf16.mxu0 0
          %9046 = vmatpush1.bf16.msra.mxu0 0
          %9047 = vmatprep.subr.bf16.mxu0 0
          %9048 = vmatpush1.bf16.msra.mxu0 0
          %9049 = vmatprep.subr.bf16.mxu0 0
          %9050 = vmatpush1.bf16.msra.mxu0 0
          %9051 = vmatprep.subr.bf16.mxu0 0
          %9052 = vmatpush1.bf16.msra.mxu0 0
          %9053 = vmatprep.subr.bf16.mxu0 0
          %9054 = vmatpush1.bf16.msra.mxu0 0
          %9055 = vmatprep.subr.bf16.mxu0 0
          %9056 = vmatpush1.bf16.msra.mxu0 0
          %9057 = vmatprep.subr.bf16.mxu0 0
          %9058 = vmatpush1.bf16.msra.mxu0 0
          %9059 = vmatprep.subr.bf16.mxu0 0
          %9060 = vmatpush1.bf16.msra.mxu0 0
          %9061 = vmatprep.subr.bf16.mxu0 0
          %9062 = vmatpush1.bf16.msra.mxu0 0
          %9063 = vmatprep.subr.bf16.mxu0 0
          %9064 = vmatpush1.bf16.msra.mxu0 0
          %9065 = vmatprep.subr.bf16.mxu0 0
          %9066 = vmatpush1.bf16.msra.mxu0 0
          %9067 = vmatprep.mubr.bf16.mxu0 0
          %9068 = vmatmul.mubr.bf16.gmra.mrb[0].mxu0 %v1193
          %v9069 = vpop.f32.mrb[0].mxu0
          %v9070 = vadd.f32 %v8726, %v9069
          %v9071 = vpop.f32.mrb[0].mxu0
          %v9072 = vadd.f32 %v8728, %v9071
          %v9073 = vpop.f32.mrb[0].mxu0
          %v9074 = vadd.f32 %v8730, %v9073
          %v9075 = vpop.f32.mrb[0].mxu0
          %v9076 = vadd.f32 %v8732, %v9075
          %9077 = vdwg.mxu0
          %9078 = vmatprep.subr.bf16.mxu0 %v8678
          %9079 = vmatpush1.bf16.msra.mxu0 %v8677
          %9080 = vmatprep.subr.bf16.mxu0 0
          %9081 = vmatpush1.bf16.msra.mxu0 0
          %9082 = vmatprep.subr.bf16.mxu0 0
          %9083 = vmatpush1.bf16.msra.mxu0 0
          %9084 = vmatprep.subr.bf16.mxu0 0
          %9085 = vmatpush1.bf16.msra.mxu0 0
          %9086 = vmatprep.subr.bf16.mxu0 0
          %9087 = vmatpush1.bf16.msra.mxu0 0
          %9088 = vmatprep.subr.bf16.mxu0 0
          %9089 = vmatpush1.bf16.msra.mxu0 0
          %9090 = vmatprep.subr.bf16.mxu0 0
          %9091 = vmatpush1.bf16.msra.mxu0 0
          %9092 = vmatprep.subr.bf16.mxu0 0
          %9093 = vmatpush1.bf16.msra.mxu0 0
          %9094 = vmatprep.subr.bf16.mxu0 0
          %9095 = vmatpush1.bf16.msra.mxu0 0
          %9096 = vmatprep.subr.bf16.mxu0 0
          %9097 = vmatpush1.bf16.msra.mxu0 0
          %9098 = vmatprep.subr.bf16.mxu0 0
          %9099 = vmatpush1.bf16.msra.mxu0 0
          %9100 = vmatprep.subr.bf16.mxu0 0
          %9101 = vmatpush1.bf16.msra.mxu0 0
          %9102 = vmatprep.subr.bf16.mxu0 0
          %9103 = vmatpush1.bf16.msra.mxu0 0
          %9104 = vmatprep.subr.bf16.mxu0 0
          %9105 = vmatpush1.bf16.msra.mxu0 0
          %9106 = vmatprep.subr.bf16.mxu0 0
          %9107 = vmatpush1.bf16.msra.mxu0 0
          %9108 = vmatprep.subr.bf16.mxu0 0
          %9109 = vmatpush1.bf16.msra.mxu0 0
          %9110 = vmatprep.mubr.bf16.mxu0 0
          %9111 = vmatmul.mubr.bf16.gmra.mrb[0].mxu0 %v1193
          %v9112 = vpop.f32.mrb[0].mxu0
          %v9113 = vadd.f32 %v8769, %v9112
          %v9114 = vpop.f32.mrb[0].mxu0
          %v9115 = vadd.f32 %v8771, %v9114
          %v9116 = vpop.f32.mrb[0].mxu0
          %v9117 = vadd.f32 %v8773, %v9116
          %v9118 = vpop.f32.mrb[0].mxu0
          %v9119 = vadd.f32 %v8775, %v9118
          %9120 = vdwg.mxu0
          %9121 = vmatprep.subr.bf16.mxu0 %v8680
          %9122 = vmatpush1.bf16.msra.mxu0 %v8679
          %9123 = vmatprep.subr.bf16.mxu0 0
          %9124 = vmatpush1.bf16.msra.mxu0 0
          %9125 = vmatprep.subr.bf16.mxu0 0
          %9126 = vmatpush1.bf16.msra.mxu0 0
          %9127 = vmatprep.subr.bf16.mxu0 0
          %9128 = vmatpush1.bf16.msra.mxu0 0
          %9129 = vmatprep.subr.bf16.mxu0 0
          %9130 = vmatpush1.bf16.msra.mxu0 0
          %9131 = vmatprep.subr.bf16.mxu0 0
          %9132 = vmatpush1.bf16.msra.mxu0 0
          %9133 = vmatprep.subr.bf16.mxu0 0
          %9134 = vmatpush1.bf16.msra.mxu0 0
          %9135 = vmatprep.subr.bf16.mxu0 0
          %9136 = vmatpush1.bf16.msra.mxu0 0
          %9137 = vmatprep.subr.bf16.mxu0 0
          %9138 = vmatpush1.bf16.msra.mxu0 0
          %9139 = vmatprep.subr.bf16.mxu0 0
          %9140 = vmatpush1.bf16.msra.mxu0 0
          %9141 = vmatprep.subr.bf16.mxu0 0
          %9142 = vmatpush1.bf16.msra.mxu0 0
          %9143 = vmatprep.subr.bf16.mxu0 0
          %9144 = vmatpush1.bf16.msra.mxu0 0
          %9145 = vmatprep.subr.bf16.mxu0 0
          %9146 = vmatpush1.bf16.msra.mxu0 0
          %9147 = vmatprep.subr.bf16.mxu0 0
          %9148 = vmatpush1.bf16.msra.mxu0 0
          %9149 = vmatprep.subr.bf16.mxu0 0
          %9150 = vmatpush1.bf16.msra.mxu0 0
          %9151 = vmatprep.subr.bf16.mxu0 0
          %9152 = vmatpush1.bf16.msra.mxu0 0
          %9153 = vmatprep.mubr.bf16.mxu0 0
          %9154 = vmatmul.mubr.bf16.gmra.mrb[0].mxu0 %v1193
          %v9155 = vpop.f32.mrb[0].mxu0
          %v9156 = vadd.f32 %v8812, %v9155
          %v9157 = vpop.f32.mrb[0].mxu0
          %v9158 = vadd.f32 %v8814, %v9157
          %v9159 = vpop.f32.mrb[0].mxu0
          %v9160 = vadd.f32 %v8816, %v9159
          %v9161 = vpop.f32.mrb[0].mxu0
          %v9162 = vadd.f32 %v8818, %v9161
          %9163 = vdwg.mxu0
          %9164 = vmatprep.subr.bf16.mxu0 %v8682
          %9165 = vmatpush1.bf16.msra.mxu0 %v8681
          %9166 = vmatprep.subr.bf16.mxu0 0
          %9167 = vmatpush1.bf16.msra.mxu0 0
          %9168 = vmatprep.subr.bf16.mxu0 0
          %9169 = vmatpush1.bf16.msra.mxu0 0
          %9170 = vmatprep.subr.bf16.mxu0 0
          %9171 = vmatpush1.bf16.msra.mxu0 0
          %9172 = vmatprep.subr.bf16.mxu0 0
          %9173 = vmatpush1.bf16.msra.mxu0 0
          %9174 = vmatprep.subr.bf16.mxu0 0
          %9175 = vmatpush1.bf16.msra.mxu0 0
          %9176 = vmatprep.subr.bf16.mxu0 0
          %9177 = vmatpush1.bf16.msra.mxu0 0
          %9178 = vmatprep.subr.bf16.mxu0 0
          %9179 = vmatpush1.bf16.msra.mxu0 0
          %9180 = vmatprep.subr.bf16.mxu0 0
          %9181 = vmatpush1.bf16.msra.mxu0 0
          %9182 = vmatprep.subr.bf16.mxu0 0
          %9183 = vmatpush1.bf16.msra.mxu0 0
          %9184 = vmatprep.subr.bf16.mxu0 0
          %9185 = vmatpush1.bf16.msra.mxu0 0
          %9186 = vmatprep.subr.bf16.mxu0 0
          %9187 = vmatpush1.bf16.msra.mxu0 0
          %9188 = vmatprep.subr.bf16.mxu0 0
          %9189 = vmatpush1.bf16.msra.mxu0 0
          %9190 = vmatprep.subr.bf16.mxu0 0
          %9191 = vmatpush1.bf16.msra.mxu0 0
          %9192 = vmatprep.subr.bf16.mxu0 0
          %9193 = vmatpush1.bf16.msra.mxu0 0
          %9194 = vmatprep.subr.bf16.mxu0 0
          %9195 = vmatpush1.bf16.msra.mxu0 0
          %9196 = vmatprep.mubr.bf16.mxu0 0
          %9197 = vmatmul.mubr.bf16.gmra.mrb[0].mxu0 %v1193
          %v9198 = vpop.f32.mrb[0].mxu0
          %v9199 = vadd.f32 %v8855, %v9198
          %v9200 = vpop.f32.mrb[0].mxu0
          %v9201 = vadd.f32 %v8857, %v9200
          %v9202 = vpop.f32.mrb[0].mxu0
          %v9203 = vadd.f32 %v8859, %v9202
          %v9204 = vpop.f32.mrb[0].mxu0
          %v9205 = vadd.f32 %v8861, %v9204
          %9206 = vdwg.mxu0
          %9207 = vmatprep.subr.bf16.mxu0 %v8684
          %9208 = vmatpush1.bf16.msra.mxu0 %v8683
          %9209 = vmatprep.subr.bf16.mxu0 0
          %9210 = vmatpush1.bf16.msra.mxu0 0
          %9211 = vmatprep.subr.bf16.mxu0 0
          %9212 = vmatpush1.bf16.msra.mxu0 0
          %9213 = vmatprep.subr.bf16.mxu0 0
          %9214 = vmatpush1.bf16.msra.mxu0 0
          %9215 = vmatprep.subr.bf16.mxu0 0
          %9216 = vmatpush1.bf16.msra.mxu0 0
          %9217 = vmatprep.subr.bf16.mxu0 0
          %9218 = vmatpush1.bf16.msra.mxu0 0
          %9219 = vmatprep.subr.bf16.mxu0 0
          %9220 = vmatpush1.bf16.msra.mxu0 0
          %9221 = vmatprep.subr.bf16.mxu0 0
          %9222 = vmatpush1.bf16.msra.mxu0 0
          %9223 = vmatprep.subr.bf16.mxu0 0
          %9224 = vmatpush1.bf16.msra.mxu0 0
          %9225 = vmatprep.subr.bf16.mxu0 0
          %9226 = vmatpush1.bf16.msra.mxu0 0
          %9227 = vmatprep.subr.bf16.mxu0 0
          %9228 = vmatpush1.bf16.msra.mxu0 0
          %9229 = vmatprep.subr.bf16.mxu0 0
          %9230 = vmatpush1.bf16.msra.mxu0 0
          %9231 = vmatprep.subr.bf16.mxu0 0
          %9232 = vmatpush1.bf16.msra.mxu0 0
          %9233 = vmatprep.subr.bf16.mxu0 0
          %9234 = vmatpush1.bf16.msra.mxu0 0
          %9235 = vmatprep.subr.bf16.mxu0 0
          %9236 = vmatpush1.bf16.msra.mxu0 0
          %9237 = vmatprep.subr.bf16.mxu0 0
          %9238 = vmatpush1.bf16.msra.mxu0 0
          %9239 = vmatprep.mubr.bf16.mxu0 0
          %9240 = vmatmul.mubr.bf16.gmra.mrb[0].mxu0 %v1193
          %v9241 = vpop.f32.mrb[0].mxu0
          %v9242 = vadd.f32 %v8898, %v9241
          %v9243 = vpop.f32.mrb[0].mxu0
          %v9244 = vadd.f32 %v8900, %v9243
          %v9245 = vpop.f32.mrb[0].mxu0
          %v9246 = vadd.f32 %v8902, %v9245
          %v9247 = vpop.f32.mrb[0].mxu0
          %v9248 = vadd.f32 %v8904, %v9247
          %9249 = vdwg.mxu0
          %9250 = vmatprep.subr.bf16.mxu0 %v8686
          %9251 = vmatpush1.bf16.msra.mxu0 %v8685
          %9252 = vmatprep.subr.bf16.mxu0 0
          %9253 = vmatpush1.bf16.msra.mxu0 0
          %9254 = vmatprep.subr.bf16.mxu0 0
          %9255 = vmatpush1.bf16.msra.mxu0 0
          %9256 = vmatprep.subr.bf16.mxu0 0
          %9257 = vmatpush1.bf16.msra.mxu0 0
          %9258 = vmatprep.subr.bf16.mxu0 0
          %9259 = vmatpush1.bf16.msra.mxu0 0
          %9260 = vmatprep.subr.bf16.mxu0 0
          %9261 = vmatpush1.bf16.msra.mxu0 0
          %9262 = vmatprep.subr.bf16.mxu0 0
          %9263 = vmatpush1.bf16.msra.mxu0 0
          %9264 = vmatprep.subr.bf16.mxu0 0
          %9265 = vmatpush1.bf16.msra.mxu0 0
          %9266 = vmatprep.subr.bf16.mxu0 0
          %9267 = vmatpush1.bf16.msra.mxu0 0
          %9268 = vmatprep.subr.bf16.mxu0 0
          %9269 = vmatpush1.bf16.msra.mxu0 0
          %9270 = vmatprep.subr.bf16.mxu0 0
          %9271 = vmatpush1.bf16.msra.mxu0 0
          %9272 = vmatprep.subr.bf16.mxu0 0
          %9273 = vmatpush1.bf16.msra.mxu0 0
          %9274 = vmatprep.subr.bf16.mxu0 0
          %9275 = vmatpush1.bf16.msra.mxu0 0
          %9276 = vmatprep.subr.bf16.mxu0 0
          %9277 = vmatpush1.bf16.msra.mxu0 0
          %9278 = vmatprep.subr.bf16.mxu0 0
          %9279 = vmatpush1.bf16.msra.mxu0 0
          %9280 = vmatprep.subr.bf16.mxu0 0
          %9281 = vmatpush1.bf16.msra.mxu0 0
          %9282 = vmatprep.mubr.bf16.mxu0 0
          %9283 = vmatmul.mubr.bf16.gmra.mrb[0].mxu0 %v1193
          %v9284 = vpop.f32.mrb[0].mxu0
          %v9285 = vadd.f32 %v8941, %v9284
          %v9286 = vpop.f32.mrb[0].mxu0
          %v9287 = vadd.f32 %v8943, %v9286
          %v9288 = vpop.f32.mrb[0].mxu0
          %v9289 = vadd.f32 %v8945, %v9288
          %v9290 = vpop.f32.mrb[0].mxu0
          %v9291 = vadd.f32 %v8947, %v9290
          %9292 = vdwg.mxu0
          %9293 = vmatprep.subr.bf16.mxu0 %v8688
          %9294 = vmatpush1.bf16.msra.mxu0 %v8687
          %9295 = vmatprep.subr.bf16.mxu0 0
          %9296 = vmatpush1.bf16.msra.mxu0 0
          %9297 = vmatprep.subr.bf16.mxu0 0
          %9298 = vmatpush1.bf16.msra.mxu0 0
          %9299 = vmatprep.subr.bf16.mxu0 0
          %9300 = vmatpush1.bf16.msra.mxu0 0
          %9301 = vmatprep.subr.bf16.mxu0 0
          %9302 = vmatpush1.bf16.msra.mxu0 0
          %9303 = vmatprep.subr.bf16.mxu0 0
          %9304 = vmatpush1.bf16.msra.mxu0 0
          %9305 = vmatprep.subr.bf16.mxu0 0
          %9306 = vmatpush1.bf16.msra.mxu0 0
          %9307 = vmatprep.subr.bf16.mxu0 0
          %9308 = vmatpush1.bf16.msra.mxu0 0
          %9309 = vmatprep.subr.bf16.mxu0 0
          %9310 = vmatpush1.bf16.msra.mxu0 0
          %9311 = vmatprep.subr.bf16.mxu0 0
          %9312 = vmatpush1.bf16.msra.mxu0 0
          %9313 = vmatprep.subr.bf16.mxu0 0
          %9314 = vmatpush1.bf16.msra.mxu0 0
          %9315 = vmatprep.subr.bf16.mxu0 0
          %9316 = vmatpush1.bf16.msra.mxu0 0
          %9317 = vmatprep.subr.bf16.mxu0 0
          %9318 = vmatpush1.bf16.msra.mxu0 0
          %9319 = vmatprep.subr.bf16.mxu0 0
          %9320 = vmatpush1.bf16.msra.mxu0 0
          %9321 = vmatprep.subr.bf16.mxu0 0
          %9322 = vmatpush1.bf16.msra.mxu0 0
          %9323 = vmatprep.subr.bf16.mxu0 0
          %9324 = vmatpush1.bf16.msra.mxu0 0
          %9325 = vmatprep.mubr.bf16.mxu0 0
          %9326 = vmatmul.mubr.bf16.gmra.mrb[0].mxu0 %v1193
          %v9327 = vpop.f32.mrb[0].mxu0
          %v9328 = vadd.f32 %v8984, %v9327
          %v9329 = vpop.f32.mrb[0].mxu0
          %v9330 = vadd.f32 %v8986, %v9329
          %v9331 = vpop.f32.mrb[0].mxu0
          %v9332 = vadd.f32 %v8988, %v9331
          %v9333 = vpop.f32.mrb[0].mxu0
          %v9334 = vadd.f32 %v8990, %v9333
          %9335 = vdwg.mxu0
          %9336 = vmatprep.subr.bf16.mxu0 %v8690
          %9337 = vmatpush1.bf16.msra.mxu0 %v8689
          %9338 = vmatprep.subr.bf16.mxu0 0
          %9339 = vmatpush1.bf16.msra.mxu0 0
          %9340 = vmatprep.subr.bf16.mxu0 0
          %9341 = vmatpush1.bf16.msra.mxu0 0
          %9342 = vmatprep.subr.bf16.mxu0 0
          %9343 = vmatpush1.bf16.msra.mxu0 0
          %9344 = vmatprep.subr.bf16.mxu0 0
          %9345 = vmatpush1.bf16.msra.mxu0 0
          %9346 = vmatprep.subr.bf16.mxu0 0
          %9347 = vmatpush1.bf16.msra.mxu0 0
          %9348 = vmatprep.subr.bf16.mxu0 0
          %9349 = vmatpush1.bf16.msra.mxu0 0
          %9350 = vmatprep.subr.bf16.mxu0 0
          %9351 = vmatpush1.bf16.msra.mxu0 0
          %9352 = vmatprep.subr.bf16.mxu0 0
          %9353 = vmatpush1.bf16.msra.mxu0 0
          %9354 = vmatprep.subr.bf16.mxu0 0
          %9355 = vmatpush1.bf16.msra.mxu0 0
          %9356 = vmatprep.subr.bf16.mxu0 0
          %9357 = vmatpush1.bf16.msra.mxu0 0
          %9358 = vmatprep.subr.bf16.mxu0 0
          %9359 = vmatpush1.bf16.msra.mxu0 0
          %9360 = vmatprep.subr.bf16.mxu0 0
          %9361 = vmatpush1.bf16.msra.mxu0 0
          %9362 = vmatprep.subr.bf16.mxu0 0
          %9363 = vmatpush1.bf16.msra.mxu0 0
          %9364 = vmatprep.subr.bf16.mxu0 0
          %9365 = vmatpush1.bf16.msra.mxu0 0
          %9366 = vmatprep.subr.bf16.mxu0 0
          %9367 = vmatpush1.bf16.msra.mxu0 0
          %9368 = vmatprep.mubr.bf16.mxu0 0
          %9369 = vmatmul.mubr.bf16.gmra.mrb[0].mxu0 %v1193
          %v9370 = vpop.f32.mrb[0].mxu0
          %v9371 = vadd.f32 %v9027, %v9370
          %v9372 = vpop.f32.mrb[0].mxu0
          %v9373 = vadd.f32 %v9029, %v9372
          %v9374 = vpop.f32.mrb[0].mxu0
          %v9375 = vadd.f32 %v9031, %v9374
          %v9376 = vpop.f32.mrb[0].mxu0
          %v9377 = vadd.f32 %v9033, %v9376
          %9378 = vdwg.mxu0
          %v9379 = vlaneseq
          %v9380 = vshrl.u32 %v9379, 7
          %v9381 = vsub.s32 7, %v9380
          %v9382 = vrot.slane %v673, %v9381
          %v9383 = vlaneseq
          %v9384 = vshrl.u32 %v9383, 7
          %v9385 = vsub.s32 7, %v9384
          %v9386 = vrot.slane %v674, %v9385
          %v9387 = vlaneseq
          %v9388 = vshrl.u32 %v9387, 7
          %v9389 = vsub.s32 7, %v9388
          %v9390 = vrot.slane %v675, %v9389
          %v9391 = vlaneseq
          %v9392 = vshrl.u32 %v9391, 7
          %v9393 = vsub.s32 7, %v9392
          %v9394 = vrot.slane %v676, %v9393
          %v9395 = vlaneseq
          %v9396 = vshrl.u32 %v9395, 7
          %v9397 = vsub.s32 7, %v9396
          %v9398 = vrot.slane %v677, %v9397
          %v9399 = vlaneseq
          %v9400 = vshrl.u32 %v9399, 7
          %v9401 = vsub.s32 7, %v9400
          %v9402 = vrot.slane %v678, %v9401
          %v9403 = vlaneseq
          %v9404 = vshrl.u32 %v9403, 7
          %v9405 = vsub.s32 7, %v9404
          %v9406 = vrot.slane %v679, %v9405
          %v9407 = vlaneseq
          %v9408 = vshrl.u32 %v9407, 7
          %v9409 = vsub.s32 7, %v9408
          %v9410 = vrot.slane %v680, %v9409
          %v9411 = vlaneseq
          %v9412 = vshrl.u32 %v9411, 7
          %v9413 = vsub.s32 7, %v9412
          %v9414 = vrot.slane %v681, %v9413
          %v9415 = vlaneseq
          %v9416 = vshrl.u32 %v9415, 7
          %v9417 = vsub.s32 7, %v9416
          %v9418 = vrot.slane %v682, %v9417
          %v9419 = vlaneseq
          %v9420 = vshrl.u32 %v9419, 7
          %v9421 = vsub.s32 7, %v9420
          %v9422 = vrot.slane %v683, %v9421
          %v9423 = vlaneseq
          %v9424 = vshrl.u32 %v9423, 7
          %v9425 = vsub.s32 7, %v9424
          %v9426 = vrot.slane %v684, %v9425
          %v9427 = vlaneseq
          %v9428 = vshrl.u32 %v9427, 7
          %v9429 = vsub.s32 7, %v9428
          %v9430 = vrot.slane %v685, %v9429
          %v9431 = vlaneseq
          %v9432 = vshrl.u32 %v9431, 7
          %v9433 = vsub.s32 7, %v9432
          %v9434 = vrot.slane %v686, %v9433
          %v9435 = vlaneseq
          %v9436 = vshrl.u32 %v9435, 7
          %v9437 = vsub.s32 7, %v9436
          %v9438 = vrot.slane %v687, %v9437
          %v9439 = vlaneseq
          %v9440 = vshrl.u32 %v9439, 7
          %v9441 = vsub.s32 7, %v9440
          %v9442 = vrot.slane %v688, %v9441
          %vm9443 = vcmp.eq.s32.totalorder %v698, %v9382
          %vm9444 = vcmp.eq.s32.totalorder %v698, %v9386
          %vm9445 = vcmp.eq.s32.totalorder %v698, %v9390
          %vm9446 = vcmp.eq.s32.totalorder %v698, %v9394
          %vm9447 = vcmp.eq.s32.totalorder %v698, %v9398
          %vm9448 = vcmp.eq.s32.totalorder %v698, %v9402
          %vm9449 = vcmp.eq.s32.totalorder %v698, %v9406
          %vm9450 = vcmp.eq.s32.totalorder %v698, %v9410
          %vm9451 = vcmp.eq.s32.totalorder %v698, %v9414
          %vm9452 = vcmp.eq.s32.totalorder %v698, %v9418
          %vm9453 = vcmp.eq.s32.totalorder %v698, %v9422
          %vm9454 = vcmp.eq.s32.totalorder %v698, %v9426
          %vm9455 = vcmp.eq.s32.totalorder %v698, %v9430
          %vm9456 = vcmp.eq.s32.totalorder %v698, %v9434
          %vm9457 = vcmp.eq.s32.totalorder %v698, %v9438
          %vm9458 = vcmp.eq.s32.totalorder %v698, %v9442
          %vm9459 = vcmp.eq.s32.totalorder %v699, %v9382
          %vm9460 = vcmp.eq.s32.totalorder %v699, %v9386
          %vm9461 = vcmp.eq.s32.totalorder %v699, %v9390
          %vm9462 = vcmp.eq.s32.totalorder %v699, %v9394
          %vm9463 = vcmp.eq.s32.totalorder %v699, %v9398
          %vm9464 = vcmp.eq.s32.totalorder %v699, %v9402
          %vm9465 = vcmp.eq.s32.totalorder %v699, %v9406
          %vm9466 = vcmp.eq.s32.totalorder %v699, %v9410
          %vm9467 = vcmp.eq.s32.totalorder %v699, %v9414
          %vm9468 = vcmp.eq.s32.totalorder %v699, %v9418
          %vm9469 = vcmp.eq.s32.totalorder %v699, %v9422
          %vm9470 = vcmp.eq.s32.totalorder %v699, %v9426
          %vm9471 = vcmp.eq.s32.totalorder %v699, %v9430
          %vm9472 = vcmp.eq.s32.totalorder %v699, %v9434
          %vm9473 = vcmp.eq.s32.totalorder %v699, %v9438
          %vm9474 = vcmp.eq.s32.totalorder %v699, %v9442
          %v9475 = vsel %vm9443, %v9070, 0.0
          %v9476 = vsel %vm9444, %v9072, 0.0
          %v9477 = vsel %vm9445, %v9113, 0.0
          %v9478 = vsel %vm9446, %v9115, 0.0
          %v9479 = vsel %vm9447, %v9156, 0.0
          %v9480 = vsel %vm9448, %v9158, 0.0
          %v9481 = vsel %vm9449, %v9199, 0.0
          %v9482 = vsel %vm9450, %v9201, 0.0
          %v9483 = vsel %vm9451, %v9242, 0.0
          %v9484 = vsel %vm9452, %v9244, 0.0
          %v9485 = vsel %vm9453, %v9285, 0.0
          %v9486 = vsel %vm9454, %v9287, 0.0
          %v9487 = vsel %vm9455, %v9328, 0.0
          %v9488 = vsel %vm9456, %v9330, 0.0
          %v9489 = vsel %vm9457, %v9371, 0.0
          %v9490 = vsel %vm9458, %v9373, 0.0
          %v9491 = vsel %vm9459, %v9074, 0.0
          %v9492 = vsel %vm9460, %v9076, 0.0
          %v9493 = vsel %vm9461, %v9117, 0.0
          %v9494 = vsel %vm9462, %v9119, 0.0
          %v9495 = vsel %vm9463, %v9160, 0.0
          %v9496 = vsel %vm9464, %v9162, 0.0
          %v9497 = vsel %vm9465, %v9203, 0.0
          %v9498 = vsel %vm9466, %v9205, 0.0
          %v9499 = vsel %vm9467, %v9246, 0.0
          %v9500 = vsel %vm9468, %v9248, 0.0
          %v9501 = vsel %vm9469, %v9289, 0.0
          %v9502 = vsel %vm9470, %v9291, 0.0
          %v9503 = vsel %vm9471, %v9332, 0.0
          %v9504 = vsel %vm9472, %v9334, 0.0
          %v9505 = vsel %vm9473, %v9375, 0.0
          %v9506 = vsel %vm9474, %v9377, 0.0
          %v9507 = vadd.f32 %v9475, %v9491
          %v9508 = vrot.slane %v9507, 4
          %v9509 = vadd.f32 %v9507, %v9508
          %v9510 = vrot.slane %v9509, 2
          %v9511 = vadd.f32 %v9509, %v9510
          %v9512 = vrot.slane %v9511, 1
          %v9513 = vadd.f32 %v9511, %v9512
          %v9514 = vadd.f32 %v9476, %v9492
          %v9515 = vrot.slane %v9514, 4
          %v9516 = vadd.f32 %v9514, %v9515
          %v9517 = vrot.slane %v9516, 2
          %v9518 = vadd.f32 %v9516, %v9517
          %v9519 = vrot.slane %v9518, 1
          %v9520 = vadd.f32 %v9518, %v9519
          %v9521 = vadd.f32 %v9477, %v9493
          %v9522 = vrot.slane %v9521, 4
          %v9523 = vadd.f32 %v9521, %v9522
          %v9524 = vrot.slane %v9523, 2
          %v9525 = vadd.f32 %v9523, %v9524
          %v9526 = vrot.slane %v9525, 1
          %v9527 = vadd.f32 %v9525, %v9526
          %v9528 = vadd.f32 %v9478, %v9494
          %v9529 = vrot.slane %v9528, 4
          %v9530 = vadd.f32 %v9528, %v9529
          %v9531 = vrot.slane %v9530, 2
          %v9532 = vadd.f32 %v9530, %v9531
          %v9533 = vrot.slane %v9532, 1
          %v9534 = vadd.f32 %v9532, %v9533
          %v9535 = vadd.f32 %v9479, %v9495
          %v9536 = vrot.slane %v9535, 4
          %v9537 = vadd.f32 %v9535, %v9536
          %v9538 = vrot.slane %v9537, 2
          %v9539 = vadd.f32 %v9537, %v9538
          %v9540 = vrot.slane %v9539, 1
          %v9541 = vadd.f32 %v9539, %v9540
          %v9542 = vadd.f32 %v9480, %v9496
          %v9543 = vrot.slane %v9542, 4
          %v9544 = vadd.f32 %v9542, %v9543
          %v9545 = vrot.slane %v9544, 2
          %v9546 = vadd.f32 %v9544, %v9545
          %v9547 = vrot.slane %v9546, 1
          %v9548 = vadd.f32 %v9546, %v9547
          %v9549 = vadd.f32 %v9481, %v9497
          %v9550 = vrot.slane %v9549, 4
          %v9551 = vadd.f32 %v9549, %v9550
          %v9552 = vrot.slane %v9551, 2
          %v9553 = vadd.f32 %v9551, %v9552
          %v9554 = vrot.slane %v9553, 1
          %v9555 = vadd.f32 %v9553, %v9554
          %v9556 = vadd.f32 %v9482, %v9498
          %v9557 = vrot.slane %v9556, 4
          %v9558 = vadd.f32 %v9556, %v9557
          %v9559 = vrot.slane %v9558, 2
          %v9560 = vadd.f32 %v9558, %v9559
          %v9561 = vrot.slane %v9560, 1
          %v9562 = vadd.f32 %v9560, %v9561
          %v9563 = vadd.f32 %v9483, %v9499
          %v9564 = vrot.slane %v9563, 4
          %v9565 = vadd.f32 %v9563, %v9564
          %v9566 = vrot.slane %v9565, 2
          %v9567 = vadd.f32 %v9565, %v9566
          %v9568 = vrot.slane %v9567, 1
          %v9569 = vadd.f32 %v9567, %v9568
          %v9570 = vadd.f32 %v9484, %v9500
          %v9571 = vrot.slane %v9570, 4
          %v9572 = vadd.f32 %v9570, %v9571
          %v9573 = vrot.slane %v9572, 2
          %v9574 = vadd.f32 %v9572, %v9573
          %v9575 = vrot.slane %v9574, 1
          %v9576 = vadd.f32 %v9574, %v9575
          %v9577 = vadd.f32 %v9485, %v9501
          %v9578 = vrot.slane %v9577, 4
          %v9579 = vadd.f32 %v9577, %v9578
          %v9580 = vrot.slane %v9579, 2
          %v9581 = vadd.f32 %v9579, %v9580
          %v9582 = vrot.slane %v9581, 1
          %v9583 = vadd.f32 %v9581, %v9582
          %v9584 = vadd.f32 %v9486, %v9502
          %v9585 = vrot.slane %v9584, 4
          %v9586 = vadd.f32 %v9584, %v9585
          %v9587 = vrot.slane %v9586, 2
          %v9588 = vadd.f32 %v9586, %v9587
          %v9589 = vrot.slane %v9588, 1
          %v9590 = vadd.f32 %v9588, %v9589
          %v9591 = vadd.f32 %v9487, %v9503
          %v9592 = vrot.slane %v9591, 4
          %v9593 = vadd.f32 %v9591, %v9592
          %v9594 = vrot.slane %v9593, 2
          %v9595 = vadd.f32 %v9593, %v9594
          %v9596 = vrot.slane %v9595, 1
          %v9597 = vadd.f32 %v9595, %v9596
          %v9598 = vadd.f32 %v9488, %v9504
          %v9599 = vrot.slane %v9598, 4
          %v9600 = vadd.f32 %v9598, %v9599
          %v9601 = vrot.slane %v9600, 2
          %v9602 = vadd.f32 %v9600, %v9601
          %v9603 = vrot.slane %v9602, 1
          %v9604 = vadd.f32 %v9602, %v9603
          %v9605 = vadd.f32 %v9489, %v9505
          %v9606 = vrot.slane %v9605, 4
          %v9607 = vadd.f32 %v9605, %v9606
          %v9608 = vrot.slane %v9607, 2
          %v9609 = vadd.f32 %v9607, %v9608
          %v9610 = vrot.slane %v9609, 1
          %v9611 = vadd.f32 %v9609, %v9610
          %v9612 = vadd.f32 %v9490, %v9506
          %v9613 = vrot.slane %v9612, 4
          %v9614 = vadd.f32 %v9612, %v9613
          %v9615 = vrot.slane %v9614, 2
          %v9616 = vadd.f32 %v9614, %v9615
          %v9617 = vrot.slane %v9616, 1
          %v9618 = vadd.f32 %v9616, %v9617
          %v9619 = vsub.f32 0.8888889, %v9513
          %v9620 = vsub.f32 0.8888889, %v9520
          %v9621 = vsub.f32 0.8888889, %v9527
          %v9622 = vsub.f32 0.8888889, %v9534
          %v9623 = vsub.f32 0.8888889, %v9541
          %v9624 = vsub.f32 0.8888889, %v9548
          %v9625 = vsub.f32 0.8888889, %v9555
          %v9626 = vsub.f32 0.8888889, %v9562
          %v9627 = vsub.f32 0.8888889, %v9569
          %v9628 = vsub.f32 0.8888889, %v9576
          %v9629 = vsub.f32 0.8888889, %v9583
          %v9630 = vsub.f32 0.8888889, %v9590
          %v9631 = vsub.f32 0.8888889, %v9597
          %v9632 = vsub.f32 0.8888889, %v9604
          %v9633 = vsub.f32 0.8888889, %v9611
          %v9634 = vsub.f32 0.8888889, %v9618
          %v9635 = vmul.f32 %v9619, %v9619
          %v9636 = vmul.f32 %v9620, %v9620
          %v9637 = vmul.f32 %v9621, %v9621
          %v9638 = vmul.f32 %v9622, %v9622
          %v9639 = vmul.f32 %v9623, %v9623
          %v9640 = vmul.f32 %v9624, %v9624
          %v9641 = vmul.f32 %v9625, %v9625
          %v9642 = vmul.f32 %v9626, %v9626
          %v9643 = vmul.f32 %v9627, %v9627
          %v9644 = vmul.f32 %v9628, %v9628
          %v9645 = vmul.f32 %v9629, %v9629
          %v9646 = vmul.f32 %v9630, %v9630
          %v9647 = vmul.f32 %v9631, %v9631
          %v9648 = vmul.f32 %v9632, %v9632
          %v9649 = vmul.f32 %v9633, %v9633
          %v9650 = vmul.f32 %v9634, %v9634
          %v9651 = vadd.f32 %v8531, %v9635
          %v9652 = vadd.f32 %v8532, %v9636
          %v9653 = vadd.f32 %v8533, %v9637
          %v9654 = vadd.f32 %v8534, %v9638
          %v9655 = vadd.f32 %v8535, %v9639
          %v9656 = vadd.f32 %v8536, %v9640
          %v9657 = vadd.f32 %v8537, %v9641
          %v9658 = vadd.f32 %v8538, %v9642
          %v9659 = vadd.f32 %v8539, %v9643
          %v9660 = vadd.f32 %v8540, %v9644
          %v9661 = vadd.f32 %v8541, %v9645
          %v9662 = vadd.f32 %v8542, %v9646
          %v9663 = vadd.f32 %v8543, %v9647
          %v9664 = vadd.f32 %v8544, %v9648
          %v9665 = vadd.f32 %v8545, %v9649
          %v9666 = vadd.f32 %v8546, %v9650
          %v9667 = vlaneseq
          %v9668 = vand.u32 %v9667, 127
          %v9669 = vadd.s32 %v9668, 128
          %v9670 = vadd.s32 %v9668, 256
          %v9671 = vadd.s32 %v9668, 384
          %v9672 = vadd.s32 %v9668, 512
          %v9673 = vadd.s32 %v9668, 640
          %v9674 = vadd.s32 %v9668, 768
          %v9675 = vadd.s32 %v9668, 896
          %v9676 = vadd.s32 %v9668, 1024
          %v9677 = vadd.s32 %v9668, 1152
          %v9678 = vadd.s32 %v9668, 1280
          %v9679 = vadd.s32 %v9668, 1408
          %v9680 = vadd.s32 %v9668, 1536
          %v9681 = vadd.s32 %v9668, 1664
          %v9682 = vadd.s32 %v9668, 1792
          %v9683 = vadd.s32 %v9668, 1920
          %p9684 = scmp.ne.s32.totalorder %s30, 1
          %vm9685 = vcmp.lt.s32.totalorder %v9668, 76
          %vm9686 = vcmp.lt.s32.totalorder %v9669, 76
          %vm9687 = vcmp.lt.s32.totalorder %v9670, 76
          %vm9688 = vcmp.lt.s32.totalorder %v9671, 76
          %vm9689 = vcmp.lt.s32.totalorder %v9672, 76
          %vm9690 = vcmp.lt.s32.totalorder %v9673, 76
          %vm9691 = vcmp.lt.s32.totalorder %v9674, 76
          %vm9692 = vcmp.lt.s32.totalorder %v9675, 76
          %vm9693 = vcmp.lt.s32.totalorder %v9676, 76
          %vm9694 = vcmp.lt.s32.totalorder %v9677, 76
          %vm9695 = vcmp.lt.s32.totalorder %v9678, 76
          %vm9696 = vcmp.lt.s32.totalorder %v9679, 76
          %vm9697 = vcmp.lt.s32.totalorder %v9680, 76
          %vm9698 = vcmp.lt.s32.totalorder %v9681, 76
          %vm9699 = vcmp.lt.s32.totalorder %v9682, 76
          %vm9700 = vcmp.lt.s32.totalorder %v9683, 76
          %s9701 = scalar_select %p9684, 1, 0
          %v9702 = vstv %s9701
          %vm9703 = vcmp.eq.s32.totalorder %v9702, 1
          %vm9704 = vmor %vm9703, %vm9685
          %vm9705 = vmor %vm9703, %vm9686
          %vm9706 = vmor %vm9703, %vm9687
          %vm9707 = vmor %vm9703, %vm9688
          %vm9708 = vmor %vm9703, %vm9689
          %vm9709 = vmor %vm9703, %vm9690
          %vm9710 = vmor %vm9703, %vm9691
          %vm9711 = vmor %vm9703, %vm9692
          %vm9712 = vmor %vm9703, %vm9693
          %vm9713 = vmor %vm9703, %vm9694
          %vm9714 = vmor %vm9703, %vm9695
          %vm9715 = vmor %vm9703, %vm9696
          %vm9716 = vmor %vm9703, %vm9697
          %vm9717 = vmor %vm9703, %vm9698
          %vm9718 = vmor %vm9703, %vm9699
          %vm9719 = vmor %vm9703, %vm9700
          %v9720 = vld [vmem:[#allocation2] sm:$0xff]
          %v9721 = vld [vmem:[#allocation2 + $0x8] sm:$0xff]
          %v9722 = vsel %vm9704, %v9651, 0.0
          %v9723 = vsel %vm9705, %v9652, 0.0
          %v9724 = vsel %vm9706, %v9653, 0.0
          %v9725 = vsel %vm9707, %v9654, 0.0
          %v9726 = vsel %vm9708, %v9655, 0.0
          %v9727 = vsel %vm9709, %v9656, 0.0
          %v9728 = vsel %vm9710, %v9657, 0.0
          %v9729 = vsel %vm9711, %v9658, 0.0
          %v9730 = vsel %vm9712, %v9659, 0.0
          %v9731 = vsel %vm9713, %v9660, 0.0
          %v9732 = vsel %vm9714, %v9661, 0.0
          %v9733 = vsel %vm9715, %v9662, 0.0
          %v9734 = vsel %vm9716, %v9663, 0.0
          %v9735 = vsel %vm9717, %v9664, 0.0
          %v9736 = vsel %vm9718, %v9665, 0.0
          %v9737 = vsel %vm9719, %v9666, 0.0
          %v9754 = vcombine.low %v9722, %v9723
          %v9755 = vcombine.low %v9724, %v9725
          %v9756 = vcombine.low %v9726, %v9727
          %v9757 = vcombine.low %v9728, %v9729
          %v9759 = vunpack.c.l.s4 1966171168
          %v9760 = vunpack.c.0.s8 %v9759
          %v9761 = vlaneseq
          %v9762 = vshrl.u32 %v9761, 7
          %v9763 = vsub.s32 %v9760, %v9762
          %v9764 = vrot.slane %v9754, %v9763
          %v9766 = vunpack.c.l.s4 1966171168
          %v9767 = vunpack.c.0.s8 %v9766
          %v9768 = vlaneseq
          %v9769 = vshrl.u32 %v9768, 7
          %v9770 = vsub.s32 %v9767, %v9769
          %v9771 = vrot.slane %v9755, %v9770
          %v9773 = vunpack.c.l.s4 1966171168
          %v9774 = vunpack.c.0.s8 %v9773
          %v9775 = vlaneseq
          %v9776 = vshrl.u32 %v9775, 7
          %v9777 = vsub.s32 %v9774, %v9776
          %v9778 = vrot.slane %v9756, %v9777
          %v9780 = vunpack.c.l.s4 1966171168
          %v9781 = vunpack.c.0.s8 %v9780
          %v9782 = vlaneseq
          %v9783 = vshrl.u32 %v9782, 7
          %v9784 = vsub.s32 %v9781, %v9783
          %v9785 = vrot.slane %v9757, %v9784
          %v9786 = vcombine.low %v9764, %v9771
          %v9787 = vcombine.low %v9778, %v9785
          %v9789 = vunpack.c.l.s4 1966171168
          %v9790 = vunpack.c.0.s8 %v9789
          %v9791 = vlaneseq
          %v9792 = vshrl.u32 %v9791, 7
          %v9793 = vsub.s32 %v9790, %v9792
          %v9794 = vrot.slane %v9786, %v9793
          %v9796 = vunpack.c.l.s4 1966171168
          %v9797 = vunpack.c.0.s8 %v9796
          %v9798 = vlaneseq
          %v9799 = vshrl.u32 %v9798, 7
          %v9800 = vsub.s32 %v9797, %v9799
          %v9801 = vrot.slane %v9787, %v9800
          %v9802 = vcombine.low %v9794, %v9801
          %v9803 = vcombine.low %v9730, %v9731
          %v9804 = vcombine.low %v9732, %v9733
          %v9805 = vcombine.low %v9734, %v9735
          %v9806 = vcombine.low %v9736, %v9737
          %v9808 = vunpack.c.l.s4 1966171168
          %v9809 = vunpack.c.0.s8 %v9808
          %v9810 = vlaneseq
          %v9811 = vshrl.u32 %v9810, 7
          %v9812 = vsub.s32 %v9809, %v9811
          %v9813 = vrot.slane %v9803, %v9812
          %v9815 = vunpack.c.l.s4 1966171168
          %v9816 = vunpack.c.0.s8 %v9815
          %v9817 = vlaneseq
          %v9818 = vshrl.u32 %v9817, 7
          %v9819 = vsub.s32 %v9816, %v9818
          %v9820 = vrot.slane %v9804, %v9819
          %v9822 = vunpack.c.l.s4 1966171168
          %v9823 = vunpack.c.0.s8 %v9822
          %v9824 = vlaneseq
          %v9825 = vshrl.u32 %v9824, 7
          %v9826 = vsub.s32 %v9823, %v9825
          %v9827 = vrot.slane %v9805, %v9826
          %v9829 = vunpack.c.l.s4 1966171168
          %v9830 = vunpack.c.0.s8 %v9829
          %v9831 = vlaneseq
          %v9832 = vshrl.u32 %v9831, 7
          %v9833 = vsub.s32 %v9830, %v9832
          %v9834 = vrot.slane %v9806, %v9833
          %v9835 = vcombine.low %v9813, %v9820
          %v9836 = vcombine.low %v9827, %v9834
          %v9838 = vunpack.c.l.s4 1966171168
          %v9839 = vunpack.c.0.s8 %v9838
          %v9840 = vlaneseq
          %v9841 = vshrl.u32 %v9840, 7
          %v9842 = vsub.s32 %v9839, %v9841
          %v9843 = vrot.slane %v9835, %v9842
          %v9845 = vunpack.c.l.s4 1966171168
          %v9846 = vunpack.c.0.s8 %v9845
          %v9847 = vlaneseq
          %v9848 = vshrl.u32 %v9847, 7
          %v9849 = vsub.s32 %v9846, %v9848
          %v9850 = vrot.slane %v9836, %v9849
          %v9851 = vcombine.low %v9843, %v9850
          %v9854 = vadd.f32 %v9720, %v9802
          %v9855 = vadd.f32 %v9721, %v9851
          %9856 = vst [vmem:[#allocation2] sm:$0xff] %v9854
          %9857 = vst [vmem:[#allocation2 + $0x8] sm:$0xff] %v9855
        $region76: #{tpu_custom_call.1} parent=55 // pred_fallthru
          _
        %p9858 = scmp.eq.s32.totalorder %s30, 1
        // Predicated region
        $region77: #{tpu_custom_call.1} parent=55 // pred_check
          %p9859 = pneg %p9858
        $region78: #{tpu_custom_call.1} parent=55 // pred_check_branch
          %9861 = sbr.rel (%p9859) target = $region80
        $region79: #{tpu_custom_call.1} parent=55 // pred_region
          %s9862 = sld [smem:[#allocation3 + $0x2]]
          %v9863 = vld [vmem:[#allocation2] sm:$0xff]
          %v9864 = vld [vmem:[#allocation2 + $0x8] sm:$0xff]
          %v9867 = vlaneseq
          %v9868 = vshrl.u32 %v9867, 7
          %v9869 = vsub.s32 0, %v9868
          %v9870 = vrot.slane %v9863, %v9869
          %v9871 = vlaneseq
          %v9872 = vshrl.u32 %v9871, 7
          %v9873 = vsub.s32 1, %v9872
          %v9874 = vrot.slane %v9863, %v9873
          %v9875 = vlaneseq
          %v9876 = vshrl.u32 %v9875, 7
          %v9877 = vsub.s32 2, %v9876
          %v9878 = vrot.slane %v9863, %v9877
          %v9879 = vlaneseq
          %v9880 = vshrl.u32 %v9879, 7
          %v9881 = vsub.s32 3, %v9880
          %v9882 = vrot.slane %v9863, %v9881
          %v9883 = vlaneseq
          %v9884 = vshrl.u32 %v9883, 7
          %v9885 = vsub.s32 4, %v9884
          %v9886 = vrot.slane %v9863, %v9885
          %v9887 = vlaneseq
          %v9888 = vshrl.u32 %v9887, 7
          %v9889 = vsub.s32 5, %v9888
          %v9890 = vrot.slane %v9863, %v9889
          %v9891 = vlaneseq
          %v9892 = vshrl.u32 %v9891, 7
          %v9893 = vsub.s32 6, %v9892
          %v9894 = vrot.slane %v9863, %v9893
          %v9895 = vlaneseq
          %v9896 = vshrl.u32 %v9895, 7
          %v9897 = vsub.s32 7, %v9896
          %v9898 = vrot.slane %v9863, %v9897
          %v9899 = vlaneseq
          %v9900 = vshrl.u32 %v9899, 7
          %v9901 = vsub.s32 0, %v9900
          %v9902 = vrot.slane %v9864, %v9901
          %v9903 = vlaneseq
          %v9904 = vshrl.u32 %v9903, 7
          %v9905 = vsub.s32 1, %v9904
          %v9906 = vrot.slane %v9864, %v9905
          %v9907 = vlaneseq
          %v9908 = vshrl.u32 %v9907, 7
          %v9909 = vsub.s32 2, %v9908
          %v9910 = vrot.slane %v9864, %v9909
          %v9911 = vlaneseq
          %v9912 = vshrl.u32 %v9911, 7
          %v9913 = vsub.s32 3, %v9912
          %v9914 = vrot.slane %v9864, %v9913
          %v9915 = vlaneseq
          %v9916 = vshrl.u32 %v9915, 7
          %v9917 = vsub.s32 4, %v9916
          %v9918 = vrot.slane %v9864, %v9917
          %v9919 = vlaneseq
          %v9920 = vshrl.u32 %v9919, 7
          %v9921 = vsub.s32 5, %v9920
          %v9922 = vrot.slane %v9864, %v9921
          %v9923 = vlaneseq
          %v9924 = vshrl.u32 %v9923, 7
          %v9925 = vsub.s32 6, %v9924
          %v9926 = vrot.slane %v9864, %v9925
          %v9927 = vlaneseq
          %v9928 = vshrl.u32 %v9927, 7
          %v9929 = vsub.s32 7, %v9928
          %v9930 = vrot.slane %v9864, %v9929
          %vm9947 = vcmask 1040384
          %v9948 = vsel %vm9947, %v9870, 0.0
          %v9949 = vsel %vm9947, %v9874, 0.0
          %v9950 = vadd.f32 %v9948, %v9949
          %v9951 = vsel %vm9947, %v9878, 0.0
          %v9952 = vadd.f32 %v9950, %v9951
          %v9953 = vsel %vm9947, %v9882, 0.0
          %v9954 = vadd.f32 %v9952, %v9953
          %v9955 = vsel %vm9947, %v9886, 0.0
          %v9956 = vadd.f32 %v9954, %v9955
          %v9957 = vsel %vm9947, %v9890, 0.0
          %v9958 = vadd.f32 %v9956, %v9957
          %v9959 = vsel %vm9947, %v9894, 0.0
          %v9960 = vadd.f32 %v9958, %v9959
          %v9961 = vsel %vm9947, %v9898, 0.0
          %v9962 = vadd.f32 %v9960, %v9961
          %v9963 = vsel %vm9947, %v9902, 0.0
          %v9964 = vadd.f32 %v9962, %v9963
          %v9965 = vsel %vm9947, %v9906, 0.0
          %v9966 = vadd.f32 %v9964, %v9965
          %v9967 = vsel %vm9947, %v9910, 0.0
          %v9968 = vadd.f32 %v9966, %v9967
          %v9969 = vsel %vm9947, %v9914, 0.0
          %v9970 = vadd.f32 %v9968, %v9969
          %v9971 = vsel %vm9947, %v9918, 0.0
          %v9972 = vadd.f32 %v9970, %v9971
          %v9973 = vsel %vm9947, %v9922, 0.0
          %v9974 = vadd.f32 %v9972, %v9973
          %v9975 = vsel %vm9947, %v9926, 0.0
          %v9976 = vadd.f32 %v9974, %v9975
          %v9977 = vsel %vm9947, %v9930, 0.0
          %v9978 = vadd.f32 %v9976, %v9977
          %9979 = vadd.xlane.f32.xlu0 %v9978
          %v9980 = vpop.xlane.xlu0 %9979
          %v9981 = vrot.slane %v9980, 4
          %v9982 = vadd.f32 %v9980, %v9981
          %v9983 = vrot.slane %v9982, 2
          %v9984 = vadd.f32 %v9982, %v9983
          %v9985 = vrot.slane %v9984, 1
          %v9986 = vadd.f32 %v9984, %v9985
          %s9987 = vtos %v9986
          %p9988 = scmp.gt.f32.partialorder %s9862, 0.0
          %s9989 = smul.f32 %s9862, %s9987
          %s9990 = smul.f32 %s9989, 0.00047080978
          %s9991 = scalar_select %p9988, %s9990, 0.0
          %s9992 = scalar_lea.smem [#allocation13], 0
          %9993 = sst [smem:[%s9992]] %s9991
        $region80: #{tpu_custom_call.1} parent=55 // pred_fallthru
          _
        // Predicated region
        $region81: #{tpu_custom_call.1} parent=55 // pred_check
          %p9994 = pneg %p237
        $region82: #{tpu_custom_call.1} parent=55 // pred_check_branch
          %9996 = sbr.rel (%p9994) target = $region84
        $region83: #{tpu_custom_call.1} parent=55 // pred_region
          %s9998 = ssub.s32 16, 16
          %9999 = vsyncadd [#allocation5], %s9998
          %10002 = dma.smem_to_hbm [#allocation10], 16, %s9, [#allocation5]
        $region84: #{tpu_custom_call.1} parent=55 // pred_fallthru
          _
        // Predicated region
        $region85: #{tpu_custom_call.1} parent=55 // pred_check
          %p10003 = pneg %p258
        $region86: #{tpu_custom_call.1} parent=55 // pred_check_branch
          %10005 = sbr.rel (%p10003) target = $region88
        $region87: #{tpu_custom_call.1} parent=55 // pred_region
          %s10007 = ssub.s32 16, 16
          %10008 = vsyncadd [#allocation12], %s10007
          %10011 = dma.smem_to_hbm [#allocation11], 16, %s10, [#allocation12]
        $region88: #{tpu_custom_call.1} parent=55 // pred_fallthru
          _
        // Predicated region
        $region89: #{tpu_custom_call.1} parent=55 // pred_check
          %p10012 = pneg %p279
        $region90: #{tpu_custom_call.1} parent=55 // pred_check_branch
          %10014 = sbr.rel (%p10012) target = $region92
        $region91: #{tpu_custom_call.1} parent=55 // pred_region
          %s10016 = ssub.s32 16, 16
          %10017 = vsyncadd [#allocation12], %s10016
          %10020 = dma.smem_to_hbm [#allocation13], 16, %s11, [#allocation12]
        $region92: #{tpu_custom_call.1} parent=55 // pred_fallthru
          _
        // Predicated region
        $region93: #{tpu_custom_call.1} parent=55 // pred_check
          %p10021 = pneg %p237
        $region94: #{tpu_custom_call.1} parent=55 // pred_check_branch
          %10023 = sbr.rel (%p10021) target = $region96
        $region95: #{tpu_custom_call.1} parent=55 // pred_region
          %10024 = dma.done [#allocation5], 16
        $region96: #{tpu_custom_call.1} parent=55 // pred_fallthru
          _
        // Predicated region
        $region97: #{tpu_custom_call.1} parent=55 // pred_check
          %p10025 = pneg %p258
        $region98: #{tpu_custom_call.1} parent=55 // pred_check_branch
          %10027 = sbr.rel (%p10025) target = $region100
        $region99: #{tpu_custom_call.1} parent=55 // pred_region
          %10028 = dma.done [#allocation12], 16
        $region100: #{tpu_custom_call.1} parent=55 // pred_fallthru
          _
        // Predicated region
        $region101: #{tpu_custom_call.1} parent=55 // pred_check
          %p10029 = pneg %p279
        $region102: #{tpu_custom_call.1} parent=55 // pred_check_branch
          %10031 = sbr.rel (%p10029) target = $region104
        $region103: #{tpu_custom_call.1} parent=55 // pred_region
          %10032 = dma.done [#allocation12], 16
        $region104: #{tpu_custom_call.1} parent=55 // pred_fallthru
          _
        %10033 = sfence
      $region56: #{tpu_custom_call.1} parent=5 // pred_fallthru
        _
      %p10034 = scmp.le.s32.totalorder 2, %s25
      // Predicated region
      $region105: #{tpu_custom_call.1} parent=5 // pred_check
        %p10035 = pneg %p10034
      $region106: #{tpu_custom_call.1} parent=5 // pred_check_branch
        %10037 = sbr.rel (%p10035) target = $region108
      $region107: #{tpu_custom_call.1} parent=5 // pred_region
        %s10038 = ssub.s32 %s25, 2
      $region108: #{tpu_custom_call.1} parent=5 // pred_fallthru
        _
    $region6: #{tpu_custom_call.1} parent=1 // loop_footer
      %s29 = sadd.s32 1, %s25
    $region7: #{tpu_custom_call.1} parent=1 // loop_footer_branch
      %24 = sbr.rel target = $region3
    $region8: #{tpu_custom_call.1} parent=1 // loop_exit
      _
    %10039 = vsyncpa [#allocation4], 1
    %s10040 = scalar_lea.sflag [#allocation4], 1
    %10041 = vsyncpa %s10040, 1
    %10042 = vsyncpa [#allocation9], 1
    %s10043 = scalar_lea.sflag [#allocation9], 1
    %10044 = vsyncpa %s10043, 1
    %10045 = vsyncpa [#allocation5], 1
    %s10046 = scalar_lea.sflag [#allocation5], 1
    %10047 = vsyncpa %s10046, 1
    %10048 = vsyncpa [#allocation12], 1
    %10049 = vsyncpa [#allocation6], 1
    %s10050 = scalar_lea.sflag [#allocation6], 1
    %10051 = vsyncpa %s10050, 1

</llo_original>
